<compile_context>
chip_gen: v6e
topology: v6e:2x2x1
jax: 0.10.0
libtpu: 0.0.40
codegen_flags: <defaults>
</compile_context>

<pallas_src>
import jax
import jax.numpy as jnp
from jax.experimental import pallas as pl
from jax.experimental.pallas import tpu as pltpu

HIDDEN1 = 1600
HIDDEN2 = 400


def _round_up(x, m):
    return (x + m - 1) // m * m


# MXU / lane aligned padded dims (multiples of 256 for v6e/v7x; also 128-dense
# on v5e).
H1_PAD = _round_up(HIDDEN1, 256)   # 1792
H2_PAD = _round_up(HIDDEN2, 256)   # 512
TILE_M = 256                       # node-row tile (two passes of v5e's 4x128^2 MXU,
TILE_K = 256                       # one pass of v6e/v7x's 256^2 MXU)
FUSE_MAX_N = 512                   # use the fused single-kernel path up to this n_pad
VMEM_LIMIT = 32 * 1024 * 1024      # explicit scoped-VMEM limit (safe on v5e..v7x)


# --------------------------------------------------------------------------
# Kernels
# --------------------------------------------------------------------------
def _fused_kernel(a_ref, x_ref, w1_ref, b1_ref, w2_ref, b2_ref, o_ref, h1_ref):
    """Both GCN layers in one kernel; h1 stays resident in VMEM scratch."""
    # Layer 1: aggregate first ((N,N)@(N,F) is the cheap contraction).
    ax = jnp.dot(a_ref[...], x_ref[...], preferred_element_type=jnp.float32)
    h1 = jnp.dot(ax.astype(jnp.bfloat16), w1_ref[...],
                 preferred_element_type=jnp.float32)
    h1_ref[...] = jnp.maximum(h1 + b1_ref[...], 0.0).astype(jnp.bfloat16)
    # Layer 2 straight out of VMEM -- no HBM round trip for h1.
    agg = jnp.dot(a_ref[...], h1_ref[...], preferred_element_type=jnp.float32)
    out = jnp.dot(agg.astype(jnp.bfloat16), w2_ref[...],
                  preferred_element_type=jnp.float32)
    o_ref[...] = out + b2_ref[...]


def _layer1_kernel(a_ref, x_ref, w1_ref, b1_ref, h1_ref, acc_ref):
    """h1_tile = relu((A_row_tile @ X) @ W1 + b1), node contraction K-tiled."""
    k = pl.program_id(1)

    @pl.when(k == 0)
    def _():
        acc_ref[...] = jnp.zeros_like(acc_ref)

    acc_ref[...] += jnp.dot(a_ref[...], x_ref[...],
                            preferred_element_type=jnp.float32)

    @pl.when(k == pl.num_programs(1) - 1)
    def _():
        ax = acc_ref[...].astype(jnp.bfloat16)
        h = jnp.dot(ax, w1_ref[...], preferred_element_type=jnp.float32)
        # Padded rows become relu(b1); zero A_hat columns neutralise them.
        h1_ref[...] = jnp.maximum(h + b1_ref[...], 0.0).astype(jnp.bfloat16)


def _layer2_kernel(a_ref, h1_ref, w2_ref, b2_ref, o_ref, acc_ref):
    """out_tile = (A_row_tile @ h1) @ W2 + b2, reduced over the k grid axis."""
    k = pl.program_id(1)

    @pl.when(k == 0)
    def _():
        acc_ref[...] = jnp.zeros_like(acc_ref)

    acc_ref[...] += jnp.dot(a_ref[...], h1_ref[...],
                            preferred_element_type=jnp.float32)

    @pl.when(k == pl.num_programs(1) - 1)
    def _():
        agg = acc_ref[...].astype(jnp.bfloat16)
        out = jnp.dot(agg, w2_ref[...], preferred_element_type=jnp.float32)
        o_ref[...] = out + b2_ref[...]


# --------------------------------------------------------------------------
# Plain-JAX glue
# --------------------------------------------------------------------------
def gcn_normalize(edge_index, num_nodes):
    """Dense D^{-1/2}(A + I_remaining)D^{-1/2} from edge_index (2, E)."""
    # TODO(synk): for sparse graphs at scale, replace the dense N x N A_hat
    # with scalar-prefetched edge lists + in-kernel gathers.
    src = edge_index[0]
    tgt = edge_index[1]
    a = jnp.zeros((num_nodes, num_nodes), dtype=jnp.float32)
    a = a.at[tgt, src].add(1.0)                      # message j -> i in row i
    # add_remaining_self_loops: keep an existing self-loop weight, else add 1.
    idx = jnp.arange(num_nodes)
    diag = jnp.diagonal(a)
    a = a.at[idx, idx].set(jnp.where(diag > 0, diag, 1.0))
    deg = jnp.sum(a, axis=1)
    dinv = jnp.where(deg > 0, 1.0 / jnp.sqrt(deg), 0.0)
    return a * dinv[:, None] * dinv[None, :]


def _pad2(x, rows, cols):
    return jnp.pad(x, ((0, rows - x.shape[0]), (0, cols - x.shape[1])))


def _fused_forward(a_p, x_p, w1_p, b1_p, w2_p, b2_p, n_pad, f_pad):
    flops = 2 * n_pad * (n_pad * f_pad + f_pad * H1_PAD
                         + n_pad * H1_PAD + H1_PAD * H2_PAD)
    bytes_accessed = (2 * (a_p.size + x_p.size + w1_p.size + w2_p.size)
                      + 4 * (b1_p.size + b2_p.size) + 4 * n_pad * H2_PAD)
    return pl.pallas_call(
        _fused_kernel,
        out_shape=jax.ShapeDtypeStruct((n_pad, H2_PAD), jnp.float32),
        grid_spec=pltpu.PrefetchScalarGridSpec(
            num_scalar_prefetch=0,
            grid=(1,),
            in_specs=[
                pl.BlockSpec((n_pad, n_pad), lambda i: (0, 0)),   # A_hat
                pl.BlockSpec((n_pad, f_pad), lambda i: (0, 0)),   # X
                pl.BlockSpec((f_pad, H1_PAD), lambda i: (0, 0)),  # W1
                pl.BlockSpec((1, H1_PAD), lambda i: (0, 0)),      # b1
                pl.BlockSpec((H1_PAD, H2_PAD), lambda i: (0, 0)),  # W2
                pl.BlockSpec((1, H2_PAD), lambda i: (0, 0)),      # b2
            ],
            out_specs=pl.BlockSpec((n_pad, H2_PAD), lambda i: (0, 0)),
            scratch_shapes=[pltpu.VMEM((n_pad, H1_PAD), jnp.bfloat16)],
        ),
        compiler_params=pltpu.CompilerParams(
            dimension_semantics=("arbitrary",),
            vmem_limit_bytes=VMEM_LIMIT),
        cost_estimate=pl.CostEstimate(
            flops=flops, transcendentals=0, bytes_accessed=bytes_accessed),
    )(a_p, x_p, w1_p, b1_p, w2_p, b2_p)


def _tiled_forward(a_p, x_p, w1_p, b1_p, w2_p, b2_p, n_pad, f_pad):
    grid_m = n_pad // TILE_M
    grid_k = n_pad // TILE_K

    # ---- stage 1: h1 = relu(A_hat @ X @ W1 + b1), rows x node-contraction --
    h1 = pl.pallas_call(
        _layer1_kernel,
        out_shape=jax.ShapeDtypeStruct((n_pad, H1_PAD), jnp.bfloat16),
        grid_spec=pltpu.PrefetchScalarGridSpec(
            num_scalar_prefetch=0,
            grid=(grid_m, grid_k),
            in_specs=[
                pl.BlockSpec((TILE_M, TILE_K), lambda i, k: (i, k)),   # A tile
                pl.BlockSpec((TILE_K, f_pad), lambda i, k: (k, 0)),    # X rows
                pl.BlockSpec((f_pad, H1_PAD), lambda i, k: (0, 0)),    # W1
                pl.BlockSpec((1, H1_PAD), lambda i, k: (0, 0)),        # b1
            ],
            out_specs=pl.BlockSpec((TILE_M, H1_PAD), lambda i, k: (i, 0)),
            scratch_shapes=[pltpu.VMEM((TILE_M, f_pad), jnp.float32)],
        ),
        compiler_params=pltpu.CompilerParams(
            dimension_semantics=("parallel", "arbitrary"),
            vmem_limit_bytes=VMEM_LIMIT),
        cost_estimate=pl.CostEstimate(
            flops=2 * n_pad * (n_pad * f_pad + f_pad * H1_PAD),
            transcendentals=0,
            bytes_accessed=2 * (a_p.size + grid_m * x_p.size + w1_p.size)
            + 4 * b1_p.size + 2 * n_pad * H1_PAD),
    )(a_p, x_p, w1_p, b1_p)

    # ---- stage 2: out = A_hat @ h1 @ W2 + b2, row tiles + k reduction ------
    out = pl.pallas_call(
        _layer2_kernel,
        out_shape=jax.ShapeDtypeStruct((n_pad, H2_PAD), jnp.float32),
        grid_spec=pltpu.PrefetchScalarGridSpec(
            num_scalar_prefetch=0,
            grid=(grid_m, grid_k),
            in_specs=[
                pl.BlockSpec((TILE_M, TILE_K), lambda i, k: (i, k)),   # A tile
                pl.BlockSpec((TILE_K, H1_PAD), lambda i, k: (k, 0)),   # h1 rows
                pl.BlockSpec((H1_PAD, H2_PAD), lambda i, k: (0, 0)),   # W2
                pl.BlockSpec((1, H2_PAD), lambda i, k: (0, 0)),        # b2
            ],
            out_specs=pl.BlockSpec((TILE_M, H2_PAD), lambda i, k: (i, 0)),
            scratch_shapes=[pltpu.VMEM((TILE_M, H1_PAD), jnp.float32)],
        ),
        compiler_params=pltpu.CompilerParams(
            dimension_semantics=("parallel", "arbitrary"),
            vmem_limit_bytes=VMEM_LIMIT),
        cost_estimate=pl.CostEstimate(
            flops=2 * n_pad * (n_pad * H1_PAD + H1_PAD * H2_PAD),
            transcendentals=0,
            # h1 is re-streamed once per row tile (index_map depends only on k).
            bytes_accessed=2 * (a_p.size + grid_m * h1.size + w2_p.size)
            + 4 * b2_p.size + 4 * n_pad * H2_PAD),
    )(a_p, h1, w2_p, b2_p)
    return out


def encoder_forward(x, edge_index, w1, b1, w2, b2, *, fuse_max_n=FUSE_MAX_N):
    n, f = x.shape
    f_pad = _round_up(f, 128)

    use_fused = _round_up(max(n, 128), 128) <= fuse_max_n
    if use_fused:
        n_pad = _round_up(max(n, 128), 128)
    else:
        n_pad = _round_up(max(n, TILE_M), TILE_M)

    a_hat = gcn_normalize(edge_index, n)

    # Zero-pad to aligned shapes; bf16 for everything that feeds the MXU.
    a_p = _pad2(a_hat, n_pad, n_pad).astype(jnp.bfloat16)
    x_p = _pad2(x, n_pad, f_pad).astype(jnp.bfloat16)
    w1_p = _pad2(w1, f_pad, H1_PAD).astype(jnp.bfloat16)
    w2_p = _pad2(w2, H1_PAD, H2_PAD).astype(jnp.bfloat16)
    b1_p = jnp.pad(b1, (0, H1_PAD - b1.shape[0])).reshape(1, -1).astype(jnp.float32)
    b2_p = jnp.pad(b2, (0, H2_PAD - b2.shape[0])).reshape(1, -1).astype(jnp.float32)

    if use_fused:
        out = _fused_forward(a_p, x_p, w1_p, b1_p, w2_p, b2_p, n_pad, f_pad)
    else:
        out = _tiled_forward(a_p, x_p, w1_p, b1_p, w2_p, b2_p, n_pad, f_pad)

    # Strip node-row and hidden-column zero padding.
    return out[:n, :HIDDEN2]


# --------------------------------------------------------------------------
# References
# --------------------------------------------------------------------------
def _ref_forward_f32(x, edge_index, w1, b1, w2, b2):
    """Pure-f32 reference matching the original PyTorch module."""
    a_hat = gcn_normalize(edge_index, x.shape[0])
    h1 = jnp.maximum(a_hat @ (x @ w1) + b1, 0.0)
    return a_hat @ (h1 @ w2) + b2


def _ref_forward_bf16(x, edge_index, w1, b1, w2, b2):
    """Mirrors the kernel's bf16-input / f32-accumulation math."""
    a = gcn_normalize(edge_index, x.shape[0]).astype(jnp.bfloat16)
    xb = x.astype(jnp.bfloat16)
    ax = jnp.dot(a, xb, preferred_element_type=jnp.float32).astype(jnp.bfloat16)
    h1 = jnp.maximum(
        jnp.dot(ax, w1.astype(jnp.bfloat16),
                preferred_element_type=jnp.float32) + b1, 0.0)
    h1 = h1.astype(jnp.bfloat16)
    agg = jnp.dot(a, h1, preferred_element_type=jnp.float32).astype(jnp.bfloat16)
    return jnp.dot(agg, w2.astype(jnp.bfloat16),
                   preferred_element_type=jnp.float32) + b2


if __name__ == "__main__":
    key = jax.random.PRNGKey(0)
    k_x, k_w1, k_b1, k_w2, k_b2 = jax.random.split(key, 5)

    num_nodes = 16
    num_features = 32

    # Deterministic node features.
    x = jax.random.normal(k_x, (num_nodes, num_features), dtype=jnp.float32)

    # Small undirected ring graph (both directions) as edge_index (2, E).
    src = jnp.arange(num_nodes, dtype=jnp.int32)
    dst = (src + 1) % num_nodes
    edge_index = jnp.stack(
        [jnp.concatenate([src, dst]), jnp.concatenate([dst, src])], axis=0
    )

    # Deterministic GCNConv parameters (Glorot-ish scale, small bias).
    w1 = jax.random.normal(k_w1, (num_features, HIDDEN1), jnp.float32) * 0.05
    b1 = jax.random.normal(k_b1, (HIDDEN1,), jnp.float32) * 0.01
    w2 = jax.random.normal(k_w2, (HIDDEN1, HIDDEN2), jnp.float32) * 0.02
    b2 = jax.random.normal(k_b2, (HIDDEN1 - HIDDEN1 + HIDDEN2,), jnp.float32) * 0.01

    # Fused single-kernel path (default for small graphs).
    encoder_fused = jax.jit(
        lambda *a: encoder_forward(*a, fuse_max_n=FUSE_MAX_N))
    out = encoder_fused(x, edge_index, w1, b1, w2, b2)
    jax.block_until_ready(out)
    assert out.shape == (num_nodes, HIDDEN2)

    # Exact-path check (same bf16 inputs / f32 accumulation as the kernel).
    ref_bf16 = _ref_forward_bf16(x, edge_index, w1, b1, w2, b2)
    assert jnp.allclose(out, ref_bf16, atol=1e-2, rtol=1e-2)

    # Module-semantics check against the pure-f32 reference (bf16 tolerance).
    ref_f32 = _ref_forward_f32(x, edge_index, w1, b1, w2, b2)
    assert jnp.allclose(out, ref_f32, atol=3e-2, rtol=3e-2)

    # Also exercise the tiled two-stage path (used for large graphs) on the
    # same inputs by disabling fusion; it must match the references too.
    encoder_tiled = jax.jit(lambda *a: encoder_forward(*a, fuse_max_n=0))
    out_tiled = encoder_tiled(x, edge_index, w1, b1, w2, b2)
    jax.block_until_ready(out_tiled)
    assert out_tiled.shape == (num_nodes, HIDDEN2)
    assert jnp.allclose(out_tiled, ref_bf16, atol=1e-2, rtol=1e-2)
    assert jnp.allclose(out_tiled, out, atol=1e-2, rtol=1e-2)

    print("KERNEL_OK")
</pallas_src>

<mosaic_0001>
module attributes {stable_mosaic.version = 11 : i64} {
  func.func private @main(%arg0: i32) attributes {dimension_semantics = [#tpu.dimension_semantics<core_parallel>], iteration_bounds = array<i64: 2>, tpu.core_type = #tpu.core_type<sc_scalar_subcore>, window_params = []} {
    return
  }
}

module attributes {stable_mosaic.version = 11 : i64} {
  func.func private @main(%arg0: i32) attributes {dimension_semantics = [#tpu.dimension_semantics<core_parallel>], iteration_bounds = array<i64: 2>, tpu.core_type = #tpu.core_type<sc_scalar_subcore>, window_params = []} {
    return
  }
}

module attributes {stable_mosaic.version = 11 : i64} {
  func.func @_fused_kernel(%arg0: i32, %arg1: memref<128x128xbf16, #tpu.memory_space<vmem>>, %arg2: memref<128x128xbf16, #tpu.memory_space<vmem>>, %arg3: memref<128x1792xbf16, #tpu.memory_space<vmem>>, %arg4: memref<1x1792xf32, #tpu.memory_space<vmem>>, %arg5: memref<1792x512xbf16, #tpu.memory_space<vmem>>, %arg6: memref<1x512xf32, #tpu.memory_space<vmem>>, %arg7: memref<128x512xf32, #tpu.memory_space<vmem>>, %arg8: memref<128x1792xbf16, #tpu.memory_space<vmem>>) attributes {dimension_semantics = [#tpu.dimension_semantics<arbitrary>], iteration_bounds = array<i64: 1>, scalar_prefetch = 0 : i64, scratch_operands = 1 : i64, tpu.core_type = #tpu.core_type<tc>, window_params = [{pipeline_mode = #tpu.pipeline_mode<synchronous>, transform_indices = @transform_0, window_bounds = array<i64: 128, 128>}, {pipeline_mode = #tpu.pipeline_mode<synchronous>, transform_indices = @transform_1, window_bounds = array<i64: 128, 128>}, {pipeline_mode = #tpu.pipeline_mode<synchronous>, transform_indices = @transform_2, window_bounds = array<i64: 128, 1792>}, {pipeline_mode = #tpu.pipeline_mode<synchronous>, transform_indices = @transform_3, window_bounds = array<i64: 1, 1792>}, {pipeline_mode = #tpu.pipeline_mode<synchronous>, transform_indices = @transform_4, window_bounds = array<i64: 1792, 512>}, {pipeline_mode = #tpu.pipeline_mode<synchronous>, transform_indices = @transform_5, window_bounds = array<i64: 1, 512>}, {pipeline_mode = #tpu.pipeline_mode<synchronous>, transform_indices = @transform_6, window_bounds = array<i64: 128, 512>}]} {
    %c0 = arith.constant 0 : index
    %c0_0 = arith.constant 0 : index
    %0 = vector.load %arg1[%c0, %c0_0] : memref<128x128xbf16, #tpu.memory_space<vmem>>, vector<128x128xbf16>
    %c0_1 = arith.constant 0 : index
    %c0_2 = arith.constant 0 : index
    %1 = vector.load %arg2[%c0_1, %c0_2] : memref<128x128xbf16, #tpu.memory_space<vmem>>, vector<128x128xbf16>
    %cst = arith.constant dense<0.000000e+00> : vector<128x128xf32>
    %2 = tpu.matmul %0, %1, %cst {dimension_numbers = #tpu.dot_dimension_numbers<[1], [0], [0], [1], [0, 0, 1, 1], [], []>} : vector<128x128xbf16>, vector<128x128xbf16>, vector<128x128xf32> -> vector<128x128xf32>
    %3 = arith.truncf %2 : vector<128x128xf32> to vector<128x128xbf16>
    %c0_3 = arith.constant 0 : index
    %c0_4 = arith.constant 0 : index
    %4 = vector.load %arg3[%c0_3, %c0_4] : memref<128x1792xbf16, #tpu.memory_space<vmem>>, vector<128x1792xbf16>
    %cst_5 = arith.constant dense<0.000000e+00> : vector<128x1792xf32>
    %5 = tpu.matmul %3, %4, %cst_5 {dimension_numbers = #tpu.dot_dimension_numbers<[1], [0], [0], [1], [0, 0, 1, 1], [], []>} : vector<128x128xbf16>, vector<128x1792xbf16>, vector<128x1792xf32> -> vector<128x1792xf32>
    %c0_6 = arith.constant 0 : index
    %c0_7 = arith.constant 0 : index
    %6 = vector.load %arg4[%c0_6, %c0_7] : memref<1x1792xf32, #tpu.memory_space<vmem>>, vector<1x1792xf32>
    %7 = vector.broadcast %6 : vector<1x1792xf32> to vector<128x1792xf32>
    %8 = arith.addf %5, %7 : vector<128x1792xf32>
    %cst_8 = arith.constant 0.000000e+00 : f32
    %9 = vector.broadcast %cst_8 : f32 to vector<128x1792xf32>
    %10 = arith.maximumf %8, %9 : vector<128x1792xf32>
    %11 = arith.truncf %10 : vector<128x1792xf32> to vector<128x1792xbf16>
    %c0_9 = arith.constant 0 : index
    %c0_10 = arith.constant 0 : index
    %12 = vector.load %arg8[%c0_9, %c0_10] : memref<128x1792xbf16, #tpu.memory_space<vmem>>, vector<128x1792xbf16>
    tpu.vector_store %arg8[%c0_9, %c0_10], %11 {strides = array<i32>} : memref<128x1792xbf16, #tpu.memory_space<vmem>>, vector<128x1792xbf16>,
    %c0_11 = arith.constant 0 : index
    %c0_12 = arith.constant 0 : index
    %13 = vector.load %arg1[%c0_11, %c0_12] : memref<128x128xbf16, #tpu.memory_space<vmem>>, vector<128x128xbf16>
    %c0_13 = arith.constant 0 : index
    %c0_14 = arith.constant 0 : index
    %14 = vector.load %arg8[%c0_13, %c0_14] : memref<128x1792xbf16, #tpu.memory_space<vmem>>, vector<128x1792xbf16>
    %cst_15 = arith.constant dense<0.000000e+00> : vector<128x1792xf32>
    %15 = tpu.matmul %13, %14, %cst_15 {dimension_numbers = #tpu.dot_dimension_numbers<[1], [0], [0], [1], [0, 0, 1, 1], [], []>} : vector<128x128xbf16>, vector<128x1792xbf16>, vector<128x1792xf32> -> vector<128x1792xf32>
    %16 = arith.truncf %15 : vector<128x1792xf32> to vector<128x1792xbf16>
    %c0_16 = arith.constant 0 : index
    %c0_17 = arith.constant 0 : index
    %17 = vector.load %arg5[%c0_16, %c0_17] : memref<1792x512xbf16, #tpu.memory_space<vmem>>, vector<1792x512xbf16>
    %cst_18 = arith.constant dense<0.000000e+00> : vector<128x512xf32>
    %18 = tpu.matmul %16, %17, %cst_18 {dimension_numbers = #tpu.dot_dimension_numbers<[1], [0], [0], [1], [0, 0, 1, 1], [], []>} : vector<128x1792xbf16>, vector<1792x512xbf16>, vector<128x512xf32> -> vector<128x512xf32>
    %c0_19 = arith.constant 0 : index
    %c0_20 = arith.constant 0 : index
    %19 = vector.load %arg6[%c0_19, %c0_20] : memref<1x512xf32, #tpu.memory_space<vmem>>, vector<1x512xf32>
    %20 = vector.broadcast %19 : vector<1x512xf32> to vector<128x512xf32>
    %21 = arith.addf %18, %20 : vector<128x512xf32>
    %c0_21 = arith.constant 0 : index
    %c0_22 = arith.constant 0 : index
    %22 = vector.load %arg7[%c0_21, %c0_22] : memref<128x512xf32, #tpu.memory_space<vmem>>, vector<128x512xf32>
    tpu.vector_store %arg7[%c0_21, %c0_22], %21 {strides = array<i32>} : memref<128x512xf32, #tpu.memory_space<vmem>>, vector<128x512xf32>,
    return
  }
  func.func @transform_0(%arg0: i32) -> (i32, i32) {
    %c0_i32 = arith.constant 0 : i32
    %c0_i32_0 = arith.constant 0 : i32
    %c0_i32_1 = arith.constant 0 : i32
    return %c0_i32, %c0_i32_0 : i32, i32
  }
  func.func @transform_1(%arg0: i32) -> (i32, i32) {
    %c0_i32 = arith.constant 0 : i32
    %c0_i32_0 = arith.constant 0 : i32
    %c0_i32_1 = arith.constant 0 : i32
    return %c0_i32, %c0_i32_0 : i32, i32
  }
  func.func @transform_2(%arg0: i32) -> (i32, i32) {
    %c0_i32 = arith.constant 0 : i32
    %c0_i32_0 = arith.constant 0 : i32
    %c0_i32_1 = arith.constant 0 : i32
    return %c0_i32, %c0_i32_0 : i32, i32
  }
  func.func @transform_3(%arg0: i32) -> (i32, i32) {
    %c0_i32 = arith.constant 0 : i32
    %c0_i32_0 = arith.constant 0 : i32
    %c0_i32_1 = arith.constant 0 : i32
    return %c0_i32, %c0_i32_0 : i32, i32
  }
  func.func @transform_4(%arg0: i32) -> (i32, i32) {
    %c0_i32 = arith.constant 0 : i32
    %c0_i32_0 = arith.constant 0 : i32
    %c0_i32_1 = arith.constant 0 : i32
    return %c0_i32, %c0_i32_0 : i32, i32
  }
  func.func @transform_5(%arg0: i32) -> (i32, i32) {
    %c0_i32 = arith.constant 0 : i32
    %c0_i32_0 = arith.constant 0 : i32
    %c0_i32_1 = arith.constant 0 : i32
    return %c0_i32, %c0_i32_0 : i32, i32
  }
  func.func @transform_6(%arg0: i32) -> (i32, i32) {
    %c0_i32 = arith.constant 0 : i32
    %c0_i32_0 = arith.constant 0 : i32
    %c0_i32_1 = arith.constant 0 : i32
    return %c0_i32, %c0_i32_0 : i32, i32
  }
}

</mosaic_0001>

<llo_original>
// kernel: _lambda_.1
$region0: #{_lambda_.1}
  #allocation0 [shape = 'u32[]', space=smem, size = 0x4, offset = 0x4, fixed_abs, tag = 'smem constant byte address 0x4 - core index']
  #allocation1 [shape = 'u32[144,128]{1,0:T(1,128)}', space=vmem, size = 0x12000, scoped, tag = 'internal scratch']
  #allocation2 [shape = 'bf16[128,1792]{1,0:T(8,128)(2,1)}', space=vmem, size = 0x70000, scoped, tag = 'scratch operand']
  %s0 = inlined_call_operand.vmem [shape: bf16[128,128], index: 0, kind: input, shape index: {}]
  %s1 = inlined_call_operand.vmem [shape: bf16[128,128], index: 1, kind: input, shape index: {}]
  %s2 = inlined_call_operand.vmem [shape: bf16[128,1792], index: 2, kind: input, shape index: {}]
  %s3 = inlined_call_operand.vmem [shape: f32[1,1792], index: 3, kind: input, shape index: {}]
  %s4 = inlined_call_operand.vmem [shape: bf16[1792,512], index: 4, kind: input, shape index: {}]
  %s5 = inlined_call_operand.vmem [shape: f32[1,512], index: 5, kind: input, shape index: {}]
  %s6 = inlined_call_operand.vmem [shape: f32[128,512], index: 6, kind: output, shape index: {}]
  %s7 = sld [smem:[#allocation0]]
  $region34: #{_lambda_.1} parent=0
    _
  %s9 = ssub.s32 1, %s7
  %s10 = scalar_select 0, %s9, %s7
  // Predicated region
  $region2: #{_lambda_.1} parent=0 // pred_check
    _
  $region3: #{_lambda_.1} parent=0 // pred_check_branch
    %12 = sbr.rel (0) target = $region5
  $region4: #{_lambda_.1} parent=0 // pred_region
    _
  $region5: #{_lambda_.1} parent=0 // pred_fallthru
    _
  // Predicated region
  $region6: #{_lambda_.1} parent=0 // pred_check
    _
  $region7: #{_lambda_.1} parent=0 // pred_check_branch
    %14 = sbr.rel (0) target = $region9
  $region8: #{_lambda_.1} parent=0 // pred_region
    _
  $region9: #{_lambda_.1} parent=0 // pred_fallthru
    _
  // Predicated region
  $region10: #{_lambda_.1} parent=0 // pred_check
    _
  $region11: #{_lambda_.1} parent=0 // pred_check_branch
    %16 = sbr.rel (0) target = $region13
  $region12: #{_lambda_.1} parent=0 // pred_region
    _
  $region13: #{_lambda_.1} parent=0 // pred_fallthru
    _
  // Predicated region
  $region14: #{_lambda_.1} parent=0 // pred_check
    _
  $region15: #{_lambda_.1} parent=0 // pred_check_branch
    %18 = sbr.rel (0) target = $region17
  $region16: #{_lambda_.1} parent=0 // pred_region
    _
  $region17: #{_lambda_.1} parent=0 // pred_fallthru
    _
  // Predicated region
  $region18: #{_lambda_.1} parent=0 // pred_check
    _
  $region19: #{_lambda_.1} parent=0 // pred_check_branch
    %20 = sbr.rel (0) target = $region21
  $region20: #{_lambda_.1} parent=0 // pred_region
    _
  $region21: #{_lambda_.1} parent=0 // pred_fallthru
    _
  // Predicated region
  $region22: #{_lambda_.1} parent=0 // pred_check
    _
  $region23: #{_lambda_.1} parent=0 // pred_check_branch
    %22 = sbr.rel (0) target = $region25
  $region24: #{_lambda_.1} parent=0 // pred_region
    _
  $region25: #{_lambda_.1} parent=0 // pred_fallthru
    _
  %v24 = vld [vmem:[%s0] sm:$0xf]
  %v25 = vld [vmem:[%s0 + $0x4] sm:$0xf]
  %v26 = vld [vmem:[%s0 + $0x8] sm:$0xf]
  %v27 = vld [vmem:[%s0 + $0xc] sm:$0xf]
  %v28 = vld [vmem:[%s0 + $0x10] sm:$0xf]
  %v29 = vld [vmem:[%s0 + $0x14] sm:$0xf]
  %v30 = vld [vmem:[%s0 + $0x18] sm:$0xf]
  %v31 = vld [vmem:[%s0 + $0x1c] sm:$0xf]
  %v32 = vld [vmem:[%s0 + $0x20] sm:$0xf]
  %v33 = vld [vmem:[%s0 + $0x24] sm:$0xf]
  %v34 = vld [vmem:[%s0 + $0x28] sm:$0xf]
  %v35 = vld [vmem:[%s0 + $0x2c] sm:$0xf]
  %v36 = vld [vmem:[%s0 + $0x30] sm:$0xf]
  %v37 = vld [vmem:[%s0 + $0x34] sm:$0xf]
  %v38 = vld [vmem:[%s0 + $0x38] sm:$0xf]
  %v39 = vld [vmem:[%s0 + $0x3c] sm:$0xf]
  %v40 = vld [vmem:[%s1] sm:$0xf]
  %v41 = vld [vmem:[%s1 + $0x4] sm:$0xf]
  %v42 = vld [vmem:[%s1 + $0x8] sm:$0xf]
  %v43 = vld [vmem:[%s1 + $0xc] sm:$0xf]
  %v44 = vld [vmem:[%s1 + $0x10] sm:$0xf]
  %v45 = vld [vmem:[%s1 + $0x14] sm:$0xf]
  %v46 = vld [vmem:[%s1 + $0x18] sm:$0xf]
  %v47 = vld [vmem:[%s1 + $0x1c] sm:$0xf]
  %v48 = vld [vmem:[%s1 + $0x20] sm:$0xf]
  %v49 = vld [vmem:[%s1 + $0x24] sm:$0xf]
  %v50 = vld [vmem:[%s1 + $0x28] sm:$0xf]
  %v51 = vld [vmem:[%s1 + $0x2c] sm:$0xf]
  %v52 = vld [vmem:[%s1 + $0x30] sm:$0xf]
  %v53 = vld [vmem:[%s1 + $0x34] sm:$0xf]
  %v54 = vld [vmem:[%s1 + $0x38] sm:$0xf]
  %v55 = vld [vmem:[%s1 + $0x3c] sm:$0xf]
  %v72 = vunpack.c.l.b16 %v24
  %v73 = vunpack.c.l.b16 %v25
  %v74 = vunpack.c.l.b16 %v26
  %v75 = vunpack.c.l.b16 %v27
  %v76 = vunpack.c.l.b16 %v28
  %v77 = vunpack.c.l.b16 %v29
  %v78 = vunpack.c.l.b16 %v30
  %v79 = vunpack.c.l.b16 %v31
  %v80 = vunpack.c.l.b16 %v32
  %v81 = vunpack.c.l.b16 %v33
  %v82 = vunpack.c.l.b16 %v34
  %v83 = vunpack.c.l.b16 %v35
  %v84 = vunpack.c.l.b16 %v36
  %v85 = vunpack.c.l.b16 %v37
  %v86 = vunpack.c.l.b16 %v38
  %v87 = vunpack.c.l.b16 %v39
  %v88 = vpack.c.b16 %v73, %v72
  %v89 = vpack.c.b16 %v75, %v74
  %v90 = vpack.c.b16 %v77, %v76
  %v91 = vpack.c.b16 %v79, %v78
  %v92 = vpack.c.b16 %v81, %v80
  %v93 = vpack.c.b16 %v83, %v82
  %v94 = vpack.c.b16 %v85, %v84
  %v95 = vpack.c.b16 %v87, %v86
  %v120 = vunpack.c.l.b16 %v40
  %v121 = vunpack.c.l.b16 %v41
  %v122 = vunpack.c.l.b16 %v42
  %v123 = vunpack.c.l.b16 %v43
  %v124 = vunpack.c.l.b16 %v44
  %v125 = vunpack.c.l.b16 %v45
  %v126 = vunpack.c.l.b16 %v46
  %v127 = vunpack.c.l.b16 %v47
  %v128 = vunpack.c.l.b16 %v48
  %v129 = vunpack.c.l.b16 %v49
  %v130 = vunpack.c.l.b16 %v50
  %v131 = vunpack.c.l.b16 %v51
  %v132 = vunpack.c.l.b16 %v52
  %v133 = vunpack.c.l.b16 %v53
  %v134 = vunpack.c.l.b16 %v54
  %v135 = vunpack.c.l.b16 %v55
  %v136 = vpack.c.b16 %v121, %v120
  %v137 = vpack.c.b16 %v123, %v122
  %v138 = vpack.c.b16 %v125, %v124
  %v139 = vpack.c.b16 %v127, %v126
  %v140 = vpack.c.b16 %v129, %v128
  %v141 = vpack.c.b16 %v131, %v130
  %v142 = vpack.c.b16 %v133, %v132
  %v143 = vpack.c.b16 %v135, %v134
  %152 = vmatprep.subr.bf16.mxu0 0
  %153 = vmatpush1.bf16.msra.mxu0 %v143
  %154 = vmatprep.subr.bf16.mxu0 0
  %155 = vmatpush1.bf16.msra.mxu0 %v142
  %156 = vmatprep.subr.bf16.mxu0 0
  %157 = vmatpush1.bf16.msra.mxu0 %v141
  %158 = vmatprep.subr.bf16.mxu0 0
  %159 = vmatpush1.bf16.msra.mxu0 %v140
  %160 = vmatprep.subr.bf16.mxu0 0
  %161 = vmatpush1.bf16.msra.mxu0 %v139
  %162 = vmatprep.subr.bf16.mxu0 0
  %163 = vmatpush1.bf16.msra.mxu0 %v138
  %164 = vmatprep.subr.bf16.mxu0 0
  %165 = vmatpush1.bf16.msra.mxu0 %v137
  %166 = vmatprep.subr.bf16.mxu0 0
  %167 = vmatpush1.bf16.msra.mxu0 %v136
  %168 = vmatprep.subr.bf16.mxu0 0
  %169 = vmatpush2.bf16.msra.mxu0 0
  %170 = vmatprep.subr.bf16.mxu0 0
  %171 = vmatpush2.bf16.msra.mxu0 0
  %172 = vmatprep.subr.bf16.mxu0 0
  %173 = vmatpush2.bf16.msra.mxu0 0
  %174 = vmatprep.subr.bf16.mxu0 0
  %175 = vmatpush2.bf16.msra.mxu0 0
  %176 = vmatprep.subr.bf16.mxu0 0
  %177 = vmatpush2.bf16.msra.mxu0 0
  %178 = vmatprep.subr.bf16.mxu0 0
  %179 = vmatpush2.bf16.msra.mxu0 0
  %180 = vmatprep.subr.bf16.mxu0 0
  %181 = vmatpush2.bf16.msra.mxu0 0
  %182 = vmatprep.subr.bf16.mxu0 0
  %183 = vmatpush2.bf16.msra.mxu0 0
  %184 = vmatprep.mubr.bf16.mxu0 0
  %185 = vmatmul.mubr.bf16.gmra.mxu0 %v88
  %v186 = vpop.f32.mrf.mxu0
  %v187 = vadd.f32 0.0, %v186
  %v188 = vpop.f32.mrf.mxu0
  %v189 = vpop.f32.mrf.mxu0
  %v190 = vadd.f32 0.0, %v189
  %v191 = vpop.f32.mrf.mxu0
  %192 = vmatprep.mubr.bf16.mxu0 0
  %193 = vmatmul.mubr.bf16.gmra.mxu0 %v89
  %v194 = vpop.f32.mrf.mxu0
  %v195 = vadd.f32 0.0, %v194
  %v196 = vpop.f32.mrf.mxu0
  %v197 = vpop.f32.mrf.mxu0
  %v198 = vadd.f32 0.0, %v197
  %v199 = vpop.f32.mrf.mxu0
  %200 = vmatprep.mubr.bf16.mxu0 0
  %201 = vmatmul.mubr.bf16.gmra.mxu0 %v90
  %v202 = vpop.f32.mrf.mxu0
  %v203 = vadd.f32 0.0, %v202
  %v204 = vpop.f32.mrf.mxu0
  %v205 = vpop.f32.mrf.mxu0
  %v206 = vadd.f32 0.0, %v205
  %v207 = vpop.f32.mrf.mxu0
  %208 = vmatprep.mubr.bf16.mxu0 0
  %209 = vmatmul.mubr.bf16.gmra.mxu0 %v91
  %v210 = vpop.f32.mrf.mxu0
  %v211 = vadd.f32 0.0, %v210
  %v212 = vpop.f32.mrf.mxu0
  %v213 = vpop.f32.mrf.mxu0
  %v214 = vadd.f32 0.0, %v213
  %v215 = vpop.f32.mrf.mxu0
  %216 = vmatprep.mubr.bf16.mxu0 0
  %217 = vmatmul.mubr.bf16.gmra.mxu0 %v92
  %v218 = vpop.f32.mrf.mxu0
  %v219 = vadd.f32 0.0, %v218
  %v220 = vpop.f32.mrf.mxu0
  %v221 = vpop.f32.mrf.mxu0
  %v222 = vadd.f32 0.0, %v221
  %v223 = vpop.f32.mrf.mxu0
  %224 = vmatprep.mubr.bf16.mxu0 0
  %225 = vmatmul.mubr.bf16.gmra.mxu0 %v93
  %v226 = vpop.f32.mrf.mxu0
  %v227 = vadd.f32 0.0, %v226
  %v228 = vpop.f32.mrf.mxu0
  %v229 = vpop.f32.mrf.mxu0
  %v230 = vadd.f32 0.0, %v229
  %v231 = vpop.f32.mrf.mxu0
  %232 = vmatprep.mubr.bf16.mxu0 0
  %233 = vmatmul.mubr.bf16.gmra.mxu0 %v94
  %v234 = vpop.f32.mrf.mxu0
  %v235 = vadd.f32 0.0, %v234
  %v236 = vpop.f32.mrf.mxu0
  %v237 = vpop.f32.mrf.mxu0
  %v238 = vadd.f32 0.0, %v237
  %v239 = vpop.f32.mrf.mxu0
  %240 = vmatprep.mubr.bf16.mxu0 0
  %241 = vmatmul.mubr.bf16.gmra.mxu0 %v95
  %v242 = vpop.f32.mrf.mxu0
  %v243 = vadd.f32 0.0, %v242
  %v244 = vpop.f32.mrf.mxu0
  %v245 = vpop.f32.mrf.mxu0
  %v246 = vadd.f32 0.0, %v245
  %v247 = vpop.f32.mrf.mxu0
  %248 = vdwg.mxu0
  %v249 = vpack.c.bf16 %v190, %v187
  %v250 = vpack.c.bf16 %v198, %v195
  %v251 = vpack.c.bf16 %v206, %v203
  %v252 = vpack.c.bf16 %v214, %v211
  %v253 = vpack.c.bf16 %v222, %v219
  %v254 = vpack.c.bf16 %v230, %v227
  %v255 = vpack.c.bf16 %v238, %v235
  %v256 = vpack.c.bf16 %v246, %v243
  %v257 = vld [vmem:[%s2] sm:$0xff]
  %v258 = vld [vmem:[%s2 + $0x8] sm:$0xff]
  %v259 = vld [vmem:[%s2 + $0x10] sm:$0xff]
  %v260 = vld [vmem:[%s2 + $0x18] sm:$0xff]
  %v261 = vld [vmem:[%s2 + $0x20] sm:$0xff]
  %v262 = vld [vmem:[%s2 + $0x28] sm:$0xff]
  %v263 = vld [vmem:[%s2 + $0x30] sm:$0xff]
  %v264 = vld [vmem:[%s2 + $0x38] sm:$0xff]
  %v265 = vld [vmem:[%s2 + $0x40] sm:$0xff]
  %v266 = vld [vmem:[%s2 + $0x48] sm:$0xff]
  %v267 = vld [vmem:[%s2 + $0x50] sm:$0xff]
  %v268 = vld [vmem:[%s2 + $0x58] sm:$0xff]
  %v269 = vld [vmem:[%s2 + $0x60] sm:$0xff]
  %v270 = vld [vmem:[%s2 + $0x68] sm:$0xff]
  %v271 = vld [vmem:[%s2 + $0x70] sm:$0xff]
  %v272 = vld [vmem:[%s2 + $0x78] sm:$0xff]
  %v273 = vld [vmem:[%s2 + $0x80] sm:$0xff]
  %v274 = vld [vmem:[%s2 + $0x88] sm:$0xff]
  %v275 = vld [vmem:[%s2 + $0x90] sm:$0xff]
  %v276 = vld [vmem:[%s2 + $0x98] sm:$0xff]
  %v277 = vld [vmem:[%s2 + $0xa0] sm:$0xff]
  %v278 = vld [vmem:[%s2 + $0xa8] sm:$0xff]
  %v279 = vld [vmem:[%s2 + $0xb0] sm:$0xff]
  %v280 = vld [vmem:[%s2 + $0xb8] sm:$0xff]
  %v281 = vld [vmem:[%s2 + $0xc0] sm:$0xff]
  %v282 = vld [vmem:[%s2 + $0xc8] sm:$0xff]
  %v283 = vld [vmem:[%s2 + $0xd0] sm:$0xff]
  %v284 = vld [vmem:[%s2 + $0xd8] sm:$0xff]
  %v285 = vld [vmem:[%s2 + $0xe0] sm:$0xff]
  %v286 = vld [vmem:[%s2 + $0xe8] sm:$0xff]
  %v287 = vld [vmem:[%s2 + $0xf0] sm:$0xff]
  %v288 = vld [vmem:[%s2 + $0xf8] sm:$0xff]
  %v289 = vld [vmem:[%s2 + $0x100] sm:$0xff]
  %v290 = vld [vmem:[%s2 + $0x108] sm:$0xff]
  %v291 = vld [vmem:[%s2 + $0x110] sm:$0xff]
  %v292 = vld [vmem:[%s2 + $0x118] sm:$0xff]
  %v293 = vld [vmem:[%s2 + $0x120] sm:$0xff]
  %v294 = vld [vmem:[%s2 + $0x128] sm:$0xff]
  %v295 = vld [vmem:[%s2 + $0x130] sm:$0xff]
  %v296 = vld [vmem:[%s2 + $0x138] sm:$0xff]
  %v297 = vld [vmem:[%s2 + $0x140] sm:$0xff]
  %v298 = vld [vmem:[%s2 + $0x148] sm:$0xff]
  %v299 = vld [vmem:[%s2 + $0x150] sm:$0xff]
  %v300 = vld [vmem:[%s2 + $0x158] sm:$0xff]
  %v301 = vld [vmem:[%s2 + $0x160] sm:$0xff]
  %v302 = vld [vmem:[%s2 + $0x168] sm:$0xff]
  %v303 = vld [vmem:[%s2 + $0x170] sm:$0xff]
  %v304 = vld [vmem:[%s2 + $0x178] sm:$0xff]
  %v305 = vld [vmem:[%s2 + $0x180] sm:$0xff]
  %v306 = vld [vmem:[%s2 + $0x188] sm:$0xff]
  %v307 = vld [vmem:[%s2 + $0x190] sm:$0xff]
  %v308 = vld [vmem:[%s2 + $0x198] sm:$0xff]
  %v309 = vld [vmem:[%s2 + $0x1a0] sm:$0xff]
  %v310 = vld [vmem:[%s2 + $0x1a8] sm:$0xff]
  %v311 = vld [vmem:[%s2 + $0x1b0] sm:$0xff]
  %v312 = vld [vmem:[%s2 + $0x1b8] sm:$0xff]
  %v313 = vld [vmem:[%s2 + $0x1c0] sm:$0xff]
  %v314 = vld [vmem:[%s2 + $0x1c8] sm:$0xff]
  %v315 = vld [vmem:[%s2 + $0x1d0] sm:$0xff]
  %v316 = vld [vmem:[%s2 + $0x1d8] sm:$0xff]
  %v317 = vld [vmem:[%s2 + $0x1e0] sm:$0xff]
  %v318 = vld [vmem:[%s2 + $0x1e8] sm:$0xff]
  %v319 = vld [vmem:[%s2 + $0x1f0] sm:$0xff]
  %v320 = vld [vmem:[%s2 + $0x1f8] sm:$0xff]
  %v321 = vld [vmem:[%s2 + $0x200] sm:$0xff]
  %v322 = vld [vmem:[%s2 + $0x208] sm:$0xff]
  %v323 = vld [vmem:[%s2 + $0x210] sm:$0xff]
  %v324 = vld [vmem:[%s2 + $0x218] sm:$0xff]
  %v325 = vld [vmem:[%s2 + $0x220] sm:$0xff]
  %v326 = vld [vmem:[%s2 + $0x228] sm:$0xff]
  %v327 = vld [vmem:[%s2 + $0x230] sm:$0xff]
  %v328 = vld [vmem:[%s2 + $0x238] sm:$0xff]
  %v329 = vld [vmem:[%s2 + $0x240] sm:$0xff]
  %v330 = vld [vmem:[%s2 + $0x248] sm:$0xff]
  %v331 = vld [vmem:[%s2 + $0x250] sm:$0xff]
  %v332 = vld [vmem:[%s2 + $0x258] sm:$0xff]
  %v333 = vld [vmem:[%s2 + $0x260] sm:$0xff]
  %v334 = vld [vmem:[%s2 + $0x268] sm:$0xff]
  %v335 = vld [vmem:[%s2 + $0x270] sm:$0xff]
  %v336 = vld [vmem:[%s2 + $0x278] sm:$0xff]
  %v337 = vld [vmem:[%s2 + $0x280] sm:$0xff]
  %v338 = vld [vmem:[%s2 + $0x288] sm:$0xff]
  %v339 = vld [vmem:[%s2 + $0x290] sm:$0xff]
  %v340 = vld [vmem:[%s2 + $0x298] sm:$0xff]
  %v341 = vld [vmem:[%s2 + $0x2a0] sm:$0xff]
  %v342 = vld [vmem:[%s2 + $0x2a8] sm:$0xff]
  %v343 = vld [vmem:[%s2 + $0x2b0] sm:$0xff]
  %v344 = vld [vmem:[%s2 + $0x2b8] sm:$0xff]
  %v345 = vld [vmem:[%s2 + $0x2c0] sm:$0xff]
  %v346 = vld [vmem:[%s2 + $0x2c8] sm:$0xff]
  %v347 = vld [vmem:[%s2 + $0x2d0] sm:$0xff]
  %v348 = vld [vmem:[%s2 + $0x2d8] sm:$0xff]
  %v349 = vld [vmem:[%s2 + $0x2e0] sm:$0xff]
  %v350 = vld [vmem:[%s2 + $0x2e8] sm:$0xff]
  %v351 = vld [vmem:[%s2 + $0x2f0] sm:$0xff]
  %v352 = vld [vmem:[%s2 + $0x2f8] sm:$0xff]
  %v353 = vld [vmem:[%s2 + $0x300] sm:$0xff]
  %v354 = vld [vmem:[%s2 + $0x308] sm:$0xff]
  %v355 = vld [vmem:[%s2 + $0x310] sm:$0xff]
  %v356 = vld [vmem:[%s2 + $0x318] sm:$0xff]
  %v357 = vld [vmem:[%s2 + $0x320] sm:$0xff]
  %v358 = vld [vmem:[%s2 + $0x328] sm:$0xff]
  %v359 = vld [vmem:[%s2 + $0x330] sm:$0xff]
  %v360 = vld [vmem:[%s2 + $0x338] sm:$0xff]
  %v361 = vld [vmem:[%s2 + $0x340] sm:$0xff]
  %v362 = vld [vmem:[%s2 + $0x348] sm:$0xff]
  %v363 = vld [vmem:[%s2 + $0x350] sm:$0xff]
  %v364 = vld [vmem:[%s2 + $0x358] sm:$0xff]
  %v365 = vld [vmem:[%s2 + $0x360] sm:$0xff]
  %v366 = vld [vmem:[%s2 + $0x368] sm:$0xff]
  %v367 = vld [vmem:[%s2 + $0x370] sm:$0xff]
  %v368 = vld [vmem:[%s2 + $0x378] sm:$0xff]
  %v369 = vld [vmem:[%s3] sm:$0xff]
  %v370 = vld [vmem:[%s3 + $0x8] sm:$0x3f]
  %v373 = vlaneseq
  %v374 = vshrl.u32 %v373, 7
  %v375 = vsub.s32 0, %v374
  %v376 = vrot.slane %v369, %v375
  %v377 = vlaneseq
  %v378 = vshrl.u32 %v377, 7
  %v379 = vsub.s32 1, %v378
  %v380 = vrot.slane %v369, %v379
  %v381 = vlaneseq
  %v382 = vshrl.u32 %v381, 7
  %v383 = vsub.s32 2, %v382
  %v384 = vrot.slane %v369, %v383
  %v385 = vlaneseq
  %v386 = vshrl.u32 %v385, 7
  %v387 = vsub.s32 3, %v386
  %v388 = vrot.slane %v369, %v387
  %v389 = vlaneseq
  %v390 = vshrl.u32 %v389, 7
  %v391 = vsub.s32 4, %v390
  %v392 = vrot.slane %v369, %v391
  %v393 = vlaneseq
  %v394 = vshrl.u32 %v393, 7
  %v395 = vsub.s32 5, %v394
  %v396 = vrot.slane %v369, %v395
  %v397 = vlaneseq
  %v398 = vshrl.u32 %v397, 7
  %v399 = vsub.s32 6, %v398
  %v400 = vrot.slane %v369, %v399
  %v401 = vlaneseq
  %v402 = vshrl.u32 %v401, 7
  %v403 = vsub.s32 7, %v402
  %v404 = vrot.slane %v369, %v403
  %v405 = vlaneseq
  %v406 = vshrl.u32 %v405, 7
  %v407 = vsub.s32 0, %v406
  %v408 = vrot.slane %v370, %v407
  %v409 = vlaneseq
  %v410 = vshrl.u32 %v409, 7
  %v411 = vsub.s32 1, %v410
  %v412 = vrot.slane %v370, %v411
  %v413 = vlaneseq
  %v414 = vshrl.u32 %v413, 7
  %v415 = vsub.s32 2, %v414
  %v416 = vrot.slane %v370, %v415
  %v417 = vlaneseq
  %v418 = vshrl.u32 %v417, 7
  %v419 = vsub.s32 3, %v418
  %v420 = vrot.slane %v370, %v419
  %v421 = vlaneseq
  %v422 = vshrl.u32 %v421, 7
  %v423 = vsub.s32 4, %v422
  %v424 = vrot.slane %v370, %v423
  %v425 = vlaneseq
  %v426 = vshrl.u32 %v425, 7
  %v427 = vsub.s32 5, %v426
  %v428 = vrot.slane %v370, %v427
  %v555 = vunpack.c.l.b16 %v257
  %v556 = vunpack.c.h.b16 %v257
  %v557 = vunpack.c.l.b16 %v258
  %v558 = vunpack.c.h.b16 %v258
  %v559 = vunpack.c.l.b16 %v259
  %v560 = vunpack.c.h.b16 %v259
  %v561 = vunpack.c.l.b16 %v260
  %v562 = vunpack.c.h.b16 %v260
  %v563 = vunpack.c.l.b16 %v261
  %v564 = vunpack.c.h.b16 %v261
  %v565 = vunpack.c.l.b16 %v262
  %v566 = vunpack.c.h.b16 %v262
  %v567 = vunpack.c.l.b16 %v263
  %v568 = vunpack.c.h.b16 %v263
  %v569 = vunpack.c.l.b16 %v264
  %v570 = vunpack.c.h.b16 %v264
  %v571 = vunpack.c.l.b16 %v265
  %v572 = vunpack.c.h.b16 %v265
  %v573 = vunpack.c.l.b16 %v266
  %v574 = vunpack.c.h.b16 %v266
  %v575 = vunpack.c.l.b16 %v267
  %v576 = vunpack.c.h.b16 %v267
  %v577 = vunpack.c.l.b16 %v268
  %v578 = vunpack.c.h.b16 %v268
  %v579 = vunpack.c.l.b16 %v269
  %v580 = vunpack.c.h.b16 %v269
  %v581 = vunpack.c.l.b16 %v270
  %v582 = vunpack.c.h.b16 %v270
  %v583 = vunpack.c.l.b16 %v271
  %v584 = vunpack.c.h.b16 %v271
  %v585 = vunpack.c.l.b16 %v272
  %v586 = vunpack.c.h.b16 %v272
  %v587 = vunpack.c.l.b16 %v273
  %v588 = vunpack.c.h.b16 %v273
  %v589 = vunpack.c.l.b16 %v274
  %v590 = vunpack.c.h.b16 %v274
  %v591 = vunpack.c.l.b16 %v275
  %v592 = vunpack.c.h.b16 %v275
  %v593 = vunpack.c.l.b16 %v276
  %v594 = vunpack.c.h.b16 %v276
  %v595 = vunpack.c.l.b16 %v277
  %v596 = vunpack.c.h.b16 %v277
  %v597 = vunpack.c.l.b16 %v278
  %v598 = vunpack.c.h.b16 %v278
  %v599 = vunpack.c.l.b16 %v279
  %v600 = vunpack.c.h.b16 %v279
  %v601 = vunpack.c.l.b16 %v280
  %v602 = vunpack.c.h.b16 %v280
  %v603 = vunpack.c.l.b16 %v281
  %v604 = vunpack.c.h.b16 %v281
  %v605 = vunpack.c.l.b16 %v282
  %v606 = vunpack.c.h.b16 %v282
  %v607 = vunpack.c.l.b16 %v283
  %v608 = vunpack.c.h.b16 %v283
  %v609 = vunpack.c.l.b16 %v284
  %v610 = vunpack.c.h.b16 %v284
  %v611 = vunpack.c.l.b16 %v285
  %v612 = vunpack.c.h.b16 %v285
  %v613 = vunpack.c.l.b16 %v286
  %v614 = vunpack.c.h.b16 %v286
  %v615 = vunpack.c.l.b16 %v287
  %v616 = vunpack.c.h.b16 %v287
  %v617 = vunpack.c.l.b16 %v288
  %v618 = vunpack.c.h.b16 %v288
  %v619 = vunpack.c.l.b16 %v289
  %v620 = vunpack.c.h.b16 %v289
  %v621 = vunpack.c.l.b16 %v290
  %v622 = vunpack.c.h.b16 %v290
  %v623 = vunpack.c.l.b16 %v291
  %v624 = vunpack.c.h.b16 %v291
  %v625 = vunpack.c.l.b16 %v292
  %v626 = vunpack.c.h.b16 %v292
  %v627 = vunpack.c.l.b16 %v293
  %v628 = vunpack.c.h.b16 %v293
  %v629 = vunpack.c.l.b16 %v294
  %v630 = vunpack.c.h.b16 %v294
  %v631 = vunpack.c.l.b16 %v295
  %v632 = vunpack.c.h.b16 %v295
  %v633 = vunpack.c.l.b16 %v296
  %v634 = vunpack.c.h.b16 %v296
  %v635 = vunpack.c.l.b16 %v297
  %v636 = vunpack.c.h.b16 %v297
  %v637 = vunpack.c.l.b16 %v298
  %v638 = vunpack.c.h.b16 %v298
  %v639 = vunpack.c.l.b16 %v299
  %v640 = vunpack.c.h.b16 %v299
  %v641 = vunpack.c.l.b16 %v300
  %v642 = vunpack.c.h.b16 %v300
  %v643 = vunpack.c.l.b16 %v301
  %v644 = vunpack.c.h.b16 %v301
  %v645 = vunpack.c.l.b16 %v302
  %v646 = vunpack.c.h.b16 %v302
  %v647 = vunpack.c.l.b16 %v303
  %v648 = vunpack.c.h.b16 %v303
  %v649 = vunpack.c.l.b16 %v304
  %v650 = vunpack.c.h.b16 %v304
  %v651 = vunpack.c.l.b16 %v305
  %v652 = vunpack.c.h.b16 %v305
  %v653 = vunpack.c.l.b16 %v306
  %v654 = vunpack.c.h.b16 %v306
  %v655 = vunpack.c.l.b16 %v307
  %v656 = vunpack.c.h.b16 %v307
  %v657 = vunpack.c.l.b16 %v308
  %v658 = vunpack.c.h.b16 %v308
  %v659 = vunpack.c.l.b16 %v309
  %v660 = vunpack.c.h.b16 %v309
  %v661 = vunpack.c.l.b16 %v310
  %v662 = vunpack.c.h.b16 %v310
  %v663 = vunpack.c.l.b16 %v311
  %v664 = vunpack.c.h.b16 %v311
  %v665 = vunpack.c.l.b16 %v312
  %v666 = vunpack.c.h.b16 %v312
  %v667 = vunpack.c.l.b16 %v313
  %v668 = vunpack.c.h.b16 %v313
  %v669 = vunpack.c.l.b16 %v314
  %v670 = vunpack.c.h.b16 %v314
  %v671 = vunpack.c.l.b16 %v315
  %v672 = vunpack.c.h.b16 %v315
  %v673 = vunpack.c.l.b16 %v316
  %v674 = vunpack.c.h.b16 %v316
  %v675 = vunpack.c.l.b16 %v317
  %v676 = vunpack.c.h.b16 %v317
  %v677 = vunpack.c.l.b16 %v318
  %v678 = vunpack.c.h.b16 %v318
  %v679 = vunpack.c.l.b16 %v319
  %v680 = vunpack.c.h.b16 %v319
  %v681 = vunpack.c.l.b16 %v320
  %v682 = vunpack.c.h.b16 %v320
  %v683 = vunpack.c.l.b16 %v321
  %v684 = vunpack.c.h.b16 %v321
  %v685 = vunpack.c.l.b16 %v322
  %v686 = vunpack.c.h.b16 %v322
  %v687 = vunpack.c.l.b16 %v323
  %v688 = vunpack.c.h.b16 %v323
  %v689 = vunpack.c.l.b16 %v324
  %v690 = vunpack.c.h.b16 %v324
  %v691 = vunpack.c.l.b16 %v325
  %v692 = vunpack.c.h.b16 %v325
  %v693 = vunpack.c.l.b16 %v326
  %v694 = vunpack.c.h.b16 %v326
  %v695 = vunpack.c.l.b16 %v327
  %v696 = vunpack.c.h.b16 %v327
  %v697 = vunpack.c.l.b16 %v328
  %v698 = vunpack.c.h.b16 %v328
  %v699 = vunpack.c.l.b16 %v329
  %v700 = vunpack.c.h.b16 %v329
  %v701 = vunpack.c.l.b16 %v330
  %v702 = vunpack.c.h.b16 %v330
  %v703 = vunpack.c.l.b16 %v331
  %v704 = vunpack.c.h.b16 %v331
  %v705 = vunpack.c.l.b16 %v332
  %v706 = vunpack.c.h.b16 %v332
  %v707 = vunpack.c.l.b16 %v333
  %v708 = vunpack.c.h.b16 %v333
  %v709 = vunpack.c.l.b16 %v334
  %v710 = vunpack.c.h.b16 %v334
  %v711 = vunpack.c.l.b16 %v335
  %v712 = vunpack.c.h.b16 %v335
  %v713 = vunpack.c.l.b16 %v336
  %v714 = vunpack.c.h.b16 %v336
  %v715 = vunpack.c.l.b16 %v337
  %v716 = vunpack.c.h.b16 %v337
  %v717 = vunpack.c.l.b16 %v338
  %v718 = vunpack.c.h.b16 %v338
  %v719 = vunpack.c.l.b16 %v339
  %v720 = vunpack.c.h.b16 %v339
  %v721 = vunpack.c.l.b16 %v340
  %v722 = vunpack.c.h.b16 %v340
  %v723 = vunpack.c.l.b16 %v341
  %v724 = vunpack.c.h.b16 %v341
  %v725 = vunpack.c.l.b16 %v342
  %v726 = vunpack.c.h.b16 %v342
  %v727 = vunpack.c.l.b16 %v343
  %v728 = vunpack.c.h.b16 %v343
  %v729 = vunpack.c.l.b16 %v344
  %v730 = vunpack.c.h.b16 %v344
  %v731 = vunpack.c.l.b16 %v345
  %v732 = vunpack.c.h.b16 %v345
  %v733 = vunpack.c.l.b16 %v346
  %v734 = vunpack.c.h.b16 %v346
  %v735 = vunpack.c.l.b16 %v347
  %v736 = vunpack.c.h.b16 %v347
  %v737 = vunpack.c.l.b16 %v348
  %v738 = vunpack.c.h.b16 %v348
  %v739 = vunpack.c.l.b16 %v349
  %v740 = vunpack.c.h.b16 %v349
  %v741 = vunpack.c.l.b16 %v350
  %v742 = vunpack.c.h.b16 %v350
  %v743 = vunpack.c.l.b16 %v351
  %v744 = vunpack.c.h.b16 %v351
  %v745 = vunpack.c.l.b16 %v352
  %v746 = vunpack.c.h.b16 %v352
  %v747 = vunpack.c.l.b16 %v353
  %v748 = vunpack.c.h.b16 %v353
  %v749 = vunpack.c.l.b16 %v354
  %v750 = vunpack.c.h.b16 %v354
  %v751 = vunpack.c.l.b16 %v355
  %v752 = vunpack.c.h.b16 %v355
  %v753 = vunpack.c.l.b16 %v356
  %v754 = vunpack.c.h.b16 %v356
  %v755 = vunpack.c.l.b16 %v357
  %v756 = vunpack.c.h.b16 %v357
  %v757 = vunpack.c.l.b16 %v358
  %v758 = vunpack.c.h.b16 %v358
  %v759 = vunpack.c.l.b16 %v359
  %v760 = vunpack.c.h.b16 %v359
  %v761 = vunpack.c.l.b16 %v360
  %v762 = vunpack.c.h.b16 %v360
  %v763 = vunpack.c.l.b16 %v361
  %v764 = vunpack.c.h.b16 %v361
  %v765 = vunpack.c.l.b16 %v362
  %v766 = vunpack.c.h.b16 %v362
  %v767 = vunpack.c.l.b16 %v363
  %v768 = vunpack.c.h.b16 %v363
  %v769 = vunpack.c.l.b16 %v364
  %v770 = vunpack.c.h.b16 %v364
  %v771 = vunpack.c.l.b16 %v365
  %v772 = vunpack.c.h.b16 %v365
  %v773 = vunpack.c.l.b16 %v366
  %v774 = vunpack.c.h.b16 %v366
  %v775 = vunpack.c.l.b16 %v367
  %v776 = vunpack.c.h.b16 %v367
  %v777 = vunpack.c.l.b16 %v368
  %v778 = vunpack.c.h.b16 %v368
  %v779 = vpack.c.b16 %v569, %v555
  %v780 = vpack.c.b16 %v570, %v556
  %v781 = vpack.c.b16 %v571, %v557
  %v782 = vpack.c.b16 %v572, %v558
  %v783 = vpack.c.b16 %v573, %v559
  %v784 = vpack.c.b16 %v574, %v560
  %v785 = vpack.c.b16 %v575, %v561
  %v786 = vpack.c.b16 %v576, %v562
  %v787 = vpack.c.b16 %v577, %v563
  %v788 = vpack.c.b16 %v578, %v564
  %v789 = vpack.c.b16 %v579, %v565
  %v790 = vpack.c.b16 %v580, %v566
  %v791 = vpack.c.b16 %v581, %v567
  %v792 = vpack.c.b16 %v582, %v568
  %v793 = vpack.c.b16 %v597, %v583
  %v794 = vpack.c.b16 %v598, %v584
  %v795 = vpack.c.b16 %v599, %v585
  %v796 = vpack.c.b16 %v600, %v586
  %v797 = vpack.c.b16 %v601, %v587
  %v798 = vpack.c.b16 %v602, %v588
  %v799 = vpack.c.b16 %v603, %v589
  %v800 = vpack.c.b16 %v604, %v590
  %v801 = vpack.c.b16 %v605, %v591
  %v802 = vpack.c.b16 %v606, %v592
  %v803 = vpack.c.b16 %v607, %v593
  %v804 = vpack.c.b16 %v608, %v594
  %v805 = vpack.c.b16 %v609, %v595
  %v806 = vpack.c.b16 %v610, %v596
  %v807 = vpack.c.b16 %v625, %v611
  %v808 = vpack.c.b16 %v626, %v612
  %v809 = vpack.c.b16 %v627, %v613
  %v810 = vpack.c.b16 %v628, %v614
  %v811 = vpack.c.b16 %v629, %v615
  %v812 = vpack.c.b16 %v630, %v616
  %v813 = vpack.c.b16 %v631, %v617
  %v814 = vpack.c.b16 %v632, %v618
  %v815 = vpack.c.b16 %v633, %v619
  %v816 = vpack.c.b16 %v634, %v620
  %v817 = vpack.c.b16 %v635, %v621
  %v818 = vpack.c.b16 %v636, %v622
  %v819 = vpack.c.b16 %v637, %v623
  %v820 = vpack.c.b16 %v638, %v624
  %v821 = vpack.c.b16 %v653, %v639
  %v822 = vpack.c.b16 %v654, %v640
  %v823 = vpack.c.b16 %v655, %v641
  %v824 = vpack.c.b16 %v656, %v642
  %v825 = vpack.c.b16 %v657, %v643
  %v826 = vpack.c.b16 %v658, %v644
  %v827 = vpack.c.b16 %v659, %v645
  %v828 = vpack.c.b16 %v660, %v646
  %v829 = vpack.c.b16 %v661, %v647
  %v830 = vpack.c.b16 %v662, %v648
  %v831 = vpack.c.b16 %v663, %v649
  %v832 = vpack.c.b16 %v664, %v650
  %v833 = vpack.c.b16 %v665, %v651
  %v834 = vpack.c.b16 %v666, %v652
  %v835 = vpack.c.b16 %v681, %v667
  %v836 = vpack.c.b16 %v682, %v668
  %v837 = vpack.c.b16 %v683, %v669
  %v838 = vpack.c.b16 %v684, %v670
  %v839 = vpack.c.b16 %v685, %v671
  %v840 = vpack.c.b16 %v686, %v672
  %v841 = vpack.c.b16 %v687, %v673
  %v842 = vpack.c.b16 %v688, %v674
  %v843 = vpack.c.b16 %v689, %v675
  %v844 = vpack.c.b16 %v690, %v676
  %v845 = vpack.c.b16 %v691, %v677
  %v846 = vpack.c.b16 %v692, %v678
  %v847 = vpack.c.b16 %v693, %v679
  %v848 = vpack.c.b16 %v694, %v680
  %v849 = vpack.c.b16 %v709, %v695
  %v850 = vpack.c.b16 %v710, %v696
  %v851 = vpack.c.b16 %v711, %v697
  %v852 = vpack.c.b16 %v712, %v698
  %v853 = vpack.c.b16 %v713, %v699
  %v854 = vpack.c.b16 %v714, %v700
  %v855 = vpack.c.b16 %v715, %v701
  %v856 = vpack.c.b16 %v716, %v702
  %v857 = vpack.c.b16 %v717, %v703
  %v858 = vpack.c.b16 %v718, %v704
  %v859 = vpack.c.b16 %v719, %v705
  %v860 = vpack.c.b16 %v720, %v706
  %v861 = vpack.c.b16 %v721, %v707
  %v862 = vpack.c.b16 %v722, %v708
  %v863 = vpack.c.b16 %v737, %v723
  %v864 = vpack.c.b16 %v738, %v724
  %v865 = vpack.c.b16 %v739, %v725
  %v866 = vpack.c.b16 %v740, %v726
  %v867 = vpack.c.b16 %v741, %v727
  %v868 = vpack.c.b16 %v742, %v728
  %v869 = vpack.c.b16 %v743, %v729
  %v870 = vpack.c.b16 %v744, %v730
  %v871 = vpack.c.b16 %v745, %v731
  %v872 = vpack.c.b16 %v746, %v732
  %v873 = vpack.c.b16 %v747, %v733
  %v874 = vpack.c.b16 %v748, %v734
  %v875 = vpack.c.b16 %v749, %v735
  %v876 = vpack.c.b16 %v750, %v736
  %v877 = vpack.c.b16 %v765, %v751
  %v878 = vpack.c.b16 %v766, %v752
  %v879 = vpack.c.b16 %v767, %v753
  %v880 = vpack.c.b16 %v768, %v754
  %v881 = vpack.c.b16 %v769, %v755
  %v882 = vpack.c.b16 %v770, %v756
  %v883 = vpack.c.b16 %v771, %v757
  %v884 = vpack.c.b16 %v772, %v758
  %v885 = vpack.c.b16 %v773, %v759
  %v886 = vpack.c.b16 %v774, %v760
  %v887 = vpack.c.b16 %v775, %v761
  %v888 = vpack.c.b16 %v776, %v762
  %v889 = vpack.c.b16 %v777, %v763
  %v890 = vpack.c.b16 %v778, %v764
  %1003 = vmatprep.subr.bf16.mxu0 %v878
  %1004 = vmatpush1.bf16.msra.mxu0 %v877
  %1005 = vmatprep.subr.bf16.mxu0 %v864
  %1006 = vmatpush1.bf16.msra.mxu0 %v863
  %1007 = vmatprep.subr.bf16.mxu0 %v850
  %1008 = vmatpush1.bf16.msra.mxu0 %v849
  %1009 = vmatprep.subr.bf16.mxu0 %v836
  %1010 = vmatpush1.bf16.msra.mxu0 %v835
  %1011 = vmatprep.subr.bf16.mxu0 %v822
  %1012 = vmatpush1.bf16.msra.mxu0 %v821
  %1013 = vmatprep.subr.bf16.mxu0 %v808
  %1014 = vmatpush1.bf16.msra.mxu0 %v807
  %1015 = vmatprep.subr.bf16.mxu0 %v794
  %1016 = vmatpush1.bf16.msra.mxu0 %v793
  %1017 = vmatprep.subr.bf16.mxu0 %v780
  %1018 = vmatpush1.bf16.msra.mxu0 %v779
  %1019 = vmatprep.subr.bf16.mxu0 0
  %1020 = vmatpush2.bf16.msra.mxu0 0
  %1021 = vmatprep.subr.bf16.mxu0 0
  %1022 = vmatpush2.bf16.msra.mxu0 0
  %1023 = vmatprep.subr.bf16.mxu0 0
  %1024 = vmatpush2.bf16.msra.mxu0 0
  %1025 = vmatprep.subr.bf16.mxu0 0
  %1026 = vmatpush2.bf16.msra.mxu0 0
  %1027 = vmatprep.subr.bf16.mxu0 0
  %1028 = vmatpush2.bf16.msra.mxu0 0
  %1029 = vmatprep.subr.bf16.mxu0 0
  %1030 = vmatpush2.bf16.msra.mxu0 0
  %1031 = vmatprep.subr.bf16.mxu0 0
  %1032 = vmatpush2.bf16.msra.mxu0 0
  %1033 = vmatprep.subr.bf16.mxu0 0
  %1034 = vmatpush2.bf16.msra.mxu0 0
  %1035 = vmatprep.mubr.bf16.mxu0 0
  %1036 = vmatmul.mubr.bf16.gmra.mxu0 %v249
  %v1037 = vpop.f32.mrf.mxu0
  %v1038 = vadd.f32 %v376, %v1037
  %v1039 = vpop.f32.mrf.mxu0
  %v1040 = vadd.f32 %v380, %v1039
  %v1041 = vpop.f32.mrf.mxu0
  %v1042 = vadd.f32 %v376, %v1041
  %v1043 = vpop.f32.mrf.mxu0
  %v1044 = vadd.f32 %v380, %v1043
  %1045 = vmatprep.mubr.bf16.mxu0 0
  %1046 = vmatmul.mubr.bf16.gmra.mxu0 %v250
  %v1047 = vpop.f32.mrf.mxu0
  %v1048 = vadd.f32 %v376, %v1047
  %v1049 = vpop.f32.mrf.mxu0
  %v1050 = vadd.f32 %v380, %v1049
  %v1051 = vpop.f32.mrf.mxu0
  %v1052 = vadd.f32 %v376, %v1051
  %v1053 = vpop.f32.mrf.mxu0
  %v1054 = vadd.f32 %v380, %v1053
  %1055 = vmatprep.mubr.bf16.mxu0 0
  %1056 = vmatmul.mubr.bf16.gmra.mxu0 %v251
  %v1057 = vpop.f32.mrf.mxu0
  %v1058 = vadd.f32 %v376, %v1057
  %v1059 = vpop.f32.mrf.mxu0
  %v1060 = vadd.f32 %v380, %v1059
  %v1061 = vpop.f32.mrf.mxu0
  %v1062 = vadd.f32 %v376, %v1061
  %v1063 = vpop.f32.mrf.mxu0
  %v1064 = vadd.f32 %v380, %v1063
  %1065 = vmatprep.mubr.bf16.mxu0 0
  %1066 = vmatmul.mubr.bf16.gmra.mxu0 %v252
  %v1067 = vpop.f32.mrf.mxu0
  %v1068 = vadd.f32 %v376, %v1067
  %v1069 = vpop.f32.mrf.mxu0
  %v1070 = vadd.f32 %v380, %v1069
  %v1071 = vpop.f32.mrf.mxu0
  %v1072 = vadd.f32 %v376, %v1071
  %v1073 = vpop.f32.mrf.mxu0
  %v1074 = vadd.f32 %v380, %v1073
  %1075 = vmatprep.mubr.bf16.mxu0 0
  %1076 = vmatmul.mubr.bf16.gmra.mxu0 %v253
  %v1077 = vpop.f32.mrf.mxu0
  %v1078 = vadd.f32 %v376, %v1077
  %v1079 = vpop.f32.mrf.mxu0
  %v1080 = vadd.f32 %v380, %v1079
  %v1081 = vpop.f32.mrf.mxu0
  %v1082 = vadd.f32 %v376, %v1081
  %v1083 = vpop.f32.mrf.mxu0
  %v1084 = vadd.f32 %v380, %v1083
  %1085 = vmatprep.mubr.bf16.mxu0 0
  %1086 = vmatmul.mubr.bf16.gmra.mxu0 %v254
  %v1087 = vpop.f32.mrf.mxu0
  %v1088 = vadd.f32 %v376, %v1087
  %v1089 = vpop.f32.mrf.mxu0
  %v1090 = vadd.f32 %v380, %v1089
  %v1091 = vpop.f32.mrf.mxu0
  %v1092 = vadd.f32 %v376, %v1091
  %v1093 = vpop.f32.mrf.mxu0
  %v1094 = vadd.f32 %v380, %v1093
  %1095 = vmatprep.mubr.bf16.mxu0 0
  %1096 = vmatmul.mubr.bf16.gmra.mxu0 %v255
  %v1097 = vpop.f32.mrf.mxu0
  %v1098 = vadd.f32 %v376, %v1097
  %v1099 = vpop.f32.mrf.mxu0
  %v1100 = vadd.f32 %v380, %v1099
  %v1101 = vpop.f32.mrf.mxu0
  %v1102 = vadd.f32 %v376, %v1101
  %v1103 = vpop.f32.mrf.mxu0
  %v1104 = vadd.f32 %v380, %v1103
  %1105 = vmatprep.mubr.bf16.mxu0 0
  %1106 = vmatmul.mubr.bf16.gmra.mxu0 %v256
  %v1107 = vpop.f32.mrf.mxu0
  %v1108 = vadd.f32 %v376, %v1107
  %v1109 = vpop.f32.mrf.mxu0
  %v1110 = vadd.f32 %v380, %v1109
  %v1111 = vpop.f32.mrf.mxu0
  %v1112 = vadd.f32 %v376, %v1111
  %v1113 = vpop.f32.mrf.mxu0
  %v1114 = vadd.f32 %v380, %v1113
  %1115 = vdwg.mxu0
  %1116 = vmatprep.subr.bf16.mxu0 %v880
  %1117 = vmatpush1.bf16.msra.mxu0 %v879
  %1118 = vmatprep.subr.bf16.mxu0 %v866
  %1119 = vmatpush1.bf16.msra.mxu0 %v865
  %1120 = vmatprep.subr.bf16.mxu0 %v852
  %1121 = vmatpush1.bf16.msra.mxu0 %v851
  %1122 = vmatprep.subr.bf16.mxu0 %v838
  %1123 = vmatpush1.bf16.msra.mxu0 %v837
  %1124 = vmatprep.subr.bf16.mxu0 %v824
  %1125 = vmatpush1.bf16.msra.mxu0 %v823
  %1126 = vmatprep.subr.bf16.mxu0 %v810
  %1127 = vmatpush1.bf16.msra.mxu0 %v809
  %1128 = vmatprep.subr.bf16.mxu0 %v796
  %1129 = vmatpush1.bf16.msra.mxu0 %v795
  %1130 = vmatprep.subr.bf16.mxu0 %v782
  %1131 = vmatpush1.bf16.msra.mxu0 %v781
  %1132 = vmatprep.subr.bf16.mxu0 0
  %1133 = vmatpush2.bf16.msra.mxu0 0
  %1134 = vmatprep.subr.bf16.mxu0 0
  %1135 = vmatpush2.bf16.msra.mxu0 0
  %1136 = vmatprep.subr.bf16.mxu0 0
  %1137 = vmatpush2.bf16.msra.mxu0 0
  %1138 = vmatprep.subr.bf16.mxu0 0
  %1139 = vmatpush2.bf16.msra.mxu0 0
  %1140 = vmatprep.subr.bf16.mxu0 0
  %1141 = vmatpush2.bf16.msra.mxu0 0
  %1142 = vmatprep.subr.bf16.mxu0 0
  %1143 = vmatpush2.bf16.msra.mxu0 0
  %1144 = vmatprep.subr.bf16.mxu0 0
  %1145 = vmatpush2.bf16.msra.mxu0 0
  %1146 = vmatprep.subr.bf16.mxu0 0
  %1147 = vmatpush2.bf16.msra.mxu0 0
  %1148 = vmatprep.mubr.bf16.mxu0 0
  %1149 = vmatmul.mubr.bf16.gmra.mxu0 %v249
  %v1150 = vpop.f32.mrf.mxu0
  %v1151 = vadd.f32 %v384, %v1150
  %v1152 = vpop.f32.mrf.mxu0
  %v1153 = vadd.f32 %v388, %v1152
  %v1154 = vpop.f32.mrf.mxu0
  %v1155 = vadd.f32 %v384, %v1154
  %v1156 = vpop.f32.mrf.mxu0
  %v1157 = vadd.f32 %v388, %v1156
  %1158 = vmatprep.mubr.bf16.mxu0 0
  %1159 = vmatmul.mubr.bf16.gmra.mxu0 %v250
  %v1160 = vpop.f32.mrf.mxu0
  %v1161 = vadd.f32 %v384, %v1160
  %v1162 = vpop.f32.mrf.mxu0
  %v1163 = vadd.f32 %v388, %v1162
  %v1164 = vpop.f32.mrf.mxu0
  %v1165 = vadd.f32 %v384, %v1164
  %v1166 = vpop.f32.mrf.mxu0
  %v1167 = vadd.f32 %v388, %v1166
  %1168 = vmatprep.mubr.bf16.mxu0 0
  %1169 = vmatmul.mubr.bf16.gmra.mxu0 %v251
  %v1170 = vpop.f32.mrf.mxu0
  %v1171 = vadd.f32 %v384, %v1170
  %v1172 = vpop.f32.mrf.mxu0
  %v1173 = vadd.f32 %v388, %v1172
  %v1174 = vpop.f32.mrf.mxu0
  %v1175 = vadd.f32 %v384, %v1174
  %v1176 = vpop.f32.mrf.mxu0
  %v1177 = vadd.f32 %v388, %v1176
  %1178 = vmatprep.mubr.bf16.mxu0 0
  %1179 = vmatmul.mubr.bf16.gmra.mxu0 %v252
  %v1180 = vpop.f32.mrf.mxu0
  %v1181 = vadd.f32 %v384, %v1180
  %v1182 = vpop.f32.mrf.mxu0
  %v1183 = vadd.f32 %v388, %v1182
  %v1184 = vpop.f32.mrf.mxu0
  %v1185 = vadd.f32 %v384, %v1184
  %v1186 = vpop.f32.mrf.mxu0
  %v1187 = vadd.f32 %v388, %v1186
  %1188 = vmatprep.mubr.bf16.mxu0 0
  %1189 = vmatmul.mubr.bf16.gmra.mxu0 %v253
  %v1190 = vpop.f32.mrf.mxu0
  %v1191 = vadd.f32 %v384, %v1190
  %v1192 = vpop.f32.mrf.mxu0
  %v1193 = vadd.f32 %v388, %v1192
  %v1194 = vpop.f32.mrf.mxu0
  %v1195 = vadd.f32 %v384, %v1194
  %v1196 = vpop.f32.mrf.mxu0
  %v1197 = vadd.f32 %v388, %v1196
  %1198 = vmatprep.mubr.bf16.mxu0 0
  %1199 = vmatmul.mubr.bf16.gmra.mxu0 %v254
  %v1200 = vpop.f32.mrf.mxu0
  %v1201 = vadd.f32 %v384, %v1200
  %v1202 = vpop.f32.mrf.mxu0
  %v1203 = vadd.f32 %v388, %v1202
  %v1204 = vpop.f32.mrf.mxu0
  %v1205 = vadd.f32 %v384, %v1204
  %v1206 = vpop.f32.mrf.mxu0
  %v1207 = vadd.f32 %v388, %v1206
  %1208 = vmatprep.mubr.bf16.mxu0 0
  %1209 = vmatmul.mubr.bf16.gmra.mxu0 %v255
  %v1210 = vpop.f32.mrf.mxu0
  %v1211 = vadd.f32 %v384, %v1210
  %v1212 = vpop.f32.mrf.mxu0
  %v1213 = vadd.f32 %v388, %v1212
  %v1214 = vpop.f32.mrf.mxu0
  %v1215 = vadd.f32 %v384, %v1214
  %v1216 = vpop.f32.mrf.mxu0
  %v1217 = vadd.f32 %v388, %v1216
  %1218 = vmatprep.mubr.bf16.mxu0 0
  %1219 = vmatmul.mubr.bf16.gmra.mxu0 %v256
  %v1220 = vpop.f32.mrf.mxu0
  %v1221 = vadd.f32 %v384, %v1220
  %v1222 = vpop.f32.mrf.mxu0
  %v1223 = vadd.f32 %v388, %v1222
  %v1224 = vpop.f32.mrf.mxu0
  %v1225 = vadd.f32 %v384, %v1224
  %v1226 = vpop.f32.mrf.mxu0
  %v1227 = vadd.f32 %v388, %v1226
  %1228 = vdwg.mxu0
  %1229 = vmatprep.subr.bf16.mxu0 %v882
  %1230 = vmatpush1.bf16.msra.mxu0 %v881
  %1231 = vmatprep.subr.bf16.mxu0 %v868
  %1232 = vmatpush1.bf16.msra.mxu0 %v867
  %1233 = vmatprep.subr.bf16.mxu0 %v854
  %1234 = vmatpush1.bf16.msra.mxu0 %v853
  %1235 = vmatprep.subr.bf16.mxu0 %v840
  %1236 = vmatpush1.bf16.msra.mxu0 %v839
  %1237 = vmatprep.subr.bf16.mxu0 %v826
  %1238 = vmatpush1.bf16.msra.mxu0 %v825
  %1239 = vmatprep.subr.bf16.mxu0 %v812
  %1240 = vmatpush1.bf16.msra.mxu0 %v811
  %1241 = vmatprep.subr.bf16.mxu0 %v798
  %1242 = vmatpush1.bf16.msra.mxu0 %v797
  %1243 = vmatprep.subr.bf16.mxu0 %v784
  %1244 = vmatpush1.bf16.msra.mxu0 %v783
  %1245 = vmatprep.subr.bf16.mxu0 0
  %1246 = vmatpush2.bf16.msra.mxu0 0
  %1247 = vmatprep.subr.bf16.mxu0 0
  %1248 = vmatpush2.bf16.msra.mxu0 0
  %1249 = vmatprep.subr.bf16.mxu0 0
  %1250 = vmatpush2.bf16.msra.mxu0 0
  %1251 = vmatprep.subr.bf16.mxu0 0
  %1252 = vmatpush2.bf16.msra.mxu0 0
  %1253 = vmatprep.subr.bf16.mxu0 0
  %1254 = vmatpush2.bf16.msra.mxu0 0
  %1255 = vmatprep.subr.bf16.mxu0 0
  %1256 = vmatpush2.bf16.msra.mxu0 0
  %1257 = vmatprep.subr.bf16.mxu0 0
  %1258 = vmatpush2.bf16.msra.mxu0 0
  %1259 = vmatprep.subr.bf16.mxu0 0
  %1260 = vmatpush2.bf16.msra.mxu0 0
  %1261 = vmatprep.mubr.bf16.mxu0 0
  %1262 = vmatmul.mubr.bf16.gmra.mxu0 %v249
  %v1263 = vpop.f32.mrf.mxu0
  %v1264 = vadd.f32 %v392, %v1263
  %v1265 = vpop.f32.mrf.mxu0
  %v1266 = vadd.f32 %v396, %v1265
  %v1267 = vpop.f32.mrf.mxu0
  %v1268 = vadd.f32 %v392, %v1267
  %v1269 = vpop.f32.mrf.mxu0
  %v1270 = vadd.f32 %v396, %v1269
  %1271 = vmatprep.mubr.bf16.mxu0 0
  %1272 = vmatmul.mubr.bf16.gmra.mxu0 %v250
  %v1273 = vpop.f32.mrf.mxu0
  %v1274 = vadd.f32 %v392, %v1273
  %v1275 = vpop.f32.mrf.mxu0
  %v1276 = vadd.f32 %v396, %v1275
  %v1277 = vpop.f32.mrf.mxu0
  %v1278 = vadd.f32 %v392, %v1277
  %v1279 = vpop.f32.mrf.mxu0
  %v1280 = vadd.f32 %v396, %v1279
  %1281 = vmatprep.mubr.bf16.mxu0 0
  %1282 = vmatmul.mubr.bf16.gmra.mxu0 %v251
  %v1283 = vpop.f32.mrf.mxu0
  %v1284 = vadd.f32 %v392, %v1283
  %v1285 = vpop.f32.mrf.mxu0
  %v1286 = vadd.f32 %v396, %v1285
  %v1287 = vpop.f32.mrf.mxu0
  %v1288 = vadd.f32 %v392, %v1287
  %v1289 = vpop.f32.mrf.mxu0
  %v1290 = vadd.f32 %v396, %v1289
  %1291 = vmatprep.mubr.bf16.mxu0 0
  %1292 = vmatmul.mubr.bf16.gmra.mxu0 %v252
  %v1293 = vpop.f32.mrf.mxu0
  %v1294 = vadd.f32 %v392, %v1293
  %v1295 = vpop.f32.mrf.mxu0
  %v1296 = vadd.f32 %v396, %v1295
  %v1297 = vpop.f32.mrf.mxu0
  %v1298 = vadd.f32 %v392, %v1297
  %v1299 = vpop.f32.mrf.mxu0
  %v1300 = vadd.f32 %v396, %v1299
  %1301 = vmatprep.mubr.bf16.mxu0 0
  %1302 = vmatmul.mubr.bf16.gmra.mxu0 %v253
  %v1303 = vpop.f32.mrf.mxu0
  %v1304 = vadd.f32 %v392, %v1303
  %v1305 = vpop.f32.mrf.mxu0
  %v1306 = vadd.f32 %v396, %v1305
  %v1307 = vpop.f32.mrf.mxu0
  %v1308 = vadd.f32 %v392, %v1307
  %v1309 = vpop.f32.mrf.mxu0
  %v1310 = vadd.f32 %v396, %v1309
  %1311 = vmatprep.mubr.bf16.mxu0 0
  %1312 = vmatmul.mubr.bf16.gmra.mxu0 %v254
  %v1313 = vpop.f32.mrf.mxu0
  %v1314 = vadd.f32 %v392, %v1313
  %v1315 = vpop.f32.mrf.mxu0
  %v1316 = vadd.f32 %v396, %v1315
  %v1317 = vpop.f32.mrf.mxu0
  %v1318 = vadd.f32 %v392, %v1317
  %v1319 = vpop.f32.mrf.mxu0
  %v1320 = vadd.f32 %v396, %v1319
  %1321 = vmatprep.mubr.bf16.mxu0 0
  %1322 = vmatmul.mubr.bf16.gmra.mxu0 %v255
  %v1323 = vpop.f32.mrf.mxu0
  %v1324 = vadd.f32 %v392, %v1323
  %v1325 = vpop.f32.mrf.mxu0
  %v1326 = vadd.f32 %v396, %v1325
  %v1327 = vpop.f32.mrf.mxu0
  %v1328 = vadd.f32 %v392, %v1327
  %v1329 = vpop.f32.mrf.mxu0
  %v1330 = vadd.f32 %v396, %v1329
  %1331 = vmatprep.mubr.bf16.mxu0 0
  %1332 = vmatmul.mubr.bf16.gmra.mxu0 %v256
  %v1333 = vpop.f32.mrf.mxu0
  %v1334 = vadd.f32 %v392, %v1333
  %v1335 = vpop.f32.mrf.mxu0
  %v1336 = vadd.f32 %v396, %v1335
  %v1337 = vpop.f32.mrf.mxu0
  %v1338 = vadd.f32 %v392, %v1337
  %v1339 = vpop.f32.mrf.mxu0
  %v1340 = vadd.f32 %v396, %v1339
  %1341 = vdwg.mxu0
  %1342 = vmatprep.subr.bf16.mxu0 %v884
  %1343 = vmatpush1.bf16.msra.mxu0 %v883
  %1344 = vmatprep.subr.bf16.mxu0 %v870
  %1345 = vmatpush1.bf16.msra.mxu0 %v869
  %1346 = vmatprep.subr.bf16.mxu0 %v856
  %1347 = vmatpush1.bf16.msra.mxu0 %v855
  %1348 = vmatprep.subr.bf16.mxu0 %v842
  %1349 = vmatpush1.bf16.msra.mxu0 %v841
  %1350 = vmatprep.subr.bf16.mxu0 %v828
  %1351 = vmatpush1.bf16.msra.mxu0 %v827
  %1352 = vmatprep.subr.bf16.mxu0 %v814
  %1353 = vmatpush1.bf16.msra.mxu0 %v813
  %1354 = vmatprep.subr.bf16.mxu0 %v800
  %1355 = vmatpush1.bf16.msra.mxu0 %v799
  %1356 = vmatprep.subr.bf16.mxu0 %v786
  %1357 = vmatpush1.bf16.msra.mxu0 %v785
  %1358 = vmatprep.subr.bf16.mxu0 0
  %1359 = vmatpush2.bf16.msra.mxu0 0
  %1360 = vmatprep.subr.bf16.mxu0 0
  %1361 = vmatpush2.bf16.msra.mxu0 0
  %1362 = vmatprep.subr.bf16.mxu0 0
  %1363 = vmatpush2.bf16.msra.mxu0 0
  %1364 = vmatprep.subr.bf16.mxu0 0
  %1365 = vmatpush2.bf16.msra.mxu0 0
  %1366 = vmatprep.subr.bf16.mxu0 0
  %1367 = vmatpush2.bf16.msra.mxu0 0
  %1368 = vmatprep.subr.bf16.mxu0 0
  %1369 = vmatpush2.bf16.msra.mxu0 0
  %1370 = vmatprep.subr.bf16.mxu0 0
  %1371 = vmatpush2.bf16.msra.mxu0 0
  %1372 = vmatprep.subr.bf16.mxu0 0
  %1373 = vmatpush2.bf16.msra.mxu0 0
  %1374 = vmatprep.mubr.bf16.mxu0 0
  %1375 = vmatmul.mubr.bf16.gmra.mxu0 %v249
  %v1376 = vpop.f32.mrf.mxu0
  %v1377 = vadd.f32 %v400, %v1376
  %v1378 = vpop.f32.mrf.mxu0
  %v1379 = vadd.f32 %v404, %v1378
  %v1380 = vpop.f32.mrf.mxu0
  %v1381 = vadd.f32 %v400, %v1380
  %v1382 = vpop.f32.mrf.mxu0
  %v1383 = vadd.f32 %v404, %v1382
  %1384 = vmatprep.mubr.bf16.mxu0 0
  %1385 = vmatmul.mubr.bf16.gmra.mxu0 %v250
  %v1386 = vpop.f32.mrf.mxu0
  %v1387 = vadd.f32 %v400, %v1386
  %v1388 = vpop.f32.mrf.mxu0
  %v1389 = vadd.f32 %v404, %v1388
  %v1390 = vpop.f32.mrf.mxu0
  %v1391 = vadd.f32 %v400, %v1390
  %v1392 = vpop.f32.mrf.mxu0
  %v1393 = vadd.f32 %v404, %v1392
  %1394 = vmatprep.mubr.bf16.mxu0 0
  %1395 = vmatmul.mubr.bf16.gmra.mxu0 %v251
  %v1396 = vpop.f32.mrf.mxu0
  %v1397 = vadd.f32 %v400, %v1396
  %v1398 = vpop.f32.mrf.mxu0
  %v1399 = vadd.f32 %v404, %v1398
  %v1400 = vpop.f32.mrf.mxu0
  %v1401 = vadd.f32 %v400, %v1400
  %v1402 = vpop.f32.mrf.mxu0
  %v1403 = vadd.f32 %v404, %v1402
  %1404 = vmatprep.mubr.bf16.mxu0 0
  %1405 = vmatmul.mubr.bf16.gmra.mxu0 %v252
  %v1406 = vpop.f32.mrf.mxu0
  %v1407 = vadd.f32 %v400, %v1406
  %v1408 = vpop.f32.mrf.mxu0
  %v1409 = vadd.f32 %v404, %v1408
  %v1410 = vpop.f32.mrf.mxu0
  %v1411 = vadd.f32 %v400, %v1410
  %v1412 = vpop.f32.mrf.mxu0
  %v1413 = vadd.f32 %v404, %v1412
  %1414 = vmatprep.mubr.bf16.mxu0 0
  %1415 = vmatmul.mubr.bf16.gmra.mxu0 %v253
  %v1416 = vpop.f32.mrf.mxu0
  %v1417 = vadd.f32 %v400, %v1416
  %v1418 = vpop.f32.mrf.mxu0
  %v1419 = vadd.f32 %v404, %v1418
  %v1420 = vpop.f32.mrf.mxu0
  %v1421 = vadd.f32 %v400, %v1420
  %v1422 = vpop.f32.mrf.mxu0
  %v1423 = vadd.f32 %v404, %v1422
  %1424 = vmatprep.mubr.bf16.mxu0 0
  %1425 = vmatmul.mubr.bf16.gmra.mxu0 %v254
  %v1426 = vpop.f32.mrf.mxu0
  %v1427 = vadd.f32 %v400, %v1426
  %v1428 = vpop.f32.mrf.mxu0
  %v1429 = vadd.f32 %v404, %v1428
  %v1430 = vpop.f32.mrf.mxu0
  %v1431 = vadd.f32 %v400, %v1430
  %v1432 = vpop.f32.mrf.mxu0
  %v1433 = vadd.f32 %v404, %v1432
  %1434 = vmatprep.mubr.bf16.mxu0 0
  %1435 = vmatmul.mubr.bf16.gmra.mxu0 %v255
  %v1436 = vpop.f32.mrf.mxu0
  %v1437 = vadd.f32 %v400, %v1436
  %v1438 = vpop.f32.mrf.mxu0
  %v1439 = vadd.f32 %v404, %v1438
  %v1440 = vpop.f32.mrf.mxu0
  %v1441 = vadd.f32 %v400, %v1440
  %v1442 = vpop.f32.mrf.mxu0
  %v1443 = vadd.f32 %v404, %v1442
  %1444 = vmatprep.mubr.bf16.mxu0 0
  %1445 = vmatmul.mubr.bf16.gmra.mxu0 %v256
  %v1446 = vpop.f32.mrf.mxu0
  %v1447 = vadd.f32 %v400, %v1446
  %v1448 = vpop.f32.mrf.mxu0
  %v1449 = vadd.f32 %v404, %v1448
  %v1450 = vpop.f32.mrf.mxu0
  %v1451 = vadd.f32 %v400, %v1450
  %v1452 = vpop.f32.mrf.mxu0
  %v1453 = vadd.f32 %v404, %v1452
  %1454 = vdwg.mxu0
  %1455 = vmatprep.subr.bf16.mxu0 %v886
  %1456 = vmatpush1.bf16.msra.mxu0 %v885
  %1457 = vmatprep.subr.bf16.mxu0 %v872
  %1458 = vmatpush1.bf16.msra.mxu0 %v871
  %1459 = vmatprep.subr.bf16.mxu0 %v858
  %1460 = vmatpush1.bf16.msra.mxu0 %v857
  %1461 = vmatprep.subr.bf16.mxu0 %v844
  %1462 = vmatpush1.bf16.msra.mxu0 %v843
  %1463 = vmatprep.subr.bf16.mxu0 %v830
  %1464 = vmatpush1.bf16.msra.mxu0 %v829
  %1465 = vmatprep.subr.bf16.mxu0 %v816
  %1466 = vmatpush1.bf16.msra.mxu0 %v815
  %1467 = vmatprep.subr.bf16.mxu0 %v802
  %1468 = vmatpush1.bf16.msra.mxu0 %v801
  %1469 = vmatprep.subr.bf16.mxu0 %v788
  %1470 = vmatpush1.bf16.msra.mxu0 %v787
  %1471 = vmatprep.subr.bf16.mxu0 0
  %1472 = vmatpush2.bf16.msra.mxu0 0
  %1473 = vmatprep.subr.bf16.mxu0 0
  %1474 = vmatpush2.bf16.msra.mxu0 0
  %1475 = vmatprep.subr.bf16.mxu0 0
  %1476 = vmatpush2.bf16.msra.mxu0 0
  %1477 = vmatprep.subr.bf16.mxu0 0
  %1478 = vmatpush2.bf16.msra.mxu0 0
  %1479 = vmatprep.subr.bf16.mxu0 0
  %1480 = vmatpush2.bf16.msra.mxu0 0
  %1481 = vmatprep.subr.bf16.mxu0 0
  %1482 = vmatpush2.bf16.msra.mxu0 0
  %1483 = vmatprep.subr.bf16.mxu0 0
  %1484 = vmatpush2.bf16.msra.mxu0 0
  %1485 = vmatprep.subr.bf16.mxu0 0
  %1486 = vmatpush2.bf16.msra.mxu0 0
  %1487 = vmatprep.mubr.bf16.mxu0 0
  %1488 = vmatmul.mubr.bf16.gmra.mxu0 %v249
  %v1489 = vpop.f32.mrf.mxu0
  %v1490 = vadd.f32 %v408, %v1489
  %v1491 = vpop.f32.mrf.mxu0
  %v1492 = vadd.f32 %v412, %v1491
  %v1493 = vpop.f32.mrf.mxu0
  %v1494 = vadd.f32 %v408, %v1493
  %v1495 = vpop.f32.mrf.mxu0
  %v1496 = vadd.f32 %v412, %v1495
  %1497 = vmatprep.mubr.bf16.mxu0 0
  %1498 = vmatmul.mubr.bf16.gmra.mxu0 %v250
  %v1499 = vpop.f32.mrf.mxu0
  %v1500 = vadd.f32 %v408, %v1499
  %v1501 = vpop.f32.mrf.mxu0
  %v1502 = vadd.f32 %v412, %v1501
  %v1503 = vpop.f32.mrf.mxu0
  %v1504 = vadd.f32 %v408, %v1503
  %v1505 = vpop.f32.mrf.mxu0
  %v1506 = vadd.f32 %v412, %v1505
  %1507 = vmatprep.mubr.bf16.mxu0 0
  %1508 = vmatmul.mubr.bf16.gmra.mxu0 %v251
  %v1509 = vpop.f32.mrf.mxu0
  %v1510 = vadd.f32 %v408, %v1509
  %v1511 = vpop.f32.mrf.mxu0
  %v1512 = vadd.f32 %v412, %v1511
  %v1513 = vpop.f32.mrf.mxu0
  %v1514 = vadd.f32 %v408, %v1513
  %v1515 = vpop.f32.mrf.mxu0
  %v1516 = vadd.f32 %v412, %v1515
  %1517 = vmatprep.mubr.bf16.mxu0 0
  %1518 = vmatmul.mubr.bf16.gmra.mxu0 %v252
  %v1519 = vpop.f32.mrf.mxu0
  %v1520 = vadd.f32 %v408, %v1519
  %v1521 = vpop.f32.mrf.mxu0
  %v1522 = vadd.f32 %v412, %v1521
  %v1523 = vpop.f32.mrf.mxu0
  %v1524 = vadd.f32 %v408, %v1523
  %v1525 = vpop.f32.mrf.mxu0
  %v1526 = vadd.f32 %v412, %v1525
  %1527 = vmatprep.mubr.bf16.mxu0 0
  %1528 = vmatmul.mubr.bf16.gmra.mxu0 %v253
  %v1529 = vpop.f32.mrf.mxu0
  %v1530 = vadd.f32 %v408, %v1529
  %v1531 = vpop.f32.mrf.mxu0
  %v1532 = vadd.f32 %v412, %v1531
  %v1533 = vpop.f32.mrf.mxu0
  %v1534 = vadd.f32 %v408, %v1533
  %v1535 = vpop.f32.mrf.mxu0
  %v1536 = vadd.f32 %v412, %v1535
  %1537 = vmatprep.mubr.bf16.mxu0 0
  %1538 = vmatmul.mubr.bf16.gmra.mxu0 %v254
  %v1539 = vpop.f32.mrf.mxu0
  %v1540 = vadd.f32 %v408, %v1539
  %v1541 = vpop.f32.mrf.mxu0
  %v1542 = vadd.f32 %v412, %v1541
  %v1543 = vpop.f32.mrf.mxu0
  %v1544 = vadd.f32 %v408, %v1543
  %v1545 = vpop.f32.mrf.mxu0
  %v1546 = vadd.f32 %v412, %v1545
  %1547 = vmatprep.mubr.bf16.mxu0 0
  %1548 = vmatmul.mubr.bf16.gmra.mxu0 %v255
  %v1549 = vpop.f32.mrf.mxu0
  %v1550 = vadd.f32 %v408, %v1549
  %v1551 = vpop.f32.mrf.mxu0
  %v1552 = vadd.f32 %v412, %v1551
  %v1553 = vpop.f32.mrf.mxu0
  %v1554 = vadd.f32 %v408, %v1553
  %v1555 = vpop.f32.mrf.mxu0
  %v1556 = vadd.f32 %v412, %v1555
  %1557 = vmatprep.mubr.bf16.mxu0 0
  %1558 = vmatmul.mubr.bf16.gmra.mxu0 %v256
  %v1559 = vpop.f32.mrf.mxu0
  %v1560 = vadd.f32 %v408, %v1559
  %v1561 = vpop.f32.mrf.mxu0
  %v1562 = vadd.f32 %v412, %v1561
  %v1563 = vpop.f32.mrf.mxu0
  %v1564 = vadd.f32 %v408, %v1563
  %v1565 = vpop.f32.mrf.mxu0
  %v1566 = vadd.f32 %v412, %v1565
  %1567 = vdwg.mxu0
  %1568 = vmatprep.subr.bf16.mxu0 %v888
  %1569 = vmatpush1.bf16.msra.mxu0 %v887
  %1570 = vmatprep.subr.bf16.mxu0 %v874
  %1571 = vmatpush1.bf16.msra.mxu0 %v873
  %1572 = vmatprep.subr.bf16.mxu0 %v860
  %1573 = vmatpush1.bf16.msra.mxu0 %v859
  %1574 = vmatprep.subr.bf16.mxu0 %v846
  %1575 = vmatpush1.bf16.msra.mxu0 %v845
  %1576 = vmatprep.subr.bf16.mxu0 %v832
  %1577 = vmatpush1.bf16.msra.mxu0 %v831
  %1578 = vmatprep.subr.bf16.mxu0 %v818
  %1579 = vmatpush1.bf16.msra.mxu0 %v817
  %1580 = vmatprep.subr.bf16.mxu0 %v804
  %1581 = vmatpush1.bf16.msra.mxu0 %v803
  %1582 = vmatprep.subr.bf16.mxu0 %v790
  %1583 = vmatpush1.bf16.msra.mxu0 %v789
  %1584 = vmatprep.subr.bf16.mxu0 0
  %1585 = vmatpush2.bf16.msra.mxu0 0
  %1586 = vmatprep.subr.bf16.mxu0 0
  %1587 = vmatpush2.bf16.msra.mxu0 0
  %1588 = vmatprep.subr.bf16.mxu0 0
  %1589 = vmatpush2.bf16.msra.mxu0 0
  %1590 = vmatprep.subr.bf16.mxu0 0
  %1591 = vmatpush2.bf16.msra.mxu0 0
  %1592 = vmatprep.subr.bf16.mxu0 0
  %1593 = vmatpush2.bf16.msra.mxu0 0
  %1594 = vmatprep.subr.bf16.mxu0 0
  %1595 = vmatpush2.bf16.msra.mxu0 0
  %1596 = vmatprep.subr.bf16.mxu0 0
  %1597 = vmatpush2.bf16.msra.mxu0 0
  %1598 = vmatprep.subr.bf16.mxu0 0
  %1599 = vmatpush2.bf16.msra.mxu0 0
  %1600 = vmatprep.mubr.bf16.mxu0 0
  %1601 = vmatmul.mubr.bf16.gmra.mxu0 %v249
  %v1602 = vpop.f32.mrf.mxu0
  %v1603 = vadd.f32 %v416, %v1602
  %v1604 = vpop.f32.mrf.mxu0
  %v1605 = vadd.f32 %v420, %v1604
  %v1606 = vpop.f32.mrf.mxu0
  %v1607 = vadd.f32 %v416, %v1606
  %v1608 = vpop.f32.mrf.mxu0
  %v1609 = vadd.f32 %v420, %v1608
  %1610 = vmatprep.mubr.bf16.mxu0 0
  %1611 = vmatmul.mubr.bf16.gmra.mxu0 %v250
  %v1612 = vpop.f32.mrf.mxu0
  %v1613 = vadd.f32 %v416, %v1612
  %v1614 = vpop.f32.mrf.mxu0
  %v1615 = vadd.f32 %v420, %v1614
  %v1616 = vpop.f32.mrf.mxu0
  %v1617 = vadd.f32 %v416, %v1616
  %v1618 = vpop.f32.mrf.mxu0
  %v1619 = vadd.f32 %v420, %v1618
  %1620 = vmatprep.mubr.bf16.mxu0 0
  %1621 = vmatmul.mubr.bf16.gmra.mxu0 %v251
  %v1622 = vpop.f32.mrf.mxu0
  %v1623 = vadd.f32 %v416, %v1622
  %v1624 = vpop.f32.mrf.mxu0
  %v1625 = vadd.f32 %v420, %v1624
  %v1626 = vpop.f32.mrf.mxu0
  %v1627 = vadd.f32 %v416, %v1626
  %v1628 = vpop.f32.mrf.mxu0
  %v1629 = vadd.f32 %v420, %v1628
  %1630 = vmatprep.mubr.bf16.mxu0 0
  %1631 = vmatmul.mubr.bf16.gmra.mxu0 %v252
  %v1632 = vpop.f32.mrf.mxu0
  %v1633 = vadd.f32 %v416, %v1632
  %v1634 = vpop.f32.mrf.mxu0
  %v1635 = vadd.f32 %v420, %v1634
  %v1636 = vpop.f32.mrf.mxu0
  %v1637 = vadd.f32 %v416, %v1636
  %v1638 = vpop.f32.mrf.mxu0
  %v1639 = vadd.f32 %v420, %v1638
  %1640 = vmatprep.mubr.bf16.mxu0 0
  %1641 = vmatmul.mubr.bf16.gmra.mxu0 %v253
  %v1642 = vpop.f32.mrf.mxu0
  %v1643 = vadd.f32 %v416, %v1642
  %v1644 = vpop.f32.mrf.mxu0
  %v1645 = vadd.f32 %v420, %v1644
  %v1646 = vpop.f32.mrf.mxu0
  %v1647 = vadd.f32 %v416, %v1646
  %v1648 = vpop.f32.mrf.mxu0
  %v1649 = vadd.f32 %v420, %v1648
  %1650 = vmatprep.mubr.bf16.mxu0 0
  %1651 = vmatmul.mubr.bf16.gmra.mxu0 %v254
  %v1652 = vpop.f32.mrf.mxu0
  %v1653 = vadd.f32 %v416, %v1652
  %v1654 = vpop.f32.mrf.mxu0
  %v1655 = vadd.f32 %v420, %v1654
  %v1656 = vpop.f32.mrf.mxu0
  %v1657 = vadd.f32 %v416, %v1656
  %v1658 = vpop.f32.mrf.mxu0
  %v1659 = vadd.f32 %v420, %v1658
  %1660 = vmatprep.mubr.bf16.mxu0 0
  %1661 = vmatmul.mubr.bf16.gmra.mxu0 %v255
  %v1662 = vpop.f32.mrf.mxu0
  %v1663 = vadd.f32 %v416, %v1662
  %v1664 = vpop.f32.mrf.mxu0
  %v1665 = vadd.f32 %v420, %v1664
  %v1666 = vpop.f32.mrf.mxu0
  %v1667 = vadd.f32 %v416, %v1666
  %v1668 = vpop.f32.mrf.mxu0
  %v1669 = vadd.f32 %v420, %v1668
  %1670 = vmatprep.mubr.bf16.mxu0 0
  %1671 = vmatmul.mubr.bf16.gmra.mxu0 %v256
  %v1672 = vpop.f32.mrf.mxu0
  %v1673 = vadd.f32 %v416, %v1672
  %v1674 = vpop.f32.mrf.mxu0
  %v1675 = vadd.f32 %v420, %v1674
  %v1676 = vpop.f32.mrf.mxu0
  %v1677 = vadd.f32 %v416, %v1676
  %v1678 = vpop.f32.mrf.mxu0
  %v1679 = vadd.f32 %v420, %v1678
  %1680 = vdwg.mxu0
  %1681 = vmatprep.subr.bf16.mxu0 %v890
  %1682 = vmatpush1.bf16.msra.mxu0 %v889
  %1683 = vmatprep.subr.bf16.mxu0 %v876
  %1684 = vmatpush1.bf16.msra.mxu0 %v875
  %1685 = vmatprep.subr.bf16.mxu0 %v862
  %1686 = vmatpush1.bf16.msra.mxu0 %v861
  %1687 = vmatprep.subr.bf16.mxu0 %v848
  %1688 = vmatpush1.bf16.msra.mxu0 %v847
  %1689 = vmatprep.subr.bf16.mxu0 %v834
  %1690 = vmatpush1.bf16.msra.mxu0 %v833
  %1691 = vmatprep.subr.bf16.mxu0 %v820
  %1692 = vmatpush1.bf16.msra.mxu0 %v819
  %1693 = vmatprep.subr.bf16.mxu0 %v806
  %1694 = vmatpush1.bf16.msra.mxu0 %v805
  %1695 = vmatprep.subr.bf16.mxu0 %v792
  %1696 = vmatpush1.bf16.msra.mxu0 %v791
  %1697 = vmatprep.subr.bf16.mxu0 0
  %1698 = vmatpush2.bf16.msra.mxu0 0
  %1699 = vmatprep.subr.bf16.mxu0 0
  %1700 = vmatpush2.bf16.msra.mxu0 0
  %1701 = vmatprep.subr.bf16.mxu0 0
  %1702 = vmatpush2.bf16.msra.mxu0 0
  %1703 = vmatprep.subr.bf16.mxu0 0
  %1704 = vmatpush2.bf16.msra.mxu0 0
  %1705 = vmatprep.subr.bf16.mxu0 0
  %1706 = vmatpush2.bf16.msra.mxu0 0
  %1707 = vmatprep.subr.bf16.mxu0 0
  %1708 = vmatpush2.bf16.msra.mxu0 0
  %1709 = vmatprep.subr.bf16.mxu0 0
  %1710 = vmatpush2.bf16.msra.mxu0 0
  %1711 = vmatprep.subr.bf16.mxu0 0
  %1712 = vmatpush2.bf16.msra.mxu0 0
  %1713 = vmatprep.mubr.bf16.mxu0 0
  %1714 = vmatmul.mubr.bf16.gmra.mxu0 %v249
  %v1715 = vpop.f32.mrf.mxu0
  %v1716 = vadd.f32 %v424, %v1715
  %v1717 = vpop.f32.mrf.mxu0
  %v1718 = vadd.f32 %v428, %v1717
  %v1719 = vpop.f32.mrf.mxu0
  %v1720 = vadd.f32 %v424, %v1719
  %v1721 = vpop.f32.mrf.mxu0
  %v1722 = vadd.f32 %v428, %v1721
  %1723 = vmatprep.mubr.bf16.mxu0 0
  %1724 = vmatmul.mubr.bf16.gmra.mxu0 %v250
  %v1725 = vpop.f32.mrf.mxu0
  %v1726 = vadd.f32 %v424, %v1725
  %v1727 = vpop.f32.mrf.mxu0
  %v1728 = vadd.f32 %v428, %v1727
  %v1729 = vpop.f32.mrf.mxu0
  %v1730 = vadd.f32 %v424, %v1729
  %v1731 = vpop.f32.mrf.mxu0
  %v1732 = vadd.f32 %v428, %v1731
  %1733 = vmatprep.mubr.bf16.mxu0 0
  %1734 = vmatmul.mubr.bf16.gmra.mxu0 %v251
  %v1735 = vpop.f32.mrf.mxu0
  %v1736 = vadd.f32 %v424, %v1735
  %v1737 = vpop.f32.mrf.mxu0
  %v1738 = vadd.f32 %v428, %v1737
  %v1739 = vpop.f32.mrf.mxu0
  %v1740 = vadd.f32 %v424, %v1739
  %v1741 = vpop.f32.mrf.mxu0
  %v1742 = vadd.f32 %v428, %v1741
  %1743 = vmatprep.mubr.bf16.mxu0 0
  %1744 = vmatmul.mubr.bf16.gmra.mxu0 %v252
  %v1745 = vpop.f32.mrf.mxu0
  %v1746 = vadd.f32 %v424, %v1745
  %v1747 = vpop.f32.mrf.mxu0
  %v1748 = vadd.f32 %v428, %v1747
  %v1749 = vpop.f32.mrf.mxu0
  %v1750 = vadd.f32 %v424, %v1749
  %v1751 = vpop.f32.mrf.mxu0
  %v1752 = vadd.f32 %v428, %v1751
  %1753 = vmatprep.mubr.bf16.mxu0 0
  %1754 = vmatmul.mubr.bf16.gmra.mxu0 %v253
  %v1755 = vpop.f32.mrf.mxu0
  %v1756 = vadd.f32 %v424, %v1755
  %v1757 = vpop.f32.mrf.mxu0
  %v1758 = vadd.f32 %v428, %v1757
  %v1759 = vpop.f32.mrf.mxu0
  %v1760 = vadd.f32 %v424, %v1759
  %v1761 = vpop.f32.mrf.mxu0
  %v1762 = vadd.f32 %v428, %v1761
  %1763 = vmatprep.mubr.bf16.mxu0 0
  %1764 = vmatmul.mubr.bf16.gmra.mxu0 %v254
  %v1765 = vpop.f32.mrf.mxu0
  %v1766 = vadd.f32 %v424, %v1765
  %v1767 = vpop.f32.mrf.mxu0
  %v1768 = vadd.f32 %v428, %v1767
  %v1769 = vpop.f32.mrf.mxu0
  %v1770 = vadd.f32 %v424, %v1769
  %v1771 = vpop.f32.mrf.mxu0
  %v1772 = vadd.f32 %v428, %v1771
  %1773 = vmatprep.mubr.bf16.mxu0 0
  %1774 = vmatmul.mubr.bf16.gmra.mxu0 %v255
  %v1775 = vpop.f32.mrf.mxu0
  %v1776 = vadd.f32 %v424, %v1775
  %v1777 = vpop.f32.mrf.mxu0
  %v1778 = vadd.f32 %v428, %v1777
  %v1779 = vpop.f32.mrf.mxu0
  %v1780 = vadd.f32 %v424, %v1779
  %v1781 = vpop.f32.mrf.mxu0
  %v1782 = vadd.f32 %v428, %v1781
  %1783 = vmatprep.mubr.bf16.mxu0 0
  %1784 = vmatmul.mubr.bf16.gmra.mxu0 %v256
  %v1785 = vpop.f32.mrf.mxu0
  %v1786 = vadd.f32 %v424, %v1785
  %v1787 = vpop.f32.mrf.mxu0
  %v1788 = vadd.f32 %v428, %v1787
  %v1789 = vpop.f32.mrf.mxu0
  %v1790 = vadd.f32 %v424, %v1789
  %v1791 = vpop.f32.mrf.mxu0
  %v1792 = vadd.f32 %v428, %v1791
  %1793 = vdwg.mxu0
  %v1794 = vmax.f32 %v1038, 0.0
  %v1795 = vmax.f32 %v1040, 0.0
  %v1796 = vmax.f32 %v1151, 0.0
  %v1797 = vmax.f32 %v1153, 0.0
  %v1798 = vmax.f32 %v1264, 0.0
  %v1799 = vmax.f32 %v1266, 0.0
  %v1800 = vmax.f32 %v1377, 0.0
  %v1801 = vmax.f32 %v1379, 0.0
  %v1802 = vmax.f32 %v1490, 0.0
  %v1803 = vmax.f32 %v1492, 0.0
  %v1804 = vmax.f32 %v1603, 0.0
  %v1805 = vmax.f32 %v1605, 0.0
  %v1806 = vmax.f32 %v1716, 0.0
  %v1807 = vmax.f32 %v1718, 0.0
  %v1808 = vmax.f32 %v1042, 0.0
  %v1809 = vmax.f32 %v1044, 0.0
  %v1810 = vmax.f32 %v1155, 0.0
  %v1811 = vmax.f32 %v1157, 0.0
  %v1812 = vmax.f32 %v1268, 0.0
  %v1813 = vmax.f32 %v1270, 0.0
  %v1814 = vmax.f32 %v1381, 0.0
  %v1815 = vmax.f32 %v1383, 0.0
  %v1816 = vmax.f32 %v1494, 0.0
  %v1817 = vmax.f32 %v1496, 0.0
  %v1818 = vmax.f32 %v1607, 0.0
  %v1819 = vmax.f32 %v1609, 0.0
  %v1820 = vmax.f32 %v1720, 0.0
  %v1821 = vmax.f32 %v1722, 0.0
  %v1822 = vmax.f32 %v1048, 0.0
  %v1823 = vmax.f32 %v1050, 0.0
  %v1824 = vmax.f32 %v1161, 0.0
  %v1825 = vmax.f32 %v1163, 0.0
  %v1826 = vmax.f32 %v1274, 0.0
  %v1827 = vmax.f32 %v1276, 0.0
  %v1828 = vmax.f32 %v1387, 0.0
  %v1829 = vmax.f32 %v1389, 0.0
  %v1830 = vmax.f32 %v1500, 0.0
  %v1831 = vmax.f32 %v1502, 0.0
  %v1832 = vmax.f32 %v1613, 0.0
  %v1833 = vmax.f32 %v1615, 0.0
  %v1834 = vmax.f32 %v1726, 0.0
  %v1835 = vmax.f32 %v1728, 0.0
  %v1836 = vmax.f32 %v1052, 0.0
  %v1837 = vmax.f32 %v1054, 0.0
  %v1838 = vmax.f32 %v1165, 0.0
  %v1839 = vmax.f32 %v1167, 0.0
  %v1840 = vmax.f32 %v1278, 0.0
  %v1841 = vmax.f32 %v1280, 0.0
  %v1842 = vmax.f32 %v1391, 0.0
  %v1843 = vmax.f32 %v1393, 0.0
  %v1844 = vmax.f32 %v1504, 0.0
  %v1845 = vmax.f32 %v1506, 0.0
  %v1846 = vmax.f32 %v1617, 0.0
  %v1847 = vmax.f32 %v1619, 0.0
  %v1848 = vmax.f32 %v1730, 0.0
  %v1849 = vmax.f32 %v1732, 0.0
  %v1850 = vmax.f32 %v1058, 0.0
  %v1851 = vmax.f32 %v1060, 0.0
  %v1852 = vmax.f32 %v1171, 0.0
  %v1853 = vmax.f32 %v1173, 0.0
  %v1854 = vmax.f32 %v1284, 0.0
  %v1855 = vmax.f32 %v1286, 0.0
  %v1856 = vmax.f32 %v1397, 0.0
  %v1857 = vmax.f32 %v1399, 0.0
  %v1858 = vmax.f32 %v1510, 0.0
  %v1859 = vmax.f32 %v1512, 0.0
  %v1860 = vmax.f32 %v1623, 0.0
  %v1861 = vmax.f32 %v1625, 0.0
  %v1862 = vmax.f32 %v1736, 0.0
  %v1863 = vmax.f32 %v1738, 0.0
  %v1864 = vmax.f32 %v1062, 0.0
  %v1865 = vmax.f32 %v1064, 0.0
  %v1866 = vmax.f32 %v1175, 0.0
  %v1867 = vmax.f32 %v1177, 0.0
  %v1868 = vmax.f32 %v1288, 0.0
  %v1869 = vmax.f32 %v1290, 0.0
  %v1870 = vmax.f32 %v1401, 0.0
  %v1871 = vmax.f32 %v1403, 0.0
  %v1872 = vmax.f32 %v1514, 0.0
  %v1873 = vmax.f32 %v1516, 0.0
  %v1874 = vmax.f32 %v1627, 0.0
  %v1875 = vmax.f32 %v1629, 0.0
  %v1876 = vmax.f32 %v1740, 0.0
  %v1877 = vmax.f32 %v1742, 0.0
  %v1878 = vmax.f32 %v1068, 0.0
  %v1879 = vmax.f32 %v1070, 0.0
  %v1880 = vmax.f32 %v1181, 0.0
  %v1881 = vmax.f32 %v1183, 0.0
  %v1882 = vmax.f32 %v1294, 0.0
  %v1883 = vmax.f32 %v1296, 0.0
  %v1884 = vmax.f32 %v1407, 0.0
  %v1885 = vmax.f32 %v1409, 0.0
  %v1886 = vmax.f32 %v1520, 0.0
  %v1887 = vmax.f32 %v1522, 0.0
  %v1888 = vmax.f32 %v1633, 0.0
  %v1889 = vmax.f32 %v1635, 0.0
  %v1890 = vmax.f32 %v1746, 0.0
  %v1891 = vmax.f32 %v1748, 0.0
  %v1892 = vmax.f32 %v1072, 0.0
  %v1893 = vmax.f32 %v1074, 0.0
  %v1894 = vmax.f32 %v1185, 0.0
  %v1895 = vmax.f32 %v1187, 0.0
  %v1896 = vmax.f32 %v1298, 0.0
  %v1897 = vmax.f32 %v1300, 0.0
  %v1898 = vmax.f32 %v1411, 0.0
  %v1899 = vmax.f32 %v1413, 0.0
  %v1900 = vmax.f32 %v1524, 0.0
  %v1901 = vmax.f32 %v1526, 0.0
  %v1902 = vmax.f32 %v1637, 0.0
  %v1903 = vmax.f32 %v1639, 0.0
  %v1904 = vmax.f32 %v1750, 0.0
  %v1905 = vmax.f32 %v1752, 0.0
  %v1906 = vmax.f32 %v1078, 0.0
  %v1907 = vmax.f32 %v1080, 0.0
  %v1908 = vmax.f32 %v1191, 0.0
  %v1909 = vmax.f32 %v1193, 0.0
  %v1910 = vmax.f32 %v1304, 0.0
  %v1911 = vmax.f32 %v1306, 0.0
  %v1912 = vmax.f32 %v1417, 0.0
  %v1913 = vmax.f32 %v1419, 0.0
  %v1914 = vmax.f32 %v1530, 0.0
  %v1915 = vmax.f32 %v1532, 0.0
  %v1916 = vmax.f32 %v1643, 0.0
  %v1917 = vmax.f32 %v1645, 0.0
  %v1918 = vmax.f32 %v1756, 0.0
  %v1919 = vmax.f32 %v1758, 0.0
  %v1920 = vmax.f32 %v1082, 0.0
  %v1921 = vmax.f32 %v1084, 0.0
  %v1922 = vmax.f32 %v1195, 0.0
  %v1923 = vmax.f32 %v1197, 0.0
  %v1924 = vmax.f32 %v1308, 0.0
  %v1925 = vmax.f32 %v1310, 0.0
  %v1926 = vmax.f32 %v1421, 0.0
  %v1927 = vmax.f32 %v1423, 0.0
  %v1928 = vmax.f32 %v1534, 0.0
  %v1929 = vmax.f32 %v1536, 0.0
  %v1930 = vmax.f32 %v1647, 0.0
  %v1931 = vmax.f32 %v1649, 0.0
  %v1932 = vmax.f32 %v1760, 0.0
  %v1933 = vmax.f32 %v1762, 0.0
  %v1934 = vmax.f32 %v1088, 0.0
  %v1935 = vmax.f32 %v1090, 0.0
  %v1936 = vmax.f32 %v1201, 0.0
  %v1937 = vmax.f32 %v1203, 0.0
  %v1938 = vmax.f32 %v1314, 0.0
  %v1939 = vmax.f32 %v1316, 0.0
  %v1940 = vmax.f32 %v1427, 0.0
  %v1941 = vmax.f32 %v1429, 0.0
  %v1942 = vmax.f32 %v1540, 0.0
  %v1943 = vmax.f32 %v1542, 0.0
  %v1944 = vmax.f32 %v1653, 0.0
  %v1945 = vmax.f32 %v1655, 0.0
  %v1946 = vmax.f32 %v1766, 0.0
  %v1947 = vmax.f32 %v1768, 0.0
  %v1948 = vmax.f32 %v1092, 0.0
  %v1949 = vmax.f32 %v1094, 0.0
  %v1950 = vmax.f32 %v1205, 0.0
  %v1951 = vmax.f32 %v1207, 0.0
  %v1952 = vmax.f32 %v1318, 0.0
  %v1953 = vmax.f32 %v1320, 0.0
  %v1954 = vmax.f32 %v1431, 0.0
  %v1955 = vmax.f32 %v1433, 0.0
  %v1956 = vmax.f32 %v1544, 0.0
  %v1957 = vmax.f32 %v1546, 0.0
  %v1958 = vmax.f32 %v1657, 0.0
  %v1959 = vmax.f32 %v1659, 0.0
  %v1960 = vmax.f32 %v1770, 0.0
  %v1961 = vmax.f32 %v1772, 0.0
  %v1962 = vmax.f32 %v1098, 0.0
  %v1963 = vmax.f32 %v1100, 0.0
  %v1964 = vmax.f32 %v1211, 0.0
  %v1965 = vmax.f32 %v1213, 0.0
  %v1966 = vmax.f32 %v1324, 0.0
  %v1967 = vmax.f32 %v1326, 0.0
  %v1968 = vmax.f32 %v1437, 0.0
  %v1969 = vmax.f32 %v1439, 0.0
  %v1970 = vmax.f32 %v1550, 0.0
  %v1971 = vmax.f32 %v1552, 0.0
  %v1972 = vmax.f32 %v1663, 0.0
  %v1973 = vmax.f32 %v1665, 0.0
  %v1974 = vmax.f32 %v1776, 0.0
  %v1975 = vmax.f32 %v1778, 0.0
  %v1976 = vmax.f32 %v1102, 0.0
  %v1977 = vmax.f32 %v1104, 0.0
  %v1978 = vmax.f32 %v1215, 0.0
  %v1979 = vmax.f32 %v1217, 0.0
  %v1980 = vmax.f32 %v1328, 0.0
  %v1981 = vmax.f32 %v1330, 0.0
  %v1982 = vmax.f32 %v1441, 0.0
  %v1983 = vmax.f32 %v1443, 0.0
  %v1984 = vmax.f32 %v1554, 0.0
  %v1985 = vmax.f32 %v1556, 0.0
  %v1986 = vmax.f32 %v1667, 0.0
  %v1987 = vmax.f32 %v1669, 0.0
  %v1988 = vmax.f32 %v1780, 0.0
  %v1989 = vmax.f32 %v1782, 0.0
  %v1990 = vmax.f32 %v1108, 0.0
  %v1991 = vmax.f32 %v1110, 0.0
  %v1992 = vmax.f32 %v1221, 0.0
  %v1993 = vmax.f32 %v1223, 0.0
  %v1994 = vmax.f32 %v1334, 0.0
  %v1995 = vmax.f32 %v1336, 0.0
  %v1996 = vmax.f32 %v1447, 0.0
  %v1997 = vmax.f32 %v1449, 0.0
  %v1998 = vmax.f32 %v1560, 0.0
  %v1999 = vmax.f32 %v1562, 0.0
  %v2000 = vmax.f32 %v1673, 0.0
  %v2001 = vmax.f32 %v1675, 0.0
  %v2002 = vmax.f32 %v1786, 0.0
  %v2003 = vmax.f32 %v1788, 0.0
  %v2004 = vmax.f32 %v1112, 0.0
  %v2005 = vmax.f32 %v1114, 0.0
  %v2006 = vmax.f32 %v1225, 0.0
  %v2007 = vmax.f32 %v1227, 0.0
  %v2008 = vmax.f32 %v1338, 0.0
  %v2009 = vmax.f32 %v1340, 0.0
  %v2010 = vmax.f32 %v1451, 0.0
  %v2011 = vmax.f32 %v1453, 0.0
  %v2012 = vmax.f32 %v1564, 0.0
  %v2013 = vmax.f32 %v1566, 0.0
  %v2014 = vmax.f32 %v1677, 0.0
  %v2015 = vmax.f32 %v1679, 0.0
  %v2016 = vmax.f32 %v1790, 0.0
  %v2017 = vmax.f32 %v1792, 0.0
  %v2018 = vpack.c.bf16 %v1808, %v1794
  %v2019 = vpack.c.bf16 %v1809, %v1795
  %v2020 = vpack.c.bf16 %v1810, %v1796
  %v2021 = vpack.c.bf16 %v1811, %v1797
  %v2022 = vpack.c.bf16 %v1812, %v1798
  %v2023 = vpack.c.bf16 %v1813, %v1799
  %v2024 = vpack.c.bf16 %v1814, %v1800
  %v2025 = vpack.c.bf16 %v1815, %v1801
  %v2026 = vpack.c.bf16 %v1816, %v1802
  %v2027 = vpack.c.bf16 %v1817, %v1803
  %v2028 = vpack.c.bf16 %v1818, %v1804
  %v2029 = vpack.c.bf16 %v1819, %v1805
  %v2030 = vpack.c.bf16 %v1820, %v1806
  %v2031 = vpack.c.bf16 %v1821, %v1807
  %v2032 = vpack.c.bf16 %v1836, %v1822
  %v2033 = vpack.c.bf16 %v1837, %v1823
  %v2034 = vpack.c.bf16 %v1838, %v1824
  %v2035 = vpack.c.bf16 %v1839, %v1825
  %v2036 = vpack.c.bf16 %v1840, %v1826
  %v2037 = vpack.c.bf16 %v1841, %v1827
  %v2038 = vpack.c.bf16 %v1842, %v1828
  %v2039 = vpack.c.bf16 %v1843, %v1829
  %v2040 = vpack.c.bf16 %v1844, %v1830
  %v2041 = vpack.c.bf16 %v1845, %v1831
  %v2042 = vpack.c.bf16 %v1846, %v1832
  %v2043 = vpack.c.bf16 %v1847, %v1833
  %v2044 = vpack.c.bf16 %v1848, %v1834
  %v2045 = vpack.c.bf16 %v1849, %v1835
  %v2046 = vpack.c.bf16 %v1864, %v1850
  %v2047 = vpack.c.bf16 %v1865, %v1851
  %v2048 = vpack.c.bf16 %v1866, %v1852
  %v2049 = vpack.c.bf16 %v1867, %v1853
  %v2050 = vpack.c.bf16 %v1868, %v1854
  %v2051 = vpack.c.bf16 %v1869, %v1855
  %v2052 = vpack.c.bf16 %v1870, %v1856
  %v2053 = vpack.c.bf16 %v1871, %v1857
  %v2054 = vpack.c.bf16 %v1872, %v1858
  %v2055 = vpack.c.bf16 %v1873, %v1859
  %v2056 = vpack.c.bf16 %v1874, %v1860
  %v2057 = vpack.c.bf16 %v1875, %v1861
  %v2058 = vpack.c.bf16 %v1876, %v1862
  %v2059 = vpack.c.bf16 %v1877, %v1863
  %v2060 = vpack.c.bf16 %v1892, %v1878
  %v2061 = vpack.c.bf16 %v1893, %v1879
  %v2062 = vpack.c.bf16 %v1894, %v1880
  %v2063 = vpack.c.bf16 %v1895, %v1881
  %v2064 = vpack.c.bf16 %v1896, %v1882
  %v2065 = vpack.c.bf16 %v1897, %v1883
  %v2066 = vpack.c.bf16 %v1898, %v1884
  %v2067 = vpack.c.bf16 %v1899, %v1885
  %v2068 = vpack.c.bf16 %v1900, %v1886
  %v2069 = vpack.c.bf16 %v1901, %v1887
  %v2070 = vpack.c.bf16 %v1902, %v1888
  %v2071 = vpack.c.bf16 %v1903, %v1889
  %v2072 = vpack.c.bf16 %v1904, %v1890
  %v2073 = vpack.c.bf16 %v1905, %v1891
  %v2074 = vpack.c.bf16 %v1920, %v1906
  %v2075 = vpack.c.bf16 %v1921, %v1907
  %v2076 = vpack.c.bf16 %v1922, %v1908
  %v2077 = vpack.c.bf16 %v1923, %v1909
  %v2078 = vpack.c.bf16 %v1924, %v1910
  %v2079 = vpack.c.bf16 %v1925, %v1911
  %v2080 = vpack.c.bf16 %v1926, %v1912
  %v2081 = vpack.c.bf16 %v1927, %v1913
  %v2082 = vpack.c.bf16 %v1928, %v1914
  %v2083 = vpack.c.bf16 %v1929, %v1915
  %v2084 = vpack.c.bf16 %v1930, %v1916
  %v2085 = vpack.c.bf16 %v1931, %v1917
  %v2086 = vpack.c.bf16 %v1932, %v1918
  %v2087 = vpack.c.bf16 %v1933, %v1919
  %v2088 = vpack.c.bf16 %v1948, %v1934
  %v2089 = vpack.c.bf16 %v1949, %v1935
  %v2090 = vpack.c.bf16 %v1950, %v1936
  %v2091 = vpack.c.bf16 %v1951, %v1937
  %v2092 = vpack.c.bf16 %v1952, %v1938
  %v2093 = vpack.c.bf16 %v1953, %v1939
  %v2094 = vpack.c.bf16 %v1954, %v1940
  %v2095 = vpack.c.bf16 %v1955, %v1941
  %v2096 = vpack.c.bf16 %v1956, %v1942
  %v2097 = vpack.c.bf16 %v1957, %v1943
  %v2098 = vpack.c.bf16 %v1958, %v1944
  %v2099 = vpack.c.bf16 %v1959, %v1945
  %v2100 = vpack.c.bf16 %v1960, %v1946
  %v2101 = vpack.c.bf16 %v1961, %v1947
  %v2102 = vpack.c.bf16 %v1976, %v1962
  %v2103 = vpack.c.bf16 %v1977, %v1963
  %v2104 = vpack.c.bf16 %v1978, %v1964
  %v2105 = vpack.c.bf16 %v1979, %v1965
  %v2106 = vpack.c.bf16 %v1980, %v1966
  %v2107 = vpack.c.bf16 %v1981, %v1967
  %v2108 = vpack.c.bf16 %v1982, %v1968
  %v2109 = vpack.c.bf16 %v1983, %v1969
  %v2110 = vpack.c.bf16 %v1984, %v1970
  %v2111 = vpack.c.bf16 %v1985, %v1971
  %v2112 = vpack.c.bf16 %v1986, %v1972
  %v2113 = vpack.c.bf16 %v1987, %v1973
  %v2114 = vpack.c.bf16 %v1988, %v1974
  %v2115 = vpack.c.bf16 %v1989, %v1975
  %v2116 = vpack.c.bf16 %v2004, %v1990
  %v2117 = vpack.c.bf16 %v2005, %v1991
  %v2118 = vpack.c.bf16 %v2006, %v1992
  %v2119 = vpack.c.bf16 %v2007, %v1993
  %v2120 = vpack.c.bf16 %v2008, %v1994
  %v2121 = vpack.c.bf16 %v2009, %v1995
  %v2122 = vpack.c.bf16 %v2010, %v1996
  %v2123 = vpack.c.bf16 %v2011, %v1997
  %v2124 = vpack.c.bf16 %v2012, %v1998
  %v2125 = vpack.c.bf16 %v2013, %v1999
  %v2126 = vpack.c.bf16 %v2014, %v2000
  %v2127 = vpack.c.bf16 %v2015, %v2001
  %v2128 = vpack.c.bf16 %v2016, %v2002
  %v2129 = vpack.c.bf16 %v2017, %v2003
  %v2242 = vunpack.c.l.b16 %v2018
  %v2243 = vunpack.c.l.b16 %v2019
  %v2244 = vunpack.c.l.b16 %v2020
  %v2245 = vunpack.c.l.b16 %v2021
  %v2246 = vunpack.c.l.b16 %v2022
  %v2247 = vunpack.c.l.b16 %v2023
  %v2248 = vunpack.c.l.b16 %v2024
  %v2249 = vunpack.c.l.b16 %v2025
  %v2250 = vunpack.c.l.b16 %v2026
  %v2251 = vunpack.c.l.b16 %v2027
  %v2252 = vunpack.c.l.b16 %v2028
  %v2253 = vunpack.c.l.b16 %v2029
  %v2254 = vunpack.c.l.b16 %v2030
  %v2255 = vunpack.c.l.b16 %v2031
  %v2256 = vunpack.c.h.b16 %v2018
  %v2257 = vunpack.c.h.b16 %v2019
  %v2258 = vunpack.c.h.b16 %v2020
  %v2259 = vunpack.c.h.b16 %v2021
  %v2260 = vunpack.c.h.b16 %v2022
  %v2261 = vunpack.c.h.b16 %v2023
  %v2262 = vunpack.c.h.b16 %v2024
  %v2263 = vunpack.c.h.b16 %v2025
  %v2264 = vunpack.c.h.b16 %v2026
  %v2265 = vunpack.c.h.b16 %v2027
  %v2266 = vunpack.c.h.b16 %v2028
  %v2267 = vunpack.c.h.b16 %v2029
  %v2268 = vunpack.c.h.b16 %v2030
  %v2269 = vunpack.c.h.b16 %v2031
  %v2270 = vunpack.c.l.b16 %v2032
  %v2271 = vunpack.c.l.b16 %v2033
  %v2272 = vunpack.c.l.b16 %v2034
  %v2273 = vunpack.c.l.b16 %v2035
  %v2274 = vunpack.c.l.b16 %v2036
  %v2275 = vunpack.c.l.b16 %v2037
  %v2276 = vunpack.c.l.b16 %v2038
  %v2277 = vunpack.c.l.b16 %v2039
  %v2278 = vunpack.c.l.b16 %v2040
  %v2279 = vunpack.c.l.b16 %v2041
  %v2280 = vunpack.c.l.b16 %v2042
  %v2281 = vunpack.c.l.b16 %v2043
  %v2282 = vunpack.c.l.b16 %v2044
  %v2283 = vunpack.c.l.b16 %v2045
  %v2284 = vunpack.c.h.b16 %v2032
  %v2285 = vunpack.c.h.b16 %v2033
  %v2286 = vunpack.c.h.b16 %v2034
  %v2287 = vunpack.c.h.b16 %v2035
  %v2288 = vunpack.c.h.b16 %v2036
  %v2289 = vunpack.c.h.b16 %v2037
  %v2290 = vunpack.c.h.b16 %v2038
  %v2291 = vunpack.c.h.b16 %v2039
  %v2292 = vunpack.c.h.b16 %v2040
  %v2293 = vunpack.c.h.b16 %v2041
  %v2294 = vunpack.c.h.b16 %v2042
  %v2295 = vunpack.c.h.b16 %v2043
  %v2296 = vunpack.c.h.b16 %v2044
  %v2297 = vunpack.c.h.b16 %v2045
  %v2298 = vunpack.c.l.b16 %v2046
  %v2299 = vunpack.c.l.b16 %v2047
  %v2300 = vunpack.c.l.b16 %v2048
  %v2301 = vunpack.c.l.b16 %v2049
  %v2302 = vunpack.c.l.b16 %v2050
  %v2303 = vunpack.c.l.b16 %v2051
  %v2304 = vunpack.c.l.b16 %v2052
  %v2305 = vunpack.c.l.b16 %v2053
  %v2306 = vunpack.c.l.b16 %v2054
  %v2307 = vunpack.c.l.b16 %v2055
  %v2308 = vunpack.c.l.b16 %v2056
  %v2309 = vunpack.c.l.b16 %v2057
  %v2310 = vunpack.c.l.b16 %v2058
  %v2311 = vunpack.c.l.b16 %v2059
  %v2312 = vunpack.c.h.b16 %v2046
  %v2313 = vunpack.c.h.b16 %v2047
  %v2314 = vunpack.c.h.b16 %v2048
  %v2315 = vunpack.c.h.b16 %v2049
  %v2316 = vunpack.c.h.b16 %v2050
  %v2317 = vunpack.c.h.b16 %v2051
  %v2318 = vunpack.c.h.b16 %v2052
  %v2319 = vunpack.c.h.b16 %v2053
  %v2320 = vunpack.c.h.b16 %v2054
  %v2321 = vunpack.c.h.b16 %v2055
  %v2322 = vunpack.c.h.b16 %v2056
  %v2323 = vunpack.c.h.b16 %v2057
  %v2324 = vunpack.c.h.b16 %v2058
  %v2325 = vunpack.c.h.b16 %v2059
  %v2326 = vunpack.c.l.b16 %v2060
  %v2327 = vunpack.c.l.b16 %v2061
  %v2328 = vunpack.c.l.b16 %v2062
  %v2329 = vunpack.c.l.b16 %v2063
  %v2330 = vunpack.c.l.b16 %v2064
  %v2331 = vunpack.c.l.b16 %v2065
  %v2332 = vunpack.c.l.b16 %v2066
  %v2333 = vunpack.c.l.b16 %v2067
  %v2334 = vunpack.c.l.b16 %v2068
  %v2335 = vunpack.c.l.b16 %v2069
  %v2336 = vunpack.c.l.b16 %v2070
  %v2337 = vunpack.c.l.b16 %v2071
  %v2338 = vunpack.c.l.b16 %v2072
  %v2339 = vunpack.c.l.b16 %v2073
  %v2340 = vunpack.c.h.b16 %v2060
  %v2341 = vunpack.c.h.b16 %v2061
  %v2342 = vunpack.c.h.b16 %v2062
  %v2343 = vunpack.c.h.b16 %v2063
  %v2344 = vunpack.c.h.b16 %v2064
  %v2345 = vunpack.c.h.b16 %v2065
  %v2346 = vunpack.c.h.b16 %v2066
  %v2347 = vunpack.c.h.b16 %v2067
  %v2348 = vunpack.c.h.b16 %v2068
  %v2349 = vunpack.c.h.b16 %v2069
  %v2350 = vunpack.c.h.b16 %v2070
  %v2351 = vunpack.c.h.b16 %v2071
  %v2352 = vunpack.c.h.b16 %v2072
  %v2353 = vunpack.c.h.b16 %v2073
  %v2354 = vunpack.c.l.b16 %v2074
  %v2355 = vunpack.c.l.b16 %v2075
  %v2356 = vunpack.c.l.b16 %v2076
  %v2357 = vunpack.c.l.b16 %v2077
  %v2358 = vunpack.c.l.b16 %v2078
  %v2359 = vunpack.c.l.b16 %v2079
  %v2360 = vunpack.c.l.b16 %v2080
  %v2361 = vunpack.c.l.b16 %v2081
  %v2362 = vunpack.c.l.b16 %v2082
  %v2363 = vunpack.c.l.b16 %v2083
  %v2364 = vunpack.c.l.b16 %v2084
  %v2365 = vunpack.c.l.b16 %v2085
  %v2366 = vunpack.c.l.b16 %v2086
  %v2367 = vunpack.c.l.b16 %v2087
  %v2368 = vunpack.c.h.b16 %v2074
  %v2369 = vunpack.c.h.b16 %v2075
  %v2370 = vunpack.c.h.b16 %v2076
  %v2371 = vunpack.c.h.b16 %v2077
  %v2372 = vunpack.c.h.b16 %v2078
  %v2373 = vunpack.c.h.b16 %v2079
  %v2374 = vunpack.c.h.b16 %v2080
  %v2375 = vunpack.c.h.b16 %v2081
  %v2376 = vunpack.c.h.b16 %v2082
  %v2377 = vunpack.c.h.b16 %v2083
  %v2378 = vunpack.c.h.b16 %v2084
  %v2379 = vunpack.c.h.b16 %v2085
  %v2380 = vunpack.c.h.b16 %v2086
  %v2381 = vunpack.c.h.b16 %v2087
  %v2382 = vunpack.c.l.b16 %v2088
  %v2383 = vunpack.c.l.b16 %v2089
  %v2384 = vunpack.c.l.b16 %v2090
  %v2385 = vunpack.c.l.b16 %v2091
  %v2386 = vunpack.c.l.b16 %v2092
  %v2387 = vunpack.c.l.b16 %v2093
  %v2388 = vunpack.c.l.b16 %v2094
  %v2389 = vunpack.c.l.b16 %v2095
  %v2390 = vunpack.c.l.b16 %v2096
  %v2391 = vunpack.c.l.b16 %v2097
  %v2392 = vunpack.c.l.b16 %v2098
  %v2393 = vunpack.c.l.b16 %v2099
  %v2394 = vunpack.c.l.b16 %v2100
  %v2395 = vunpack.c.l.b16 %v2101
  %v2396 = vunpack.c.h.b16 %v2088
  %v2397 = vunpack.c.h.b16 %v2089
  %v2398 = vunpack.c.h.b16 %v2090
  %v2399 = vunpack.c.h.b16 %v2091
  %v2400 = vunpack.c.h.b16 %v2092
  %v2401 = vunpack.c.h.b16 %v2093
  %v2402 = vunpack.c.h.b16 %v2094
  %v2403 = vunpack.c.h.b16 %v2095
  %v2404 = vunpack.c.h.b16 %v2096
  %v2405 = vunpack.c.h.b16 %v2097
  %v2406 = vunpack.c.h.b16 %v2098
  %v2407 = vunpack.c.h.b16 %v2099
  %v2408 = vunpack.c.h.b16 %v2100
  %v2409 = vunpack.c.h.b16 %v2101
  %v2410 = vunpack.c.l.b16 %v2102
  %v2411 = vunpack.c.l.b16 %v2103
  %v2412 = vunpack.c.l.b16 %v2104
  %v2413 = vunpack.c.l.b16 %v2105
  %v2414 = vunpack.c.l.b16 %v2106
  %v2415 = vunpack.c.l.b16 %v2107
  %v2416 = vunpack.c.l.b16 %v2108
  %v2417 = vunpack.c.l.b16 %v2109
  %v2418 = vunpack.c.l.b16 %v2110
  %v2419 = vunpack.c.l.b16 %v2111
  %v2420 = vunpack.c.l.b16 %v2112
  %v2421 = vunpack.c.l.b16 %v2113
  %v2422 = vunpack.c.l.b16 %v2114
  %v2423 = vunpack.c.l.b16 %v2115
  %v2424 = vunpack.c.h.b16 %v2102
  %v2425 = vunpack.c.h.b16 %v2103
  %v2426 = vunpack.c.h.b16 %v2104
  %v2427 = vunpack.c.h.b16 %v2105
  %v2428 = vunpack.c.h.b16 %v2106
  %v2429 = vunpack.c.h.b16 %v2107
  %v2430 = vunpack.c.h.b16 %v2108
  %v2431 = vunpack.c.h.b16 %v2109
  %v2432 = vunpack.c.h.b16 %v2110
  %v2433 = vunpack.c.h.b16 %v2111
  %v2434 = vunpack.c.h.b16 %v2112
  %v2435 = vunpack.c.h.b16 %v2113
  %v2436 = vunpack.c.h.b16 %v2114
  %v2437 = vunpack.c.h.b16 %v2115
  %v2438 = vunpack.c.l.b16 %v2116
  %v2439 = vunpack.c.l.b16 %v2117
  %v2440 = vunpack.c.l.b16 %v2118
  %v2441 = vunpack.c.l.b16 %v2119
  %v2442 = vunpack.c.l.b16 %v2120
  %v2443 = vunpack.c.l.b16 %v2121
  %v2444 = vunpack.c.l.b16 %v2122
  %v2445 = vunpack.c.l.b16 %v2123
  %v2446 = vunpack.c.l.b16 %v2124
  %v2447 = vunpack.c.l.b16 %v2125
  %v2448 = vunpack.c.l.b16 %v2126
  %v2449 = vunpack.c.l.b16 %v2127
  %v2450 = vunpack.c.l.b16 %v2128
  %v2451 = vunpack.c.l.b16 %v2129
  %v2452 = vunpack.c.h.b16 %v2116
  %v2453 = vunpack.c.h.b16 %v2117
  %v2454 = vunpack.c.h.b16 %v2118
  %v2455 = vunpack.c.h.b16 %v2119
  %v2456 = vunpack.c.h.b16 %v2120
  %v2457 = vunpack.c.h.b16 %v2121
  %v2458 = vunpack.c.h.b16 %v2122
  %v2459 = vunpack.c.h.b16 %v2123
  %v2460 = vunpack.c.h.b16 %v2124
  %v2461 = vunpack.c.h.b16 %v2125
  %v2462 = vunpack.c.h.b16 %v2126
  %v2463 = vunpack.c.h.b16 %v2127
  %v2464 = vunpack.c.h.b16 %v2128
  %v2465 = vunpack.c.h.b16 %v2129
  %v2466 = vpack.c.b16 %v2243, %v2242
  %v2467 = vpack.c.b16 %v2245, %v2244
  %v2468 = vpack.c.b16 %v2247, %v2246
  %v2469 = vpack.c.b16 %v2249, %v2248
  %v2470 = vpack.c.b16 %v2251, %v2250
  %v2471 = vpack.c.b16 %v2253, %v2252
  %v2472 = vpack.c.b16 %v2255, %v2254
  %v2473 = vpack.c.b16 %v2257, %v2256
  %v2474 = vpack.c.b16 %v2259, %v2258
  %v2475 = vpack.c.b16 %v2261, %v2260
  %v2476 = vpack.c.b16 %v2263, %v2262
  %v2477 = vpack.c.b16 %v2265, %v2264
  %v2478 = vpack.c.b16 %v2267, %v2266
  %v2479 = vpack.c.b16 %v2269, %v2268
  %v2480 = vpack.c.b16 %v2271, %v2270
  %v2481 = vpack.c.b16 %v2273, %v2272
  %v2482 = vpack.c.b16 %v2275, %v2274
  %v2483 = vpack.c.b16 %v2277, %v2276
  %v2484 = vpack.c.b16 %v2279, %v2278
  %v2485 = vpack.c.b16 %v2281, %v2280
  %v2486 = vpack.c.b16 %v2283, %v2282
  %v2487 = vpack.c.b16 %v2285, %v2284
  %v2488 = vpack.c.b16 %v2287, %v2286
  %v2489 = vpack.c.b16 %v2289, %v2288
  %v2490 = vpack.c.b16 %v2291, %v2290
  %v2491 = vpack.c.b16 %v2293, %v2292
  %v2492 = vpack.c.b16 %v2295, %v2294
  %v2493 = vpack.c.b16 %v2297, %v2296
  %v2494 = vpack.c.b16 %v2299, %v2298
  %v2495 = vpack.c.b16 %v2301, %v2300
  %v2496 = vpack.c.b16 %v2303, %v2302
  %v2497 = vpack.c.b16 %v2305, %v2304
  %v2498 = vpack.c.b16 %v2307, %v2306
  %v2499 = vpack.c.b16 %v2309, %v2308
  %v2500 = vpack.c.b16 %v2311, %v2310
  %v2501 = vpack.c.b16 %v2313, %v2312
  %v2502 = vpack.c.b16 %v2315, %v2314
  %v2503 = vpack.c.b16 %v2317, %v2316
  %v2504 = vpack.c.b16 %v2319, %v2318
  %v2505 = vpack.c.b16 %v2321, %v2320
  %v2506 = vpack.c.b16 %v2323, %v2322
  %v2507 = vpack.c.b16 %v2325, %v2324
  %v2508 = vpack.c.b16 %v2327, %v2326
  %v2509 = vpack.c.b16 %v2329, %v2328
  %v2510 = vpack.c.b16 %v2331, %v2330
  %v2511 = vpack.c.b16 %v2333, %v2332
  %v2512 = vpack.c.b16 %v2335, %v2334
  %v2513 = vpack.c.b16 %v2337, %v2336
  %v2514 = vpack.c.b16 %v2339, %v2338
  %v2515 = vpack.c.b16 %v2341, %v2340
  %v2516 = vpack.c.b16 %v2343, %v2342
  %v2517 = vpack.c.b16 %v2345, %v2344
  %v2518 = vpack.c.b16 %v2347, %v2346
  %v2519 = vpack.c.b16 %v2349, %v2348
  %v2520 = vpack.c.b16 %v2351, %v2350
  %v2521 = vpack.c.b16 %v2353, %v2352
  %v2522 = vpack.c.b16 %v2355, %v2354
  %v2523 = vpack.c.b16 %v2357, %v2356
  %v2524 = vpack.c.b16 %v2359, %v2358
  %v2525 = vpack.c.b16 %v2361, %v2360
  %v2526 = vpack.c.b16 %v2363, %v2362
  %v2527 = vpack.c.b16 %v2365, %v2364
  %v2528 = vpack.c.b16 %v2367, %v2366
  %v2529 = vpack.c.b16 %v2369, %v2368
  %v2530 = vpack.c.b16 %v2371, %v2370
  %v2531 = vpack.c.b16 %v2373, %v2372
  %v2532 = vpack.c.b16 %v2375, %v2374
  %v2533 = vpack.c.b16 %v2377, %v2376
  %v2534 = vpack.c.b16 %v2379, %v2378
  %v2535 = vpack.c.b16 %v2381, %v2380
  %v2536 = vpack.c.b16 %v2383, %v2382
  %v2537 = vpack.c.b16 %v2385, %v2384
  %v2538 = vpack.c.b16 %v2387, %v2386
  %v2539 = vpack.c.b16 %v2389, %v2388
  %v2540 = vpack.c.b16 %v2391, %v2390
  %v2541 = vpack.c.b16 %v2393, %v2392
  %v2542 = vpack.c.b16 %v2395, %v2394
  %v2543 = vpack.c.b16 %v2397, %v2396
  %v2544 = vpack.c.b16 %v2399, %v2398
  %v2545 = vpack.c.b16 %v2401, %v2400
  %v2546 = vpack.c.b16 %v2403, %v2402
  %v2547 = vpack.c.b16 %v2405, %v2404
  %v2548 = vpack.c.b16 %v2407, %v2406
  %v2549 = vpack.c.b16 %v2409, %v2408
  %v2550 = vpack.c.b16 %v2411, %v2410
  %v2551 = vpack.c.b16 %v2413, %v2412
  %v2552 = vpack.c.b16 %v2415, %v2414
  %v2553 = vpack.c.b16 %v2417, %v2416
  %v2554 = vpack.c.b16 %v2419, %v2418
  %v2555 = vpack.c.b16 %v2421, %v2420
  %v2556 = vpack.c.b16 %v2423, %v2422
  %v2557 = vpack.c.b16 %v2425, %v2424
  %v2558 = vpack.c.b16 %v2427, %v2426
  %v2559 = vpack.c.b16 %v2429, %v2428
  %v2560 = vpack.c.b16 %v2431, %v2430
  %v2561 = vpack.c.b16 %v2433, %v2432
  %v2562 = vpack.c.b16 %v2435, %v2434
  %v2563 = vpack.c.b16 %v2437, %v2436
  %v2564 = vpack.c.b16 %v2439, %v2438
  %v2565 = vpack.c.b16 %v2441, %v2440
  %v2566 = vpack.c.b16 %v2443, %v2442
  %v2567 = vpack.c.b16 %v2445, %v2444
  %v2568 = vpack.c.b16 %v2447, %v2446
  %v2569 = vpack.c.b16 %v2449, %v2448
  %v2570 = vpack.c.b16 %v2451, %v2450
  %v2571 = vpack.c.b16 %v2453, %v2452
  %v2572 = vpack.c.b16 %v2455, %v2454
  %v2573 = vpack.c.b16 %v2457, %v2456
  %v2574 = vpack.c.b16 %v2459, %v2458
  %v2575 = vpack.c.b16 %v2461, %v2460
  %v2576 = vpack.c.b16 %v2463, %v2462
  %v2577 = vpack.c.b16 %v2465, %v2464
  %2690 = vst [vmem:[#allocation2] sm:$0xff] %v2466
  %2691 = vst [vmem:[#allocation2 + $0x8] sm:$0xff] %v2467
  %2692 = vst [vmem:[#allocation2 + $0x10] sm:$0xff] %v2468
  %2693 = vst [vmem:[#allocation2 + $0x18] sm:$0xff] %v2469
  %2694 = vst [vmem:[#allocation2 + $0x20] sm:$0xff] %v2470
  %2695 = vst [vmem:[#allocation2 + $0x28] sm:$0xff] %v2471
  %2696 = vst [vmem:[#allocation2 + $0x30] sm:$0xff] %v2472
  %2697 = vst [vmem:[#allocation2 + $0x38] sm:$0xff] %v2473
  %2698 = vst [vmem:[#allocation2 + $0x40] sm:$0xff] %v2474
  %2699 = vst [vmem:[#allocation2 + $0x48] sm:$0xff] %v2475
  %2700 = vst [vmem:[#allocation2 + $0x50] sm:$0xff] %v2476
  %2701 = vst [vmem:[#allocation2 + $0x58] sm:$0xff] %v2477
  %2702 = vst [vmem:[#allocation2 + $0x60] sm:$0xff] %v2478
  %2703 = vst [vmem:[#allocation2 + $0x68] sm:$0xff] %v2479
  %2704 = vst [vmem:[#allocation2 + $0x70] sm:$0xff] %v2480
  %2705 = vst [vmem:[#allocation2 + $0x78] sm:$0xff] %v2481
  %2706 = vst [vmem:[#allocation2 + $0x80] sm:$0xff] %v2482
  %2707 = vst [vmem:[#allocation2 + $0x88] sm:$0xff] %v2483
  %2708 = vst [vmem:[#allocation2 + $0x90] sm:$0xff] %v2484
  %2709 = vst [vmem:[#allocation2 + $0x98] sm:$0xff] %v2485
  %2710 = vst [vmem:[#allocation2 + $0xa0] sm:$0xff] %v2486
  %2711 = vst [vmem:[#allocation2 + $0xa8] sm:$0xff] %v2487
  %2712 = vst [vmem:[#allocation2 + $0xb0] sm:$0xff] %v2488
  %2713 = vst [vmem:[#allocation2 + $0xb8] sm:$0xff] %v2489
  %2714 = vst [vmem:[#allocation2 + $0xc0] sm:$0xff] %v2490
  %2715 = vst [vmem:[#allocation2 + $0xc8] sm:$0xff] %v2491
  %2716 = vst [vmem:[#allocation2 + $0xd0] sm:$0xff] %v2492
  %2717 = vst [vmem:[#allocation2 + $0xd8] sm:$0xff] %v2493
  %2718 = vst [vmem:[#allocation2 + $0xe0] sm:$0xff] %v2494
  %2719 = vst [vmem:[#allocation2 + $0xe8] sm:$0xff] %v2495
  %2720 = vst [vmem:[#allocation2 + $0xf0] sm:$0xff] %v2496
  %2721 = vst [vmem:[#allocation2 + $0xf8] sm:$0xff] %v2497
  %2722 = vst [vmem:[#allocation2 + $0x100] sm:$0xff] %v2498
  %2723 = vst [vmem:[#allocation2 + $0x108] sm:$0xff] %v2499
  %2724 = vst [vmem:[#allocation2 + $0x110] sm:$0xff] %v2500
  %2725 = vst [vmem:[#allocation2 + $0x118] sm:$0xff] %v2501
  %2726 = vst [vmem:[#allocation2 + $0x120] sm:$0xff] %v2502
  %2727 = vst [vmem:[#allocation2 + $0x128] sm:$0xff] %v2503
  %2728 = vst [vmem:[#allocation2 + $0x130] sm:$0xff] %v2504
  %2729 = vst [vmem:[#allocation2 + $0x138] sm:$0xff] %v2505
  %2730 = vst [vmem:[#allocation2 + $0x140] sm:$0xff] %v2506
  %2731 = vst [vmem:[#allocation2 + $0x148] sm:$0xff] %v2507
  %2732 = vst [vmem:[#allocation2 + $0x150] sm:$0xff] %v2508
  %2733 = vst [vmem:[#allocation2 + $0x158] sm:$0xff] %v2509
  %2734 = vst [vmem:[#allocation2 + $0x160] sm:$0xff] %v2510
  %2735 = vst [vmem:[#allocation2 + $0x168] sm:$0xff] %v2511
  %2736 = vst [vmem:[#allocation2 + $0x170] sm:$0xff] %v2512
  %2737 = vst [vmem:[#allocation2 + $0x178] sm:$0xff] %v2513
  %2738 = vst [vmem:[#allocation2 + $0x180] sm:$0xff] %v2514
  %2739 = vst [vmem:[#allocation2 + $0x188] sm:$0xff] %v2515
  %2740 = vst [vmem:[#allocation2 + $0x190] sm:$0xff] %v2516
  %2741 = vst [vmem:[#allocation2 + $0x198] sm:$0xff] %v2517
  %2742 = vst [vmem:[#allocation2 + $0x1a0] sm:$0xff] %v2518
  %2743 = vst [vmem:[#allocation2 + $0x1a8] sm:$0xff] %v2519
  %2744 = vst [vmem:[#allocation2 + $0x1b0] sm:$0xff] %v2520
  %2745 = vst [vmem:[#allocation2 + $0x1b8] sm:$0xff] %v2521
  %2746 = vst [vmem:[#allocation2 + $0x1c0] sm:$0xff] %v2522
  %2747 = vst [vmem:[#allocation2 + $0x1c8] sm:$0xff] %v2523
  %2748 = vst [vmem:[#allocation2 + $0x1d0] sm:$0xff] %v2524
  %2749 = vst [vmem:[#allocation2 + $0x1d8] sm:$0xff] %v2525
  %2750 = vst [vmem:[#allocation2 + $0x1e0] sm:$0xff] %v2526
  %2751 = vst [vmem:[#allocation2 + $0x1e8] sm:$0xff] %v2527
  %2752 = vst [vmem:[#allocation2 + $0x1f0] sm:$0xff] %v2528
  %2753 = vst [vmem:[#allocation2 + $0x1f8] sm:$0xff] %v2529
  %2754 = vst [vmem:[#allocation2 + $0x200] sm:$0xff] %v2530
  %2755 = vst [vmem:[#allocation2 + $0x208] sm:$0xff] %v2531
  %2756 = vst [vmem:[#allocation2 + $0x210] sm:$0xff] %v2532
  %2757 = vst [vmem:[#allocation2 + $0x218] sm:$0xff] %v2533
  %2758 = vst [vmem:[#allocation2 + $0x220] sm:$0xff] %v2534
  %2759 = vst [vmem:[#allocation2 + $0x228] sm:$0xff] %v2535
  %2760 = vst [vmem:[#allocation2 + $0x230] sm:$0xff] %v2536
  %2761 = vst [vmem:[#allocation2 + $0x238] sm:$0xff] %v2537
  %2762 = vst [vmem:[#allocation2 + $0x240] sm:$0xff] %v2538
  %2763 = vst [vmem:[#allocation2 + $0x248] sm:$0xff] %v2539
  %2764 = vst [vmem:[#allocation2 + $0x250] sm:$0xff] %v2540
  %2765 = vst [vmem:[#allocation2 + $0x258] sm:$0xff] %v2541
  %2766 = vst [vmem:[#allocation2 + $0x260] sm:$0xff] %v2542
  %2767 = vst [vmem:[#allocation2 + $0x268] sm:$0xff] %v2543
  %2768 = vst [vmem:[#allocation2 + $0x270] sm:$0xff] %v2544
  %2769 = vst [vmem:[#allocation2 + $0x278] sm:$0xff] %v2545
  %2770 = vst [vmem:[#allocation2 + $0x280] sm:$0xff] %v2546
  %2771 = vst [vmem:[#allocation2 + $0x288] sm:$0xff] %v2547
  %2772 = vst [vmem:[#allocation2 + $0x290] sm:$0xff] %v2548
  %2773 = vst [vmem:[#allocation2 + $0x298] sm:$0xff] %v2549
  %2774 = vst [vmem:[#allocation2 + $0x2a0] sm:$0xff] %v2550
  %2775 = vst [vmem:[#allocation2 + $0x2a8] sm:$0xff] %v2551
  %2776 = vst [vmem:[#allocation2 + $0x2b0] sm:$0xff] %v2552
  %2777 = vst [vmem:[#allocation2 + $0x2b8] sm:$0xff] %v2553
  %2778 = vst [vmem:[#allocation2 + $0x2c0] sm:$0xff] %v2554
  %2779 = vst [vmem:[#allocation2 + $0x2c8] sm:$0xff] %v2555
  %2780 = vst [vmem:[#allocation2 + $0x2d0] sm:$0xff] %v2556
  %2781 = vst [vmem:[#allocation2 + $0x2d8] sm:$0xff] %v2557
  %2782 = vst [vmem:[#allocation2 + $0x2e0] sm:$0xff] %v2558
  %2783 = vst [vmem:[#allocation2 + $0x2e8] sm:$0xff] %v2559
  %2784 = vst [vmem:[#allocation2 + $0x2f0] sm:$0xff] %v2560
  %2785 = vst [vmem:[#allocation2 + $0x2f8] sm:$0xff] %v2561
  %2786 = vst [vmem:[#allocation2 + $0x300] sm:$0xff] %v2562
  %2787 = vst [vmem:[#allocation2 + $0x308] sm:$0xff] %v2563
  %2788 = vst [vmem:[#allocation2 + $0x310] sm:$0xff] %v2564
  %2789 = vst [vmem:[#allocation2 + $0x318] sm:$0xff] %v2565
  %2790 = vst [vmem:[#allocation2 + $0x320] sm:$0xff] %v2566
  %2791 = vst [vmem:[#allocation2 + $0x328] sm:$0xff] %v2567
  %2792 = vst [vmem:[#allocation2 + $0x330] sm:$0xff] %v2568
  %2793 = vst [vmem:[#allocation2 + $0x338] sm:$0xff] %v2569
  %2794 = vst [vmem:[#allocation2 + $0x340] sm:$0xff] %v2570
  %2795 = vst [vmem:[#allocation2 + $0x348] sm:$0xff] %v2571
  %2796 = vst [vmem:[#allocation2 + $0x350] sm:$0xff] %v2572
  %2797 = vst [vmem:[#allocation2 + $0x358] sm:$0xff] %v2573
  %2798 = vst [vmem:[#allocation2 + $0x360] sm:$0xff] %v2574
  %2799 = vst [vmem:[#allocation2 + $0x368] sm:$0xff] %v2575
  %2800 = vst [vmem:[#allocation2 + $0x370] sm:$0xff] %v2576
  %2801 = vst [vmem:[#allocation2 + $0x378] sm:$0xff] %v2577
  %v2802 = vld [vmem:[%s0] sm:$0xf]
  %v2803 = vld [vmem:[%s0 + $0x4] sm:$0xf]
  %v2804 = vld [vmem:[%s0 + $0x8] sm:$0xf]
  %v2805 = vld [vmem:[%s0 + $0xc] sm:$0xf]
  %v2806 = vld [vmem:[%s0 + $0x10] sm:$0xf]
  %v2807 = vld [vmem:[%s0 + $0x14] sm:$0xf]
  %v2808 = vld [vmem:[%s0 + $0x18] sm:$0xf]
  %v2809 = vld [vmem:[%s0 + $0x1c] sm:$0xf]
  %v2810 = vld [vmem:[%s0 + $0x20] sm:$0xf]
  %v2811 = vld [vmem:[%s0 + $0x24] sm:$0xf]
  %v2812 = vld [vmem:[%s0 + $0x28] sm:$0xf]
  %v2813 = vld [vmem:[%s0 + $0x2c] sm:$0xf]
  %v2814 = vld [vmem:[%s0 + $0x30] sm:$0xf]
  %v2815 = vld [vmem:[%s0 + $0x34] sm:$0xf]
  %v2816 = vld [vmem:[%s0 + $0x38] sm:$0xf]
  %v2817 = vld [vmem:[%s0 + $0x3c] sm:$0xf]
  %v2818 = vld [vmem:[#allocation2] sm:$0xff]
  %v2819 = vld [vmem:[#allocation2 + $0x8] sm:$0xff]
  %v2820 = vld [vmem:[#allocation2 + $0x10] sm:$0xff]
  %v2821 = vld [vmem:[#allocation2 + $0x18] sm:$0xff]
  %v2822 = vld [vmem:[#allocation2 + $0x20] sm:$0xff]
  %v2823 = vld [vmem:[#allocation2 + $0x28] sm:$0xff]
  %v2824 = vld [vmem:[#allocation2 + $0x30] sm:$0xff]
  %v2825 = vld [vmem:[#allocation2 + $0x38] sm:$0xff]
  %v2826 = vld [vmem:[#allocation2 + $0x40] sm:$0xff]
  %v2827 = vld [vmem:[#allocation2 + $0x48] sm:$0xff]
  %v2828 = vld [vmem:[#allocation2 + $0x50] sm:$0xff]
  %v2829 = vld [vmem:[#allocation2 + $0x58] sm:$0xff]
  %v2830 = vld [vmem:[#allocation2 + $0x60] sm:$0xff]
  %v2831 = vld [vmem:[#allocation2 + $0x68] sm:$0xff]
  %v2832 = vld [vmem:[#allocation2 + $0x70] sm:$0xff]
  %v2833 = vld [vmem:[#allocation2 + $0x78] sm:$0xff]
  %v2834 = vld [vmem:[#allocation2 + $0x80] sm:$0xff]
  %v2835 = vld [vmem:[#allocation2 + $0x88] sm:$0xff]
  %v2836 = vld [vmem:[#allocation2 + $0x90] sm:$0xff]
  %v2837 = vld [vmem:[#allocation2 + $0x98] sm:$0xff]
  %v2838 = vld [vmem:[#allocation2 + $0xa0] sm:$0xff]
  %v2839 = vld [vmem:[#allocation2 + $0xa8] sm:$0xff]
  %v2840 = vld [vmem:[#allocation2 + $0xb0] sm:$0xff]
  %v2841 = vld [vmem:[#allocation2 + $0xb8] sm:$0xff]
  %v2842 = vld [vmem:[#allocation2 + $0xc0] sm:$0xff]
  %v2843 = vld [vmem:[#allocation2 + $0xc8] sm:$0xff]
  %v2844 = vld [vmem:[#allocation2 + $0xd0] sm:$0xff]
  %v2845 = vld [vmem:[#allocation2 + $0xd8] sm:$0xff]
  %v2846 = vld [vmem:[#allocation2 + $0xe0] sm:$0xff]
  %v2847 = vld [vmem:[#allocation2 + $0xe8] sm:$0xff]
  %v2848 = vld [vmem:[#allocation2 + $0xf0] sm:$0xff]
  %v2849 = vld [vmem:[#allocation2 + $0xf8] sm:$0xff]
  %v2850 = vld [vmem:[#allocation2 + $0x100] sm:$0xff]
  %v2851 = vld [vmem:[#allocation2 + $0x108] sm:$0xff]
  %v2852 = vld [vmem:[#allocation2 + $0x110] sm:$0xff]
  %v2853 = vld [vmem:[#allocation2 + $0x118] sm:$0xff]
  %v2854 = vld [vmem:[#allocation2 + $0x120] sm:$0xff]
  %v2855 = vld [vmem:[#allocation2 + $0x128] sm:$0xff]
  %v2856 = vld [vmem:[#allocation2 + $0x130] sm:$0xff]
  %v2857 = vld [vmem:[#allocation2 + $0x138] sm:$0xff]
  %v2858 = vld [vmem:[#allocation2 + $0x140] sm:$0xff]
  %v2859 = vld [vmem:[#allocation2 + $0x148] sm:$0xff]
  %v2860 = vld [vmem:[#allocation2 + $0x150] sm:$0xff]
  %v2861 = vld [vmem:[#allocation2 + $0x158] sm:$0xff]
  %v2862 = vld [vmem:[#allocation2 + $0x160] sm:$0xff]
  %v2863 = vld [vmem:[#allocation2 + $0x168] sm:$0xff]
  %v2864 = vld [vmem:[#allocation2 + $0x170] sm:$0xff]
  %v2865 = vld [vmem:[#allocation2 + $0x178] sm:$0xff]
  %v2866 = vld [vmem:[#allocation2 + $0x180] sm:$0xff]
  %v2867 = vld [vmem:[#allocation2 + $0x188] sm:$0xff]
  %v2868 = vld [vmem:[#allocation2 + $0x190] sm:$0xff]
  %v2869 = vld [vmem:[#allocation2 + $0x198] sm:$0xff]
  %v2870 = vld [vmem:[#allocation2 + $0x1a0] sm:$0xff]
  %v2871 = vld [vmem:[#allocation2 + $0x1a8] sm:$0xff]
  %v2872 = vld [vmem:[#allocation2 + $0x1b0] sm:$0xff]
  %v2873 = vld [vmem:[#allocation2 + $0x1b8] sm:$0xff]
  %v2874 = vld [vmem:[#allocation2 + $0x1c0] sm:$0xff]
  %v2875 = vld [vmem:[#allocation2 + $0x1c8] sm:$0xff]
  %v2876 = vld [vmem:[#allocation2 + $0x1d0] sm:$0xff]
  %v2877 = vld [vmem:[#allocation2 + $0x1d8] sm:$0xff]
  %v2878 = vld [vmem:[#allocation2 + $0x1e0] sm:$0xff]
  %v2879 = vld [vmem:[#allocation2 + $0x1e8] sm:$0xff]
  %v2880 = vld [vmem:[#allocation2 + $0x1f0] sm:$0xff]
  %v2881 = vld [vmem:[#allocation2 + $0x1f8] sm:$0xff]
  %v2882 = vld [vmem:[#allocation2 + $0x200] sm:$0xff]
  %v2883 = vld [vmem:[#allocation2 + $0x208] sm:$0xff]
  %v2884 = vld [vmem:[#allocation2 + $0x210] sm:$0xff]
  %v2885 = vld [vmem:[#allocation2 + $0x218] sm:$0xff]
  %v2886 = vld [vmem:[#allocation2 + $0x220] sm:$0xff]
  %v2887 = vld [vmem:[#allocation2 + $0x228] sm:$0xff]
  %v2888 = vld [vmem:[#allocation2 + $0x230] sm:$0xff]
  %v2889 = vld [vmem:[#allocation2 + $0x238] sm:$0xff]
  %v2890 = vld [vmem:[#allocation2 + $0x240] sm:$0xff]
  %v2891 = vld [vmem:[#allocation2 + $0x248] sm:$0xff]
  %v2892 = vld [vmem:[#allocation2 + $0x250] sm:$0xff]
  %v2893 = vld [vmem:[#allocation2 + $0x258] sm:$0xff]
  %v2894 = vld [vmem:[#allocation2 + $0x260] sm:$0xff]
  %v2895 = vld [vmem:[#allocation2 + $0x268] sm:$0xff]
  %v2896 = vld [vmem:[#allocation2 + $0x270] sm:$0xff]
  %v2897 = vld [vmem:[#allocation2 + $0x278] sm:$0xff]
  %v2898 = vld [vmem:[#allocation2 + $0x280] sm:$0xff]
  %v2899 = vld [vmem:[#allocation2 + $0x288] sm:$0xff]
  %v2900 = vld [vmem:[#allocation2 + $0x290] sm:$0xff]
  %v2901 = vld [vmem:[#allocation2 + $0x298] sm:$0xff]
  %v2902 = vld [vmem:[#allocation2 + $0x2a0] sm:$0xff]
  %v2903 = vld [vmem:[#allocation2 + $0x2a8] sm:$0xff]
  %v2904 = vld [vmem:[#allocation2 + $0x2b0] sm:$0xff]
  %v2905 = vld [vmem:[#allocation2 + $0x2b8] sm:$0xff]
  %v2906 = vld [vmem:[#allocation2 + $0x2c0] sm:$0xff]
  %v2907 = vld [vmem:[#allocation2 + $0x2c8] sm:$0xff]
  %v2908 = vld [vmem:[#allocation2 + $0x2d0] sm:$0xff]
  %v2909 = vld [vmem:[#allocation2 + $0x2d8] sm:$0xff]
  %v2910 = vld [vmem:[#allocation2 + $0x2e0] sm:$0xff]
  %v2911 = vld [vmem:[#allocation2 + $0x2e8] sm:$0xff]
  %v2912 = vld [vmem:[#allocation2 + $0x2f0] sm:$0xff]
  %v2913 = vld [vmem:[#allocation2 + $0x2f8] sm:$0xff]
  %v2914 = vld [vmem:[#allocation2 + $0x300] sm:$0xff]
  %v2915 = vld [vmem:[#allocation2 + $0x308] sm:$0xff]
  %v2916 = vld [vmem:[#allocation2 + $0x310] sm:$0xff]
  %v2917 = vld [vmem:[#allocation2 + $0x318] sm:$0xff]
  %v2918 = vld [vmem:[#allocation2 + $0x320] sm:$0xff]
  %v2919 = vld [vmem:[#allocation2 + $0x328] sm:$0xff]
  %v2920 = vld [vmem:[#allocation2 + $0x330] sm:$0xff]
  %v2921 = vld [vmem:[#allocation2 + $0x338] sm:$0xff]
  %v2922 = vld [vmem:[#allocation2 + $0x340] sm:$0xff]
  %v2923 = vld [vmem:[#allocation2 + $0x348] sm:$0xff]
  %v2924 = vld [vmem:[#allocation2 + $0x350] sm:$0xff]
  %v2925 = vld [vmem:[#allocation2 + $0x358] sm:$0xff]
  %v2926 = vld [vmem:[#allocation2 + $0x360] sm:$0xff]
  %v2927 = vld [vmem:[#allocation2 + $0x368] sm:$0xff]
  %v2928 = vld [vmem:[#allocation2 + $0x370] sm:$0xff]
  %v2929 = vld [vmem:[#allocation2 + $0x378] sm:$0xff]
  %v2946 = vunpack.c.l.b16 %v2802
  %v2947 = vunpack.c.l.b16 %v2803
  %v2948 = vunpack.c.l.b16 %v2804
  %v2949 = vunpack.c.l.b16 %v2805
  %v2950 = vunpack.c.l.b16 %v2806
  %v2951 = vunpack.c.l.b16 %v2807
  %v2952 = vunpack.c.l.b16 %v2808
  %v2953 = vunpack.c.l.b16 %v2809
  %v2954 = vunpack.c.l.b16 %v2810
  %v2955 = vunpack.c.l.b16 %v2811
  %v2956 = vunpack.c.l.b16 %v2812
  %v2957 = vunpack.c.l.b16 %v2813
  %v2958 = vunpack.c.l.b16 %v2814
  %v2959 = vunpack.c.l.b16 %v2815
  %v2960 = vunpack.c.l.b16 %v2816
  %v2961 = vunpack.c.l.b16 %v2817
  %v2962 = vpack.c.b16 %v2947, %v2946
  %v2963 = vpack.c.b16 %v2949, %v2948
  %v2964 = vpack.c.b16 %v2951, %v2950
  %v2965 = vpack.c.b16 %v2953, %v2952
  %v2966 = vpack.c.b16 %v2955, %v2954
  %v2967 = vpack.c.b16 %v2957, %v2956
  %v2968 = vpack.c.b16 %v2959, %v2958
  %v2969 = vpack.c.b16 %v2961, %v2960
  %v3090 = vunpack.c.l.b16 %v2818
  %v3091 = vunpack.c.h.b16 %v2818
  %v3092 = vunpack.c.l.b16 %v2819
  %v3093 = vunpack.c.h.b16 %v2819
  %v3094 = vunpack.c.l.b16 %v2820
  %v3095 = vunpack.c.h.b16 %v2820
  %v3096 = vunpack.c.l.b16 %v2821
  %v3097 = vunpack.c.h.b16 %v2821
  %v3098 = vunpack.c.l.b16 %v2822
  %v3099 = vunpack.c.h.b16 %v2822
  %v3100 = vunpack.c.l.b16 %v2823
  %v3101 = vunpack.c.h.b16 %v2823
  %v3102 = vunpack.c.l.b16 %v2824
  %v3103 = vunpack.c.h.b16 %v2824
  %v3104 = vunpack.c.l.b16 %v2825
  %v3105 = vunpack.c.h.b16 %v2825
  %v3106 = vunpack.c.l.b16 %v2826
  %v3107 = vunpack.c.h.b16 %v2826
  %v3108 = vunpack.c.l.b16 %v2827
  %v3109 = vunpack.c.h.b16 %v2827
  %v3110 = vunpack.c.l.b16 %v2828
  %v3111 = vunpack.c.h.b16 %v2828
  %v3112 = vunpack.c.l.b16 %v2829
  %v3113 = vunpack.c.h.b16 %v2829
  %v3114 = vunpack.c.l.b16 %v2830
  %v3115 = vunpack.c.h.b16 %v2830
  %v3116 = vunpack.c.l.b16 %v2831
  %v3117 = vunpack.c.h.b16 %v2831
  %v3118 = vunpack.c.l.b16 %v2832
  %v3119 = vunpack.c.h.b16 %v2832
  %v3120 = vunpack.c.l.b16 %v2833
  %v3121 = vunpack.c.h.b16 %v2833
  %v3122 = vunpack.c.l.b16 %v2834
  %v3123 = vunpack.c.h.b16 %v2834
  %v3124 = vunpack.c.l.b16 %v2835
  %v3125 = vunpack.c.h.b16 %v2835
  %v3126 = vunpack.c.l.b16 %v2836
  %v3127 = vunpack.c.h.b16 %v2836
  %v3128 = vunpack.c.l.b16 %v2837
  %v3129 = vunpack.c.h.b16 %v2837
  %v3130 = vunpack.c.l.b16 %v2838
  %v3131 = vunpack.c.h.b16 %v2838
  %v3132 = vunpack.c.l.b16 %v2839
  %v3133 = vunpack.c.h.b16 %v2839
  %v3134 = vunpack.c.l.b16 %v2840
  %v3135 = vunpack.c.h.b16 %v2840
  %v3136 = vunpack.c.l.b16 %v2841
  %v3137 = vunpack.c.h.b16 %v2841
  %v3138 = vunpack.c.l.b16 %v2842
  %v3139 = vunpack.c.h.b16 %v2842
  %v3140 = vunpack.c.l.b16 %v2843
  %v3141 = vunpack.c.h.b16 %v2843
  %v3142 = vunpack.c.l.b16 %v2844
  %v3143 = vunpack.c.h.b16 %v2844
  %v3144 = vunpack.c.l.b16 %v2845
  %v3145 = vunpack.c.h.b16 %v2845
  %v3146 = vunpack.c.l.b16 %v2846
  %v3147 = vunpack.c.h.b16 %v2846
  %v3148 = vunpack.c.l.b16 %v2847
  %v3149 = vunpack.c.h.b16 %v2847
  %v3150 = vunpack.c.l.b16 %v2848
  %v3151 = vunpack.c.h.b16 %v2848
  %v3152 = vunpack.c.l.b16 %v2849
  %v3153 = vunpack.c.h.b16 %v2849
  %v3154 = vunpack.c.l.b16 %v2850
  %v3155 = vunpack.c.h.b16 %v2850
  %v3156 = vunpack.c.l.b16 %v2851
  %v3157 = vunpack.c.h.b16 %v2851
  %v3158 = vunpack.c.l.b16 %v2852
  %v3159 = vunpack.c.h.b16 %v2852
  %v3160 = vunpack.c.l.b16 %v2853
  %v3161 = vunpack.c.h.b16 %v2853
  %v3162 = vunpack.c.l.b16 %v2854
  %v3163 = vunpack.c.h.b16 %v2854
  %v3164 = vunpack.c.l.b16 %v2855
  %v3165 = vunpack.c.h.b16 %v2855
  %v3166 = vunpack.c.l.b16 %v2856
  %v3167 = vunpack.c.h.b16 %v2856
  %v3168 = vunpack.c.l.b16 %v2857
  %v3169 = vunpack.c.h.b16 %v2857
  %v3170 = vunpack.c.l.b16 %v2858
  %v3171 = vunpack.c.h.b16 %v2858
  %v3172 = vunpack.c.l.b16 %v2859
  %v3173 = vunpack.c.h.b16 %v2859
  %v3174 = vunpack.c.l.b16 %v2860
  %v3175 = vunpack.c.h.b16 %v2860
  %v3176 = vunpack.c.l.b16 %v2861
  %v3177 = vunpack.c.h.b16 %v2861
  %v3178 = vunpack.c.l.b16 %v2862
  %v3179 = vunpack.c.h.b16 %v2862
  %v3180 = vunpack.c.l.b16 %v2863
  %v3181 = vunpack.c.h.b16 %v2863
  %v3182 = vunpack.c.l.b16 %v2864
  %v3183 = vunpack.c.h.b16 %v2864
  %v3184 = vunpack.c.l.b16 %v2865
  %v3185 = vunpack.c.h.b16 %v2865
  %v3186 = vunpack.c.l.b16 %v2866
  %v3187 = vunpack.c.h.b16 %v2866
  %v3188 = vunpack.c.l.b16 %v2867
  %v3189 = vunpack.c.h.b16 %v2867
  %v3190 = vunpack.c.l.b16 %v2868
  %v3191 = vunpack.c.h.b16 %v2868
  %v3192 = vunpack.c.l.b16 %v2869
  %v3193 = vunpack.c.h.b16 %v2869
  %v3194 = vunpack.c.l.b16 %v2870
  %v3195 = vunpack.c.h.b16 %v2870
  %v3196 = vunpack.c.l.b16 %v2871
  %v3197 = vunpack.c.h.b16 %v2871
  %v3198 = vunpack.c.l.b16 %v2872
  %v3199 = vunpack.c.h.b16 %v2872
  %v3200 = vunpack.c.l.b16 %v2873
  %v3201 = vunpack.c.h.b16 %v2873
  %v3202 = vunpack.c.l.b16 %v2874
  %v3203 = vunpack.c.h.b16 %v2874
  %v3204 = vunpack.c.l.b16 %v2875
  %v3205 = vunpack.c.h.b16 %v2875
  %v3206 = vunpack.c.l.b16 %v2876
  %v3207 = vunpack.c.h.b16 %v2876
  %v3208 = vunpack.c.l.b16 %v2877
  %v3209 = vunpack.c.h.b16 %v2877
  %v3210 = vunpack.c.l.b16 %v2878
  %v3211 = vunpack.c.h.b16 %v2878
  %v3212 = vunpack.c.l.b16 %v2879
  %v3213 = vunpack.c.h.b16 %v2879
  %v3214 = vunpack.c.l.b16 %v2880
  %v3215 = vunpack.c.h.b16 %v2880
  %v3216 = vunpack.c.l.b16 %v2881
  %v3217 = vunpack.c.h.b16 %v2881
  %v3218 = vunpack.c.l.b16 %v2882
  %v3219 = vunpack.c.h.b16 %v2882
  %v3220 = vunpack.c.l.b16 %v2883
  %v3221 = vunpack.c.h.b16 %v2883
  %v3222 = vunpack.c.l.b16 %v2884
  %v3223 = vunpack.c.h.b16 %v2884
  %v3224 = vunpack.c.l.b16 %v2885
  %v3225 = vunpack.c.h.b16 %v2885
  %v3226 = vunpack.c.l.b16 %v2886
  %v3227 = vunpack.c.h.b16 %v2886
  %v3228 = vunpack.c.l.b16 %v2887
  %v3229 = vunpack.c.h.b16 %v2887
  %v3230 = vunpack.c.l.b16 %v2888
  %v3231 = vunpack.c.h.b16 %v2888
  %v3232 = vunpack.c.l.b16 %v2889
  %v3233 = vunpack.c.h.b16 %v2889
  %v3234 = vunpack.c.l.b16 %v2890
  %v3235 = vunpack.c.h.b16 %v2890
  %v3236 = vunpack.c.l.b16 %v2891
  %v3237 = vunpack.c.h.b16 %v2891
  %v3238 = vunpack.c.l.b16 %v2892
  %v3239 = vunpack.c.h.b16 %v2892
  %v3240 = vunpack.c.l.b16 %v2893
  %v3241 = vunpack.c.h.b16 %v2893
  %v3242 = vunpack.c.l.b16 %v2894
  %v3243 = vunpack.c.h.b16 %v2894
  %v3244 = vunpack.c.l.b16 %v2895
  %v3245 = vunpack.c.h.b16 %v2895
  %v3246 = vunpack.c.l.b16 %v2896
  %v3247 = vunpack.c.h.b16 %v2896
  %v3248 = vunpack.c.l.b16 %v2897
  %v3249 = vunpack.c.h.b16 %v2897
  %v3250 = vunpack.c.l.b16 %v2898
  %v3251 = vunpack.c.h.b16 %v2898
  %v3252 = vunpack.c.l.b16 %v2899
  %v3253 = vunpack.c.h.b16 %v2899
  %v3254 = vunpack.c.l.b16 %v2900
  %v3255 = vunpack.c.h.b16 %v2900
  %v3256 = vunpack.c.l.b16 %v2901
  %v3257 = vunpack.c.h.b16 %v2901
  %v3258 = vunpack.c.l.b16 %v2902
  %v3259 = vunpack.c.h.b16 %v2902
  %v3260 = vunpack.c.l.b16 %v2903
  %v3261 = vunpack.c.h.b16 %v2903
  %v3262 = vunpack.c.l.b16 %v2904
  %v3263 = vunpack.c.h.b16 %v2904
  %v3264 = vunpack.c.l.b16 %v2905
  %v3265 = vunpack.c.h.b16 %v2905
  %v3266 = vunpack.c.l.b16 %v2906
  %v3267 = vunpack.c.h.b16 %v2906
  %v3268 = vunpack.c.l.b16 %v2907
  %v3269 = vunpack.c.h.b16 %v2907
  %v3270 = vunpack.c.l.b16 %v2908
  %v3271 = vunpack.c.h.b16 %v2908
  %v3272 = vunpack.c.l.b16 %v2909
  %v3273 = vunpack.c.h.b16 %v2909
  %v3274 = vunpack.c.l.b16 %v2910
  %v3275 = vunpack.c.h.b16 %v2910
  %v3276 = vunpack.c.l.b16 %v2911
  %v3277 = vunpack.c.h.b16 %v2911
  %v3278 = vunpack.c.l.b16 %v2912
  %v3279 = vunpack.c.h.b16 %v2912
  %v3280 = vunpack.c.l.b16 %v2913
  %v3281 = vunpack.c.h.b16 %v2913
  %v3282 = vunpack.c.l.b16 %v2914
  %v3283 = vunpack.c.h.b16 %v2914
  %v3284 = vunpack.c.l.b16 %v2915
  %v3285 = vunpack.c.h.b16 %v2915
  %v3286 = vunpack.c.l.b16 %v2916
  %v3287 = vunpack.c.h.b16 %v2916
  %v3288 = vunpack.c.l.b16 %v2917
  %v3289 = vunpack.c.h.b16 %v2917
  %v3290 = vunpack.c.l.b16 %v2918
  %v3291 = vunpack.c.h.b16 %v2918
  %v3292 = vunpack.c.l.b16 %v2919
  %v3293 = vunpack.c.h.b16 %v2919
  %v3294 = vunpack.c.l.b16 %v2920
  %v3295 = vunpack.c.h.b16 %v2920
  %v3296 = vunpack.c.l.b16 %v2921
  %v3297 = vunpack.c.h.b16 %v2921
  %v3298 = vunpack.c.l.b16 %v2922
  %v3299 = vunpack.c.h.b16 %v2922
  %v3300 = vunpack.c.l.b16 %v2923
  %v3301 = vunpack.c.h.b16 %v2923
  %v3302 = vunpack.c.l.b16 %v2924
  %v3303 = vunpack.c.h.b16 %v2924
  %v3304 = vunpack.c.l.b16 %v2925
  %v3305 = vunpack.c.h.b16 %v2925
  %v3306 = vunpack.c.l.b16 %v2926
  %v3307 = vunpack.c.h.b16 %v2926
  %v3308 = vunpack.c.l.b16 %v2927
  %v3309 = vunpack.c.h.b16 %v2927
  %v3310 = vunpack.c.l.b16 %v2928
  %v3311 = vunpack.c.h.b16 %v2928
  %v3312 = vunpack.c.l.b16 %v2929
  %v3313 = vunpack.c.h.b16 %v2929
  %v3314 = vpack.c.b16 %v3104, %v3090
  %v3315 = vpack.c.b16 %v3105, %v3091
  %v3316 = vpack.c.b16 %v3106, %v3092
  %v3317 = vpack.c.b16 %v3107, %v3093
  %v3318 = vpack.c.b16 %v3108, %v3094
  %v3319 = vpack.c.b16 %v3109, %v3095
  %v3320 = vpack.c.b16 %v3110, %v3096
  %v3321 = vpack.c.b16 %v3111, %v3097
  %v3322 = vpack.c.b16 %v3112, %v3098
  %v3323 = vpack.c.b16 %v3113, %v3099
  %v3324 = vpack.c.b16 %v3114, %v3100
  %v3325 = vpack.c.b16 %v3115, %v3101
  %v3326 = vpack.c.b16 %v3116, %v3102
  %v3327 = vpack.c.b16 %v3117, %v3103
  %v3328 = vpack.c.b16 %v3132, %v3118
  %v3329 = vpack.c.b16 %v3133, %v3119
  %v3330 = vpack.c.b16 %v3134, %v3120
  %v3331 = vpack.c.b16 %v3135, %v3121
  %v3332 = vpack.c.b16 %v3136, %v3122
  %v3333 = vpack.c.b16 %v3137, %v3123
  %v3334 = vpack.c.b16 %v3138, %v3124
  %v3335 = vpack.c.b16 %v3139, %v3125
  %v3336 = vpack.c.b16 %v3140, %v3126
  %v3337 = vpack.c.b16 %v3141, %v3127
  %v3338 = vpack.c.b16 %v3142, %v3128
  %v3339 = vpack.c.b16 %v3143, %v3129
  %v3340 = vpack.c.b16 %v3144, %v3130
  %v3341 = vpack.c.b16 %v3145, %v3131
  %v3342 = vpack.c.b16 %v3160, %v3146
  %v3343 = vpack.c.b16 %v3161, %v3147
  %v3344 = vpack.c.b16 %v3162, %v3148
  %v3345 = vpack.c.b16 %v3163, %v3149
  %v3346 = vpack.c.b16 %v3164, %v3150
  %v3347 = vpack.c.b16 %v3165, %v3151
  %v3348 = vpack.c.b16 %v3166, %v3152
  %v3349 = vpack.c.b16 %v3167, %v3153
  %v3350 = vpack.c.b16 %v3168, %v3154
  %v3351 = vpack.c.b16 %v3169, %v3155
  %v3352 = vpack.c.b16 %v3170, %v3156
  %v3353 = vpack.c.b16 %v3171, %v3157
  %v3354 = vpack.c.b16 %v3172, %v3158
  %v3355 = vpack.c.b16 %v3173, %v3159
  %v3356 = vpack.c.b16 %v3188, %v3174
  %v3357 = vpack.c.b16 %v3189, %v3175
  %v3358 = vpack.c.b16 %v3190, %v3176
  %v3359 = vpack.c.b16 %v3191, %v3177
  %v3360 = vpack.c.b16 %v3192, %v3178
  %v3361 = vpack.c.b16 %v3193, %v3179
  %v3362 = vpack.c.b16 %v3194, %v3180
  %v3363 = vpack.c.b16 %v3195, %v3181
  %v3364 = vpack.c.b16 %v3196, %v3182
  %v3365 = vpack.c.b16 %v3197, %v3183
  %v3366 = vpack.c.b16 %v3198, %v3184
  %v3367 = vpack.c.b16 %v3199, %v3185
  %v3368 = vpack.c.b16 %v3200, %v3186
  %v3369 = vpack.c.b16 %v3201, %v3187
  %v3370 = vpack.c.b16 %v3216, %v3202
  %v3371 = vpack.c.b16 %v3217, %v3203
  %v3372 = vpack.c.b16 %v3218, %v3204
  %v3373 = vpack.c.b16 %v3219, %v3205
  %v3374 = vpack.c.b16 %v3220, %v3206
  %v3375 = vpack.c.b16 %v3221, %v3207
  %v3376 = vpack.c.b16 %v3222, %v3208
  %v3377 = vpack.c.b16 %v3223, %v3209
  %v3378 = vpack.c.b16 %v3224, %v3210
  %v3379 = vpack.c.b16 %v3225, %v3211
  %v3380 = vpack.c.b16 %v3226, %v3212
  %v3381 = vpack.c.b16 %v3227, %v3213
  %v3382 = vpack.c.b16 %v3228, %v3214
  %v3383 = vpack.c.b16 %v3229, %v3215
  %v3384 = vpack.c.b16 %v3244, %v3230
  %v3385 = vpack.c.b16 %v3245, %v3231
  %v3386 = vpack.c.b16 %v3246, %v3232
  %v3387 = vpack.c.b16 %v3247, %v3233
  %v3388 = vpack.c.b16 %v3248, %v3234
  %v3389 = vpack.c.b16 %v3249, %v3235
  %v3390 = vpack.c.b16 %v3250, %v3236
  %v3391 = vpack.c.b16 %v3251, %v3237
  %v3392 = vpack.c.b16 %v3252, %v3238
  %v3393 = vpack.c.b16 %v3253, %v3239
  %v3394 = vpack.c.b16 %v3254, %v3240
  %v3395 = vpack.c.b16 %v3255, %v3241
  %v3396 = vpack.c.b16 %v3256, %v3242
  %v3397 = vpack.c.b16 %v3257, %v3243
  %v3398 = vpack.c.b16 %v3272, %v3258
  %v3399 = vpack.c.b16 %v3273, %v3259
  %v3400 = vpack.c.b16 %v3274, %v3260
  %v3401 = vpack.c.b16 %v3275, %v3261
  %v3402 = vpack.c.b16 %v3276, %v3262
  %v3403 = vpack.c.b16 %v3277, %v3263
  %v3404 = vpack.c.b16 %v3278, %v3264
  %v3405 = vpack.c.b16 %v3279, %v3265
  %v3406 = vpack.c.b16 %v3280, %v3266
  %v3407 = vpack.c.b16 %v3281, %v3267
  %v3408 = vpack.c.b16 %v3282, %v3268
  %v3409 = vpack.c.b16 %v3283, %v3269
  %v3410 = vpack.c.b16 %v3284, %v3270
  %v3411 = vpack.c.b16 %v3285, %v3271
  %v3412 = vpack.c.b16 %v3300, %v3286
  %v3413 = vpack.c.b16 %v3301, %v3287
  %v3414 = vpack.c.b16 %v3302, %v3288
  %v3415 = vpack.c.b16 %v3303, %v3289
  %v3416 = vpack.c.b16 %v3304, %v3290
  %v3417 = vpack.c.b16 %v3305, %v3291
  %v3418 = vpack.c.b16 %v3306, %v3292
  %v3419 = vpack.c.b16 %v3307, %v3293
  %v3420 = vpack.c.b16 %v3308, %v3294
  %v3421 = vpack.c.b16 %v3309, %v3295
  %v3422 = vpack.c.b16 %v3310, %v3296
  %v3423 = vpack.c.b16 %v3311, %v3297
  %v3424 = vpack.c.b16 %v3312, %v3298
  %v3425 = vpack.c.b16 %v3313, %v3299
  %3538 = vmatprep.subr.bf16.mxu0 %v3413
  %3539 = vmatpush1.bf16.msra.mxu0 %v3412
  %3540 = vmatprep.subr.bf16.mxu0 %v3399
  %3541 = vmatpush1.bf16.msra.mxu0 %v3398
  %3542 = vmatprep.subr.bf16.mxu0 %v3385
  %3543 = vmatpush1.bf16.msra.mxu0 %v3384
  %3544 = vmatprep.subr.bf16.mxu0 %v3371
  %3545 = vmatpush1.bf16.msra.mxu0 %v3370
  %3546 = vmatprep.subr.bf16.mxu0 %v3357
  %3547 = vmatpush1.bf16.msra.mxu0 %v3356
  %3548 = vmatprep.subr.bf16.mxu0 %v3343
  %3549 = vmatpush1.bf16.msra.mxu0 %v3342
  %3550 = vmatprep.subr.bf16.mxu0 %v3329
  %3551 = vmatpush1.bf16.msra.mxu0 %v3328
  %3552 = vmatprep.subr.bf16.mxu0 %v3315
  %3553 = vmatpush1.bf16.msra.mxu0 %v3314
  %3554 = vmatprep.subr.bf16.mxu0 0
  %3555 = vmatpush2.bf16.msra.mxu0 0
  %3556 = vmatprep.subr.bf16.mxu0 0
  %3557 = vmatpush2.bf16.msra.mxu0 0
  %3558 = vmatprep.subr.bf16.mxu0 0
  %3559 = vmatpush2.bf16.msra.mxu0 0
  %3560 = vmatprep.subr.bf16.mxu0 0
  %3561 = vmatpush2.bf16.msra.mxu0 0
  %3562 = vmatprep.subr.bf16.mxu0 0
  %3563 = vmatpush2.bf16.msra.mxu0 0
  %3564 = vmatprep.subr.bf16.mxu0 0
  %3565 = vmatpush2.bf16.msra.mxu0 0
  %3566 = vmatprep.subr.bf16.mxu0 0
  %3567 = vmatpush2.bf16.msra.mxu0 0
  %3568 = vmatprep.subr.bf16.mxu0 0
  %3569 = vmatpush2.bf16.msra.mxu0 0
  %3570 = vmatprep.mubr.bf16.mxu0 0
  %3571 = vmatmul.mubr.bf16.gmra.mxu0 %v2962
  %v3572 = vpop.f32.mrf.mxu0
  %v3573 = vadd.f32 0.0, %v3572
  %v3574 = vpop.f32.mrf.mxu0
  %v3575 = vadd.f32 0.0, %v3574
  %v3576 = vpop.f32.mrf.mxu0
  %v3577 = vadd.f32 0.0, %v3576
  %v3578 = vpop.f32.mrf.mxu0
  %v3579 = vadd.f32 0.0, %v3578
  %3580 = vmatprep.mubr.bf16.mxu0 0
  %3581 = vmatmul.mubr.bf16.gmra.mxu0 %v2963
  %v3582 = vpop.f32.mrf.mxu0
  %v3583 = vadd.f32 0.0, %v3582
  %v3584 = vpop.f32.mrf.mxu0
  %v3585 = vadd.f32 0.0, %v3584
  %v3586 = vpop.f32.mrf.mxu0
  %v3587 = vadd.f32 0.0, %v3586
  %v3588 = vpop.f32.mrf.mxu0
  %v3589 = vadd.f32 0.0, %v3588
  %3590 = vmatprep.mubr.bf16.mxu0 0
  %3591 = vmatmul.mubr.bf16.gmra.mxu0 %v2964
  %v3592 = vpop.f32.mrf.mxu0
  %v3593 = vadd.f32 0.0, %v3592
  %v3594 = vpop.f32.mrf.mxu0
  %v3595 = vadd.f32 0.0, %v3594
  %v3596 = vpop.f32.mrf.mxu0
  %v3597 = vadd.f32 0.0, %v3596
  %v3598 = vpop.f32.mrf.mxu0
  %v3599 = vadd.f32 0.0, %v3598
  %3600 = vmatprep.mubr.bf16.mxu0 0
  %3601 = vmatmul.mubr.bf16.gmra.mxu0 %v2965
  %v3602 = vpop.f32.mrf.mxu0
  %v3603 = vadd.f32 0.0, %v3602
  %v3604 = vpop.f32.mrf.mxu0
  %v3605 = vadd.f32 0.0, %v3604
  %v3606 = vpop.f32.mrf.mxu0
  %v3607 = vadd.f32 0.0, %v3606
  %v3608 = vpop.f32.mrf.mxu0
  %v3609 = vadd.f32 0.0, %v3608
  %3610 = vmatprep.mubr.bf16.mxu0 0
  %3611 = vmatmul.mubr.bf16.gmra.mxu0 %v2966
  %v3612 = vpop.f32.mrf.mxu0
  %v3613 = vadd.f32 0.0, %v3612
  %v3614 = vpop.f32.mrf.mxu0
  %v3615 = vadd.f32 0.0, %v3614
  %v3616 = vpop.f32.mrf.mxu0
  %v3617 = vadd.f32 0.0, %v3616
  %v3618 = vpop.f32.mrf.mxu0
  %v3619 = vadd.f32 0.0, %v3618
  %3620 = vmatprep.mubr.bf16.mxu0 0
  %3621 = vmatmul.mubr.bf16.gmra.mxu0 %v2967
  %v3622 = vpop.f32.mrf.mxu0
  %v3623 = vadd.f32 0.0, %v3622
  %v3624 = vpop.f32.mrf.mxu0
  %v3625 = vadd.f32 0.0, %v3624
  %v3626 = vpop.f32.mrf.mxu0
  %v3627 = vadd.f32 0.0, %v3626
  %v3628 = vpop.f32.mrf.mxu0
  %v3629 = vadd.f32 0.0, %v3628
  %3630 = vmatprep.mubr.bf16.mxu0 0
  %3631 = vmatmul.mubr.bf16.gmra.mxu0 %v2968
  %v3632 = vpop.f32.mrf.mxu0
  %v3633 = vadd.f32 0.0, %v3632
  %v3634 = vpop.f32.mrf.mxu0
  %v3635 = vadd.f32 0.0, %v3634
  %v3636 = vpop.f32.mrf.mxu0
  %v3637 = vadd.f32 0.0, %v3636
  %v3638 = vpop.f32.mrf.mxu0
  %v3639 = vadd.f32 0.0, %v3638
  %3640 = vmatprep.mubr.bf16.mxu0 0
  %3641 = vmatmul.mubr.bf16.gmra.mxu0 %v2969
  %v3642 = vpop.f32.mrf.mxu0
  %v3643 = vadd.f32 0.0, %v3642
  %v3644 = vpop.f32.mrf.mxu0
  %v3645 = vadd.f32 0.0, %v3644
  %v3646 = vpop.f32.mrf.mxu0
  %v3647 = vadd.f32 0.0, %v3646
  %v3648 = vpop.f32.mrf.mxu0
  %v3649 = vadd.f32 0.0, %v3648
  %3650 = vdwg.mxu0
  %3651 = vmatprep.subr.bf16.mxu0 %v3415
  %3652 = vmatpush1.bf16.msra.mxu0 %v3414
  %3653 = vmatprep.subr.bf16.mxu0 %v3401
  %3654 = vmatpush1.bf16.msra.mxu0 %v3400
  %3655 = vmatprep.subr.bf16.mxu0 %v3387
  %3656 = vmatpush1.bf16.msra.mxu0 %v3386
  %3657 = vmatprep.subr.bf16.mxu0 %v3373
  %3658 = vmatpush1.bf16.msra.mxu0 %v3372
  %3659 = vmatprep.subr.bf16.mxu0 %v3359
  %3660 = vmatpush1.bf16.msra.mxu0 %v3358
  %3661 = vmatprep.subr.bf16.mxu0 %v3345
  %3662 = vmatpush1.bf16.msra.mxu0 %v3344
  %3663 = vmatprep.subr.bf16.mxu0 %v3331
  %3664 = vmatpush1.bf16.msra.mxu0 %v3330
  %3665 = vmatprep.subr.bf16.mxu0 %v3317
  %3666 = vmatpush1.bf16.msra.mxu0 %v3316
  %3667 = vmatprep.subr.bf16.mxu0 0
  %3668 = vmatpush2.bf16.msra.mxu0 0
  %3669 = vmatprep.subr.bf16.mxu0 0
  %3670 = vmatpush2.bf16.msra.mxu0 0
  %3671 = vmatprep.subr.bf16.mxu0 0
  %3672 = vmatpush2.bf16.msra.mxu0 0
  %3673 = vmatprep.subr.bf16.mxu0 0
  %3674 = vmatpush2.bf16.msra.mxu0 0
  %3675 = vmatprep.subr.bf16.mxu0 0
  %3676 = vmatpush2.bf16.msra.mxu0 0
  %3677 = vmatprep.subr.bf16.mxu0 0
  %3678 = vmatpush2.bf16.msra.mxu0 0
  %3679 = vmatprep.subr.bf16.mxu0 0
  %3680 = vmatpush2.bf16.msra.mxu0 0
  %3681 = vmatprep.subr.bf16.mxu0 0
  %3682 = vmatpush2.bf16.msra.mxu0 0
  %3683 = vmatprep.mubr.bf16.mxu0 0
  %3684 = vmatmul.mubr.bf16.gmra.mxu0 %v2962
  %v3685 = vpop.f32.mrf.mxu0
  %v3686 = vadd.f32 0.0, %v3685
  %v3687 = vpop.f32.mrf.mxu0
  %v3688 = vadd.f32 0.0, %v3687
  %v3689 = vpop.f32.mrf.mxu0
  %v3690 = vadd.f32 0.0, %v3689
  %v3691 = vpop.f32.mrf.mxu0
  %v3692 = vadd.f32 0.0, %v3691
  %3693 = vmatprep.mubr.bf16.mxu0 0
  %3694 = vmatmul.mubr.bf16.gmra.mxu0 %v2963
  %v3695 = vpop.f32.mrf.mxu0
  %v3696 = vadd.f32 0.0, %v3695
  %v3697 = vpop.f32.mrf.mxu0
  %v3698 = vadd.f32 0.0, %v3697
  %v3699 = vpop.f32.mrf.mxu0
  %v3700 = vadd.f32 0.0, %v3699
  %v3701 = vpop.f32.mrf.mxu0
  %v3702 = vadd.f32 0.0, %v3701
  %3703 = vmatprep.mubr.bf16.mxu0 0
  %3704 = vmatmul.mubr.bf16.gmra.mxu0 %v2964
  %v3705 = vpop.f32.mrf.mxu0
  %v3706 = vadd.f32 0.0, %v3705
  %v3707 = vpop.f32.mrf.mxu0
  %v3708 = vadd.f32 0.0, %v3707
  %v3709 = vpop.f32.mrf.mxu0
  %v3710 = vadd.f32 0.0, %v3709
  %v3711 = vpop.f32.mrf.mxu0
  %v3712 = vadd.f32 0.0, %v3711
  %3713 = vmatprep.mubr.bf16.mxu0 0
  %3714 = vmatmul.mubr.bf16.gmra.mxu0 %v2965
  %v3715 = vpop.f32.mrf.mxu0
  %v3716 = vadd.f32 0.0, %v3715
  %v3717 = vpop.f32.mrf.mxu0
  %v3718 = vadd.f32 0.0, %v3717
  %v3719 = vpop.f32.mrf.mxu0
  %v3720 = vadd.f32 0.0, %v3719
  %v3721 = vpop.f32.mrf.mxu0
  %v3722 = vadd.f32 0.0, %v3721
  %3723 = vmatprep.mubr.bf16.mxu0 0
  %3724 = vmatmul.mubr.bf16.gmra.mxu0 %v2966
  %v3725 = vpop.f32.mrf.mxu0
  %v3726 = vadd.f32 0.0, %v3725
  %v3727 = vpop.f32.mrf.mxu0
  %v3728 = vadd.f32 0.0, %v3727
  %v3729 = vpop.f32.mrf.mxu0
  %v3730 = vadd.f32 0.0, %v3729
  %v3731 = vpop.f32.mrf.mxu0
  %v3732 = vadd.f32 0.0, %v3731
  %3733 = vmatprep.mubr.bf16.mxu0 0
  %3734 = vmatmul.mubr.bf16.gmra.mxu0 %v2967
  %v3735 = vpop.f32.mrf.mxu0
  %v3736 = vadd.f32 0.0, %v3735
  %v3737 = vpop.f32.mrf.mxu0
  %v3738 = vadd.f32 0.0, %v3737
  %v3739 = vpop.f32.mrf.mxu0
  %v3740 = vadd.f32 0.0, %v3739
  %v3741 = vpop.f32.mrf.mxu0
  %v3742 = vadd.f32 0.0, %v3741
  %3743 = vmatprep.mubr.bf16.mxu0 0
  %3744 = vmatmul.mubr.bf16.gmra.mxu0 %v2968
  %v3745 = vpop.f32.mrf.mxu0
  %v3746 = vadd.f32 0.0, %v3745
  %v3747 = vpop.f32.mrf.mxu0
  %v3748 = vadd.f32 0.0, %v3747
  %v3749 = vpop.f32.mrf.mxu0
  %v3750 = vadd.f32 0.0, %v3749
  %v3751 = vpop.f32.mrf.mxu0
  %v3752 = vadd.f32 0.0, %v3751
  %3753 = vmatprep.mubr.bf16.mxu0 0
  %3754 = vmatmul.mubr.bf16.gmra.mxu0 %v2969
  %v3755 = vpop.f32.mrf.mxu0
  %v3756 = vadd.f32 0.0, %v3755
  %v3757 = vpop.f32.mrf.mxu0
  %v3758 = vadd.f32 0.0, %v3757
  %v3759 = vpop.f32.mrf.mxu0
  %v3760 = vadd.f32 0.0, %v3759
  %v3761 = vpop.f32.mrf.mxu0
  %v3762 = vadd.f32 0.0, %v3761
  %3763 = vdwg.mxu0
  %3764 = vmatprep.subr.bf16.mxu0 %v3417
  %3765 = vmatpush1.bf16.msra.mxu0 %v3416
  %3766 = vmatprep.subr.bf16.mxu0 %v3403
  %3767 = vmatpush1.bf16.msra.mxu0 %v3402
  %3768 = vmatprep.subr.bf16.mxu0 %v3389
  %3769 = vmatpush1.bf16.msra.mxu0 %v3388
  %3770 = vmatprep.subr.bf16.mxu0 %v3375
  %3771 = vmatpush1.bf16.msra.mxu0 %v3374
  %3772 = vmatprep.subr.bf16.mxu0 %v3361
  %3773 = vmatpush1.bf16.msra.mxu0 %v3360
  %3774 = vmatprep.subr.bf16.mxu0 %v3347
  %3775 = vmatpush1.bf16.msra.mxu0 %v3346
  %3776 = vmatprep.subr.bf16.mxu0 %v3333
  %3777 = vmatpush1.bf16.msra.mxu0 %v3332
  %3778 = vmatprep.subr.bf16.mxu0 %v3319
  %3779 = vmatpush1.bf16.msra.mxu0 %v3318
  %3780 = vmatprep.subr.bf16.mxu0 0
  %3781 = vmatpush2.bf16.msra.mxu0 0
  %3782 = vmatprep.subr.bf16.mxu0 0
  %3783 = vmatpush2.bf16.msra.mxu0 0
  %3784 = vmatprep.subr.bf16.mxu0 0
  %3785 = vmatpush2.bf16.msra.mxu0 0
  %3786 = vmatprep.subr.bf16.mxu0 0
  %3787 = vmatpush2.bf16.msra.mxu0 0
  %3788 = vmatprep.subr.bf16.mxu0 0
  %3789 = vmatpush2.bf16.msra.mxu0 0
  %3790 = vmatprep.subr.bf16.mxu0 0
  %3791 = vmatpush2.bf16.msra.mxu0 0
  %3792 = vmatprep.subr.bf16.mxu0 0
  %3793 = vmatpush2.bf16.msra.mxu0 0
  %3794 = vmatprep.subr.bf16.mxu0 0
  %3795 = vmatpush2.bf16.msra.mxu0 0
  %3796 = vmatprep.mubr.bf16.mxu0 0
  %3797 = vmatmul.mubr.bf16.gmra.mxu0 %v2962
  %v3798 = vpop.f32.mrf.mxu0
  %v3799 = vadd.f32 0.0, %v3798
  %v3800 = vpop.f32.mrf.mxu0
  %v3801 = vadd.f32 0.0, %v3800
  %v3802 = vpop.f32.mrf.mxu0
  %v3803 = vadd.f32 0.0, %v3802
  %v3804 = vpop.f32.mrf.mxu0
  %v3805 = vadd.f32 0.0, %v3804
  %3806 = vmatprep.mubr.bf16.mxu0 0
  %3807 = vmatmul.mubr.bf16.gmra.mxu0 %v2963
  %v3808 = vpop.f32.mrf.mxu0
  %v3809 = vadd.f32 0.0, %v3808
  %v3810 = vpop.f32.mrf.mxu0
  %v3811 = vadd.f32 0.0, %v3810
  %v3812 = vpop.f32.mrf.mxu0
  %v3813 = vadd.f32 0.0, %v3812
  %v3814 = vpop.f32.mrf.mxu0
  %v3815 = vadd.f32 0.0, %v3814
  %3816 = vmatprep.mubr.bf16.mxu0 0
  %3817 = vmatmul.mubr.bf16.gmra.mxu0 %v2964
  %v3818 = vpop.f32.mrf.mxu0
  %v3819 = vadd.f32 0.0, %v3818
  %v3820 = vpop.f32.mrf.mxu0
  %v3821 = vadd.f32 0.0, %v3820
  %v3822 = vpop.f32.mrf.mxu0
  %v3823 = vadd.f32 0.0, %v3822
  %v3824 = vpop.f32.mrf.mxu0
  %v3825 = vadd.f32 0.0, %v3824
  %3826 = vmatprep.mubr.bf16.mxu0 0
  %3827 = vmatmul.mubr.bf16.gmra.mxu0 %v2965
  %v3828 = vpop.f32.mrf.mxu0
  %v3829 = vadd.f32 0.0, %v3828
  %v3830 = vpop.f32.mrf.mxu0
  %v3831 = vadd.f32 0.0, %v3830
  %v3832 = vpop.f32.mrf.mxu0
  %v3833 = vadd.f32 0.0, %v3832
  %v3834 = vpop.f32.mrf.mxu0
  %v3835 = vadd.f32 0.0, %v3834
  %3836 = vmatprep.mubr.bf16.mxu0 0
  %3837 = vmatmul.mubr.bf16.gmra.mxu0 %v2966
  %v3838 = vpop.f32.mrf.mxu0
  %v3839 = vadd.f32 0.0, %v3838
  %v3840 = vpop.f32.mrf.mxu0
  %v3841 = vadd.f32 0.0, %v3840
  %v3842 = vpop.f32.mrf.mxu0
  %v3843 = vadd.f32 0.0, %v3842
  %v3844 = vpop.f32.mrf.mxu0
  %v3845 = vadd.f32 0.0, %v3844
  %3846 = vmatprep.mubr.bf16.mxu0 0
  %3847 = vmatmul.mubr.bf16.gmra.mxu0 %v2967
  %v3848 = vpop.f32.mrf.mxu0
  %v3849 = vadd.f32 0.0, %v3848
  %v3850 = vpop.f32.mrf.mxu0
  %v3851 = vadd.f32 0.0, %v3850
  %v3852 = vpop.f32.mrf.mxu0
  %v3853 = vadd.f32 0.0, %v3852
  %v3854 = vpop.f32.mrf.mxu0
  %v3855 = vadd.f32 0.0, %v3854
  %3856 = vmatprep.mubr.bf16.mxu0 0
  %3857 = vmatmul.mubr.bf16.gmra.mxu0 %v2968
  %v3858 = vpop.f32.mrf.mxu0
  %v3859 = vadd.f32 0.0, %v3858
  %v3860 = vpop.f32.mrf.mxu0
  %v3861 = vadd.f32 0.0, %v3860
  %v3862 = vpop.f32.mrf.mxu0
  %v3863 = vadd.f32 0.0, %v3862
  %v3864 = vpop.f32.mrf.mxu0
  %v3865 = vadd.f32 0.0, %v3864
  %3866 = vmatprep.mubr.bf16.mxu0 0
  %3867 = vmatmul.mubr.bf16.gmra.mxu0 %v2969
  %v3868 = vpop.f32.mrf.mxu0
  %v3869 = vadd.f32 0.0, %v3868
  %v3870 = vpop.f32.mrf.mxu0
  %v3871 = vadd.f32 0.0, %v3870
  %v3872 = vpop.f32.mrf.mxu0
  %v3873 = vadd.f32 0.0, %v3872
  %v3874 = vpop.f32.mrf.mxu0
  %v3875 = vadd.f32 0.0, %v3874
  %3876 = vdwg.mxu0
  %3877 = vmatprep.subr.bf16.mxu0 %v3419
  %3878 = vmatpush1.bf16.msra.mxu0 %v3418
  %3879 = vmatprep.subr.bf16.mxu0 %v3405
  %3880 = vmatpush1.bf16.msra.mxu0 %v3404
  %3881 = vmatprep.subr.bf16.mxu0 %v3391
  %3882 = vmatpush1.bf16.msra.mxu0 %v3390
  %3883 = vmatprep.subr.bf16.mxu0 %v3377
  %3884 = vmatpush1.bf16.msra.mxu0 %v3376
  %3885 = vmatprep.subr.bf16.mxu0 %v3363
  %3886 = vmatpush1.bf16.msra.mxu0 %v3362
  %3887 = vmatprep.subr.bf16.mxu0 %v3349
  %3888 = vmatpush1.bf16.msra.mxu0 %v3348
  %3889 = vmatprep.subr.bf16.mxu0 %v3335
  %3890 = vmatpush1.bf16.msra.mxu0 %v3334
  %3891 = vmatprep.subr.bf16.mxu0 %v3321
  %3892 = vmatpush1.bf16.msra.mxu0 %v3320
  %3893 = vmatprep.subr.bf16.mxu0 0
  %3894 = vmatpush2.bf16.msra.mxu0 0
  %3895 = vmatprep.subr.bf16.mxu0 0
  %3896 = vmatpush2.bf16.msra.mxu0 0
  %3897 = vmatprep.subr.bf16.mxu0 0
  %3898 = vmatpush2.bf16.msra.mxu0 0
  %3899 = vmatprep.subr.bf16.mxu0 0
  %3900 = vmatpush2.bf16.msra.mxu0 0
  %3901 = vmatprep.subr.bf16.mxu0 0
  %3902 = vmatpush2.bf16.msra.mxu0 0
  %3903 = vmatprep.subr.bf16.mxu0 0
  %3904 = vmatpush2.bf16.msra.mxu0 0
  %3905 = vmatprep.subr.bf16.mxu0 0
  %3906 = vmatpush2.bf16.msra.mxu0 0
  %3907 = vmatprep.subr.bf16.mxu0 0
  %3908 = vmatpush2.bf16.msra.mxu0 0
  %3909 = vmatprep.mubr.bf16.mxu0 0
  %3910 = vmatmul.mubr.bf16.gmra.mxu0 %v2962
  %v3911 = vpop.f32.mrf.mxu0
  %v3912 = vadd.f32 0.0, %v3911
  %v3913 = vpop.f32.mrf.mxu0
  %v3914 = vadd.f32 0.0, %v3913
  %v3915 = vpop.f32.mrf.mxu0
  %v3916 = vadd.f32 0.0, %v3915
  %v3917 = vpop.f32.mrf.mxu0
  %v3918 = vadd.f32 0.0, %v3917
  %3919 = vmatprep.mubr.bf16.mxu0 0
  %3920 = vmatmul.mubr.bf16.gmra.mxu0 %v2963
  %v3921 = vpop.f32.mrf.mxu0
  %v3922 = vadd.f32 0.0, %v3921
  %v3923 = vpop.f32.mrf.mxu0
  %v3924 = vadd.f32 0.0, %v3923
  %v3925 = vpop.f32.mrf.mxu0
  %v3926 = vadd.f32 0.0, %v3925
  %v3927 = vpop.f32.mrf.mxu0
  %v3928 = vadd.f32 0.0, %v3927
  %3929 = vmatprep.mubr.bf16.mxu0 0
  %3930 = vmatmul.mubr.bf16.gmra.mxu0 %v2964
  %v3931 = vpop.f32.mrf.mxu0
  %v3932 = vadd.f32 0.0, %v3931
  %v3933 = vpop.f32.mrf.mxu0
  %v3934 = vadd.f32 0.0, %v3933
  %v3935 = vpop.f32.mrf.mxu0
  %v3936 = vadd.f32 0.0, %v3935
  %v3937 = vpop.f32.mrf.mxu0
  %v3938 = vadd.f32 0.0, %v3937
  %3939 = vmatprep.mubr.bf16.mxu0 0
  %3940 = vmatmul.mubr.bf16.gmra.mxu0 %v2965
  %v3941 = vpop.f32.mrf.mxu0
  %v3942 = vadd.f32 0.0, %v3941
  %v3943 = vpop.f32.mrf.mxu0
  %v3944 = vadd.f32 0.0, %v3943
  %v3945 = vpop.f32.mrf.mxu0
  %v3946 = vadd.f32 0.0, %v3945
  %v3947 = vpop.f32.mrf.mxu0
  %v3948 = vadd.f32 0.0, %v3947
  %3949 = vmatprep.mubr.bf16.mxu0 0
  %3950 = vmatmul.mubr.bf16.gmra.mxu0 %v2966
  %v3951 = vpop.f32.mrf.mxu0
  %v3952 = vadd.f32 0.0, %v3951
  %v3953 = vpop.f32.mrf.mxu0
  %v3954 = vadd.f32 0.0, %v3953
  %v3955 = vpop.f32.mrf.mxu0
  %v3956 = vadd.f32 0.0, %v3955
  %v3957 = vpop.f32.mrf.mxu0
  %v3958 = vadd.f32 0.0, %v3957
  %3959 = vmatprep.mubr.bf16.mxu0 0
  %3960 = vmatmul.mubr.bf16.gmra.mxu0 %v2967
  %v3961 = vpop.f32.mrf.mxu0
  %v3962 = vadd.f32 0.0, %v3961
  %v3963 = vpop.f32.mrf.mxu0
  %v3964 = vadd.f32 0.0, %v3963
  %v3965 = vpop.f32.mrf.mxu0
  %v3966 = vadd.f32 0.0, %v3965
  %v3967 = vpop.f32.mrf.mxu0
  %v3968 = vadd.f32 0.0, %v3967
  %3969 = vmatprep.mubr.bf16.mxu0 0
  %3970 = vmatmul.mubr.bf16.gmra.mxu0 %v2968
  %v3971 = vpop.f32.mrf.mxu0
  %v3972 = vadd.f32 0.0, %v3971
  %v3973 = vpop.f32.mrf.mxu0
  %v3974 = vadd.f32 0.0, %v3973
  %v3975 = vpop.f32.mrf.mxu0
  %v3976 = vadd.f32 0.0, %v3975
  %v3977 = vpop.f32.mrf.mxu0
  %v3978 = vadd.f32 0.0, %v3977
  %3979 = vmatprep.mubr.bf16.mxu0 0
  %3980 = vmatmul.mubr.bf16.gmra.mxu0 %v2969
  %v3981 = vpop.f32.mrf.mxu0
  %v3982 = vadd.f32 0.0, %v3981
  %v3983 = vpop.f32.mrf.mxu0
  %v3984 = vadd.f32 0.0, %v3983
  %v3985 = vpop.f32.mrf.mxu0
  %v3986 = vadd.f32 0.0, %v3985
  %v3987 = vpop.f32.mrf.mxu0
  %v3988 = vadd.f32 0.0, %v3987
  %3989 = vdwg.mxu0
  %3990 = vmatprep.subr.bf16.mxu0 %v3421
  %3991 = vmatpush1.bf16.msra.mxu0 %v3420
  %3992 = vmatprep.subr.bf16.mxu0 %v3407
  %3993 = vmatpush1.bf16.msra.mxu0 %v3406
  %3994 = vmatprep.subr.bf16.mxu0 %v3393
  %3995 = vmatpush1.bf16.msra.mxu0 %v3392
  %3996 = vmatprep.subr.bf16.mxu0 %v3379
  %3997 = vmatpush1.bf16.msra.mxu0 %v3378
  %3998 = vmatprep.subr.bf16.mxu0 %v3365
  %3999 = vmatpush1.bf16.msra.mxu0 %v3364
  %4000 = vmatprep.subr.bf16.mxu0 %v3351
  %4001 = vmatpush1.bf16.msra.mxu0 %v3350
  %4002 = vmatprep.subr.bf16.mxu0 %v3337
  %4003 = vmatpush1.bf16.msra.mxu0 %v3336
  %4004 = vmatprep.subr.bf16.mxu0 %v3323
  %4005 = vmatpush1.bf16.msra.mxu0 %v3322
  %4006 = vmatprep.subr.bf16.mxu0 0
  %4007 = vmatpush2.bf16.msra.mxu0 0
  %4008 = vmatprep.subr.bf16.mxu0 0
  %4009 = vmatpush2.bf16.msra.mxu0 0
  %4010 = vmatprep.subr.bf16.mxu0 0
  %4011 = vmatpush2.bf16.msra.mxu0 0
  %4012 = vmatprep.subr.bf16.mxu0 0
  %4013 = vmatpush2.bf16.msra.mxu0 0
  %4014 = vmatprep.subr.bf16.mxu0 0
  %4015 = vmatpush2.bf16.msra.mxu0 0
  %4016 = vmatprep.subr.bf16.mxu0 0
  %4017 = vmatpush2.bf16.msra.mxu0 0
  %4018 = vmatprep.subr.bf16.mxu0 0
  %4019 = vmatpush2.bf16.msra.mxu0 0
  %4020 = vmatprep.subr.bf16.mxu0 0
  %4021 = vmatpush2.bf16.msra.mxu0 0
  %4022 = vmatprep.mubr.bf16.mxu0 0
  %4023 = vmatmul.mubr.bf16.gmra.mxu0 %v2962
  %v4024 = vpop.f32.mrf.mxu0
  %v4025 = vadd.f32 0.0, %v4024
  %v4026 = vpop.f32.mrf.mxu0
  %v4027 = vadd.f32 0.0, %v4026
  %v4028 = vpop.f32.mrf.mxu0
  %v4029 = vadd.f32 0.0, %v4028
  %v4030 = vpop.f32.mrf.mxu0
  %v4031 = vadd.f32 0.0, %v4030
  %4032 = vmatprep.mubr.bf16.mxu0 0
  %4033 = vmatmul.mubr.bf16.gmra.mxu0 %v2963
  %v4034 = vpop.f32.mrf.mxu0
  %v4035 = vadd.f32 0.0, %v4034
  %v4036 = vpop.f32.mrf.mxu0
  %v4037 = vadd.f32 0.0, %v4036
  %v4038 = vpop.f32.mrf.mxu0
  %v4039 = vadd.f32 0.0, %v4038
  %v4040 = vpop.f32.mrf.mxu0
  %v4041 = vadd.f32 0.0, %v4040
  %4042 = vmatprep.mubr.bf16.mxu0 0
  %4043 = vmatmul.mubr.bf16.gmra.mxu0 %v2964
  %v4044 = vpop.f32.mrf.mxu0
  %v4045 = vadd.f32 0.0, %v4044
  %v4046 = vpop.f32.mrf.mxu0
  %v4047 = vadd.f32 0.0, %v4046
  %v4048 = vpop.f32.mrf.mxu0
  %v4049 = vadd.f32 0.0, %v4048
  %v4050 = vpop.f32.mrf.mxu0
  %v4051 = vadd.f32 0.0, %v4050
  %4052 = vmatprep.mubr.bf16.mxu0 0
  %4053 = vmatmul.mubr.bf16.gmra.mxu0 %v2965
  %v4054 = vpop.f32.mrf.mxu0
  %v4055 = vadd.f32 0.0, %v4054
  %v4056 = vpop.f32.mrf.mxu0
  %v4057 = vadd.f32 0.0, %v4056
  %v4058 = vpop.f32.mrf.mxu0
  %v4059 = vadd.f32 0.0, %v4058
  %v4060 = vpop.f32.mrf.mxu0
  %v4061 = vadd.f32 0.0, %v4060
  %4062 = vmatprep.mubr.bf16.mxu0 0
  %4063 = vmatmul.mubr.bf16.gmra.mxu0 %v2966
  %v4064 = vpop.f32.mrf.mxu0
  %v4065 = vadd.f32 0.0, %v4064
  %v4066 = vpop.f32.mrf.mxu0
  %v4067 = vadd.f32 0.0, %v4066
  %v4068 = vpop.f32.mrf.mxu0
  %v4069 = vadd.f32 0.0, %v4068
  %v4070 = vpop.f32.mrf.mxu0
  %v4071 = vadd.f32 0.0, %v4070
  %4072 = vmatprep.mubr.bf16.mxu0 0
  %4073 = vmatmul.mubr.bf16.gmra.mxu0 %v2967
  %v4074 = vpop.f32.mrf.mxu0
  %v4075 = vadd.f32 0.0, %v4074
  %v4076 = vpop.f32.mrf.mxu0
  %v4077 = vadd.f32 0.0, %v4076
  %v4078 = vpop.f32.mrf.mxu0
  %v4079 = vadd.f32 0.0, %v4078
  %v4080 = vpop.f32.mrf.mxu0
  %v4081 = vadd.f32 0.0, %v4080
  %4082 = vmatprep.mubr.bf16.mxu0 0
  %4083 = vmatmul.mubr.bf16.gmra.mxu0 %v2968
  %v4084 = vpop.f32.mrf.mxu0
  %v4085 = vadd.f32 0.0, %v4084
  %v4086 = vpop.f32.mrf.mxu0
  %v4087 = vadd.f32 0.0, %v4086
  %v4088 = vpop.f32.mrf.mxu0
  %v4089 = vadd.f32 0.0, %v4088
  %v4090 = vpop.f32.mrf.mxu0
  %v4091 = vadd.f32 0.0, %v4090
  %4092 = vmatprep.mubr.bf16.mxu0 0
  %4093 = vmatmul.mubr.bf16.gmra.mxu0 %v2969
  %v4094 = vpop.f32.mrf.mxu0
  %v4095 = vadd.f32 0.0, %v4094
  %v4096 = vpop.f32.mrf.mxu0
  %v4097 = vadd.f32 0.0, %v4096
  %v4098 = vpop.f32.mrf.mxu0
  %v4099 = vadd.f32 0.0, %v4098
  %v4100 = vpop.f32.mrf.mxu0
  %v4101 = vadd.f32 0.0, %v4100
  %4102 = vdwg.mxu0
  %4103 = vmatprep.subr.bf16.mxu0 %v3423
  %4104 = vmatpush1.bf16.msra.mxu0 %v3422
  %4105 = vmatprep.subr.bf16.mxu0 %v3409
  %4106 = vmatpush1.bf16.msra.mxu0 %v3408
  %4107 = vmatprep.subr.bf16.mxu0 %v3395
  %4108 = vmatpush1.bf16.msra.mxu0 %v3394
  %4109 = vmatprep.subr.bf16.mxu0 %v3381
  %4110 = vmatpush1.bf16.msra.mxu0 %v3380
  %4111 = vmatprep.subr.bf16.mxu0 %v3367
  %4112 = vmatpush1.bf16.msra.mxu0 %v3366
  %4113 = vmatprep.subr.bf16.mxu0 %v3353
  %4114 = vmatpush1.bf16.msra.mxu0 %v3352
  %4115 = vmatprep.subr.bf16.mxu0 %v3339
  %4116 = vmatpush1.bf16.msra.mxu0 %v3338
  %4117 = vmatprep.subr.bf16.mxu0 %v3325
  %4118 = vmatpush1.bf16.msra.mxu0 %v3324
  %4119 = vmatprep.subr.bf16.mxu0 0
  %4120 = vmatpush2.bf16.msra.mxu0 0
  %4121 = vmatprep.subr.bf16.mxu0 0
  %4122 = vmatpush2.bf16.msra.mxu0 0
  %4123 = vmatprep.subr.bf16.mxu0 0
  %4124 = vmatpush2.bf16.msra.mxu0 0
  %4125 = vmatprep.subr.bf16.mxu0 0
  %4126 = vmatpush2.bf16.msra.mxu0 0
  %4127 = vmatprep.subr.bf16.mxu0 0
  %4128 = vmatpush2.bf16.msra.mxu0 0
  %4129 = vmatprep.subr.bf16.mxu0 0
  %4130 = vmatpush2.bf16.msra.mxu0 0
  %4131 = vmatprep.subr.bf16.mxu0 0
  %4132 = vmatpush2.bf16.msra.mxu0 0
  %4133 = vmatprep.subr.bf16.mxu0 0
  %4134 = vmatpush2.bf16.msra.mxu0 0
  %4135 = vmatprep.mubr.bf16.mxu0 0
  %4136 = vmatmul.mubr.bf16.gmra.mxu0 %v2962
  %v4137 = vpop.f32.mrf.mxu0
  %v4138 = vadd.f32 0.0, %v4137
  %v4139 = vpop.f32.mrf.mxu0
  %v4140 = vadd.f32 0.0, %v4139
  %v4141 = vpop.f32.mrf.mxu0
  %v4142 = vadd.f32 0.0, %v4141
  %v4143 = vpop.f32.mrf.mxu0
  %v4144 = vadd.f32 0.0, %v4143
  %4145 = vmatprep.mubr.bf16.mxu0 0
  %4146 = vmatmul.mubr.bf16.gmra.mxu0 %v2963
  %v4147 = vpop.f32.mrf.mxu0
  %v4148 = vadd.f32 0.0, %v4147
  %v4149 = vpop.f32.mrf.mxu0
  %v4150 = vadd.f32 0.0, %v4149
  %v4151 = vpop.f32.mrf.mxu0
  %v4152 = vadd.f32 0.0, %v4151
  %v4153 = vpop.f32.mrf.mxu0
  %v4154 = vadd.f32 0.0, %v4153
  %4155 = vmatprep.mubr.bf16.mxu0 0
  %4156 = vmatmul.mubr.bf16.gmra.mxu0 %v2964
  %v4157 = vpop.f32.mrf.mxu0
  %v4158 = vadd.f32 0.0, %v4157
  %v4159 = vpop.f32.mrf.mxu0
  %v4160 = vadd.f32 0.0, %v4159
  %v4161 = vpop.f32.mrf.mxu0
  %v4162 = vadd.f32 0.0, %v4161
  %v4163 = vpop.f32.mrf.mxu0
  %v4164 = vadd.f32 0.0, %v4163
  %4165 = vmatprep.mubr.bf16.mxu0 0
  %4166 = vmatmul.mubr.bf16.gmra.mxu0 %v2965
  %v4167 = vpop.f32.mrf.mxu0
  %v4168 = vadd.f32 0.0, %v4167
  %v4169 = vpop.f32.mrf.mxu0
  %v4170 = vadd.f32 0.0, %v4169
  %v4171 = vpop.f32.mrf.mxu0
  %v4172 = vadd.f32 0.0, %v4171
  %v4173 = vpop.f32.mrf.mxu0
  %v4174 = vadd.f32 0.0, %v4173
  %4175 = vmatprep.mubr.bf16.mxu0 0
  %4176 = vmatmul.mubr.bf16.gmra.mxu0 %v2966
  %v4177 = vpop.f32.mrf.mxu0
  %v4178 = vadd.f32 0.0, %v4177
  %v4179 = vpop.f32.mrf.mxu0
  %v4180 = vadd.f32 0.0, %v4179
  %v4181 = vpop.f32.mrf.mxu0
  %v4182 = vadd.f32 0.0, %v4181
  %v4183 = vpop.f32.mrf.mxu0
  %v4184 = vadd.f32 0.0, %v4183
  %4185 = vmatprep.mubr.bf16.mxu0 0
  %4186 = vmatmul.mubr.bf16.gmra.mxu0 %v2967
  %v4187 = vpop.f32.mrf.mxu0
  %v4188 = vadd.f32 0.0, %v4187
  %v4189 = vpop.f32.mrf.mxu0
  %v4190 = vadd.f32 0.0, %v4189
  %v4191 = vpop.f32.mrf.mxu0
  %v4192 = vadd.f32 0.0, %v4191
  %v4193 = vpop.f32.mrf.mxu0
  %v4194 = vadd.f32 0.0, %v4193
  %4195 = vmatprep.mubr.bf16.mxu0 0
  %4196 = vmatmul.mubr.bf16.gmra.mxu0 %v2968
  %v4197 = vpop.f32.mrf.mxu0
  %v4198 = vadd.f32 0.0, %v4197
  %v4199 = vpop.f32.mrf.mxu0
  %v4200 = vadd.f32 0.0, %v4199
  %v4201 = vpop.f32.mrf.mxu0
  %v4202 = vadd.f32 0.0, %v4201
  %v4203 = vpop.f32.mrf.mxu0
  %v4204 = vadd.f32 0.0, %v4203
  %4205 = vmatprep.mubr.bf16.mxu0 0
  %4206 = vmatmul.mubr.bf16.gmra.mxu0 %v2969
  %v4207 = vpop.f32.mrf.mxu0
  %v4208 = vadd.f32 0.0, %v4207
  %v4209 = vpop.f32.mrf.mxu0
  %v4210 = vadd.f32 0.0, %v4209
  %v4211 = vpop.f32.mrf.mxu0
  %v4212 = vadd.f32 0.0, %v4211
  %v4213 = vpop.f32.mrf.mxu0
  %v4214 = vadd.f32 0.0, %v4213
  %4215 = vdwg.mxu0
  %4216 = vmatprep.subr.bf16.mxu0 %v3425
  %4217 = vmatpush1.bf16.msra.mxu0 %v3424
  %4218 = vmatprep.subr.bf16.mxu0 %v3411
  %4219 = vmatpush1.bf16.msra.mxu0 %v3410
  %4220 = vmatprep.subr.bf16.mxu0 %v3397
  %4221 = vmatpush1.bf16.msra.mxu0 %v3396
  %4222 = vmatprep.subr.bf16.mxu0 %v3383
  %4223 = vmatpush1.bf16.msra.mxu0 %v3382
  %4224 = vmatprep.subr.bf16.mxu0 %v3369
  %4225 = vmatpush1.bf16.msra.mxu0 %v3368
  %4226 = vmatprep.subr.bf16.mxu0 %v3355
  %4227 = vmatpush1.bf16.msra.mxu0 %v3354
  %4228 = vmatprep.subr.bf16.mxu0 %v3341
  %4229 = vmatpush1.bf16.msra.mxu0 %v3340
  %4230 = vmatprep.subr.bf16.mxu0 %v3327
  %4231 = vmatpush1.bf16.msra.mxu0 %v3326
  %4232 = vmatprep.subr.bf16.mxu0 0
  %4233 = vmatpush2.bf16.msra.mxu0 0
  %4234 = vmatprep.subr.bf16.mxu0 0
  %4235 = vmatpush2.bf16.msra.mxu0 0
  %4236 = vmatprep.subr.bf16.mxu0 0
  %4237 = vmatpush2.bf16.msra.mxu0 0
  %4238 = vmatprep.subr.bf16.mxu0 0
  %4239 = vmatpush2.bf16.msra.mxu0 0
  %4240 = vmatprep.subr.bf16.mxu0 0
  %4241 = vmatpush2.bf16.msra.mxu0 0
  %4242 = vmatprep.subr.bf16.mxu0 0
  %4243 = vmatpush2.bf16.msra.mxu0 0
  %4244 = vmatprep.subr.bf16.mxu0 0
  %4245 = vmatpush2.bf16.msra.mxu0 0
  %4246 = vmatprep.subr.bf16.mxu0 0
  %4247 = vmatpush2.bf16.msra.mxu0 0
  %4248 = vmatprep.mubr.bf16.mxu0 0
  %4249 = vmatmul.mubr.bf16.gmra.mxu0 %v2962
  %v4250 = vpop.f32.mrf.mxu0
  %v4251 = vadd.f32 0.0, %v4250
  %v4252 = vpop.f32.mrf.mxu0
  %v4253 = vadd.f32 0.0, %v4252
  %v4254 = vpop.f32.mrf.mxu0
  %v4255 = vadd.f32 0.0, %v4254
  %v4256 = vpop.f32.mrf.mxu0
  %v4257 = vadd.f32 0.0, %v4256
  %4258 = vmatprep.mubr.bf16.mxu0 0
  %4259 = vmatmul.mubr.bf16.gmra.mxu0 %v2963
  %v4260 = vpop.f32.mrf.mxu0
  %v4261 = vadd.f32 0.0, %v4260
  %v4262 = vpop.f32.mrf.mxu0
  %v4263 = vadd.f32 0.0, %v4262
  %v4264 = vpop.f32.mrf.mxu0
  %v4265 = vadd.f32 0.0, %v4264
  %v4266 = vpop.f32.mrf.mxu0
  %v4267 = vadd.f32 0.0, %v4266
  %4268 = vmatprep.mubr.bf16.mxu0 0
  %4269 = vmatmul.mubr.bf16.gmra.mxu0 %v2964
  %v4270 = vpop.f32.mrf.mxu0
  %v4271 = vadd.f32 0.0, %v4270
  %v4272 = vpop.f32.mrf.mxu0
  %v4273 = vadd.f32 0.0, %v4272
  %v4274 = vpop.f32.mrf.mxu0
  %v4275 = vadd.f32 0.0, %v4274
  %v4276 = vpop.f32.mrf.mxu0
  %v4277 = vadd.f32 0.0, %v4276
  %4278 = vmatprep.mubr.bf16.mxu0 0
  %4279 = vmatmul.mubr.bf16.gmra.mxu0 %v2965
  %v4280 = vpop.f32.mrf.mxu0
  %v4281 = vadd.f32 0.0, %v4280
  %v4282 = vpop.f32.mrf.mxu0
  %v4283 = vadd.f32 0.0, %v4282
  %v4284 = vpop.f32.mrf.mxu0
  %v4285 = vadd.f32 0.0, %v4284
  %v4286 = vpop.f32.mrf.mxu0
  %v4287 = vadd.f32 0.0, %v4286
  %4288 = vmatprep.mubr.bf16.mxu0 0
  %4289 = vmatmul.mubr.bf16.gmra.mxu0 %v2966
  %v4290 = vpop.f32.mrf.mxu0
  %v4291 = vadd.f32 0.0, %v4290
  %v4292 = vpop.f32.mrf.mxu0
  %v4293 = vadd.f32 0.0, %v4292
  %v4294 = vpop.f32.mrf.mxu0
  %v4295 = vadd.f32 0.0, %v4294
  %v4296 = vpop.f32.mrf.mxu0
  %v4297 = vadd.f32 0.0, %v4296
  %4298 = vmatprep.mubr.bf16.mxu0 0
  %4299 = vmatmul.mubr.bf16.gmra.mxu0 %v2967
  %v4300 = vpop.f32.mrf.mxu0
  %v4301 = vadd.f32 0.0, %v4300
  %v4302 = vpop.f32.mrf.mxu0
  %v4303 = vadd.f32 0.0, %v4302
  %v4304 = vpop.f32.mrf.mxu0
  %v4305 = vadd.f32 0.0, %v4304
  %v4306 = vpop.f32.mrf.mxu0
  %v4307 = vadd.f32 0.0, %v4306
  %4308 = vmatprep.mubr.bf16.mxu0 0
  %4309 = vmatmul.mubr.bf16.gmra.mxu0 %v2968
  %v4310 = vpop.f32.mrf.mxu0
  %v4311 = vadd.f32 0.0, %v4310
  %v4312 = vpop.f32.mrf.mxu0
  %v4313 = vadd.f32 0.0, %v4312
  %v4314 = vpop.f32.mrf.mxu0
  %v4315 = vadd.f32 0.0, %v4314
  %v4316 = vpop.f32.mrf.mxu0
  %v4317 = vadd.f32 0.0, %v4316
  %4318 = vmatprep.mubr.bf16.mxu0 0
  %4319 = vmatmul.mubr.bf16.gmra.mxu0 %v2969
  %v4320 = vpop.f32.mrf.mxu0
  %v4321 = vadd.f32 0.0, %v4320
  %v4322 = vpop.f32.mrf.mxu0
  %v4323 = vadd.f32 0.0, %v4322
  %v4324 = vpop.f32.mrf.mxu0
  %v4325 = vadd.f32 0.0, %v4324
  %v4326 = vpop.f32.mrf.mxu0
  %v4327 = vadd.f32 0.0, %v4326
  %4328 = vdwg.mxu0
  %v4329 = vpack.c.bf16 %v3577, %v3573
  %v4330 = vpack.c.bf16 %v3579, %v3575
  %v4331 = vpack.c.bf16 %v3690, %v3686
  %v4332 = vpack.c.bf16 %v3692, %v3688
  %v4333 = vpack.c.bf16 %v3803, %v3799
  %v4334 = vpack.c.bf16 %v3805, %v3801
  %v4335 = vpack.c.bf16 %v3916, %v3912
  %v4336 = vpack.c.bf16 %v3918, %v3914
  %v4337 = vpack.c.bf16 %v4029, %v4025
  %v4338 = vpack.c.bf16 %v4031, %v4027
  %v4339 = vpack.c.bf16 %v4142, %v4138
  %v4340 = vpack.c.bf16 %v4144, %v4140
  %v4341 = vpack.c.bf16 %v4255, %v4251
  %v4342 = vpack.c.bf16 %v4257, %v4253
  %v4343 = vpack.c.bf16 %v3587, %v3583
  %v4344 = vpack.c.bf16 %v3589, %v3585
  %v4345 = vpack.c.bf16 %v3700, %v3696
  %v4346 = vpack.c.bf16 %v3702, %v3698
  %v4347 = vpack.c.bf16 %v3813, %v3809
  %v4348 = vpack.c.bf16 %v3815, %v3811
  %v4349 = vpack.c.bf16 %v3926, %v3922
  %v4350 = vpack.c.bf16 %v3928, %v3924
  %v4351 = vpack.c.bf16 %v4039, %v4035
  %v4352 = vpack.c.bf16 %v4041, %v4037
  %v4353 = vpack.c.bf16 %v4152, %v4148
  %v4354 = vpack.c.bf16 %v4154, %v4150
  %v4355 = vpack.c.bf16 %v4265, %v4261
  %v4356 = vpack.c.bf16 %v4267, %v4263
  %v4357 = vpack.c.bf16 %v3597, %v3593
  %v4358 = vpack.c.bf16 %v3599, %v3595
  %v4359 = vpack.c.bf16 %v3710, %v3706
  %v4360 = vpack.c.bf16 %v3712, %v3708
  %v4361 = vpack.c.bf16 %v3823, %v3819
  %v4362 = vpack.c.bf16 %v3825, %v3821
  %v4363 = vpack.c.bf16 %v3936, %v3932
  %v4364 = vpack.c.bf16 %v3938, %v3934
  %v4365 = vpack.c.bf16 %v4049, %v4045
  %v4366 = vpack.c.bf16 %v4051, %v4047
  %v4367 = vpack.c.bf16 %v4162, %v4158
  %v4368 = vpack.c.bf16 %v4164, %v4160
  %v4369 = vpack.c.bf16 %v4275, %v4271
  %v4370 = vpack.c.bf16 %v4277, %v4273
  %v4371 = vpack.c.bf16 %v3607, %v3603
  %v4372 = vpack.c.bf16 %v3609, %v3605
  %v4373 = vpack.c.bf16 %v3720, %v3716
  %v4374 = vpack.c.bf16 %v3722, %v3718
  %v4375 = vpack.c.bf16 %v3833, %v3829
  %v4376 = vpack.c.bf16 %v3835, %v3831
  %v4377 = vpack.c.bf16 %v3946, %v3942
  %v4378 = vpack.c.bf16 %v3948, %v3944
  %v4379 = vpack.c.bf16 %v4059, %v4055
  %v4380 = vpack.c.bf16 %v4061, %v4057
  %v4381 = vpack.c.bf16 %v4172, %v4168
  %v4382 = vpack.c.bf16 %v4174, %v4170
  %v4383 = vpack.c.bf16 %v4285, %v4281
  %v4384 = vpack.c.bf16 %v4287, %v4283
  %v4385 = vpack.c.bf16 %v3617, %v3613
  %v4386 = vpack.c.bf16 %v3619, %v3615
  %v4387 = vpack.c.bf16 %v3730, %v3726
  %v4388 = vpack.c.bf16 %v3732, %v3728
  %v4389 = vpack.c.bf16 %v3843, %v3839
  %v4390 = vpack.c.bf16 %v3845, %v3841
  %v4391 = vpack.c.bf16 %v3956, %v3952
  %v4392 = vpack.c.bf16 %v3958, %v3954
  %v4393 = vpack.c.bf16 %v4069, %v4065
  %v4394 = vpack.c.bf16 %v4071, %v4067
  %v4395 = vpack.c.bf16 %v4182, %v4178
  %v4396 = vpack.c.bf16 %v4184, %v4180
  %v4397 = vpack.c.bf16 %v4295, %v4291
  %v4398 = vpack.c.bf16 %v4297, %v4293
  %v4399 = vpack.c.bf16 %v3627, %v3623
  %v4400 = vpack.c.bf16 %v3629, %v3625
  %v4401 = vpack.c.bf16 %v3740, %v3736
  %v4402 = vpack.c.bf16 %v3742, %v3738
  %v4403 = vpack.c.bf16 %v3853, %v3849
  %v4404 = vpack.c.bf16 %v3855, %v3851
  %v4405 = vpack.c.bf16 %v3966, %v3962
  %v4406 = vpack.c.bf16 %v3968, %v3964
  %v4407 = vpack.c.bf16 %v4079, %v4075
  %v4408 = vpack.c.bf16 %v4081, %v4077
  %v4409 = vpack.c.bf16 %v4192, %v4188
  %v4410 = vpack.c.bf16 %v4194, %v4190
  %v4411 = vpack.c.bf16 %v4305, %v4301
  %v4412 = vpack.c.bf16 %v4307, %v4303
  %v4413 = vpack.c.bf16 %v3637, %v3633
  %v4414 = vpack.c.bf16 %v3639, %v3635
  %v4415 = vpack.c.bf16 %v3750, %v3746
  %v4416 = vpack.c.bf16 %v3752, %v3748
  %v4417 = vpack.c.bf16 %v3863, %v3859
  %v4418 = vpack.c.bf16 %v3865, %v3861
  %v4419 = vpack.c.bf16 %v3976, %v3972
  %v4420 = vpack.c.bf16 %v3978, %v3974
  %v4421 = vpack.c.bf16 %v4089, %v4085
  %v4422 = vpack.c.bf16 %v4091, %v4087
  %v4423 = vpack.c.bf16 %v4202, %v4198
  %v4424 = vpack.c.bf16 %v4204, %v4200
  %v4425 = vpack.c.bf16 %v4315, %v4311
  %v4426 = vpack.c.bf16 %v4317, %v4313
  %v4427 = vpack.c.bf16 %v3647, %v3643
  %v4428 = vpack.c.bf16 %v3649, %v3645
  %v4429 = vpack.c.bf16 %v3760, %v3756
  %v4430 = vpack.c.bf16 %v3762, %v3758
  %v4431 = vpack.c.bf16 %v3873, %v3869
  %v4432 = vpack.c.bf16 %v3875, %v3871
  %v4433 = vpack.c.bf16 %v3986, %v3982
  %v4434 = vpack.c.bf16 %v3988, %v3984
  %v4435 = vpack.c.bf16 %v4099, %v4095
  %v4436 = vpack.c.bf16 %v4101, %v4097
  %v4437 = vpack.c.bf16 %v4212, %v4208
  %v4438 = vpack.c.bf16 %v4214, %v4210
  %v4439 = vpack.c.bf16 %v4325, %v4321
  %v4440 = vpack.c.bf16 %v4327, %v4323
  %v4441 = vld [vmem:[%s4] sm:$0xff]
  %v4442 = vld [vmem:[%s4 + $0x8] sm:$0xff]
  %v4443 = vld [vmem:[%s4 + $0x10] sm:$0xff]
  %v4444 = vld [vmem:[%s4 + $0x18] sm:$0xff]
  %v4445 = vld [vmem:[%s4 + $0x20] sm:$0xff]
  %v4446 = vld [vmem:[%s4 + $0x28] sm:$0xff]
  %v4447 = vld [vmem:[%s4 + $0x30] sm:$0xff]
  %v4448 = vld [vmem:[%s4 + $0x38] sm:$0xff]
  %v4449 = vld [vmem:[%s4 + $0x40] sm:$0xff]
  %v4450 = vld [vmem:[%s4 + $0x48] sm:$0xff]
  %v4451 = vld [vmem:[%s4 + $0x50] sm:$0xff]
  %v4452 = vld [vmem:[%s4 + $0x58] sm:$0xff]
  %v4453 = vld [vmem:[%s4 + $0x60] sm:$0xff]
  %v4454 = vld [vmem:[%s4 + $0x68] sm:$0xff]
  %v4455 = vld [vmem:[%s4 + $0x70] sm:$0xff]
  %v4456 = vld [vmem:[%s4 + $0x78] sm:$0xff]
  %v4457 = vld [vmem:[%s4 + $0x80] sm:$0xff]
  %v4458 = vld [vmem:[%s4 + $0x88] sm:$0xff]
  %v4459 = vld [vmem:[%s4 + $0x90] sm:$0xff]
  %v4460 = vld [vmem:[%s4 + $0x98] sm:$0xff]
  %v4461 = vld [vmem:[%s4 + $0xa0] sm:$0xff]
  %v4462 = vld [vmem:[%s4 + $0xa8] sm:$0xff]
  %v4463 = vld [vmem:[%s4 + $0xb0] sm:$0xff]
  %v4464 = vld [vmem:[%s4 + $0xb8] sm:$0xff]
  %v4465 = vld [vmem:[%s4 + $0xc0] sm:$0xff]
  %v4466 = vld [vmem:[%s4 + $0xc8] sm:$0xff]
  %v4467 = vld [vmem:[%s4 + $0xd0] sm:$0xff]
  %v4468 = vld [vmem:[%s4 + $0xd8] sm:$0xff]
  %v4469 = vld [vmem:[%s4 + $0xe0] sm:$0xff]
  %v4470 = vld [vmem:[%s4 + $0xe8] sm:$0xff]
  %v4471 = vld [vmem:[%s4 + $0xf0] sm:$0xff]
  %v4472 = vld [vmem:[%s4 + $0xf8] sm:$0xff]
  %v4473 = vld [vmem:[%s4 + $0x100] sm:$0xff]
  %v4474 = vld [vmem:[%s4 + $0x108] sm:$0xff]
  %v4475 = vld [vmem:[%s4 + $0x110] sm:$0xff]
  %v4476 = vld [vmem:[%s4 + $0x118] sm:$0xff]
  %v4477 = vld [vmem:[%s4 + $0x120] sm:$0xff]
  %v4478 = vld [vmem:[%s4 + $0x128] sm:$0xff]
  %v4479 = vld [vmem:[%s4 + $0x130] sm:$0xff]
  %v4480 = vld [vmem:[%s4 + $0x138] sm:$0xff]
  %v4481 = vld [vmem:[%s4 + $0x140] sm:$0xff]
  %v4482 = vld [vmem:[%s4 + $0x148] sm:$0xff]
  %v4483 = vld [vmem:[%s4 + $0x150] sm:$0xff]
  %v4484 = vld [vmem:[%s4 + $0x158] sm:$0xff]
  %v4485 = vld [vmem:[%s4 + $0x160] sm:$0xff]
  %v4486 = vld [vmem:[%s4 + $0x168] sm:$0xff]
  %v4487 = vld [vmem:[%s4 + $0x170] sm:$0xff]
  %v4488 = vld [vmem:[%s4 + $0x178] sm:$0xff]
  %v4489 = vld [vmem:[%s4 + $0x180] sm:$0xff]
  %v4490 = vld [vmem:[%s4 + $0x188] sm:$0xff]
  %v4491 = vld [vmem:[%s4 + $0x190] sm:$0xff]
  %v4492 = vld [vmem:[%s4 + $0x198] sm:$0xff]
  %v4493 = vld [vmem:[%s4 + $0x1a0] sm:$0xff]
  %v4494 = vld [vmem:[%s4 + $0x1a8] sm:$0xff]
  %v4495 = vld [vmem:[%s4 + $0x1b0] sm:$0xff]
  %v4496 = vld [vmem:[%s4 + $0x1b8] sm:$0xff]
  %v4497 = vld [vmem:[%s4 + $0x1c0] sm:$0xff]
  %v4498 = vld [vmem:[%s4 + $0x1c8] sm:$0xff]
  %v4499 = vld [vmem:[%s4 + $0x1d0] sm:$0xff]
  %v4500 = vld [vmem:[%s4 + $0x1d8] sm:$0xff]
  %v4501 = vld [vmem:[%s4 + $0x1e0] sm:$0xff]
  %v4502 = vld [vmem:[%s4 + $0x1e8] sm:$0xff]
  %v4503 = vld [vmem:[%s4 + $0x1f0] sm:$0xff]
  %v4504 = vld [vmem:[%s4 + $0x1f8] sm:$0xff]
  %v4505 = vld [vmem:[%s4 + $0x200] sm:$0xff]
  %v4506 = vld [vmem:[%s4 + $0x208] sm:$0xff]
  %v4507 = vld [vmem:[%s4 + $0x210] sm:$0xff]
  %v4508 = vld [vmem:[%s4 + $0x218] sm:$0xff]
  %v4509 = vld [vmem:[%s4 + $0x220] sm:$0xff]
  %v4510 = vld [vmem:[%s4 + $0x228] sm:$0xff]
  %v4511 = vld [vmem:[%s4 + $0x230] sm:$0xff]
  %v4512 = vld [vmem:[%s4 + $0x238] sm:$0xff]
  %v4513 = vld [vmem:[%s4 + $0x240] sm:$0xff]
  %v4514 = vld [vmem:[%s4 + $0x248] sm:$0xff]
  %v4515 = vld [vmem:[%s4 + $0x250] sm:$0xff]
  %v4516 = vld [vmem:[%s4 + $0x258] sm:$0xff]
  %v4517 = vld [vmem:[%s4 + $0x260] sm:$0xff]
  %v4518 = vld [vmem:[%s4 + $0x268] sm:$0xff]
  %v4519 = vld [vmem:[%s4 + $0x270] sm:$0xff]
  %v4520 = vld [vmem:[%s4 + $0x278] sm:$0xff]
  %v4521 = vld [vmem:[%s4 + $0x280] sm:$0xff]
  %v4522 = vld [vmem:[%s4 + $0x288] sm:$0xff]
  %v4523 = vld [vmem:[%s4 + $0x290] sm:$0xff]
  %v4524 = vld [vmem:[%s4 + $0x298] sm:$0xff]
  %v4525 = vld [vmem:[%s4 + $0x2a0] sm:$0xff]
  %v4526 = vld [vmem:[%s4 + $0x2a8] sm:$0xff]
  %v4527 = vld [vmem:[%s4 + $0x2b0] sm:$0xff]
  %v4528 = vld [vmem:[%s4 + $0x2b8] sm:$0xff]
  %v4529 = vld [vmem:[%s4 + $0x2c0] sm:$0xff]
  %v4530 = vld [vmem:[%s4 + $0x2c8] sm:$0xff]
  %v4531 = vld [vmem:[%s4 + $0x2d0] sm:$0xff]
  %v4532 = vld [vmem:[%s4 + $0x2d8] sm:$0xff]
  %v4533 = vld [vmem:[%s4 + $0x2e0] sm:$0xff]
  %v4534 = vld [vmem:[%s4 + $0x2e8] sm:$0xff]
  %v4535 = vld [vmem:[%s4 + $0x2f0] sm:$0xff]
  %v4536 = vld [vmem:[%s4 + $0x2f8] sm:$0xff]
  %v4537 = vld [vmem:[%s4 + $0x300] sm:$0xff]
  %v4538 = vld [vmem:[%s4 + $0x308] sm:$0xff]
  %v4539 = vld [vmem:[%s4 + $0x310] sm:$0xff]
  %v4540 = vld [vmem:[%s4 + $0x318] sm:$0xff]
  %v4541 = vld [vmem:[%s4 + $0x320] sm:$0xff]
  %v4542 = vld [vmem:[%s4 + $0x328] sm:$0xff]
  %v4543 = vld [vmem:[%s4 + $0x330] sm:$0xff]
  %v4544 = vld [vmem:[%s4 + $0x338] sm:$0xff]
  %v4545 = vld [vmem:[%s4 + $0x340] sm:$0xff]
  %v4546 = vld [vmem:[%s4 + $0x348] sm:$0xff]
  %v4547 = vld [vmem:[%s4 + $0x350] sm:$0xff]
  %v4548 = vld [vmem:[%s4 + $0x358] sm:$0xff]
  %v4549 = vld [vmem:[%s4 + $0x360] sm:$0xff]
  %v4550 = vld [vmem:[%s4 + $0x368] sm:$0xff]
  %v4551 = vld [vmem:[%s4 + $0x370] sm:$0xff]
  %v4552 = vld [vmem:[%s4 + $0x378] sm:$0xff]
  %v4553 = vld [vmem:[%s4 + $0x380] sm:$0xff]
  %v4554 = vld [vmem:[%s4 + $0x388] sm:$0xff]
  %v4555 = vld [vmem:[%s4 + $0x390] sm:$0xff]
  %v4556 = vld [vmem:[%s4 + $0x398] sm:$0xff]
  %v4557 = vld [vmem:[%s4 + $0x3a0] sm:$0xff]
  %v4558 = vld [vmem:[%s4 + $0x3a8] sm:$0xff]
  %v4559 = vld [vmem:[%s4 + $0x3b0] sm:$0xff]
  %v4560 = vld [vmem:[%s4 + $0x3b8] sm:$0xff]
  %v4561 = vld [vmem:[%s4 + $0x3c0] sm:$0xff]
  %v4562 = vld [vmem:[%s4 + $0x3c8] sm:$0xff]
  %v4563 = vld [vmem:[%s4 + $0x3d0] sm:$0xff]
  %v4564 = vld [vmem:[%s4 + $0x3d8] sm:$0xff]
  %v4565 = vld [vmem:[%s4 + $0x3e0] sm:$0xff]
  %v4566 = vld [vmem:[%s4 + $0x3e8] sm:$0xff]
  %v4567 = vld [vmem:[%s4 + $0x3f0] sm:$0xff]
  %v4568 = vld [vmem:[%s4 + $0x3f8] sm:$0xff]
  %v4569 = vld [vmem:[%s4 + $0x400] sm:$0xff]
  %v4570 = vld [vmem:[%s4 + $0x408] sm:$0xff]
  %v4571 = vld [vmem:[%s4 + $0x410] sm:$0xff]
  %v4572 = vld [vmem:[%s4 + $0x418] sm:$0xff]
  %v4573 = vld [vmem:[%s4 + $0x420] sm:$0xff]
  %v4574 = vld [vmem:[%s4 + $0x428] sm:$0xff]
  %v4575 = vld [vmem:[%s4 + $0x430] sm:$0xff]
  %v4576 = vld [vmem:[%s4 + $0x438] sm:$0xff]
  %v4577 = vld [vmem:[%s4 + $0x440] sm:$0xff]
  %v4578 = vld [vmem:[%s4 + $0x448] sm:$0xff]
  %v4579 = vld [vmem:[%s4 + $0x450] sm:$0xff]
  %v4580 = vld [vmem:[%s4 + $0x458] sm:$0xff]
  %v4581 = vld [vmem:[%s4 + $0x460] sm:$0xff]
  %v4582 = vld [vmem:[%s4 + $0x468] sm:$0xff]
  %v4583 = vld [vmem:[%s4 + $0x470] sm:$0xff]
  %v4584 = vld [vmem:[%s4 + $0x478] sm:$0xff]
  %v4585 = vld [vmem:[%s4 + $0x480] sm:$0xff]
  %v4586 = vld [vmem:[%s4 + $0x488] sm:$0xff]
  %v4587 = vld [vmem:[%s4 + $0x490] sm:$0xff]
  %v4588 = vld [vmem:[%s4 + $0x498] sm:$0xff]
  %v4589 = vld [vmem:[%s4 + $0x4a0] sm:$0xff]
  %v4590 = vld [vmem:[%s4 + $0x4a8] sm:$0xff]
  %v4591 = vld [vmem:[%s4 + $0x4b0] sm:$0xff]
  %v4592 = vld [vmem:[%s4 + $0x4b8] sm:$0xff]
  %v4593 = vld [vmem:[%s4 + $0x4c0] sm:$0xff]
  %v4594 = vld [vmem:[%s4 + $0x4c8] sm:$0xff]
  %v4595 = vld [vmem:[%s4 + $0x4d0] sm:$0xff]
  %v4596 = vld [vmem:[%s4 + $0x4d8] sm:$0xff]
  %v4597 = vld [vmem:[%s4 + $0x4e0] sm:$0xff]
  %v4598 = vld [vmem:[%s4 + $0x4e8] sm:$0xff]
  %v4599 = vld [vmem:[%s4 + $0x4f0] sm:$0xff]
  %v4600 = vld [vmem:[%s4 + $0x4f8] sm:$0xff]
  %v4601 = vld [vmem:[%s4 + $0x500] sm:$0xff]
  %v4602 = vld [vmem:[%s4 + $0x508] sm:$0xff]
  %v4603 = vld [vmem:[%s4 + $0x510] sm:$0xff]
  %v4604 = vld [vmem:[%s4 + $0x518] sm:$0xff]
  %v4605 = vld [vmem:[%s4 + $0x520] sm:$0xff]
  %v4606 = vld [vmem:[%s4 + $0x528] sm:$0xff]
  %v4607 = vld [vmem:[%s4 + $0x530] sm:$0xff]
  %v4608 = vld [vmem:[%s4 + $0x538] sm:$0xff]
  %v4609 = vld [vmem:[%s4 + $0x540] sm:$0xff]
  %v4610 = vld [vmem:[%s4 + $0x548] sm:$0xff]
  %v4611 = vld [vmem:[%s4 + $0x550] sm:$0xff]
  %v4612 = vld [vmem:[%s4 + $0x558] sm:$0xff]
  %v4613 = vld [vmem:[%s4 + $0x560] sm:$0xff]
  %v4614 = vld [vmem:[%s4 + $0x568] sm:$0xff]
  %v4615 = vld [vmem:[%s4 + $0x570] sm:$0xff]
  %v4616 = vld [vmem:[%s4 + $0x578] sm:$0xff]
  %v4617 = vld [vmem:[%s4 + $0x580] sm:$0xff]
  %v4618 = vld [vmem:[%s4 + $0x588] sm:$0xff]
  %v4619 = vld [vmem:[%s4 + $0x590] sm:$0xff]
  %v4620 = vld [vmem:[%s4 + $0x598] sm:$0xff]
  %v4621 = vld [vmem:[%s4 + $0x5a0] sm:$0xff]
  %v4622 = vld [vmem:[%s4 + $0x5a8] sm:$0xff]
  %v4623 = vld [vmem:[%s4 + $0x5b0] sm:$0xff]
  %v4624 = vld [vmem:[%s4 + $0x5b8] sm:$0xff]
  %v4625 = vld [vmem:[%s4 + $0x5c0] sm:$0xff]
  %v4626 = vld [vmem:[%s4 + $0x5c8] sm:$0xff]
  %v4627 = vld [vmem:[%s4 + $0x5d0] sm:$0xff]
  %v4628 = vld [vmem:[%s4 + $0x5d8] sm:$0xff]
  %v4629 = vld [vmem:[%s4 + $0x5e0] sm:$0xff]
  %v4630 = vld [vmem:[%s4 + $0x5e8] sm:$0xff]
  %v4631 = vld [vmem:[%s4 + $0x5f0] sm:$0xff]
  %v4632 = vld [vmem:[%s4 + $0x5f8] sm:$0xff]
  %v4633 = vld [vmem:[%s4 + $0x600] sm:$0xff]
  %v4634 = vld [vmem:[%s4 + $0x608] sm:$0xff]
  %v4635 = vld [vmem:[%s4 + $0x610] sm:$0xff]
  %v4636 = vld [vmem:[%s4 + $0x618] sm:$0xff]
  %v4637 = vld [vmem:[%s4 + $0x620] sm:$0xff]
  %v4638 = vld [vmem:[%s4 + $0x628] sm:$0xff]
  %v4639 = vld [vmem:[%s4 + $0x630] sm:$0xff]
  %v4640 = vld [vmem:[%s4 + $0x638] sm:$0xff]
  %v4641 = vld [vmem:[%s4 + $0x640] sm:$0xff]
  %v4642 = vld [vmem:[%s4 + $0x648] sm:$0xff]
  %v4643 = vld [vmem:[%s4 + $0x650] sm:$0xff]
  %v4644 = vld [vmem:[%s4 + $0x658] sm:$0xff]
  %v4645 = vld [vmem:[%s4 + $0x660] sm:$0xff]
  %v4646 = vld [vmem:[%s4 + $0x668] sm:$0xff]
  %v4647 = vld [vmem:[%s4 + $0x670] sm:$0xff]
  %v4648 = vld [vmem:[%s4 + $0x678] sm:$0xff]
  %v4649 = vld [vmem:[%s4 + $0x680] sm:$0xff]
  %v4650 = vld [vmem:[%s4 + $0x688] sm:$0xff]
  %v4651 = vld [vmem:[%s4 + $0x690] sm:$0xff]
  %v4652 = vld [vmem:[%s4 + $0x698] sm:$0xff]
  %v4653 = vld [vmem:[%s4 + $0x6a0] sm:$0xff]
  %v4654 = vld [vmem:[%s4 + $0x6a8] sm:$0xff]
  %v4655 = vld [vmem:[%s4 + $0x6b0] sm:$0xff]
  %v4656 = vld [vmem:[%s4 + $0x6b8] sm:$0xff]
  %v4657 = vld [vmem:[%s4 + $0x6c0] sm:$0xff]
  %v4658 = vld [vmem:[%s4 + $0x6c8] sm:$0xff]
  %v4659 = vld [vmem:[%s4 + $0x6d0] sm:$0xff]
  %v4660 = vld [vmem:[%s4 + $0x6d8] sm:$0xff]
  %v4661 = vld [vmem:[%s4 + $0x6e0] sm:$0xff]
  %v4662 = vld [vmem:[%s4 + $0x6e8] sm:$0xff]
  %v4663 = vld [vmem:[%s4 + $0x6f0] sm:$0xff]
  %v4664 = vld [vmem:[%s4 + $0x6f8] sm:$0xff]
  %v4665 = vld [vmem:[%s4 + $0x700] sm:$0xff]
  %v4666 = vld [vmem:[%s4 + $0x708] sm:$0xff]
  %v4667 = vld [vmem:[%s4 + $0x710] sm:$0xff]
  %v4668 = vld [vmem:[%s4 + $0x718] sm:$0xff]
  %v4669 = vld [vmem:[%s4 + $0x720] sm:$0xff]
  %v4670 = vld [vmem:[%s4 + $0x728] sm:$0xff]
  %v4671 = vld [vmem:[%s4 + $0x730] sm:$0xff]
  %v4672 = vld [vmem:[%s4 + $0x738] sm:$0xff]
  %v4673 = vld [vmem:[%s4 + $0x740] sm:$0xff]
  %v4674 = vld [vmem:[%s4 + $0x748] sm:$0xff]
  %v4675 = vld [vmem:[%s4 + $0x750] sm:$0xff]
  %v4676 = vld [vmem:[%s4 + $0x758] sm:$0xff]
  %v4677 = vld [vmem:[%s4 + $0x760] sm:$0xff]
  %v4678 = vld [vmem:[%s4 + $0x768] sm:$0xff]
  %v4679 = vld [vmem:[%s4 + $0x770] sm:$0xff]
  %v4680 = vld [vmem:[%s4 + $0x778] sm:$0xff]
  %v4681 = vld [vmem:[%s4 + $0x780] sm:$0xff]
  %v4682 = vld [vmem:[%s4 + $0x788] sm:$0xff]
  %v4683 = vld [vmem:[%s4 + $0x790] sm:$0xff]
  %v4684 = vld [vmem:[%s4 + $0x798] sm:$0xff]
  %v4685 = vld [vmem:[%s4 + $0x7a0] sm:$0xff]
  %v4686 = vld [vmem:[%s4 + $0x7a8] sm:$0xff]
  %v4687 = vld [vmem:[%s4 + $0x7b0] sm:$0xff]
  %v4688 = vld [vmem:[%s4 + $0x7b8] sm:$0xff]
  %v4689 = vld [vmem:[%s4 + $0x7c0] sm:$0xff]
  %v4690 = vld [vmem:[%s4 + $0x7c8] sm:$0xff]
  %v4691 = vld [vmem:[%s4 + $0x7d0] sm:$0xff]
  %v4692 = vld [vmem:[%s4 + $0x7d8] sm:$0xff]
  %v4693 = vld [vmem:[%s4 + $0x7e0] sm:$0xff]
  %v4694 = vld [vmem:[%s4 + $0x7e8] sm:$0xff]
  %v4695 = vld [vmem:[%s4 + $0x7f0] sm:$0xff]
  %v4696 = vld [vmem:[%s4 + $0x7f8] sm:$0xff]
  %v4697 = vld [vmem:[%s4 + $0x800] sm:$0xff]
  %v4698 = vld [vmem:[%s4 + $0x808] sm:$0xff]
  %v4699 = vld [vmem:[%s4 + $0x810] sm:$0xff]
  %v4700 = vld [vmem:[%s4 + $0x818] sm:$0xff]
  %v4701 = vld [vmem:[%s4 + $0x820] sm:$0xff]
  %v4702 = vld [vmem:[%s4 + $0x828] sm:$0xff]
  %v4703 = vld [vmem:[%s4 + $0x830] sm:$0xff]
  %v4704 = vld [vmem:[%s4 + $0x838] sm:$0xff]
  %v4705 = vld [vmem:[%s4 + $0x840] sm:$0xff]
  %v4706 = vld [vmem:[%s4 + $0x848] sm:$0xff]
  %v4707 = vld [vmem:[%s4 + $0x850] sm:$0xff]
  %v4708 = vld [vmem:[%s4 + $0x858] sm:$0xff]
  %v4709 = vld [vmem:[%s4 + $0x860] sm:$0xff]
  %v4710 = vld [vmem:[%s4 + $0x868] sm:$0xff]
  %v4711 = vld [vmem:[%s4 + $0x870] sm:$0xff]
  %v4712 = vld [vmem:[%s4 + $0x878] sm:$0xff]
  %v4713 = vld [vmem:[%s4 + $0x880] sm:$0xff]
  %v4714 = vld [vmem:[%s4 + $0x888] sm:$0xff]
  %v4715 = vld [vmem:[%s4 + $0x890] sm:$0xff]
  %v4716 = vld [vmem:[%s4 + $0x898] sm:$0xff]
  %v4717 = vld [vmem:[%s4 + $0x8a0] sm:$0xff]
  %v4718 = vld [vmem:[%s4 + $0x8a8] sm:$0xff]
  %v4719 = vld [vmem:[%s4 + $0x8b0] sm:$0xff]
  %v4720 = vld [vmem:[%s4 + $0x8b8] sm:$0xff]
  %v4721 = vld [vmem:[%s4 + $0x8c0] sm:$0xff]
  %v4722 = vld [vmem:[%s4 + $0x8c8] sm:$0xff]
  %v4723 = vld [vmem:[%s4 + $0x8d0] sm:$0xff]
  %v4724 = vld [vmem:[%s4 + $0x8d8] sm:$0xff]
  %v4725 = vld [vmem:[%s4 + $0x8e0] sm:$0xff]
  %v4726 = vld [vmem:[%s4 + $0x8e8] sm:$0xff]
  %v4727 = vld [vmem:[%s4 + $0x8f0] sm:$0xff]
  %v4728 = vld [vmem:[%s4 + $0x8f8] sm:$0xff]
  %v4729 = vld [vmem:[%s4 + $0x900] sm:$0xff]
  %v4730 = vld [vmem:[%s4 + $0x908] sm:$0xff]
  %v4731 = vld [vmem:[%s4 + $0x910] sm:$0xff]
  %v4732 = vld [vmem:[%s4 + $0x918] sm:$0xff]
  %v4733 = vld [vmem:[%s4 + $0x920] sm:$0xff]
  %v4734 = vld [vmem:[%s4 + $0x928] sm:$0xff]
  %v4735 = vld [vmem:[%s4 + $0x930] sm:$0xff]
  %v4736 = vld [vmem:[%s4 + $0x938] sm:$0xff]
  %v4737 = vld [vmem:[%s4 + $0x940] sm:$0xff]
  %v4738 = vld [vmem:[%s4 + $0x948] sm:$0xff]
  %v4739 = vld [vmem:[%s4 + $0x950] sm:$0xff]
  %v4740 = vld [vmem:[%s4 + $0x958] sm:$0xff]
  %v4741 = vld [vmem:[%s4 + $0x960] sm:$0xff]
  %v4742 = vld [vmem:[%s4 + $0x968] sm:$0xff]
  %v4743 = vld [vmem:[%s4 + $0x970] sm:$0xff]
  %v4744 = vld [vmem:[%s4 + $0x978] sm:$0xff]
  %v4745 = vld [vmem:[%s4 + $0x980] sm:$0xff]
  %v4746 = vld [vmem:[%s4 + $0x988] sm:$0xff]
  %v4747 = vld [vmem:[%s4 + $0x990] sm:$0xff]
  %v4748 = vld [vmem:[%s4 + $0x998] sm:$0xff]
  %v4749 = vld [vmem:[%s4 + $0x9a0] sm:$0xff]
  %v4750 = vld [vmem:[%s4 + $0x9a8] sm:$0xff]
  %v4751 = vld [vmem:[%s4 + $0x9b0] sm:$0xff]
  %v4752 = vld [vmem:[%s4 + $0x9b8] sm:$0xff]
  %v4753 = vld [vmem:[%s4 + $0x9c0] sm:$0xff]
  %v4754 = vld [vmem:[%s4 + $0x9c8] sm:$0xff]
  %v4755 = vld [vmem:[%s4 + $0x9d0] sm:$0xff]
  %v4756 = vld [vmem:[%s4 + $0x9d8] sm:$0xff]
  %v4757 = vld [vmem:[%s4 + $0x9e0] sm:$0xff]
  %v4758 = vld [vmem:[%s4 + $0x9e8] sm:$0xff]
  %v4759 = vld [vmem:[%s4 + $0x9f0] sm:$0xff]
  %v4760 = vld [vmem:[%s4 + $0x9f8] sm:$0xff]
  %v4761 = vld [vmem:[%s4 + $0xa00] sm:$0xff]
  %v4762 = vld [vmem:[%s4 + $0xa08] sm:$0xff]
  %v4763 = vld [vmem:[%s4 + $0xa10] sm:$0xff]
  %v4764 = vld [vmem:[%s4 + $0xa18] sm:$0xff]
  %v4765 = vld [vmem:[%s4 + $0xa20] sm:$0xff]
  %v4766 = vld [vmem:[%s4 + $0xa28] sm:$0xff]
  %v4767 = vld [vmem:[%s4 + $0xa30] sm:$0xff]
  %v4768 = vld [vmem:[%s4 + $0xa38] sm:$0xff]
  %v4769 = vld [vmem:[%s4 + $0xa40] sm:$0xff]
  %v4770 = vld [vmem:[%s4 + $0xa48] sm:$0xff]
  %v4771 = vld [vmem:[%s4 + $0xa50] sm:$0xff]
  %v4772 = vld [vmem:[%s4 + $0xa58] sm:$0xff]
  %v4773 = vld [vmem:[%s4 + $0xa60] sm:$0xff]
  %v4774 = vld [vmem:[%s4 + $0xa68] sm:$0xff]
  %v4775 = vld [vmem:[%s4 + $0xa70] sm:$0xff]
  %v4776 = vld [vmem:[%s4 + $0xa78] sm:$0xff]
  %v4777 = vld [vmem:[%s4 + $0xa80] sm:$0xff]
  %v4778 = vld [vmem:[%s4 + $0xa88] sm:$0xff]
  %v4779 = vld [vmem:[%s4 + $0xa90] sm:$0xff]
  %v4780 = vld [vmem:[%s4 + $0xa98] sm:$0xff]
  %v4781 = vld [vmem:[%s4 + $0xaa0] sm:$0xff]
  %v4782 = vld [vmem:[%s4 + $0xaa8] sm:$0xff]
  %v4783 = vld [vmem:[%s4 + $0xab0] sm:$0xff]
  %v4784 = vld [vmem:[%s4 + $0xab8] sm:$0xff]
  %v4785 = vld [vmem:[%s4 + $0xac0] sm:$0xff]
  %v4786 = vld [vmem:[%s4 + $0xac8] sm:$0xff]
  %v4787 = vld [vmem:[%s4 + $0xad0] sm:$0xff]
  %v4788 = vld [vmem:[%s4 + $0xad8] sm:$0xff]
  %v4789 = vld [vmem:[%s4 + $0xae0] sm:$0xff]
  %v4790 = vld [vmem:[%s4 + $0xae8] sm:$0xff]
  %v4791 = vld [vmem:[%s4 + $0xaf0] sm:$0xff]
  %v4792 = vld [vmem:[%s4 + $0xaf8] sm:$0xff]
  %v4793 = vld [vmem:[%s4 + $0xb00] sm:$0xff]
  %v4794 = vld [vmem:[%s4 + $0xb08] sm:$0xff]
  %v4795 = vld [vmem:[%s4 + $0xb10] sm:$0xff]
  %v4796 = vld [vmem:[%s4 + $0xb18] sm:$0xff]
  %v4797 = vld [vmem:[%s4 + $0xb20] sm:$0xff]
  %v4798 = vld [vmem:[%s4 + $0xb28] sm:$0xff]
  %v4799 = vld [vmem:[%s4 + $0xb30] sm:$0xff]
  %v4800 = vld [vmem:[%s4 + $0xb38] sm:$0xff]
  %v4801 = vld [vmem:[%s4 + $0xb40] sm:$0xff]
  %v4802 = vld [vmem:[%s4 + $0xb48] sm:$0xff]
  %v4803 = vld [vmem:[%s4 + $0xb50] sm:$0xff]
  %v4804 = vld [vmem:[%s4 + $0xb58] sm:$0xff]
  %v4805 = vld [vmem:[%s4 + $0xb60] sm:$0xff]
  %v4806 = vld [vmem:[%s4 + $0xb68] sm:$0xff]
  %v4807 = vld [vmem:[%s4 + $0xb70] sm:$0xff]
  %v4808 = vld [vmem:[%s4 + $0xb78] sm:$0xff]
  %v4809 = vld [vmem:[%s4 + $0xb80] sm:$0xff]
  %v4810 = vld [vmem:[%s4 + $0xb88] sm:$0xff]
  %v4811 = vld [vmem:[%s4 + $0xb90] sm:$0xff]
  %v4812 = vld [vmem:[%s4 + $0xb98] sm:$0xff]
  %v4813 = vld [vmem:[%s4 + $0xba0] sm:$0xff]
  %v4814 = vld [vmem:[%s4 + $0xba8] sm:$0xff]
  %v4815 = vld [vmem:[%s4 + $0xbb0] sm:$0xff]
  %v4816 = vld [vmem:[%s4 + $0xbb8] sm:$0xff]
  %v4817 = vld [vmem:[%s4 + $0xbc0] sm:$0xff]
  %v4818 = vld [vmem:[%s4 + $0xbc8] sm:$0xff]
  %v4819 = vld [vmem:[%s4 + $0xbd0] sm:$0xff]
  %v4820 = vld [vmem:[%s4 + $0xbd8] sm:$0xff]
  %v4821 = vld [vmem:[%s4 + $0xbe0] sm:$0xff]
  %v4822 = vld [vmem:[%s4 + $0xbe8] sm:$0xff]
  %v4823 = vld [vmem:[%s4 + $0xbf0] sm:$0xff]
  %v4824 = vld [vmem:[%s4 + $0xbf8] sm:$0xff]
  %v4825 = vld [vmem:[%s4 + $0xc00] sm:$0xff]
  %v4826 = vld [vmem:[%s4 + $0xc08] sm:$0xff]
  %v4827 = vld [vmem:[%s4 + $0xc10] sm:$0xff]
  %v4828 = vld [vmem:[%s4 + $0xc18] sm:$0xff]
  %v4829 = vld [vmem:[%s4 + $0xc20] sm:$0xff]
  %v4830 = vld [vmem:[%s4 + $0xc28] sm:$0xff]
  %v4831 = vld [vmem:[%s4 + $0xc30] sm:$0xff]
  %v4832 = vld [vmem:[%s4 + $0xc38] sm:$0xff]
  %v4833 = vld [vmem:[%s4 + $0xc40] sm:$0xff]
  %v4834 = vld [vmem:[%s4 + $0xc48] sm:$0xff]
  %v4835 = vld [vmem:[%s4 + $0xc50] sm:$0xff]
  %v4836 = vld [vmem:[%s4 + $0xc58] sm:$0xff]
  %v4837 = vld [vmem:[%s4 + $0xc60] sm:$0xff]
  %v4838 = vld [vmem:[%s4 + $0xc68] sm:$0xff]
  %v4839 = vld [vmem:[%s4 + $0xc70] sm:$0xff]
  %v4840 = vld [vmem:[%s4 + $0xc78] sm:$0xff]
  %v4841 = vld [vmem:[%s4 + $0xc80] sm:$0xff]
  %v4842 = vld [vmem:[%s4 + $0xc88] sm:$0xff]
  %v4843 = vld [vmem:[%s4 + $0xc90] sm:$0xff]
  %v4844 = vld [vmem:[%s4 + $0xc98] sm:$0xff]
  %v4845 = vld [vmem:[%s4 + $0xca0] sm:$0xff]
  %v4846 = vld [vmem:[%s4 + $0xca8] sm:$0xff]
  %v4847 = vld [vmem:[%s4 + $0xcb0] sm:$0xff]
  %v4848 = vld [vmem:[%s4 + $0xcb8] sm:$0xff]
  %v4849 = vld [vmem:[%s4 + $0xcc0] sm:$0xff]
  %v4850 = vld [vmem:[%s4 + $0xcc8] sm:$0xff]
  %v4851 = vld [vmem:[%s4 + $0xcd0] sm:$0xff]
  %v4852 = vld [vmem:[%s4 + $0xcd8] sm:$0xff]
  %v4853 = vld [vmem:[%s4 + $0xce0] sm:$0xff]
  %v4854 = vld [vmem:[%s4 + $0xce8] sm:$0xff]
  %v4855 = vld [vmem:[%s4 + $0xcf0] sm:$0xff]
  %v4856 = vld [vmem:[%s4 + $0xcf8] sm:$0xff]
  %v4857 = vld [vmem:[%s4 + $0xd00] sm:$0xff]
  %v4858 = vld [vmem:[%s4 + $0xd08] sm:$0xff]
  %v4859 = vld [vmem:[%s4 + $0xd10] sm:$0xff]
  %v4860 = vld [vmem:[%s4 + $0xd18] sm:$0xff]
  %v4861 = vld [vmem:[%s4 + $0xd20] sm:$0xff]
  %v4862 = vld [vmem:[%s4 + $0xd28] sm:$0xff]
  %v4863 = vld [vmem:[%s4 + $0xd30] sm:$0xff]
  %v4864 = vld [vmem:[%s4 + $0xd38] sm:$0xff]
  %v4865 = vld [vmem:[%s4 + $0xd40] sm:$0xff]
  %v4866 = vld [vmem:[%s4 + $0xd48] sm:$0xff]
  %v4867 = vld [vmem:[%s4 + $0xd50] sm:$0xff]
  %v4868 = vld [vmem:[%s4 + $0xd58] sm:$0xff]
  %v4869 = vld [vmem:[%s4 + $0xd60] sm:$0xff]
  %v4870 = vld [vmem:[%s4 + $0xd68] sm:$0xff]
  %v4871 = vld [vmem:[%s4 + $0xd70] sm:$0xff]
  %v4872 = vld [vmem:[%s4 + $0xd78] sm:$0xff]
  %v4873 = vld [vmem:[%s4 + $0xd80] sm:$0xff]
  %v4874 = vld [vmem:[%s4 + $0xd88] sm:$0xff]
  %v4875 = vld [vmem:[%s4 + $0xd90] sm:$0xff]
  %v4876 = vld [vmem:[%s4 + $0xd98] sm:$0xff]
  %v4877 = vld [vmem:[%s4 + $0xda0] sm:$0xff]
  %v4878 = vld [vmem:[%s4 + $0xda8] sm:$0xff]
  %v4879 = vld [vmem:[%s4 + $0xdb0] sm:$0xff]
  %v4880 = vld [vmem:[%s4 + $0xdb8] sm:$0xff]
  %v4881 = vld [vmem:[%s4 + $0xdc0] sm:$0xff]
  %v4882 = vld [vmem:[%s4 + $0xdc8] sm:$0xff]
  %v4883 = vld [vmem:[%s4 + $0xdd0] sm:$0xff]
  %v4884 = vld [vmem:[%s4 + $0xdd8] sm:$0xff]
  %v4885 = vld [vmem:[%s4 + $0xde0] sm:$0xff]
  %v4886 = vld [vmem:[%s4 + $0xde8] sm:$0xff]
  %v4887 = vld [vmem:[%s4 + $0xdf0] sm:$0xff]
  %v4888 = vld [vmem:[%s4 + $0xdf8] sm:$0xff]
  %v4889 = vld [vmem:[%s5] sm:$0xf]
  %v4891 = vlaneseq
  %v4892 = vshrl.u32 %v4891, 7
  %v4893 = vsub.s32 0, %v4892
  %v4894 = vrot.slane %v4889, %v4893
  %v4895 = vlaneseq
  %v4896 = vshrl.u32 %v4895, 7
  %v4897 = vsub.s32 1, %v4896
  %v4898 = vrot.slane %v4889, %v4897
  %v4899 = vlaneseq
  %v4900 = vshrl.u32 %v4899, 7
  %v4901 = vsub.s32 2, %v4900
  %v4902 = vrot.slane %v4889, %v4901
  %v4903 = vlaneseq
  %v4904 = vshrl.u32 %v4903, 7
  %v4905 = vsub.s32 3, %v4904
  %v4906 = vrot.slane %v4889, %v4905
  %v5359 = vunpack.c.l.b16 %v4441
  %v5360 = vunpack.c.h.b16 %v4441
  %v5361 = vunpack.c.l.b16 %v4442
  %v5362 = vunpack.c.h.b16 %v4442
  %v5363 = vunpack.c.l.b16 %v4443
  %v5364 = vunpack.c.h.b16 %v4443
  %v5365 = vunpack.c.l.b16 %v4444
  %v5366 = vunpack.c.h.b16 %v4444
  %v5367 = vunpack.c.l.b16 %v4445
  %v5368 = vunpack.c.h.b16 %v4445
  %v5369 = vunpack.c.l.b16 %v4446
  %v5370 = vunpack.c.h.b16 %v4446
  %v5371 = vunpack.c.l.b16 %v4447
  %v5372 = vunpack.c.h.b16 %v4447
  %v5373 = vunpack.c.l.b16 %v4448
  %v5374 = vunpack.c.h.b16 %v4448
  %v5375 = vunpack.c.l.b16 %v4449
  %v5376 = vunpack.c.h.b16 %v4449
  %v5377 = vunpack.c.l.b16 %v4450
  %v5378 = vunpack.c.h.b16 %v4450
  %v5379 = vunpack.c.l.b16 %v4451
  %v5380 = vunpack.c.h.b16 %v4451
  %v5381 = vunpack.c.l.b16 %v4452
  %v5382 = vunpack.c.h.b16 %v4452
  %v5383 = vunpack.c.l.b16 %v4453
  %v5384 = vunpack.c.h.b16 %v4453
  %v5385 = vunpack.c.l.b16 %v4454
  %v5386 = vunpack.c.h.b16 %v4454
  %v5387 = vunpack.c.l.b16 %v4455
  %v5388 = vunpack.c.h.b16 %v4455
  %v5389 = vunpack.c.l.b16 %v4456
  %v5390 = vunpack.c.h.b16 %v4456
  %v5391 = vunpack.c.l.b16 %v4457
  %v5392 = vunpack.c.h.b16 %v4457
  %v5393 = vunpack.c.l.b16 %v4458
  %v5394 = vunpack.c.h.b16 %v4458
  %v5395 = vunpack.c.l.b16 %v4459
  %v5396 = vunpack.c.h.b16 %v4459
  %v5397 = vunpack.c.l.b16 %v4460
  %v5398 = vunpack.c.h.b16 %v4460
  %v5399 = vunpack.c.l.b16 %v4461
  %v5400 = vunpack.c.h.b16 %v4461
  %v5401 = vunpack.c.l.b16 %v4462
  %v5402 = vunpack.c.h.b16 %v4462
  %v5403 = vunpack.c.l.b16 %v4463
  %v5404 = vunpack.c.h.b16 %v4463
  %v5405 = vunpack.c.l.b16 %v4464
  %v5406 = vunpack.c.h.b16 %v4464
  %v5407 = vunpack.c.l.b16 %v4465
  %v5408 = vunpack.c.h.b16 %v4465
  %v5409 = vunpack.c.l.b16 %v4466
  %v5410 = vunpack.c.h.b16 %v4466
  %v5411 = vunpack.c.l.b16 %v4467
  %v5412 = vunpack.c.h.b16 %v4467
  %v5413 = vunpack.c.l.b16 %v4468
  %v5414 = vunpack.c.h.b16 %v4468
  %v5415 = vunpack.c.l.b16 %v4469
  %v5416 = vunpack.c.h.b16 %v4469
  %v5417 = vunpack.c.l.b16 %v4470
  %v5418 = vunpack.c.h.b16 %v4470
  %v5419 = vunpack.c.l.b16 %v4471
  %v5420 = vunpack.c.h.b16 %v4471
  %v5421 = vunpack.c.l.b16 %v4472
  %v5422 = vunpack.c.h.b16 %v4472
  %v5423 = vunpack.c.l.b16 %v4473
  %v5424 = vunpack.c.h.b16 %v4473
  %v5425 = vunpack.c.l.b16 %v4474
  %v5426 = vunpack.c.h.b16 %v4474
  %v5427 = vunpack.c.l.b16 %v4475
  %v5428 = vunpack.c.h.b16 %v4475
  %v5429 = vunpack.c.l.b16 %v4476
  %v5430 = vunpack.c.h.b16 %v4476
  %v5431 = vunpack.c.l.b16 %v4477
  %v5432 = vunpack.c.h.b16 %v4477
  %v5433 = vunpack.c.l.b16 %v4478
  %v5434 = vunpack.c.h.b16 %v4478
  %v5435 = vunpack.c.l.b16 %v4479
  %v5436 = vunpack.c.h.b16 %v4479
  %v5437 = vunpack.c.l.b16 %v4480
  %v5438 = vunpack.c.h.b16 %v4480
  %v5439 = vunpack.c.l.b16 %v4481
  %v5440 = vunpack.c.h.b16 %v4481
  %v5441 = vunpack.c.l.b16 %v4482
  %v5442 = vunpack.c.h.b16 %v4482
  %v5443 = vunpack.c.l.b16 %v4483
  %v5444 = vunpack.c.h.b16 %v4483
  %v5445 = vunpack.c.l.b16 %v4484
  %v5446 = vunpack.c.h.b16 %v4484
  %v5447 = vunpack.c.l.b16 %v4485
  %v5448 = vunpack.c.h.b16 %v4485
  %v5449 = vunpack.c.l.b16 %v4486
  %v5450 = vunpack.c.h.b16 %v4486
  %v5451 = vunpack.c.l.b16 %v4487
  %v5452 = vunpack.c.h.b16 %v4487
  %v5453 = vunpack.c.l.b16 %v4488
  %v5454 = vunpack.c.h.b16 %v4488
  %v5455 = vunpack.c.l.b16 %v4489
  %v5456 = vunpack.c.h.b16 %v4489
  %v5457 = vunpack.c.l.b16 %v4490
  %v5458 = vunpack.c.h.b16 %v4490
  %v5459 = vunpack.c.l.b16 %v4491
  %v5460 = vunpack.c.h.b16 %v4491
  %v5461 = vunpack.c.l.b16 %v4492
  %v5462 = vunpack.c.h.b16 %v4492
  %v5463 = vunpack.c.l.b16 %v4493
  %v5464 = vunpack.c.h.b16 %v4493
  %v5465 = vunpack.c.l.b16 %v4494
  %v5466 = vunpack.c.h.b16 %v4494
  %v5467 = vunpack.c.l.b16 %v4495
  %v5468 = vunpack.c.h.b16 %v4495
  %v5469 = vunpack.c.l.b16 %v4496
  %v5470 = vunpack.c.h.b16 %v4496
  %v5471 = vunpack.c.l.b16 %v4497
  %v5472 = vunpack.c.h.b16 %v4497
  %v5473 = vunpack.c.l.b16 %v4498
  %v5474 = vunpack.c.h.b16 %v4498
  %v5475 = vunpack.c.l.b16 %v4499
  %v5476 = vunpack.c.h.b16 %v4499
  %v5477 = vunpack.c.l.b16 %v4500
  %v5478 = vunpack.c.h.b16 %v4500
  %v5479 = vunpack.c.l.b16 %v4501
  %v5480 = vunpack.c.h.b16 %v4501
  %v5481 = vunpack.c.l.b16 %v4502
  %v5482 = vunpack.c.h.b16 %v4502
  %v5483 = vunpack.c.l.b16 %v4503
  %v5484 = vunpack.c.h.b16 %v4503
  %v5485 = vunpack.c.l.b16 %v4504
  %v5486 = vunpack.c.h.b16 %v4504
  %v5487 = vunpack.c.l.b16 %v4505
  %v5488 = vunpack.c.h.b16 %v4505
  %v5489 = vunpack.c.l.b16 %v4506
  %v5490 = vunpack.c.h.b16 %v4506
  %v5491 = vunpack.c.l.b16 %v4507
  %v5492 = vunpack.c.h.b16 %v4507
  %v5493 = vunpack.c.l.b16 %v4508
  %v5494 = vunpack.c.h.b16 %v4508
  %v5495 = vunpack.c.l.b16 %v4509
  %v5496 = vunpack.c.h.b16 %v4509
  %v5497 = vunpack.c.l.b16 %v4510
  %v5498 = vunpack.c.h.b16 %v4510
  %v5499 = vunpack.c.l.b16 %v4511
  %v5500 = vunpack.c.h.b16 %v4511
  %v5501 = vunpack.c.l.b16 %v4512
  %v5502 = vunpack.c.h.b16 %v4512
  %v5503 = vunpack.c.l.b16 %v4513
  %v5504 = vunpack.c.h.b16 %v4513
  %v5505 = vunpack.c.l.b16 %v4514
  %v5506 = vunpack.c.h.b16 %v4514
  %v5507 = vunpack.c.l.b16 %v4515
  %v5508 = vunpack.c.h.b16 %v4515
  %v5509 = vunpack.c.l.b16 %v4516
  %v5510 = vunpack.c.h.b16 %v4516
  %v5511 = vunpack.c.l.b16 %v4517
  %v5512 = vunpack.c.h.b16 %v4517
  %v5513 = vunpack.c.l.b16 %v4518
  %v5514 = vunpack.c.h.b16 %v4518
  %v5515 = vunpack.c.l.b16 %v4519
  %v5516 = vunpack.c.h.b16 %v4519
  %v5517 = vunpack.c.l.b16 %v4520
  %v5518 = vunpack.c.h.b16 %v4520
  %v5519 = vunpack.c.l.b16 %v4521
  %v5520 = vunpack.c.h.b16 %v4521
  %v5521 = vunpack.c.l.b16 %v4522
  %v5522 = vunpack.c.h.b16 %v4522
  %v5523 = vunpack.c.l.b16 %v4523
  %v5524 = vunpack.c.h.b16 %v4523
  %v5525 = vunpack.c.l.b16 %v4524
  %v5526 = vunpack.c.h.b16 %v4524
  %v5527 = vunpack.c.l.b16 %v4525
  %v5528 = vunpack.c.h.b16 %v4525
  %v5529 = vunpack.c.l.b16 %v4526
  %v5530 = vunpack.c.h.b16 %v4526
  %v5531 = vunpack.c.l.b16 %v4527
  %v5532 = vunpack.c.h.b16 %v4527
  %v5533 = vunpack.c.l.b16 %v4528
  %v5534 = vunpack.c.h.b16 %v4528
  %v5535 = vunpack.c.l.b16 %v4529
  %v5536 = vunpack.c.h.b16 %v4529
  %v5537 = vunpack.c.l.b16 %v4530
  %v5538 = vunpack.c.h.b16 %v4530
  %v5539 = vunpack.c.l.b16 %v4531
  %v5540 = vunpack.c.h.b16 %v4531
  %v5541 = vunpack.c.l.b16 %v4532
  %v5542 = vunpack.c.h.b16 %v4532
  %v5543 = vunpack.c.l.b16 %v4533
  %v5544 = vunpack.c.h.b16 %v4533
  %v5545 = vunpack.c.l.b16 %v4534
  %v5546 = vunpack.c.h.b16 %v4534
  %v5547 = vunpack.c.l.b16 %v4535
  %v5548 = vunpack.c.h.b16 %v4535
  %v5549 = vunpack.c.l.b16 %v4536
  %v5550 = vunpack.c.h.b16 %v4536
  %v5551 = vunpack.c.l.b16 %v4537
  %v5552 = vunpack.c.h.b16 %v4537
  %v5553 = vunpack.c.l.b16 %v4538
  %v5554 = vunpack.c.h.b16 %v4538
  %v5555 = vunpack.c.l.b16 %v4539
  %v5556 = vunpack.c.h.b16 %v4539
  %v5557 = vunpack.c.l.b16 %v4540
  %v5558 = vunpack.c.h.b16 %v4540
  %v5559 = vunpack.c.l.b16 %v4541
  %v5560 = vunpack.c.h.b16 %v4541
  %v5561 = vunpack.c.l.b16 %v4542
  %v5562 = vunpack.c.h.b16 %v4542
  %v5563 = vunpack.c.l.b16 %v4543
  %v5564 = vunpack.c.h.b16 %v4543
  %v5565 = vunpack.c.l.b16 %v4544
  %v5566 = vunpack.c.h.b16 %v4544
  %v5567 = vunpack.c.l.b16 %v4545
  %v5568 = vunpack.c.h.b16 %v4545
  %v5569 = vunpack.c.l.b16 %v4546
  %v5570 = vunpack.c.h.b16 %v4546
  %v5571 = vunpack.c.l.b16 %v4547
  %v5572 = vunpack.c.h.b16 %v4547
  %v5573 = vunpack.c.l.b16 %v4548
  %v5574 = vunpack.c.h.b16 %v4548
  %v5575 = vunpack.c.l.b16 %v4549
  %v5576 = vunpack.c.h.b16 %v4549
  %v5577 = vunpack.c.l.b16 %v4550
  %v5578 = vunpack.c.h.b16 %v4550
  %v5579 = vunpack.c.l.b16 %v4551
  %v5580 = vunpack.c.h.b16 %v4551
  %v5581 = vunpack.c.l.b16 %v4552
  %v5582 = vunpack.c.h.b16 %v4552
  %v5583 = vunpack.c.l.b16 %v4553
  %v5584 = vunpack.c.h.b16 %v4553
  %v5585 = vunpack.c.l.b16 %v4554
  %v5586 = vunpack.c.h.b16 %v4554
  %v5587 = vunpack.c.l.b16 %v4555
  %v5588 = vunpack.c.h.b16 %v4555
  %v5589 = vunpack.c.l.b16 %v4556
  %v5590 = vunpack.c.h.b16 %v4556
  %v5591 = vunpack.c.l.b16 %v4557
  %v5592 = vunpack.c.h.b16 %v4557
  %v5593 = vunpack.c.l.b16 %v4558
  %v5594 = vunpack.c.h.b16 %v4558
  %v5595 = vunpack.c.l.b16 %v4559
  %v5596 = vunpack.c.h.b16 %v4559
  %v5597 = vunpack.c.l.b16 %v4560
  %v5598 = vunpack.c.h.b16 %v4560
  %v5599 = vunpack.c.l.b16 %v4561
  %v5600 = vunpack.c.h.b16 %v4561
  %v5601 = vunpack.c.l.b16 %v4562
  %v5602 = vunpack.c.h.b16 %v4562
  %v5603 = vunpack.c.l.b16 %v4563
  %v5604 = vunpack.c.h.b16 %v4563
  %v5605 = vunpack.c.l.b16 %v4564
  %v5606 = vunpack.c.h.b16 %v4564
  %v5607 = vunpack.c.l.b16 %v4565
  %v5608 = vunpack.c.h.b16 %v4565
  %v5609 = vunpack.c.l.b16 %v4566
  %v5610 = vunpack.c.h.b16 %v4566
  %v5611 = vunpack.c.l.b16 %v4567
  %v5612 = vunpack.c.h.b16 %v4567
  %v5613 = vunpack.c.l.b16 %v4568
  %v5614 = vunpack.c.h.b16 %v4568
  %v5615 = vunpack.c.l.b16 %v4569
  %v5616 = vunpack.c.h.b16 %v4569
  %v5617 = vunpack.c.l.b16 %v4570
  %v5618 = vunpack.c.h.b16 %v4570
  %v5619 = vunpack.c.l.b16 %v4571
  %v5620 = vunpack.c.h.b16 %v4571
  %v5621 = vunpack.c.l.b16 %v4572
  %v5622 = vunpack.c.h.b16 %v4572
  %v5623 = vunpack.c.l.b16 %v4573
  %v5624 = vunpack.c.h.b16 %v4573
  %v5625 = vunpack.c.l.b16 %v4574
  %v5626 = vunpack.c.h.b16 %v4574
  %v5627 = vunpack.c.l.b16 %v4575
  %v5628 = vunpack.c.h.b16 %v4575
  %v5629 = vunpack.c.l.b16 %v4576
  %v5630 = vunpack.c.h.b16 %v4576
  %v5631 = vunpack.c.l.b16 %v4577
  %v5632 = vunpack.c.h.b16 %v4577
  %v5633 = vunpack.c.l.b16 %v4578
  %v5634 = vunpack.c.h.b16 %v4578
  %v5635 = vunpack.c.l.b16 %v4579
  %v5636 = vunpack.c.h.b16 %v4579
  %v5637 = vunpack.c.l.b16 %v4580
  %v5638 = vunpack.c.h.b16 %v4580
  %v5639 = vunpack.c.l.b16 %v4581
  %v5640 = vunpack.c.h.b16 %v4581
  %v5641 = vunpack.c.l.b16 %v4582
  %v5642 = vunpack.c.h.b16 %v4582
  %v5643 = vunpack.c.l.b16 %v4583
  %v5644 = vunpack.c.h.b16 %v4583
  %v5645 = vunpack.c.l.b16 %v4584
  %v5646 = vunpack.c.h.b16 %v4584
  %v5647 = vunpack.c.l.b16 %v4585
  %v5648 = vunpack.c.h.b16 %v4585
  %v5649 = vunpack.c.l.b16 %v4586
  %v5650 = vunpack.c.h.b16 %v4586
  %v5651 = vunpack.c.l.b16 %v4587
  %v5652 = vunpack.c.h.b16 %v4587
  %v5653 = vunpack.c.l.b16 %v4588
  %v5654 = vunpack.c.h.b16 %v4588
  %v5655 = vunpack.c.l.b16 %v4589
  %v5656 = vunpack.c.h.b16 %v4589
  %v5657 = vunpack.c.l.b16 %v4590
  %v5658 = vunpack.c.h.b16 %v4590
  %v5659 = vunpack.c.l.b16 %v4591
  %v5660 = vunpack.c.h.b16 %v4591
  %v5661 = vunpack.c.l.b16 %v4592
  %v5662 = vunpack.c.h.b16 %v4592
  %v5663 = vunpack.c.l.b16 %v4593
  %v5664 = vunpack.c.h.b16 %v4593
  %v5665 = vunpack.c.l.b16 %v4594
  %v5666 = vunpack.c.h.b16 %v4594
  %v5667 = vunpack.c.l.b16 %v4595
  %v5668 = vunpack.c.h.b16 %v4595
  %v5669 = vunpack.c.l.b16 %v4596
  %v5670 = vunpack.c.h.b16 %v4596
  %v5671 = vunpack.c.l.b16 %v4597
  %v5672 = vunpack.c.h.b16 %v4597
  %v5673 = vunpack.c.l.b16 %v4598
  %v5674 = vunpack.c.h.b16 %v4598
  %v5675 = vunpack.c.l.b16 %v4599
  %v5676 = vunpack.c.h.b16 %v4599
  %v5677 = vunpack.c.l.b16 %v4600
  %v5678 = vunpack.c.h.b16 %v4600
  %v5679 = vunpack.c.l.b16 %v4601
  %v5680 = vunpack.c.h.b16 %v4601
  %v5681 = vunpack.c.l.b16 %v4602
  %v5682 = vunpack.c.h.b16 %v4602
  %v5683 = vunpack.c.l.b16 %v4603
  %v5684 = vunpack.c.h.b16 %v4603
  %v5685 = vunpack.c.l.b16 %v4604
  %v5686 = vunpack.c.h.b16 %v4604
  %v5687 = vunpack.c.l.b16 %v4605
  %v5688 = vunpack.c.h.b16 %v4605
  %v5689 = vunpack.c.l.b16 %v4606
  %v5690 = vunpack.c.h.b16 %v4606
  %v5691 = vunpack.c.l.b16 %v4607
  %v5692 = vunpack.c.h.b16 %v4607
  %v5693 = vunpack.c.l.b16 %v4608
  %v5694 = vunpack.c.h.b16 %v4608
  %v5695 = vunpack.c.l.b16 %v4609
  %v5696 = vunpack.c.h.b16 %v4609
  %v5697 = vunpack.c.l.b16 %v4610
  %v5698 = vunpack.c.h.b16 %v4610
  %v5699 = vunpack.c.l.b16 %v4611
  %v5700 = vunpack.c.h.b16 %v4611
  %v5701 = vunpack.c.l.b16 %v4612
  %v5702 = vunpack.c.h.b16 %v4612
  %v5703 = vunpack.c.l.b16 %v4613
  %v5704 = vunpack.c.h.b16 %v4613
  %v5705 = vunpack.c.l.b16 %v4614
  %v5706 = vunpack.c.h.b16 %v4614
  %v5707 = vunpack.c.l.b16 %v4615
  %v5708 = vunpack.c.h.b16 %v4615
  %v5709 = vunpack.c.l.b16 %v4616
  %v5710 = vunpack.c.h.b16 %v4616
  %v5711 = vunpack.c.l.b16 %v4617
  %v5712 = vunpack.c.h.b16 %v4617
  %v5713 = vunpack.c.l.b16 %v4618
  %v5714 = vunpack.c.h.b16 %v4618
  %v5715 = vunpack.c.l.b16 %v4619
  %v5716 = vunpack.c.h.b16 %v4619
  %v5717 = vunpack.c.l.b16 %v4620
  %v5718 = vunpack.c.h.b16 %v4620
  %v5719 = vunpack.c.l.b16 %v4621
  %v5720 = vunpack.c.h.b16 %v4621
  %v5721 = vunpack.c.l.b16 %v4622
  %v5722 = vunpack.c.h.b16 %v4622
  %v5723 = vunpack.c.l.b16 %v4623
  %v5724 = vunpack.c.h.b16 %v4623
  %v5725 = vunpack.c.l.b16 %v4624
  %v5726 = vunpack.c.h.b16 %v4624
  %v5727 = vunpack.c.l.b16 %v4625
  %v5728 = vunpack.c.h.b16 %v4625
  %v5729 = vunpack.c.l.b16 %v4626
  %v5730 = vunpack.c.h.b16 %v4626
  %v5731 = vunpack.c.l.b16 %v4627
  %v5732 = vunpack.c.h.b16 %v4627
  %v5733 = vunpack.c.l.b16 %v4628
  %v5734 = vunpack.c.h.b16 %v4628
  %v5735 = vunpack.c.l.b16 %v4629
  %v5736 = vunpack.c.h.b16 %v4629
  %v5737 = vunpack.c.l.b16 %v4630
  %v5738 = vunpack.c.h.b16 %v4630
  %v5739 = vunpack.c.l.b16 %v4631
  %v5740 = vunpack.c.h.b16 %v4631
  %v5741 = vunpack.c.l.b16 %v4632
  %v5742 = vunpack.c.h.b16 %v4632
  %v5743 = vunpack.c.l.b16 %v4633
  %v5744 = vunpack.c.h.b16 %v4633
  %v5745 = vunpack.c.l.b16 %v4634
  %v5746 = vunpack.c.h.b16 %v4634
  %v5747 = vunpack.c.l.b16 %v4635
  %v5748 = vunpack.c.h.b16 %v4635
  %v5749 = vunpack.c.l.b16 %v4636
  %v5750 = vunpack.c.h.b16 %v4636
  %v5751 = vunpack.c.l.b16 %v4637
  %v5752 = vunpack.c.h.b16 %v4637
  %v5753 = vunpack.c.l.b16 %v4638
  %v5754 = vunpack.c.h.b16 %v4638
  %v5755 = vunpack.c.l.b16 %v4639
  %v5756 = vunpack.c.h.b16 %v4639
  %v5757 = vunpack.c.l.b16 %v4640
  %v5758 = vunpack.c.h.b16 %v4640
  %v5759 = vunpack.c.l.b16 %v4641
  %v5760 = vunpack.c.h.b16 %v4641
  %v5761 = vunpack.c.l.b16 %v4642
  %v5762 = vunpack.c.h.b16 %v4642
  %v5763 = vunpack.c.l.b16 %v4643
  %v5764 = vunpack.c.h.b16 %v4643
  %v5765 = vunpack.c.l.b16 %v4644
  %v5766 = vunpack.c.h.b16 %v4644
  %v5767 = vunpack.c.l.b16 %v4645
  %v5768 = vunpack.c.h.b16 %v4645
  %v5769 = vunpack.c.l.b16 %v4646
  %v5770 = vunpack.c.h.b16 %v4646
  %v5771 = vunpack.c.l.b16 %v4647
  %v5772 = vunpack.c.h.b16 %v4647
  %v5773 = vunpack.c.l.b16 %v4648
  %v5774 = vunpack.c.h.b16 %v4648
  %v5775 = vunpack.c.l.b16 %v4649
  %v5776 = vunpack.c.h.b16 %v4649
  %v5777 = vunpack.c.l.b16 %v4650
  %v5778 = vunpack.c.h.b16 %v4650
  %v5779 = vunpack.c.l.b16 %v4651
  %v5780 = vunpack.c.h.b16 %v4651
  %v5781 = vunpack.c.l.b16 %v4652
  %v5782 = vunpack.c.h.b16 %v4652
  %v5783 = vunpack.c.l.b16 %v4653
  %v5784 = vunpack.c.h.b16 %v4653
  %v5785 = vunpack.c.l.b16 %v4654
  %v5786 = vunpack.c.h.b16 %v4654
  %v5787 = vunpack.c.l.b16 %v4655
  %v5788 = vunpack.c.h.b16 %v4655
  %v5789 = vunpack.c.l.b16 %v4656
  %v5790 = vunpack.c.h.b16 %v4656
  %v5791 = vunpack.c.l.b16 %v4657
  %v5792 = vunpack.c.h.b16 %v4657
  %v5793 = vunpack.c.l.b16 %v4658
  %v5794 = vunpack.c.h.b16 %v4658
  %v5795 = vunpack.c.l.b16 %v4659
  %v5796 = vunpack.c.h.b16 %v4659
  %v5797 = vunpack.c.l.b16 %v4660
  %v5798 = vunpack.c.h.b16 %v4660
  %v5799 = vunpack.c.l.b16 %v4661
  %v5800 = vunpack.c.h.b16 %v4661
  %v5801 = vunpack.c.l.b16 %v4662
  %v5802 = vunpack.c.h.b16 %v4662
  %v5803 = vunpack.c.l.b16 %v4663
  %v5804 = vunpack.c.h.b16 %v4663
  %v5805 = vunpack.c.l.b16 %v4664
  %v5806 = vunpack.c.h.b16 %v4664
  %v5807 = vunpack.c.l.b16 %v4665
  %v5808 = vunpack.c.h.b16 %v4665
  %v5809 = vunpack.c.l.b16 %v4666
  %v5810 = vunpack.c.h.b16 %v4666
  %v5811 = vunpack.c.l.b16 %v4667
  %v5812 = vunpack.c.h.b16 %v4667
  %v5813 = vunpack.c.l.b16 %v4668
  %v5814 = vunpack.c.h.b16 %v4668
  %v5815 = vunpack.c.l.b16 %v4669
  %v5816 = vunpack.c.h.b16 %v4669
  %v5817 = vunpack.c.l.b16 %v4670
  %v5818 = vunpack.c.h.b16 %v4670
  %v5819 = vunpack.c.l.b16 %v4671
  %v5820 = vunpack.c.h.b16 %v4671
  %v5821 = vunpack.c.l.b16 %v4672
  %v5822 = vunpack.c.h.b16 %v4672
  %v5823 = vunpack.c.l.b16 %v4673
  %v5824 = vunpack.c.h.b16 %v4673
  %v5825 = vunpack.c.l.b16 %v4674
  %v5826 = vunpack.c.h.b16 %v4674
  %v5827 = vunpack.c.l.b16 %v4675
  %v5828 = vunpack.c.h.b16 %v4675
  %v5829 = vunpack.c.l.b16 %v4676
  %v5830 = vunpack.c.h.b16 %v4676
  %v5831 = vunpack.c.l.b16 %v4677
  %v5832 = vunpack.c.h.b16 %v4677
  %v5833 = vunpack.c.l.b16 %v4678
  %v5834 = vunpack.c.h.b16 %v4678
  %v5835 = vunpack.c.l.b16 %v4679
  %v5836 = vunpack.c.h.b16 %v4679
  %v5837 = vunpack.c.l.b16 %v4680
  %v5838 = vunpack.c.h.b16 %v4680
  %v5839 = vunpack.c.l.b16 %v4681
  %v5840 = vunpack.c.h.b16 %v4681
  %v5841 = vunpack.c.l.b16 %v4682
  %v5842 = vunpack.c.h.b16 %v4682
  %v5843 = vunpack.c.l.b16 %v4683
  %v5844 = vunpack.c.h.b16 %v4683
  %v5845 = vunpack.c.l.b16 %v4684
  %v5846 = vunpack.c.h.b16 %v4684
  %v5847 = vunpack.c.l.b16 %v4685
  %v5848 = vunpack.c.h.b16 %v4685
  %v5849 = vunpack.c.l.b16 %v4686
  %v5850 = vunpack.c.h.b16 %v4686
  %v5851 = vunpack.c.l.b16 %v4687
  %v5852 = vunpack.c.h.b16 %v4687
  %v5853 = vunpack.c.l.b16 %v4688
  %v5854 = vunpack.c.h.b16 %v4688
  %v5855 = vunpack.c.l.b16 %v4689
  %v5856 = vunpack.c.h.b16 %v4689
  %v5857 = vunpack.c.l.b16 %v4690
  %v5858 = vunpack.c.h.b16 %v4690
  %v5859 = vunpack.c.l.b16 %v4691
  %v5860 = vunpack.c.h.b16 %v4691
  %v5861 = vunpack.c.l.b16 %v4692
  %v5862 = vunpack.c.h.b16 %v4692
  %v5863 = vunpack.c.l.b16 %v4693
  %v5864 = vunpack.c.h.b16 %v4693
  %v5865 = vunpack.c.l.b16 %v4694
  %v5866 = vunpack.c.h.b16 %v4694
  %v5867 = vunpack.c.l.b16 %v4695
  %v5868 = vunpack.c.h.b16 %v4695
  %v5869 = vunpack.c.l.b16 %v4696
  %v5870 = vunpack.c.h.b16 %v4696
  %v5871 = vunpack.c.l.b16 %v4697
  %v5872 = vunpack.c.h.b16 %v4697
  %v5873 = vunpack.c.l.b16 %v4698
  %v5874 = vunpack.c.h.b16 %v4698
  %v5875 = vunpack.c.l.b16 %v4699
  %v5876 = vunpack.c.h.b16 %v4699
  %v5877 = vunpack.c.l.b16 %v4700
  %v5878 = vunpack.c.h.b16 %v4700
  %v5879 = vunpack.c.l.b16 %v4701
  %v5880 = vunpack.c.h.b16 %v4701
  %v5881 = vunpack.c.l.b16 %v4702
  %v5882 = vunpack.c.h.b16 %v4702
  %v5883 = vunpack.c.l.b16 %v4703
  %v5884 = vunpack.c.h.b16 %v4703
  %v5885 = vunpack.c.l.b16 %v4704
  %v5886 = vunpack.c.h.b16 %v4704
  %v5887 = vunpack.c.l.b16 %v4705
  %v5888 = vunpack.c.h.b16 %v4705
  %v5889 = vunpack.c.l.b16 %v4706
  %v5890 = vunpack.c.h.b16 %v4706
  %v5891 = vunpack.c.l.b16 %v4707
  %v5892 = vunpack.c.h.b16 %v4707
  %v5893 = vunpack.c.l.b16 %v4708
  %v5894 = vunpack.c.h.b16 %v4708
  %v5895 = vunpack.c.l.b16 %v4709
  %v5896 = vunpack.c.h.b16 %v4709
  %v5897 = vunpack.c.l.b16 %v4710
  %v5898 = vunpack.c.h.b16 %v4710
  %v5899 = vunpack.c.l.b16 %v4711
  %v5900 = vunpack.c.h.b16 %v4711
  %v5901 = vunpack.c.l.b16 %v4712
  %v5902 = vunpack.c.h.b16 %v4712
  %v5903 = vunpack.c.l.b16 %v4713
  %v5904 = vunpack.c.h.b16 %v4713
  %v5905 = vunpack.c.l.b16 %v4714
  %v5906 = vunpack.c.h.b16 %v4714
  %v5907 = vunpack.c.l.b16 %v4715
  %v5908 = vunpack.c.h.b16 %v4715
  %v5909 = vunpack.c.l.b16 %v4716
  %v5910 = vunpack.c.h.b16 %v4716
  %v5911 = vunpack.c.l.b16 %v4717
  %v5912 = vunpack.c.h.b16 %v4717
  %v5913 = vunpack.c.l.b16 %v4718
  %v5914 = vunpack.c.h.b16 %v4718
  %v5915 = vunpack.c.l.b16 %v4719
  %v5916 = vunpack.c.h.b16 %v4719
  %v5917 = vunpack.c.l.b16 %v4720
  %v5918 = vunpack.c.h.b16 %v4720
  %v5919 = vunpack.c.l.b16 %v4721
  %v5920 = vunpack.c.h.b16 %v4721
  %v5921 = vunpack.c.l.b16 %v4722
  %v5922 = vunpack.c.h.b16 %v4722
  %v5923 = vunpack.c.l.b16 %v4723
  %v5924 = vunpack.c.h.b16 %v4723
  %v5925 = vunpack.c.l.b16 %v4724
  %v5926 = vunpack.c.h.b16 %v4724
  %v5927 = vunpack.c.l.b16 %v4725
  %v5928 = vunpack.c.h.b16 %v4725
  %v5929 = vunpack.c.l.b16 %v4726
  %v5930 = vunpack.c.h.b16 %v4726
  %v5931 = vunpack.c.l.b16 %v4727
  %v5932 = vunpack.c.h.b16 %v4727
  %v5933 = vunpack.c.l.b16 %v4728
  %v5934 = vunpack.c.h.b16 %v4728
  %v5935 = vunpack.c.l.b16 %v4729
  %v5936 = vunpack.c.h.b16 %v4729
  %v5937 = vunpack.c.l.b16 %v4730
  %v5938 = vunpack.c.h.b16 %v4730
  %v5939 = vunpack.c.l.b16 %v4731
  %v5940 = vunpack.c.h.b16 %v4731
  %v5941 = vunpack.c.l.b16 %v4732
  %v5942 = vunpack.c.h.b16 %v4732
  %v5943 = vunpack.c.l.b16 %v4733
  %v5944 = vunpack.c.h.b16 %v4733
  %v5945 = vunpack.c.l.b16 %v4734
  %v5946 = vunpack.c.h.b16 %v4734
  %v5947 = vunpack.c.l.b16 %v4735
  %v5948 = vunpack.c.h.b16 %v4735
  %v5949 = vunpack.c.l.b16 %v4736
  %v5950 = vunpack.c.h.b16 %v4736
  %v5951 = vunpack.c.l.b16 %v4737
  %v5952 = vunpack.c.h.b16 %v4737
  %v5953 = vunpack.c.l.b16 %v4738
  %v5954 = vunpack.c.h.b16 %v4738
  %v5955 = vunpack.c.l.b16 %v4739
  %v5956 = vunpack.c.h.b16 %v4739
  %v5957 = vunpack.c.l.b16 %v4740
  %v5958 = vunpack.c.h.b16 %v4740
  %v5959 = vunpack.c.l.b16 %v4741
  %v5960 = vunpack.c.h.b16 %v4741
  %v5961 = vunpack.c.l.b16 %v4742
  %v5962 = vunpack.c.h.b16 %v4742
  %v5963 = vunpack.c.l.b16 %v4743
  %v5964 = vunpack.c.h.b16 %v4743
  %v5965 = vunpack.c.l.b16 %v4744
  %v5966 = vunpack.c.h.b16 %v4744
  %v5967 = vunpack.c.l.b16 %v4745
  %v5968 = vunpack.c.h.b16 %v4745
  %v5969 = vunpack.c.l.b16 %v4746
  %v5970 = vunpack.c.h.b16 %v4746
  %v5971 = vunpack.c.l.b16 %v4747
  %v5972 = vunpack.c.h.b16 %v4747
  %v5973 = vunpack.c.l.b16 %v4748
  %v5974 = vunpack.c.h.b16 %v4748
  %v5975 = vunpack.c.l.b16 %v4749
  %v5976 = vunpack.c.h.b16 %v4749
  %v5977 = vunpack.c.l.b16 %v4750
  %v5978 = vunpack.c.h.b16 %v4750
  %v5979 = vunpack.c.l.b16 %v4751
  %v5980 = vunpack.c.h.b16 %v4751
  %v5981 = vunpack.c.l.b16 %v4752
  %v5982 = vunpack.c.h.b16 %v4752
  %v5983 = vunpack.c.l.b16 %v4753
  %v5984 = vunpack.c.h.b16 %v4753
  %v5985 = vunpack.c.l.b16 %v4754
  %v5986 = vunpack.c.h.b16 %v4754
  %v5987 = vunpack.c.l.b16 %v4755
  %v5988 = vunpack.c.h.b16 %v4755
  %v5989 = vunpack.c.l.b16 %v4756
  %v5990 = vunpack.c.h.b16 %v4756
  %v5991 = vunpack.c.l.b16 %v4757
  %v5992 = vunpack.c.h.b16 %v4757
  %v5993 = vunpack.c.l.b16 %v4758
  %v5994 = vunpack.c.h.b16 %v4758
  %v5995 = vunpack.c.l.b16 %v4759
  %v5996 = vunpack.c.h.b16 %v4759
  %v5997 = vunpack.c.l.b16 %v4760
  %v5998 = vunpack.c.h.b16 %v4760
  %v5999 = vunpack.c.l.b16 %v4761
  %v6000 = vunpack.c.h.b16 %v4761
  %v6001 = vunpack.c.l.b16 %v4762
  %v6002 = vunpack.c.h.b16 %v4762
  %v6003 = vunpack.c.l.b16 %v4763
  %v6004 = vunpack.c.h.b16 %v4763
  %v6005 = vunpack.c.l.b16 %v4764
  %v6006 = vunpack.c.h.b16 %v4764
  %v6007 = vunpack.c.l.b16 %v4765
  %v6008 = vunpack.c.h.b16 %v4765
  %v6009 = vunpack.c.l.b16 %v4766
  %v6010 = vunpack.c.h.b16 %v4766
  %v6011 = vunpack.c.l.b16 %v4767
  %v6012 = vunpack.c.h.b16 %v4767
  %v6013 = vunpack.c.l.b16 %v4768
  %v6014 = vunpack.c.h.b16 %v4768
  %v6015 = vunpack.c.l.b16 %v4769
  %v6016 = vunpack.c.h.b16 %v4769
  %v6017 = vunpack.c.l.b16 %v4770
  %v6018 = vunpack.c.h.b16 %v4770
  %v6019 = vunpack.c.l.b16 %v4771
  %v6020 = vunpack.c.h.b16 %v4771
  %v6021 = vunpack.c.l.b16 %v4772
  %v6022 = vunpack.c.h.b16 %v4772
  %v6023 = vunpack.c.l.b16 %v4773
  %v6024 = vunpack.c.h.b16 %v4773
  %v6025 = vunpack.c.l.b16 %v4774
  %v6026 = vunpack.c.h.b16 %v4774
  %v6027 = vunpack.c.l.b16 %v4775
  %v6028 = vunpack.c.h.b16 %v4775
  %v6029 = vunpack.c.l.b16 %v4776
  %v6030 = vunpack.c.h.b16 %v4776
  %v6031 = vunpack.c.l.b16 %v4777
  %v6032 = vunpack.c.h.b16 %v4777
  %v6033 = vunpack.c.l.b16 %v4778
  %v6034 = vunpack.c.h.b16 %v4778
  %v6035 = vunpack.c.l.b16 %v4779
  %v6036 = vunpack.c.h.b16 %v4779
  %v6037 = vunpack.c.l.b16 %v4780
  %v6038 = vunpack.c.h.b16 %v4780
  %v6039 = vunpack.c.l.b16 %v4781
  %v6040 = vunpack.c.h.b16 %v4781
  %v6041 = vunpack.c.l.b16 %v4782
  %v6042 = vunpack.c.h.b16 %v4782
  %v6043 = vunpack.c.l.b16 %v4783
  %v6044 = vunpack.c.h.b16 %v4783
  %v6045 = vunpack.c.l.b16 %v4784
  %v6046 = vunpack.c.h.b16 %v4784
  %v6047 = vunpack.c.l.b16 %v4785
  %v6048 = vunpack.c.h.b16 %v4785
  %v6049 = vunpack.c.l.b16 %v4786
  %v6050 = vunpack.c.h.b16 %v4786
  %v6051 = vunpack.c.l.b16 %v4787
  %v6052 = vunpack.c.h.b16 %v4787
  %v6053 = vunpack.c.l.b16 %v4788
  %v6054 = vunpack.c.h.b16 %v4788
  %v6055 = vunpack.c.l.b16 %v4789
  %v6056 = vunpack.c.h.b16 %v4789
  %v6057 = vunpack.c.l.b16 %v4790
  %v6058 = vunpack.c.h.b16 %v4790
  %v6059 = vunpack.c.l.b16 %v4791
  %v6060 = vunpack.c.h.b16 %v4791
  %v6061 = vunpack.c.l.b16 %v4792
  %v6062 = vunpack.c.h.b16 %v4792
  %v6063 = vunpack.c.l.b16 %v4793
  %v6064 = vunpack.c.h.b16 %v4793
  %v6065 = vunpack.c.l.b16 %v4794
  %v6066 = vunpack.c.h.b16 %v4794
  %v6067 = vunpack.c.l.b16 %v4795
  %v6068 = vunpack.c.h.b16 %v4795
  %v6069 = vunpack.c.l.b16 %v4796
  %v6070 = vunpack.c.h.b16 %v4796
  %v6071 = vunpack.c.l.b16 %v4797
  %v6072 = vunpack.c.h.b16 %v4797
  %v6073 = vunpack.c.l.b16 %v4798
  %v6074 = vunpack.c.h.b16 %v4798
  %v6075 = vunpack.c.l.b16 %v4799
  %v6076 = vunpack.c.h.b16 %v4799
  %v6077 = vunpack.c.l.b16 %v4800
  %v6078 = vunpack.c.h.b16 %v4800
  %v6079 = vunpack.c.l.b16 %v4801
  %v6080 = vunpack.c.h.b16 %v4801
  %v6081 = vunpack.c.l.b16 %v4802
  %v6082 = vunpack.c.h.b16 %v4802
  %v6083 = vunpack.c.l.b16 %v4803
  %v6084 = vunpack.c.h.b16 %v4803
  %v6085 = vunpack.c.l.b16 %v4804
  %v6086 = vunpack.c.h.b16 %v4804
  %v6087 = vunpack.c.l.b16 %v4805
  %v6088 = vunpack.c.h.b16 %v4805
  %v6089 = vunpack.c.l.b16 %v4806
  %v6090 = vunpack.c.h.b16 %v4806
  %v6091 = vunpack.c.l.b16 %v4807
  %v6092 = vunpack.c.h.b16 %v4807
  %v6093 = vunpack.c.l.b16 %v4808
  %v6094 = vunpack.c.h.b16 %v4808
  %v6095 = vunpack.c.l.b16 %v4809
  %v6096 = vunpack.c.h.b16 %v4809
  %v6097 = vunpack.c.l.b16 %v4810
  %v6098 = vunpack.c.h.b16 %v4810
  %v6099 = vunpack.c.l.b16 %v4811
  %v6100 = vunpack.c.h.b16 %v4811
  %v6101 = vunpack.c.l.b16 %v4812
  %v6102 = vunpack.c.h.b16 %v4812
  %v6103 = vunpack.c.l.b16 %v4813
  %v6104 = vunpack.c.h.b16 %v4813
  %v6105 = vunpack.c.l.b16 %v4814
  %v6106 = vunpack.c.h.b16 %v4814
  %v6107 = vunpack.c.l.b16 %v4815
  %v6108 = vunpack.c.h.b16 %v4815
  %v6109 = vunpack.c.l.b16 %v4816
  %v6110 = vunpack.c.h.b16 %v4816
  %v6111 = vunpack.c.l.b16 %v4817
  %v6112 = vunpack.c.h.b16 %v4817
  %v6113 = vunpack.c.l.b16 %v4818
  %v6114 = vunpack.c.h.b16 %v4818
  %v6115 = vunpack.c.l.b16 %v4819
  %v6116 = vunpack.c.h.b16 %v4819
  %v6117 = vunpack.c.l.b16 %v4820
  %v6118 = vunpack.c.h.b16 %v4820
  %v6119 = vunpack.c.l.b16 %v4821
  %v6120 = vunpack.c.h.b16 %v4821
  %v6121 = vunpack.c.l.b16 %v4822
  %v6122 = vunpack.c.h.b16 %v4822
  %v6123 = vunpack.c.l.b16 %v4823
  %v6124 = vunpack.c.h.b16 %v4823
  %v6125 = vunpack.c.l.b16 %v4824
  %v6126 = vunpack.c.h.b16 %v4824
  %v6127 = vunpack.c.l.b16 %v4825
  %v6128 = vunpack.c.h.b16 %v4825
  %v6129 = vunpack.c.l.b16 %v4826
  %v6130 = vunpack.c.h.b16 %v4826
  %v6131 = vunpack.c.l.b16 %v4827
  %v6132 = vunpack.c.h.b16 %v4827
  %v6133 = vunpack.c.l.b16 %v4828
  %v6134 = vunpack.c.h.b16 %v4828
  %v6135 = vunpack.c.l.b16 %v4829
  %v6136 = vunpack.c.h.b16 %v4829
  %v6137 = vunpack.c.l.b16 %v4830
  %v6138 = vunpack.c.h.b16 %v4830
  %v6139 = vunpack.c.l.b16 %v4831
  %v6140 = vunpack.c.h.b16 %v4831
  %v6141 = vunpack.c.l.b16 %v4832
  %v6142 = vunpack.c.h.b16 %v4832
  %v6143 = vunpack.c.l.b16 %v4833
  %v6144 = vunpack.c.h.b16 %v4833
  %v6145 = vunpack.c.l.b16 %v4834
  %v6146 = vunpack.c.h.b16 %v4834
  %v6147 = vunpack.c.l.b16 %v4835
  %v6148 = vunpack.c.h.b16 %v4835
  %v6149 = vunpack.c.l.b16 %v4836
  %v6150 = vunpack.c.h.b16 %v4836
  %v6151 = vunpack.c.l.b16 %v4837
  %v6152 = vunpack.c.h.b16 %v4837
  %v6153 = vunpack.c.l.b16 %v4838
  %v6154 = vunpack.c.h.b16 %v4838
  %v6155 = vunpack.c.l.b16 %v4839
  %v6156 = vunpack.c.h.b16 %v4839
  %v6157 = vunpack.c.l.b16 %v4840
  %v6158 = vunpack.c.h.b16 %v4840
  %v6159 = vunpack.c.l.b16 %v4841
  %v6160 = vunpack.c.h.b16 %v4841
  %v6161 = vunpack.c.l.b16 %v4842
  %v6162 = vunpack.c.h.b16 %v4842
  %v6163 = vunpack.c.l.b16 %v4843
  %v6164 = vunpack.c.h.b16 %v4843
  %v6165 = vunpack.c.l.b16 %v4844
  %v6166 = vunpack.c.h.b16 %v4844
  %v6167 = vunpack.c.l.b16 %v4845
  %v6168 = vunpack.c.h.b16 %v4845
  %v6169 = vunpack.c.l.b16 %v4846
  %v6170 = vunpack.c.h.b16 %v4846
  %v6171 = vunpack.c.l.b16 %v4847
  %v6172 = vunpack.c.h.b16 %v4847
  %v6173 = vunpack.c.l.b16 %v4848
  %v6174 = vunpack.c.h.b16 %v4848
  %v6175 = vunpack.c.l.b16 %v4849
  %v6176 = vunpack.c.h.b16 %v4849
  %v6177 = vunpack.c.l.b16 %v4850
  %v6178 = vunpack.c.h.b16 %v4850
  %v6179 = vunpack.c.l.b16 %v4851
  %v6180 = vunpack.c.h.b16 %v4851
  %v6181 = vunpack.c.l.b16 %v4852
  %v6182 = vunpack.c.h.b16 %v4852
  %v6183 = vunpack.c.l.b16 %v4853
  %v6184 = vunpack.c.h.b16 %v4853
  %v6185 = vunpack.c.l.b16 %v4854
  %v6186 = vunpack.c.h.b16 %v4854
  %v6187 = vunpack.c.l.b16 %v4855
  %v6188 = vunpack.c.h.b16 %v4855
  %v6189 = vunpack.c.l.b16 %v4856
  %v6190 = vunpack.c.h.b16 %v4856
  %v6191 = vunpack.c.l.b16 %v4857
  %v6192 = vunpack.c.h.b16 %v4857
  %v6193 = vunpack.c.l.b16 %v4858
  %v6194 = vunpack.c.h.b16 %v4858
  %v6195 = vunpack.c.l.b16 %v4859
  %v6196 = vunpack.c.h.b16 %v4859
  %v6197 = vunpack.c.l.b16 %v4860
  %v6198 = vunpack.c.h.b16 %v4860
  %v6199 = vunpack.c.l.b16 %v4861
  %v6200 = vunpack.c.h.b16 %v4861
  %v6201 = vunpack.c.l.b16 %v4862
  %v6202 = vunpack.c.h.b16 %v4862
  %v6203 = vunpack.c.l.b16 %v4863
  %v6204 = vunpack.c.h.b16 %v4863
  %v6205 = vunpack.c.l.b16 %v4864
  %v6206 = vunpack.c.h.b16 %v4864
  %v6207 = vunpack.c.l.b16 %v4865
  %v6208 = vunpack.c.h.b16 %v4865
  %v6209 = vunpack.c.l.b16 %v4866
  %v6210 = vunpack.c.h.b16 %v4866
  %v6211 = vunpack.c.l.b16 %v4867
  %v6212 = vunpack.c.h.b16 %v4867
  %v6213 = vunpack.c.l.b16 %v4868
  %v6214 = vunpack.c.h.b16 %v4868
  %v6215 = vunpack.c.l.b16 %v4869
  %v6216 = vunpack.c.h.b16 %v4869
  %v6217 = vunpack.c.l.b16 %v4870
  %v6218 = vunpack.c.h.b16 %v4870
  %v6219 = vunpack.c.l.b16 %v4871
  %v6220 = vunpack.c.h.b16 %v4871
  %v6221 = vunpack.c.l.b16 %v4872
  %v6222 = vunpack.c.h.b16 %v4872
  %v6223 = vunpack.c.l.b16 %v4873
  %v6224 = vunpack.c.h.b16 %v4873
  %v6225 = vunpack.c.l.b16 %v4874
  %v6226 = vunpack.c.h.b16 %v4874
  %v6227 = vunpack.c.l.b16 %v4875
  %v6228 = vunpack.c.h.b16 %v4875
  %v6229 = vunpack.c.l.b16 %v4876
  %v6230 = vunpack.c.h.b16 %v4876
  %v6231 = vunpack.c.l.b16 %v4877
  %v6232 = vunpack.c.h.b16 %v4877
  %v6233 = vunpack.c.l.b16 %v4878
  %v6234 = vunpack.c.h.b16 %v4878
  %v6235 = vunpack.c.l.b16 %v4879
  %v6236 = vunpack.c.h.b16 %v4879
  %v6237 = vunpack.c.l.b16 %v4880
  %v6238 = vunpack.c.h.b16 %v4880
  %v6239 = vunpack.c.l.b16 %v4881
  %v6240 = vunpack.c.h.b16 %v4881
  %v6241 = vunpack.c.l.b16 %v4882
  %v6242 = vunpack.c.h.b16 %v4882
  %v6243 = vunpack.c.l.b16 %v4883
  %v6244 = vunpack.c.h.b16 %v4883
  %v6245 = vunpack.c.l.b16 %v4884
  %v6246 = vunpack.c.h.b16 %v4884
  %v6247 = vunpack.c.l.b16 %v4885
  %v6248 = vunpack.c.h.b16 %v4885
  %v6249 = vunpack.c.l.b16 %v4886
  %v6250 = vunpack.c.h.b16 %v4886
  %v6251 = vunpack.c.l.b16 %v4887
  %v6252 = vunpack.c.h.b16 %v4887
  %v6253 = vunpack.c.l.b16 %v4888
  %v6254 = vunpack.c.h.b16 %v4888
  %v6255 = vpack.c.b16 %v5363, %v5359
  %v6256 = vpack.c.b16 %v5364, %v5360
  %v6257 = vpack.c.b16 %v5365, %v5361
  %v6258 = vpack.c.b16 %v5366, %v5362
  %v6259 = vpack.c.b16 %v5371, %v5367
  %v6260 = vpack.c.b16 %v5372, %v5368
  %v6261 = vpack.c.b16 %v5373, %v5369
  %v6262 = vpack.c.b16 %v5374, %v5370
  %v6263 = vpack.c.b16 %v5379, %v5375
  %v6264 = vpack.c.b16 %v5380, %v5376
  %v6265 = vpack.c.b16 %v5381, %v5377
  %v6266 = vpack.c.b16 %v5382, %v5378
  %v6267 = vpack.c.b16 %v5387, %v5383
  %v6268 = vpack.c.b16 %v5388, %v5384
  %v6269 = vpack.c.b16 %v5389, %v5385
  %v6270 = vpack.c.b16 %v5390, %v5386
  %v6271 = vpack.c.b16 %v5395, %v5391
  %v6272 = vpack.c.b16 %v5396, %v5392
  %v6273 = vpack.c.b16 %v5397, %v5393
  %v6274 = vpack.c.b16 %v5398, %v5394
  %v6275 = vpack.c.b16 %v5403, %v5399
  %v6276 = vpack.c.b16 %v5404, %v5400
  %v6277 = vpack.c.b16 %v5405, %v5401
  %v6278 = vpack.c.b16 %v5406, %v5402
  %v6279 = vpack.c.b16 %v5411, %v5407
  %v6280 = vpack.c.b16 %v5412, %v5408
  %v6281 = vpack.c.b16 %v5413, %v5409
  %v6282 = vpack.c.b16 %v5414, %v5410
  %v6283 = vpack.c.b16 %v5419, %v5415
  %v6284 = vpack.c.b16 %v5420, %v5416
  %v6285 = vpack.c.b16 %v5421, %v5417
  %v6286 = vpack.c.b16 %v5422, %v5418
  %v6287 = vpack.c.b16 %v5427, %v5423
  %v6288 = vpack.c.b16 %v5428, %v5424
  %v6289 = vpack.c.b16 %v5429, %v5425
  %v6290 = vpack.c.b16 %v5430, %v5426
  %v6291 = vpack.c.b16 %v5435, %v5431
  %v6292 = vpack.c.b16 %v5436, %v5432
  %v6293 = vpack.c.b16 %v5437, %v5433
  %v6294 = vpack.c.b16 %v5438, %v5434
  %v6295 = vpack.c.b16 %v5443, %v5439
  %v6296 = vpack.c.b16 %v5444, %v5440
  %v6297 = vpack.c.b16 %v5445, %v5441
  %v6298 = vpack.c.b16 %v5446, %v5442
  %v6299 = vpack.c.b16 %v5451, %v5447
  %v6300 = vpack.c.b16 %v5452, %v5448
  %v6301 = vpack.c.b16 %v5453, %v5449
  %v6302 = vpack.c.b16 %v5454, %v5450
  %v6303 = vpack.c.b16 %v5459, %v5455
  %v6304 = vpack.c.b16 %v5460, %v5456
  %v6305 = vpack.c.b16 %v5461, %v5457
  %v6306 = vpack.c.b16 %v5462, %v5458
  %v6307 = vpack.c.b16 %v5467, %v5463
  %v6308 = vpack.c.b16 %v5468, %v5464
  %v6309 = vpack.c.b16 %v5469, %v5465
  %v6310 = vpack.c.b16 %v5470, %v5466
  %v6311 = vpack.c.b16 %v5475, %v5471
  %v6312 = vpack.c.b16 %v5476, %v5472
  %v6313 = vpack.c.b16 %v5477, %v5473
  %v6314 = vpack.c.b16 %v5478, %v5474
  %v6315 = vpack.c.b16 %v5483, %v5479
  %v6316 = vpack.c.b16 %v5484, %v5480
  %v6317 = vpack.c.b16 %v5485, %v5481
  %v6318 = vpack.c.b16 %v5486, %v5482
  %v6319 = vpack.c.b16 %v5491, %v5487
  %v6320 = vpack.c.b16 %v5492, %v5488
  %v6321 = vpack.c.b16 %v5493, %v5489
  %v6322 = vpack.c.b16 %v5494, %v5490
  %v6323 = vpack.c.b16 %v5499, %v5495
  %v6324 = vpack.c.b16 %v5500, %v5496
  %v6325 = vpack.c.b16 %v5501, %v5497
  %v6326 = vpack.c.b16 %v5502, %v5498
  %v6327 = vpack.c.b16 %v5507, %v5503
  %v6328 = vpack.c.b16 %v5508, %v5504
  %v6329 = vpack.c.b16 %v5509, %v5505
  %v6330 = vpack.c.b16 %v5510, %v5506
  %v6331 = vpack.c.b16 %v5515, %v5511
  %v6332 = vpack.c.b16 %v5516, %v5512
  %v6333 = vpack.c.b16 %v5517, %v5513
  %v6334 = vpack.c.b16 %v5518, %v5514
  %v6335 = vpack.c.b16 %v5523, %v5519
  %v6336 = vpack.c.b16 %v5524, %v5520
  %v6337 = vpack.c.b16 %v5525, %v5521
  %v6338 = vpack.c.b16 %v5526, %v5522
  %v6339 = vpack.c.b16 %v5531, %v5527
  %v6340 = vpack.c.b16 %v5532, %v5528
  %v6341 = vpack.c.b16 %v5533, %v5529
  %v6342 = vpack.c.b16 %v5534, %v5530
  %v6343 = vpack.c.b16 %v5539, %v5535
  %v6344 = vpack.c.b16 %v5540, %v5536
  %v6345 = vpack.c.b16 %v5541, %v5537
  %v6346 = vpack.c.b16 %v5542, %v5538
  %v6347 = vpack.c.b16 %v5547, %v5543
  %v6348 = vpack.c.b16 %v5548, %v5544
  %v6349 = vpack.c.b16 %v5549, %v5545
  %v6350 = vpack.c.b16 %v5550, %v5546
  %v6351 = vpack.c.b16 %v5555, %v5551
  %v6352 = vpack.c.b16 %v5556, %v5552
  %v6353 = vpack.c.b16 %v5557, %v5553
  %v6354 = vpack.c.b16 %v5558, %v5554
  %v6355 = vpack.c.b16 %v5563, %v5559
  %v6356 = vpack.c.b16 %v5564, %v5560
  %v6357 = vpack.c.b16 %v5565, %v5561
  %v6358 = vpack.c.b16 %v5566, %v5562
  %v6359 = vpack.c.b16 %v5571, %v5567
  %v6360 = vpack.c.b16 %v5572, %v5568
  %v6361 = vpack.c.b16 %v5573, %v5569
  %v6362 = vpack.c.b16 %v5574, %v5570
  %v6363 = vpack.c.b16 %v5579, %v5575
  %v6364 = vpack.c.b16 %v5580, %v5576
  %v6365 = vpack.c.b16 %v5581, %v5577
  %v6366 = vpack.c.b16 %v5582, %v5578
  %v6367 = vpack.c.b16 %v5587, %v5583
  %v6368 = vpack.c.b16 %v5588, %v5584
  %v6369 = vpack.c.b16 %v5589, %v5585
  %v6370 = vpack.c.b16 %v5590, %v5586
  %v6371 = vpack.c.b16 %v5595, %v5591
  %v6372 = vpack.c.b16 %v5596, %v5592
  %v6373 = vpack.c.b16 %v5597, %v5593
  %v6374 = vpack.c.b16 %v5598, %v5594
  %v6375 = vpack.c.b16 %v5603, %v5599
  %v6376 = vpack.c.b16 %v5604, %v5600
  %v6377 = vpack.c.b16 %v5605, %v5601
  %v6378 = vpack.c.b16 %v5606, %v5602
  %v6379 = vpack.c.b16 %v5611, %v5607
  %v6380 = vpack.c.b16 %v5612, %v5608
  %v6381 = vpack.c.b16 %v5613, %v5609
  %v6382 = vpack.c.b16 %v5614, %v5610
  %v6383 = vpack.c.b16 %v5619, %v5615
  %v6384 = vpack.c.b16 %v5620, %v5616
  %v6385 = vpack.c.b16 %v5621, %v5617
  %v6386 = vpack.c.b16 %v5622, %v5618
  %v6387 = vpack.c.b16 %v5627, %v5623
  %v6388 = vpack.c.b16 %v5628, %v5624
  %v6389 = vpack.c.b16 %v5629, %v5625
  %v6390 = vpack.c.b16 %v5630, %v5626
  %v6391 = vpack.c.b16 %v5635, %v5631
  %v6392 = vpack.c.b16 %v5636, %v5632
  %v6393 = vpack.c.b16 %v5637, %v5633
  %v6394 = vpack.c.b16 %v5638, %v5634
  %v6395 = vpack.c.b16 %v5643, %v5639
  %v6396 = vpack.c.b16 %v5644, %v5640
  %v6397 = vpack.c.b16 %v5645, %v5641
  %v6398 = vpack.c.b16 %v5646, %v5642
  %v6399 = vpack.c.b16 %v5651, %v5647
  %v6400 = vpack.c.b16 %v5652, %v5648
  %v6401 = vpack.c.b16 %v5653, %v5649
  %v6402 = vpack.c.b16 %v5654, %v5650
  %v6403 = vpack.c.b16 %v5659, %v5655
  %v6404 = vpack.c.b16 %v5660, %v5656
  %v6405 = vpack.c.b16 %v5661, %v5657
  %v6406 = vpack.c.b16 %v5662, %v5658
  %v6407 = vpack.c.b16 %v5667, %v5663
  %v6408 = vpack.c.b16 %v5668, %v5664
  %v6409 = vpack.c.b16 %v5669, %v5665
  %v6410 = vpack.c.b16 %v5670, %v5666
  %v6411 = vpack.c.b16 %v5675, %v5671
  %v6412 = vpack.c.b16 %v5676, %v5672
  %v6413 = vpack.c.b16 %v5677, %v5673
  %v6414 = vpack.c.b16 %v5678, %v5674
  %v6415 = vpack.c.b16 %v5683, %v5679
  %v6416 = vpack.c.b16 %v5684, %v5680
  %v6417 = vpack.c.b16 %v5685, %v5681
  %v6418 = vpack.c.b16 %v5686, %v5682
  %v6419 = vpack.c.b16 %v5691, %v5687
  %v6420 = vpack.c.b16 %v5692, %v5688
  %v6421 = vpack.c.b16 %v5693, %v5689
  %v6422 = vpack.c.b16 %v5694, %v5690
  %v6423 = vpack.c.b16 %v5699, %v5695
  %v6424 = vpack.c.b16 %v5700, %v5696
  %v6425 = vpack.c.b16 %v5701, %v5697
  %v6426 = vpack.c.b16 %v5702, %v5698
  %v6427 = vpack.c.b16 %v5707, %v5703
  %v6428 = vpack.c.b16 %v5708, %v5704
  %v6429 = vpack.c.b16 %v5709, %v5705
  %v6430 = vpack.c.b16 %v5710, %v5706
  %v6431 = vpack.c.b16 %v5715, %v5711
  %v6432 = vpack.c.b16 %v5716, %v5712
  %v6433 = vpack.c.b16 %v5717, %v5713
  %v6434 = vpack.c.b16 %v5718, %v5714
  %v6435 = vpack.c.b16 %v5723, %v5719
  %v6436 = vpack.c.b16 %v5724, %v5720
  %v6437 = vpack.c.b16 %v5725, %v5721
  %v6438 = vpack.c.b16 %v5726, %v5722
  %v6439 = vpack.c.b16 %v5731, %v5727
  %v6440 = vpack.c.b16 %v5732, %v5728
  %v6441 = vpack.c.b16 %v5733, %v5729
  %v6442 = vpack.c.b16 %v5734, %v5730
  %v6443 = vpack.c.b16 %v5739, %v5735
  %v6444 = vpack.c.b16 %v5740, %v5736
  %v6445 = vpack.c.b16 %v5741, %v5737
  %v6446 = vpack.c.b16 %v5742, %v5738
  %v6447 = vpack.c.b16 %v5747, %v5743
  %v6448 = vpack.c.b16 %v5748, %v5744
  %v6449 = vpack.c.b16 %v5749, %v5745
  %v6450 = vpack.c.b16 %v5750, %v5746
  %v6451 = vpack.c.b16 %v5755, %v5751
  %v6452 = vpack.c.b16 %v5756, %v5752
  %v6453 = vpack.c.b16 %v5757, %v5753
  %v6454 = vpack.c.b16 %v5758, %v5754
  %v6455 = vpack.c.b16 %v5763, %v5759
  %v6456 = vpack.c.b16 %v5764, %v5760
  %v6457 = vpack.c.b16 %v5765, %v5761
  %v6458 = vpack.c.b16 %v5766, %v5762
  %v6459 = vpack.c.b16 %v5771, %v5767
  %v6460 = vpack.c.b16 %v5772, %v5768
  %v6461 = vpack.c.b16 %v5773, %v5769
  %v6462 = vpack.c.b16 %v5774, %v5770
  %v6463 = vpack.c.b16 %v5779, %v5775
  %v6464 = vpack.c.b16 %v5780, %v5776
  %v6465 = vpack.c.b16 %v5781, %v5777
  %v6466 = vpack.c.b16 %v5782, %v5778
  %v6467 = vpack.c.b16 %v5787, %v5783
  %v6468 = vpack.c.b16 %v5788, %v5784
  %v6469 = vpack.c.b16 %v5789, %v5785
  %v6470 = vpack.c.b16 %v5790, %v5786
  %v6471 = vpack.c.b16 %v5795, %v5791
  %v6472 = vpack.c.b16 %v5796, %v5792
  %v6473 = vpack.c.b16 %v5797, %v5793
  %v6474 = vpack.c.b16 %v5798, %v5794
  %v6475 = vpack.c.b16 %v5803, %v5799
  %v6476 = vpack.c.b16 %v5804, %v5800
  %v6477 = vpack.c.b16 %v5805, %v5801
  %v6478 = vpack.c.b16 %v5806, %v5802
  %v6479 = vpack.c.b16 %v5811, %v5807
  %v6480 = vpack.c.b16 %v5812, %v5808
  %v6481 = vpack.c.b16 %v5813, %v5809
  %v6482 = vpack.c.b16 %v5814, %v5810
  %v6483 = vpack.c.b16 %v5819, %v5815
  %v6484 = vpack.c.b16 %v5820, %v5816
  %v6485 = vpack.c.b16 %v5821, %v5817
  %v6486 = vpack.c.b16 %v5822, %v5818
  %v6487 = vpack.c.b16 %v5827, %v5823
  %v6488 = vpack.c.b16 %v5828, %v5824
  %v6489 = vpack.c.b16 %v5829, %v5825
  %v6490 = vpack.c.b16 %v5830, %v5826
  %v6491 = vpack.c.b16 %v5835, %v5831
  %v6492 = vpack.c.b16 %v5836, %v5832
  %v6493 = vpack.c.b16 %v5837, %v5833
  %v6494 = vpack.c.b16 %v5838, %v5834
  %v6495 = vpack.c.b16 %v5843, %v5839
  %v6496 = vpack.c.b16 %v5844, %v5840
  %v6497 = vpack.c.b16 %v5845, %v5841
  %v6498 = vpack.c.b16 %v5846, %v5842
  %v6499 = vpack.c.b16 %v5851, %v5847
  %v6500 = vpack.c.b16 %v5852, %v5848
  %v6501 = vpack.c.b16 %v5853, %v5849
  %v6502 = vpack.c.b16 %v5854, %v5850
  %v6503 = vpack.c.b16 %v5859, %v5855
  %v6504 = vpack.c.b16 %v5860, %v5856
  %v6505 = vpack.c.b16 %v5861, %v5857
  %v6506 = vpack.c.b16 %v5862, %v5858
  %v6507 = vpack.c.b16 %v5867, %v5863
  %v6508 = vpack.c.b16 %v5868, %v5864
  %v6509 = vpack.c.b16 %v5869, %v5865
  %v6510 = vpack.c.b16 %v5870, %v5866
  %v6511 = vpack.c.b16 %v5875, %v5871
  %v6512 = vpack.c.b16 %v5876, %v5872
  %v6513 = vpack.c.b16 %v5877, %v5873
  %v6514 = vpack.c.b16 %v5878, %v5874
  %v6515 = vpack.c.b16 %v5883, %v5879
  %v6516 = vpack.c.b16 %v5884, %v5880
  %v6517 = vpack.c.b16 %v5885, %v5881
  %v6518 = vpack.c.b16 %v5886, %v5882
  %v6519 = vpack.c.b16 %v5891, %v5887
  %v6520 = vpack.c.b16 %v5892, %v5888
  %v6521 = vpack.c.b16 %v5893, %v5889
  %v6522 = vpack.c.b16 %v5894, %v5890
  %v6523 = vpack.c.b16 %v5899, %v5895
  %v6524 = vpack.c.b16 %v5900, %v5896
  %v6525 = vpack.c.b16 %v5901, %v5897
  %v6526 = vpack.c.b16 %v5902, %v5898
  %v6527 = vpack.c.b16 %v5907, %v5903
  %v6528 = vpack.c.b16 %v5908, %v5904
  %v6529 = vpack.c.b16 %v5909, %v5905
  %v6530 = vpack.c.b16 %v5910, %v5906
  %v6531 = vpack.c.b16 %v5915, %v5911
  %v6532 = vpack.c.b16 %v5916, %v5912
  %v6533 = vpack.c.b16 %v5917, %v5913
  %v6534 = vpack.c.b16 %v5918, %v5914
  %v6535 = vpack.c.b16 %v5923, %v5919
  %v6536 = vpack.c.b16 %v5924, %v5920
  %v6537 = vpack.c.b16 %v5925, %v5921
  %v6538 = vpack.c.b16 %v5926, %v5922
  %v6539 = vpack.c.b16 %v5931, %v5927
  %v6540 = vpack.c.b16 %v5932, %v5928
  %v6541 = vpack.c.b16 %v5933, %v5929
  %v6542 = vpack.c.b16 %v5934, %v5930
  %v6543 = vpack.c.b16 %v5939, %v5935
  %v6544 = vpack.c.b16 %v5940, %v5936
  %v6545 = vpack.c.b16 %v5941, %v5937
  %v6546 = vpack.c.b16 %v5942, %v5938
  %v6547 = vpack.c.b16 %v5947, %v5943
  %v6548 = vpack.c.b16 %v5948, %v5944
  %v6549 = vpack.c.b16 %v5949, %v5945
  %v6550 = vpack.c.b16 %v5950, %v5946
  %v6551 = vpack.c.b16 %v5955, %v5951
  %v6552 = vpack.c.b16 %v5956, %v5952
  %v6553 = vpack.c.b16 %v5957, %v5953
  %v6554 = vpack.c.b16 %v5958, %v5954
  %v6555 = vpack.c.b16 %v5963, %v5959
  %v6556 = vpack.c.b16 %v5964, %v5960
  %v6557 = vpack.c.b16 %v5965, %v5961
  %v6558 = vpack.c.b16 %v5966, %v5962
  %v6559 = vpack.c.b16 %v5971, %v5967
  %v6560 = vpack.c.b16 %v5972, %v5968
  %v6561 = vpack.c.b16 %v5973, %v5969
  %v6562 = vpack.c.b16 %v5974, %v5970
  %v6563 = vpack.c.b16 %v5979, %v5975
  %v6564 = vpack.c.b16 %v5980, %v5976
  %v6565 = vpack.c.b16 %v5981, %v5977
  %v6566 = vpack.c.b16 %v5982, %v5978
  %v6567 = vpack.c.b16 %v5987, %v5983
  %v6568 = vpack.c.b16 %v5988, %v5984
  %v6569 = vpack.c.b16 %v5989, %v5985
  %v6570 = vpack.c.b16 %v5990, %v5986
  %v6571 = vpack.c.b16 %v5995, %v5991
  %v6572 = vpack.c.b16 %v5996, %v5992
  %v6573 = vpack.c.b16 %v5997, %v5993
  %v6574 = vpack.c.b16 %v5998, %v5994
  %v6575 = vpack.c.b16 %v6003, %v5999
  %v6576 = vpack.c.b16 %v6004, %v6000
  %v6577 = vpack.c.b16 %v6005, %v6001
  %v6578 = vpack.c.b16 %v6006, %v6002
  %v6579 = vpack.c.b16 %v6011, %v6007
  %v6580 = vpack.c.b16 %v6012, %v6008
  %v6581 = vpack.c.b16 %v6013, %v6009
  %v6582 = vpack.c.b16 %v6014, %v6010
  %v6583 = vpack.c.b16 %v6019, %v6015
  %v6584 = vpack.c.b16 %v6020, %v6016
  %v6585 = vpack.c.b16 %v6021, %v6017
  %v6586 = vpack.c.b16 %v6022, %v6018
  %v6587 = vpack.c.b16 %v6027, %v6023
  %v6588 = vpack.c.b16 %v6028, %v6024
  %v6589 = vpack.c.b16 %v6029, %v6025
  %v6590 = vpack.c.b16 %v6030, %v6026
  %v6591 = vpack.c.b16 %v6035, %v6031
  %v6592 = vpack.c.b16 %v6036, %v6032
  %v6593 = vpack.c.b16 %v6037, %v6033
  %v6594 = vpack.c.b16 %v6038, %v6034
  %v6595 = vpack.c.b16 %v6043, %v6039
  %v6596 = vpack.c.b16 %v6044, %v6040
  %v6597 = vpack.c.b16 %v6045, %v6041
  %v6598 = vpack.c.b16 %v6046, %v6042
  %v6599 = vpack.c.b16 %v6051, %v6047
  %v6600 = vpack.c.b16 %v6052, %v6048
  %v6601 = vpack.c.b16 %v6053, %v6049
  %v6602 = vpack.c.b16 %v6054, %v6050
  %v6603 = vpack.c.b16 %v6059, %v6055
  %v6604 = vpack.c.b16 %v6060, %v6056
  %v6605 = vpack.c.b16 %v6061, %v6057
  %v6606 = vpack.c.b16 %v6062, %v6058
  %v6607 = vpack.c.b16 %v6067, %v6063
  %v6608 = vpack.c.b16 %v6068, %v6064
  %v6609 = vpack.c.b16 %v6069, %v6065
  %v6610 = vpack.c.b16 %v6070, %v6066
  %v6611 = vpack.c.b16 %v6075, %v6071
  %v6612 = vpack.c.b16 %v6076, %v6072
  %v6613 = vpack.c.b16 %v6077, %v6073
  %v6614 = vpack.c.b16 %v6078, %v6074
  %v6615 = vpack.c.b16 %v6083, %v6079
  %v6616 = vpack.c.b16 %v6084, %v6080
  %v6617 = vpack.c.b16 %v6085, %v6081
  %v6618 = vpack.c.b16 %v6086, %v6082
  %v6619 = vpack.c.b16 %v6091, %v6087
  %v6620 = vpack.c.b16 %v6092, %v6088
  %v6621 = vpack.c.b16 %v6093, %v6089
  %v6622 = vpack.c.b16 %v6094, %v6090
  %v6623 = vpack.c.b16 %v6099, %v6095
  %v6624 = vpack.c.b16 %v6100, %v6096
  %v6625 = vpack.c.b16 %v6101, %v6097
  %v6626 = vpack.c.b16 %v6102, %v6098
  %v6627 = vpack.c.b16 %v6107, %v6103
  %v6628 = vpack.c.b16 %v6108, %v6104
  %v6629 = vpack.c.b16 %v6109, %v6105
  %v6630 = vpack.c.b16 %v6110, %v6106
  %v6631 = vpack.c.b16 %v6115, %v6111
  %v6632 = vpack.c.b16 %v6116, %v6112
  %v6633 = vpack.c.b16 %v6117, %v6113
  %v6634 = vpack.c.b16 %v6118, %v6114
  %v6635 = vpack.c.b16 %v6123, %v6119
  %v6636 = vpack.c.b16 %v6124, %v6120
  %v6637 = vpack.c.b16 %v6125, %v6121
  %v6638 = vpack.c.b16 %v6126, %v6122
  %v6639 = vpack.c.b16 %v6131, %v6127
  %v6640 = vpack.c.b16 %v6132, %v6128
  %v6641 = vpack.c.b16 %v6133, %v6129
  %v6642 = vpack.c.b16 %v6134, %v6130
  %v6643 = vpack.c.b16 %v6139, %v6135
  %v6644 = vpack.c.b16 %v6140, %v6136
  %v6645 = vpack.c.b16 %v6141, %v6137
  %v6646 = vpack.c.b16 %v6142, %v6138
  %v6647 = vpack.c.b16 %v6147, %v6143
  %v6648 = vpack.c.b16 %v6148, %v6144
  %v6649 = vpack.c.b16 %v6149, %v6145
  %v6650 = vpack.c.b16 %v6150, %v6146
  %v6651 = vpack.c.b16 %v6155, %v6151
  %v6652 = vpack.c.b16 %v6156, %v6152
  %v6653 = vpack.c.b16 %v6157, %v6153
  %v6654 = vpack.c.b16 %v6158, %v6154
  %v6655 = vpack.c.b16 %v6163, %v6159
  %v6656 = vpack.c.b16 %v6164, %v6160
  %v6657 = vpack.c.b16 %v6165, %v6161
  %v6658 = vpack.c.b16 %v6166, %v6162
  %v6659 = vpack.c.b16 %v6171, %v6167
  %v6660 = vpack.c.b16 %v6172, %v6168
  %v6661 = vpack.c.b16 %v6173, %v6169
  %v6662 = vpack.c.b16 %v6174, %v6170
  %v6663 = vpack.c.b16 %v6179, %v6175
  %v6664 = vpack.c.b16 %v6180, %v6176
  %v6665 = vpack.c.b16 %v6181, %v6177
  %v6666 = vpack.c.b16 %v6182, %v6178
  %v6667 = vpack.c.b16 %v6187, %v6183
  %v6668 = vpack.c.b16 %v6188, %v6184
  %v6669 = vpack.c.b16 %v6189, %v6185
  %v6670 = vpack.c.b16 %v6190, %v6186
  %v6671 = vpack.c.b16 %v6195, %v6191
  %v6672 = vpack.c.b16 %v6196, %v6192
  %v6673 = vpack.c.b16 %v6197, %v6193
  %v6674 = vpack.c.b16 %v6198, %v6194
  %v6675 = vpack.c.b16 %v6203, %v6199
  %v6676 = vpack.c.b16 %v6204, %v6200
  %v6677 = vpack.c.b16 %v6205, %v6201
  %v6678 = vpack.c.b16 %v6206, %v6202
  %v6679 = vpack.c.b16 %v6211, %v6207
  %v6680 = vpack.c.b16 %v6212, %v6208
  %v6681 = vpack.c.b16 %v6213, %v6209
  %v6682 = vpack.c.b16 %v6214, %v6210
  %v6683 = vpack.c.b16 %v6219, %v6215
  %v6684 = vpack.c.b16 %v6220, %v6216
  %v6685 = vpack.c.b16 %v6221, %v6217
  %v6686 = vpack.c.b16 %v6222, %v6218
  %v6687 = vpack.c.b16 %v6227, %v6223
  %v6688 = vpack.c.b16 %v6228, %v6224
  %v6689 = vpack.c.b16 %v6229, %v6225
  %v6690 = vpack.c.b16 %v6230, %v6226
  %v6691 = vpack.c.b16 %v6235, %v6231
  %v6692 = vpack.c.b16 %v6236, %v6232
  %v6693 = vpack.c.b16 %v6237, %v6233
  %v6694 = vpack.c.b16 %v6238, %v6234
  %v6695 = vpack.c.b16 %v6243, %v6239
  %v6696 = vpack.c.b16 %v6244, %v6240
  %v6697 = vpack.c.b16 %v6245, %v6241
  %v6698 = vpack.c.b16 %v6246, %v6242
  %v6699 = vpack.c.b16 %v6251, %v6247
  %v6700 = vpack.c.b16 %v6252, %v6248
  %v6701 = vpack.c.b16 %v6253, %v6249
  %v6702 = vpack.c.b16 %v6254, %v6250
  %7151 = vmatprep.subr.bf16.mxu0 %v6284
  %7152 = vmatpush1.bf16.msra.mxu0 %v6283
  %7153 = vmatprep.subr.bf16.mxu0 %v6280
  %7154 = vmatpush1.bf16.msra.mxu0 %v6279
  %7155 = vmatprep.subr.bf16.mxu0 %v6276
  %7156 = vmatpush1.bf16.msra.mxu0 %v6275
  %7157 = vmatprep.subr.bf16.mxu0 %v6272
  %7158 = vmatpush1.bf16.msra.mxu0 %v6271
  %7159 = vmatprep.subr.bf16.mxu0 %v6268
  %7160 = vmatpush1.bf16.msra.mxu0 %v6267
  %7161 = vmatprep.subr.bf16.mxu0 %v6264
  %7162 = vmatpush1.bf16.msra.mxu0 %v6263
  %7163 = vmatprep.subr.bf16.mxu0 %v6260
  %7164 = vmatpush1.bf16.msra.mxu0 %v6259
  %7165 = vmatprep.subr.bf16.mxu0 %v6256
  %7166 = vmatpush1.bf16.msra.mxu0 %v6255
  %7167 = vmatprep.subr.bf16.mxu0 %v6316
  %7168 = vmatpush2.bf16.msra.mxu0 %v6315
  %7169 = vmatprep.subr.bf16.mxu0 %v6312
  %7170 = vmatpush2.bf16.msra.mxu0 %v6311
  %7171 = vmatprep.subr.bf16.mxu0 %v6308
  %7172 = vmatpush2.bf16.msra.mxu0 %v6307
  %7173 = vmatprep.subr.bf16.mxu0 %v6304
  %7174 = vmatpush2.bf16.msra.mxu0 %v6303
  %7175 = vmatprep.subr.bf16.mxu0 %v6300
  %7176 = vmatpush2.bf16.msra.mxu0 %v6299
  %7177 = vmatprep.subr.bf16.mxu0 %v6296
  %7178 = vmatpush2.bf16.msra.mxu0 %v6295
  %7179 = vmatprep.subr.bf16.mxu0 %v6292
  %7180 = vmatpush2.bf16.msra.mxu0 %v6291
  %7181 = vmatprep.subr.bf16.mxu0 %v6288
  %7182 = vmatpush2.bf16.msra.mxu0 %v6287
  %7183 = vmatprep.mubr.bf16.mxu0 %v4330
  %7184 = vmatmul.mubr.bf16.gmra.mxu0 %v4329
  %v7185 = vpop.f32.mrf.mxu0
  %v7186 = vadd.f32 %v4894, %v7185
  %v7187 = vpop.f32.mrf.mxu0
  %v7188 = vadd.f32 %v4898, %v7187
  %v7189 = vpop.f32.mrf.mxu0
  %v7190 = vadd.f32 %v4894, %v7189
  %v7191 = vpop.f32.mrf.mxu0
  %v7192 = vadd.f32 %v4898, %v7191
  %7193 = vmatprep.mubr.bf16.mxu0 %v4344
  %7194 = vmatmul.mubr.bf16.gmra.mxu0 %v4343
  %v7195 = vpop.f32.mrf.mxu0
  %v7196 = vadd.f32 %v4894, %v7195
  %v7197 = vpop.f32.mrf.mxu0
  %v7198 = vadd.f32 %v4898, %v7197
  %v7199 = vpop.f32.mrf.mxu0
  %v7200 = vadd.f32 %v4894, %v7199
  %v7201 = vpop.f32.mrf.mxu0
  %v7202 = vadd.f32 %v4898, %v7201
  %7203 = vmatprep.mubr.bf16.mxu0 %v4358
  %7204 = vmatmul.mubr.bf16.gmra.mxu0 %v4357
  %v7205 = vpop.f32.mrf.mxu0
  %v7206 = vadd.f32 %v4894, %v7205
  %v7207 = vpop.f32.mrf.mxu0
  %v7208 = vadd.f32 %v4898, %v7207
  %v7209 = vpop.f32.mrf.mxu0
  %v7210 = vadd.f32 %v4894, %v7209
  %v7211 = vpop.f32.mrf.mxu0
  %v7212 = vadd.f32 %v4898, %v7211
  %7213 = vmatprep.mubr.bf16.mxu0 %v4372
  %7214 = vmatmul.mubr.bf16.gmra.mxu0 %v4371
  %v7215 = vpop.f32.mrf.mxu0
  %v7216 = vadd.f32 %v4894, %v7215
  %v7217 = vpop.f32.mrf.mxu0
  %v7218 = vadd.f32 %v4898, %v7217
  %v7219 = vpop.f32.mrf.mxu0
  %v7220 = vadd.f32 %v4894, %v7219
  %v7221 = vpop.f32.mrf.mxu0
  %v7222 = vadd.f32 %v4898, %v7221
  %7223 = vmatprep.mubr.bf16.mxu0 %v4386
  %7224 = vmatmul.mubr.bf16.gmra.mxu0 %v4385
  %v7225 = vpop.f32.mrf.mxu0
  %v7226 = vadd.f32 %v4894, %v7225
  %v7227 = vpop.f32.mrf.mxu0
  %v7228 = vadd.f32 %v4898, %v7227
  %v7229 = vpop.f32.mrf.mxu0
  %v7230 = vadd.f32 %v4894, %v7229
  %v7231 = vpop.f32.mrf.mxu0
  %v7232 = vadd.f32 %v4898, %v7231
  %7233 = vmatprep.mubr.bf16.mxu0 %v4400
  %7234 = vmatmul.mubr.bf16.gmra.mxu0 %v4399
  %v7235 = vpop.f32.mrf.mxu0
  %v7236 = vadd.f32 %v4894, %v7235
  %v7237 = vpop.f32.mrf.mxu0
  %v7238 = vadd.f32 %v4898, %v7237
  %v7239 = vpop.f32.mrf.mxu0
  %v7240 = vadd.f32 %v4894, %v7239
  %v7241 = vpop.f32.mrf.mxu0
  %v7242 = vadd.f32 %v4898, %v7241
  %7243 = vmatprep.mubr.bf16.mxu0 %v4414
  %7244 = vmatmul.mubr.bf16.gmra.mxu0 %v4413
  %v7245 = vpop.f32.mrf.mxu0
  %v7246 = vadd.f32 %v4894, %v7245
  %v7247 = vpop.f32.mrf.mxu0
  %v7248 = vadd.f32 %v4898, %v7247
  %v7249 = vpop.f32.mrf.mxu0
  %v7250 = vadd.f32 %v4894, %v7249
  %v7251 = vpop.f32.mrf.mxu0
  %v7252 = vadd.f32 %v4898, %v7251
  %7253 = vmatprep.mubr.bf16.mxu0 %v4428
  %7254 = vmatmul.mubr.bf16.gmra.mxu0 %v4427
  %v7255 = vpop.f32.mrf.mxu0
  %v7256 = vadd.f32 %v4894, %v7255
  %v7257 = vpop.f32.mrf.mxu0
  %v7258 = vadd.f32 %v4898, %v7257
  %v7259 = vpop.f32.mrf.mxu0
  %v7260 = vadd.f32 %v4894, %v7259
  %v7261 = vpop.f32.mrf.mxu0
  %v7262 = vadd.f32 %v4898, %v7261
  %7263 = vdwg.mxu0
  %7264 = vmatprep.subr.bf16.mxu0 %v6348
  %7265 = vmatpush1.bf16.msra.mxu0 %v6347
  %7266 = vmatprep.subr.bf16.mxu0 %v6344
  %7267 = vmatpush1.bf16.msra.mxu0 %v6343
  %7268 = vmatprep.subr.bf16.mxu0 %v6340
  %7269 = vmatpush1.bf16.msra.mxu0 %v6339
  %7270 = vmatprep.subr.bf16.mxu0 %v6336
  %7271 = vmatpush1.bf16.msra.mxu0 %v6335
  %7272 = vmatprep.subr.bf16.mxu0 %v6332
  %7273 = vmatpush1.bf16.msra.mxu0 %v6331
  %7274 = vmatprep.subr.bf16.mxu0 %v6328
  %7275 = vmatpush1.bf16.msra.mxu0 %v6327
  %7276 = vmatprep.subr.bf16.mxu0 %v6324
  %7277 = vmatpush1.bf16.msra.mxu0 %v6323
  %7278 = vmatprep.subr.bf16.mxu0 %v6320
  %7279 = vmatpush1.bf16.msra.mxu0 %v6319
  %7280 = vmatprep.subr.bf16.mxu0 %v6380
  %7281 = vmatpush2.bf16.msra.mxu0 %v6379
  %7282 = vmatprep.subr.bf16.mxu0 %v6376
  %7283 = vmatpush2.bf16.msra.mxu0 %v6375
  %7284 = vmatprep.subr.bf16.mxu0 %v6372
  %7285 = vmatpush2.bf16.msra.mxu0 %v6371
  %7286 = vmatprep.subr.bf16.mxu0 %v6368
  %7287 = vmatpush2.bf16.msra.mxu0 %v6367
  %7288 = vmatprep.subr.bf16.mxu0 %v6364
  %7289 = vmatpush2.bf16.msra.mxu0 %v6363
  %7290 = vmatprep.subr.bf16.mxu0 %v6360
  %7291 = vmatpush2.bf16.msra.mxu0 %v6359
  %7292 = vmatprep.subr.bf16.mxu0 %v6356
  %7293 = vmatpush2.bf16.msra.mxu0 %v6355
  %7294 = vmatprep.subr.bf16.mxu0 %v6352
  %7295 = vmatpush2.bf16.msra.mxu0 %v6351
  %7296 = vmatprep.mubr.bf16.mxu0 %v4332
  %7297 = vmatmul.mubr.bf16.gmra.mxu0 %v4331
  %v7298 = vpop.f32.mrf.mxu0
  %v7299 = vadd.f32 %v7186, %v7298
  %v7300 = vpop.f32.mrf.mxu0
  %v7301 = vadd.f32 %v7188, %v7300
  %v7302 = vpop.f32.mrf.mxu0
  %v7303 = vadd.f32 %v7190, %v7302
  %v7304 = vpop.f32.mrf.mxu0
  %v7305 = vadd.f32 %v7192, %v7304
  %7306 = vmatprep.mubr.bf16.mxu0 %v4346
  %7307 = vmatmul.mubr.bf16.gmra.mxu0 %v4345
  %v7308 = vpop.f32.mrf.mxu0
  %v7309 = vadd.f32 %v7196, %v7308
  %v7310 = vpop.f32.mrf.mxu0
  %v7311 = vadd.f32 %v7198, %v7310
  %v7312 = vpop.f32.mrf.mxu0
  %v7313 = vadd.f32 %v7200, %v7312
  %v7314 = vpop.f32.mrf.mxu0
  %v7315 = vadd.f32 %v7202, %v7314
  %7316 = vmatprep.mubr.bf16.mxu0 %v4360
  %7317 = vmatmul.mubr.bf16.gmra.mxu0 %v4359
  %v7318 = vpop.f32.mrf.mxu0
  %v7319 = vadd.f32 %v7206, %v7318
  %v7320 = vpop.f32.mrf.mxu0
  %v7321 = vadd.f32 %v7208, %v7320
  %v7322 = vpop.f32.mrf.mxu0
  %v7323 = vadd.f32 %v7210, %v7322
  %v7324 = vpop.f32.mrf.mxu0
  %v7325 = vadd.f32 %v7212, %v7324
  %7326 = vmatprep.mubr.bf16.mxu0 %v4374
  %7327 = vmatmul.mubr.bf16.gmra.mxu0 %v4373
  %v7328 = vpop.f32.mrf.mxu0
  %v7329 = vadd.f32 %v7216, %v7328
  %v7330 = vpop.f32.mrf.mxu0
  %v7331 = vadd.f32 %v7218, %v7330
  %v7332 = vpop.f32.mrf.mxu0
  %v7333 = vadd.f32 %v7220, %v7332
  %v7334 = vpop.f32.mrf.mxu0
  %v7335 = vadd.f32 %v7222, %v7334
  %7336 = vmatprep.mubr.bf16.mxu0 %v4388
  %7337 = vmatmul.mubr.bf16.gmra.mxu0 %v4387
  %v7338 = vpop.f32.mrf.mxu0
  %v7339 = vadd.f32 %v7226, %v7338
  %v7340 = vpop.f32.mrf.mxu0
  %v7341 = vadd.f32 %v7228, %v7340
  %v7342 = vpop.f32.mrf.mxu0
  %v7343 = vadd.f32 %v7230, %v7342
  %v7344 = vpop.f32.mrf.mxu0
  %v7345 = vadd.f32 %v7232, %v7344
  %7346 = vmatprep.mubr.bf16.mxu0 %v4402
  %7347 = vmatmul.mubr.bf16.gmra.mxu0 %v4401
  %v7348 = vpop.f32.mrf.mxu0
  %v7349 = vadd.f32 %v7236, %v7348
  %v7350 = vpop.f32.mrf.mxu0
  %v7351 = vadd.f32 %v7238, %v7350
  %v7352 = vpop.f32.mrf.mxu0
  %v7353 = vadd.f32 %v7240, %v7352
  %v7354 = vpop.f32.mrf.mxu0
  %v7355 = vadd.f32 %v7242, %v7354
  %7356 = vmatprep.mubr.bf16.mxu0 %v4416
  %7357 = vmatmul.mubr.bf16.gmra.mxu0 %v4415
  %v7358 = vpop.f32.mrf.mxu0
  %v7359 = vadd.f32 %v7246, %v7358
  %v7360 = vpop.f32.mrf.mxu0
  %v7361 = vadd.f32 %v7248, %v7360
  %v7362 = vpop.f32.mrf.mxu0
  %v7363 = vadd.f32 %v7250, %v7362
  %v7364 = vpop.f32.mrf.mxu0
  %v7365 = vadd.f32 %v7252, %v7364
  %7366 = vmatprep.mubr.bf16.mxu0 %v4430
  %7367 = vmatmul.mubr.bf16.gmra.mxu0 %v4429
  %v7368 = vpop.f32.mrf.mxu0
  %v7369 = vadd.f32 %v7256, %v7368
  %v7370 = vpop.f32.mrf.mxu0
  %v7371 = vadd.f32 %v7258, %v7370
  %v7372 = vpop.f32.mrf.mxu0
  %v7373 = vadd.f32 %v7260, %v7372
  %v7374 = vpop.f32.mrf.mxu0
  %v7375 = vadd.f32 %v7262, %v7374
  %7376 = vdwg.mxu0
  %7377 = vmatprep.subr.bf16.mxu0 %v6412
  %7378 = vmatpush1.bf16.msra.mxu0 %v6411
  %7379 = vmatprep.subr.bf16.mxu0 %v6408
  %7380 = vmatpush1.bf16.msra.mxu0 %v6407
  %7381 = vmatprep.subr.bf16.mxu0 %v6404
  %7382 = vmatpush1.bf16.msra.mxu0 %v6403
  %7383 = vmatprep.subr.bf16.mxu0 %v6400
  %7384 = vmatpush1.bf16.msra.mxu0 %v6399
  %7385 = vmatprep.subr.bf16.mxu0 %v6396
  %7386 = vmatpush1.bf16.msra.mxu0 %v6395
  %7387 = vmatprep.subr.bf16.mxu0 %v6392
  %7388 = vmatpush1.bf16.msra.mxu0 %v6391
  %7389 = vmatprep.subr.bf16.mxu0 %v6388
  %7390 = vmatpush1.bf16.msra.mxu0 %v6387
  %7391 = vmatprep.subr.bf16.mxu0 %v6384
  %7392 = vmatpush1.bf16.msra.mxu0 %v6383
  %7393 = vmatprep.subr.bf16.mxu0 %v6444
  %7394 = vmatpush2.bf16.msra.mxu0 %v6443
  %7395 = vmatprep.subr.bf16.mxu0 %v6440
  %7396 = vmatpush2.bf16.msra.mxu0 %v6439
  %7397 = vmatprep.subr.bf16.mxu0 %v6436
  %7398 = vmatpush2.bf16.msra.mxu0 %v6435
  %7399 = vmatprep.subr.bf16.mxu0 %v6432
  %7400 = vmatpush2.bf16.msra.mxu0 %v6431
  %7401 = vmatprep.subr.bf16.mxu0 %v6428
  %7402 = vmatpush2.bf16.msra.mxu0 %v6427
  %7403 = vmatprep.subr.bf16.mxu0 %v6424
  %7404 = vmatpush2.bf16.msra.mxu0 %v6423
  %7405 = vmatprep.subr.bf16.mxu0 %v6420
  %7406 = vmatpush2.bf16.msra.mxu0 %v6419
  %7407 = vmatprep.subr.bf16.mxu0 %v6416
  %7408 = vmatpush2.bf16.msra.mxu0 %v6415
  %7409 = vmatprep.mubr.bf16.mxu0 %v4334
  %7410 = vmatmul.mubr.bf16.gmra.mxu0 %v4333
  %v7411 = vpop.f32.mrf.mxu0
  %v7412 = vadd.f32 %v7299, %v7411
  %v7413 = vpop.f32.mrf.mxu0
  %v7414 = vadd.f32 %v7301, %v7413
  %v7415 = vpop.f32.mrf.mxu0
  %v7416 = vadd.f32 %v7303, %v7415
  %v7417 = vpop.f32.mrf.mxu0
  %v7418 = vadd.f32 %v7305, %v7417
  %7419 = vmatprep.mubr.bf16.mxu0 %v4348
  %7420 = vmatmul.mubr.bf16.gmra.mxu0 %v4347
  %v7421 = vpop.f32.mrf.mxu0
  %v7422 = vadd.f32 %v7309, %v7421
  %v7423 = vpop.f32.mrf.mxu0
  %v7424 = vadd.f32 %v7311, %v7423
  %v7425 = vpop.f32.mrf.mxu0
  %v7426 = vadd.f32 %v7313, %v7425
  %v7427 = vpop.f32.mrf.mxu0
  %v7428 = vadd.f32 %v7315, %v7427
  %7429 = vmatprep.mubr.bf16.mxu0 %v4362
  %7430 = vmatmul.mubr.bf16.gmra.mxu0 %v4361
  %v7431 = vpop.f32.mrf.mxu0
  %v7432 = vadd.f32 %v7319, %v7431
  %v7433 = vpop.f32.mrf.mxu0
  %v7434 = vadd.f32 %v7321, %v7433
  %v7435 = vpop.f32.mrf.mxu0
  %v7436 = vadd.f32 %v7323, %v7435
  %v7437 = vpop.f32.mrf.mxu0
  %v7438 = vadd.f32 %v7325, %v7437
  %7439 = vmatprep.mubr.bf16.mxu0 %v4376
  %7440 = vmatmul.mubr.bf16.gmra.mxu0 %v4375
  %v7441 = vpop.f32.mrf.mxu0
  %v7442 = vadd.f32 %v7329, %v7441
  %v7443 = vpop.f32.mrf.mxu0
  %v7444 = vadd.f32 %v7331, %v7443
  %v7445 = vpop.f32.mrf.mxu0
  %v7446 = vadd.f32 %v7333, %v7445
  %v7447 = vpop.f32.mrf.mxu0
  %v7448 = vadd.f32 %v7335, %v7447
  %7449 = vmatprep.mubr.bf16.mxu0 %v4390
  %7450 = vmatmul.mubr.bf16.gmra.mxu0 %v4389
  %v7451 = vpop.f32.mrf.mxu0
  %v7452 = vadd.f32 %v7339, %v7451
  %v7453 = vpop.f32.mrf.mxu0
  %v7454 = vadd.f32 %v7341, %v7453
  %v7455 = vpop.f32.mrf.mxu0
  %v7456 = vadd.f32 %v7343, %v7455
  %v7457 = vpop.f32.mrf.mxu0
  %v7458 = vadd.f32 %v7345, %v7457
  %7459 = vmatprep.mubr.bf16.mxu0 %v4404
  %7460 = vmatmul.mubr.bf16.gmra.mxu0 %v4403
  %v7461 = vpop.f32.mrf.mxu0
  %v7462 = vadd.f32 %v7349, %v7461
  %v7463 = vpop.f32.mrf.mxu0
  %v7464 = vadd.f32 %v7351, %v7463
  %v7465 = vpop.f32.mrf.mxu0
  %v7466 = vadd.f32 %v7353, %v7465
  %v7467 = vpop.f32.mrf.mxu0
  %v7468 = vadd.f32 %v7355, %v7467
  %7469 = vmatprep.mubr.bf16.mxu0 %v4418
  %7470 = vmatmul.mubr.bf16.gmra.mxu0 %v4417
  %v7471 = vpop.f32.mrf.mxu0
  %v7472 = vadd.f32 %v7359, %v7471
  %v7473 = vpop.f32.mrf.mxu0
  %v7474 = vadd.f32 %v7361, %v7473
  %v7475 = vpop.f32.mrf.mxu0
  %v7476 = vadd.f32 %v7363, %v7475
  %v7477 = vpop.f32.mrf.mxu0
  %v7478 = vadd.f32 %v7365, %v7477
  %7479 = vmatprep.mubr.bf16.mxu0 %v4432
  %7480 = vmatmul.mubr.bf16.gmra.mxu0 %v4431
  %v7481 = vpop.f32.mrf.mxu0
  %v7482 = vadd.f32 %v7369, %v7481
  %v7483 = vpop.f32.mrf.mxu0
  %v7484 = vadd.f32 %v7371, %v7483
  %v7485 = vpop.f32.mrf.mxu0
  %v7486 = vadd.f32 %v7373, %v7485
  %v7487 = vpop.f32.mrf.mxu0
  %v7488 = vadd.f32 %v7375, %v7487
  %7489 = vdwg.mxu0
  %7490 = vmatprep.subr.bf16.mxu0 %v6476
  %7491 = vmatpush1.bf16.msra.mxu0 %v6475
  %7492 = vmatprep.subr.bf16.mxu0 %v6472
  %7493 = vmatpush1.bf16.msra.mxu0 %v6471
  %7494 = vmatprep.subr.bf16.mxu0 %v6468
  %7495 = vmatpush1.bf16.msra.mxu0 %v6467
  %7496 = vmatprep.subr.bf16.mxu0 %v6464
  %7497 = vmatpush1.bf16.msra.mxu0 %v6463
  %7498 = vmatprep.subr.bf16.mxu0 %v6460
  %7499 = vmatpush1.bf16.msra.mxu0 %v6459
  %7500 = vmatprep.subr.bf16.mxu0 %v6456
  %7501 = vmatpush1.bf16.msra.mxu0 %v6455
  %7502 = vmatprep.subr.bf16.mxu0 %v6452
  %7503 = vmatpush1.bf16.msra.mxu0 %v6451
  %7504 = vmatprep.subr.bf16.mxu0 %v6448
  %7505 = vmatpush1.bf16.msra.mxu0 %v6447
  %7506 = vmatprep.subr.bf16.mxu0 %v6508
  %7507 = vmatpush2.bf16.msra.mxu0 %v6507
  %7508 = vmatprep.subr.bf16.mxu0 %v6504
  %7509 = vmatpush2.bf16.msra.mxu0 %v6503
  %7510 = vmatprep.subr.bf16.mxu0 %v6500
  %7511 = vmatpush2.bf16.msra.mxu0 %v6499
  %7512 = vmatprep.subr.bf16.mxu0 %v6496
  %7513 = vmatpush2.bf16.msra.mxu0 %v6495
  %7514 = vmatprep.subr.bf16.mxu0 %v6492
  %7515 = vmatpush2.bf16.msra.mxu0 %v6491
  %7516 = vmatprep.subr.bf16.mxu0 %v6488
  %7517 = vmatpush2.bf16.msra.mxu0 %v6487
  %7518 = vmatprep.subr.bf16.mxu0 %v6484
  %7519 = vmatpush2.bf16.msra.mxu0 %v6483
  %7520 = vmatprep.subr.bf16.mxu0 %v6480
  %7521 = vmatpush2.bf16.msra.mxu0 %v6479
  %7522 = vmatprep.mubr.bf16.mxu0 %v4336
  %7523 = vmatmul.mubr.bf16.gmra.mxu0 %v4335
  %v7524 = vpop.f32.mrf.mxu0
  %v7525 = vadd.f32 %v7412, %v7524
  %v7526 = vpop.f32.mrf.mxu0
  %v7527 = vadd.f32 %v7414, %v7526
  %v7528 = vpop.f32.mrf.mxu0
  %v7529 = vadd.f32 %v7416, %v7528
  %v7530 = vpop.f32.mrf.mxu0
  %v7531 = vadd.f32 %v7418, %v7530
  %7532 = vmatprep.mubr.bf16.mxu0 %v4350
  %7533 = vmatmul.mubr.bf16.gmra.mxu0 %v4349
  %v7534 = vpop.f32.mrf.mxu0
  %v7535 = vadd.f32 %v7422, %v7534
  %v7536 = vpop.f32.mrf.mxu0
  %v7537 = vadd.f32 %v7424, %v7536
  %v7538 = vpop.f32.mrf.mxu0
  %v7539 = vadd.f32 %v7426, %v7538
  %v7540 = vpop.f32.mrf.mxu0
  %v7541 = vadd.f32 %v7428, %v7540
  %7542 = vmatprep.mubr.bf16.mxu0 %v4364
  %7543 = vmatmul.mubr.bf16.gmra.mxu0 %v4363
  %v7544 = vpop.f32.mrf.mxu0
  %v7545 = vadd.f32 %v7432, %v7544
  %v7546 = vpop.f32.mrf.mxu0
  %v7547 = vadd.f32 %v7434, %v7546
  %v7548 = vpop.f32.mrf.mxu0
  %v7549 = vadd.f32 %v7436, %v7548
  %v7550 = vpop.f32.mrf.mxu0
  %v7551 = vadd.f32 %v7438, %v7550
  %7552 = vmatprep.mubr.bf16.mxu0 %v4378
  %7553 = vmatmul.mubr.bf16.gmra.mxu0 %v4377
  %v7554 = vpop.f32.mrf.mxu0
  %v7555 = vadd.f32 %v7442, %v7554
  %v7556 = vpop.f32.mrf.mxu0
  %v7557 = vadd.f32 %v7444, %v7556
  %v7558 = vpop.f32.mrf.mxu0
  %v7559 = vadd.f32 %v7446, %v7558
  %v7560 = vpop.f32.mrf.mxu0
  %v7561 = vadd.f32 %v7448, %v7560
  %7562 = vmatprep.mubr.bf16.mxu0 %v4392
  %7563 = vmatmul.mubr.bf16.gmra.mxu0 %v4391
  %v7564 = vpop.f32.mrf.mxu0
  %v7565 = vadd.f32 %v7452, %v7564
  %v7566 = vpop.f32.mrf.mxu0
  %v7567 = vadd.f32 %v7454, %v7566
  %v7568 = vpop.f32.mrf.mxu0
  %v7569 = vadd.f32 %v7456, %v7568
  %v7570 = vpop.f32.mrf.mxu0
  %v7571 = vadd.f32 %v7458, %v7570
  %7572 = vmatprep.mubr.bf16.mxu0 %v4406
  %7573 = vmatmul.mubr.bf16.gmra.mxu0 %v4405
  %v7574 = vpop.f32.mrf.mxu0
  %v7575 = vadd.f32 %v7462, %v7574
  %v7576 = vpop.f32.mrf.mxu0
  %v7577 = vadd.f32 %v7464, %v7576
  %v7578 = vpop.f32.mrf.mxu0
  %v7579 = vadd.f32 %v7466, %v7578
  %v7580 = vpop.f32.mrf.mxu0
  %v7581 = vadd.f32 %v7468, %v7580
  %7582 = vmatprep.mubr.bf16.mxu0 %v4420
  %7583 = vmatmul.mubr.bf16.gmra.mxu0 %v4419
  %v7584 = vpop.f32.mrf.mxu0
  %v7585 = vadd.f32 %v7472, %v7584
  %v7586 = vpop.f32.mrf.mxu0
  %v7587 = vadd.f32 %v7474, %v7586
  %v7588 = vpop.f32.mrf.mxu0
  %v7589 = vadd.f32 %v7476, %v7588
  %v7590 = vpop.f32.mrf.mxu0
  %v7591 = vadd.f32 %v7478, %v7590
  %7592 = vmatprep.mubr.bf16.mxu0 %v4434
  %7593 = vmatmul.mubr.bf16.gmra.mxu0 %v4433
  %v7594 = vpop.f32.mrf.mxu0
  %v7595 = vadd.f32 %v7482, %v7594
  %v7596 = vpop.f32.mrf.mxu0
  %v7597 = vadd.f32 %v7484, %v7596
  %v7598 = vpop.f32.mrf.mxu0
  %v7599 = vadd.f32 %v7486, %v7598
  %v7600 = vpop.f32.mrf.mxu0
  %v7601 = vadd.f32 %v7488, %v7600
  %7602 = vdwg.mxu0
  %7603 = vmatprep.subr.bf16.mxu0 %v6540
  %7604 = vmatpush1.bf16.msra.mxu0 %v6539
  %7605 = vmatprep.subr.bf16.mxu0 %v6536
  %7606 = vmatpush1.bf16.msra.mxu0 %v6535
  %7607 = vmatprep.subr.bf16.mxu0 %v6532
  %7608 = vmatpush1.bf16.msra.mxu0 %v6531
  %7609 = vmatprep.subr.bf16.mxu0 %v6528
  %7610 = vmatpush1.bf16.msra.mxu0 %v6527
  %7611 = vmatprep.subr.bf16.mxu0 %v6524
  %7612 = vmatpush1.bf16.msra.mxu0 %v6523
  %7613 = vmatprep.subr.bf16.mxu0 %v6520
  %7614 = vmatpush1.bf16.msra.mxu0 %v6519
  %7615 = vmatprep.subr.bf16.mxu0 %v6516
  %7616 = vmatpush1.bf16.msra.mxu0 %v6515
  %7617 = vmatprep.subr.bf16.mxu0 %v6512
  %7618 = vmatpush1.bf16.msra.mxu0 %v6511
  %7619 = vmatprep.subr.bf16.mxu0 %v6572
  %7620 = vmatpush2.bf16.msra.mxu0 %v6571
  %7621 = vmatprep.subr.bf16.mxu0 %v6568
  %7622 = vmatpush2.bf16.msra.mxu0 %v6567
  %7623 = vmatprep.subr.bf16.mxu0 %v6564
  %7624 = vmatpush2.bf16.msra.mxu0 %v6563
  %7625 = vmatprep.subr.bf16.mxu0 %v6560
  %7626 = vmatpush2.bf16.msra.mxu0 %v6559
  %7627 = vmatprep.subr.bf16.mxu0 %v6556
  %7628 = vmatpush2.bf16.msra.mxu0 %v6555
  %7629 = vmatprep.subr.bf16.mxu0 %v6552
  %7630 = vmatpush2.bf16.msra.mxu0 %v6551
  %7631 = vmatprep.subr.bf16.mxu0 %v6548
  %7632 = vmatpush2.bf16.msra.mxu0 %v6547
  %7633 = vmatprep.subr.bf16.mxu0 %v6544
  %7634 = vmatpush2.bf16.msra.mxu0 %v6543
  %7635 = vmatprep.mubr.bf16.mxu0 %v4338
  %7636 = vmatmul.mubr.bf16.gmra.mxu0 %v4337
  %v7637 = vpop.f32.mrf.mxu0
  %v7638 = vadd.f32 %v7525, %v7637
  %v7639 = vpop.f32.mrf.mxu0
  %v7640 = vadd.f32 %v7527, %v7639
  %v7641 = vpop.f32.mrf.mxu0
  %v7642 = vadd.f32 %v7529, %v7641
  %v7643 = vpop.f32.mrf.mxu0
  %v7644 = vadd.f32 %v7531, %v7643
  %7645 = vmatprep.mubr.bf16.mxu0 %v4352
  %7646 = vmatmul.mubr.bf16.gmra.mxu0 %v4351
  %v7647 = vpop.f32.mrf.mxu0
  %v7648 = vadd.f32 %v7535, %v7647
  %v7649 = vpop.f32.mrf.mxu0
  %v7650 = vadd.f32 %v7537, %v7649
  %v7651 = vpop.f32.mrf.mxu0
  %v7652 = vadd.f32 %v7539, %v7651
  %v7653 = vpop.f32.mrf.mxu0
  %v7654 = vadd.f32 %v7541, %v7653
  %7655 = vmatprep.mubr.bf16.mxu0 %v4366
  %7656 = vmatmul.mubr.bf16.gmra.mxu0 %v4365
  %v7657 = vpop.f32.mrf.mxu0
  %v7658 = vadd.f32 %v7545, %v7657
  %v7659 = vpop.f32.mrf.mxu0
  %v7660 = vadd.f32 %v7547, %v7659
  %v7661 = vpop.f32.mrf.mxu0
  %v7662 = vadd.f32 %v7549, %v7661
  %v7663 = vpop.f32.mrf.mxu0
  %v7664 = vadd.f32 %v7551, %v7663
  %7665 = vmatprep.mubr.bf16.mxu0 %v4380
  %7666 = vmatmul.mubr.bf16.gmra.mxu0 %v4379
  %v7667 = vpop.f32.mrf.mxu0
  %v7668 = vadd.f32 %v7555, %v7667
  %v7669 = vpop.f32.mrf.mxu0
  %v7670 = vadd.f32 %v7557, %v7669
  %v7671 = vpop.f32.mrf.mxu0
  %v7672 = vadd.f32 %v7559, %v7671
  %v7673 = vpop.f32.mrf.mxu0
  %v7674 = vadd.f32 %v7561, %v7673
  %7675 = vmatprep.mubr.bf16.mxu0 %v4394
  %7676 = vmatmul.mubr.bf16.gmra.mxu0 %v4393
  %v7677 = vpop.f32.mrf.mxu0
  %v7678 = vadd.f32 %v7565, %v7677
  %v7679 = vpop.f32.mrf.mxu0
  %v7680 = vadd.f32 %v7567, %v7679
  %v7681 = vpop.f32.mrf.mxu0
  %v7682 = vadd.f32 %v7569, %v7681
  %v7683 = vpop.f32.mrf.mxu0
  %v7684 = vadd.f32 %v7571, %v7683
  %7685 = vmatprep.mubr.bf16.mxu0 %v4408
  %7686 = vmatmul.mubr.bf16.gmra.mxu0 %v4407
  %v7687 = vpop.f32.mrf.mxu0
  %v7688 = vadd.f32 %v7575, %v7687
  %v7689 = vpop.f32.mrf.mxu0
  %v7690 = vadd.f32 %v7577, %v7689
  %v7691 = vpop.f32.mrf.mxu0
  %v7692 = vadd.f32 %v7579, %v7691
  %v7693 = vpop.f32.mrf.mxu0
  %v7694 = vadd.f32 %v7581, %v7693
  %7695 = vmatprep.mubr.bf16.mxu0 %v4422
  %7696 = vmatmul.mubr.bf16.gmra.mxu0 %v4421
  %v7697 = vpop.f32.mrf.mxu0
  %v7698 = vadd.f32 %v7585, %v7697
  %v7699 = vpop.f32.mrf.mxu0
  %v7700 = vadd.f32 %v7587, %v7699
  %v7701 = vpop.f32.mrf.mxu0
  %v7702 = vadd.f32 %v7589, %v7701
  %v7703 = vpop.f32.mrf.mxu0
  %v7704 = vadd.f32 %v7591, %v7703
  %7705 = vmatprep.mubr.bf16.mxu0 %v4436
  %7706 = vmatmul.mubr.bf16.gmra.mxu0 %v4435
  %v7707 = vpop.f32.mrf.mxu0
  %v7708 = vadd.f32 %v7595, %v7707
  %v7709 = vpop.f32.mrf.mxu0
  %v7710 = vadd.f32 %v7597, %v7709
  %v7711 = vpop.f32.mrf.mxu0
  %v7712 = vadd.f32 %v7599, %v7711
  %v7713 = vpop.f32.mrf.mxu0
  %v7714 = vadd.f32 %v7601, %v7713
  %7715 = vdwg.mxu0
  %7716 = vmatprep.subr.bf16.mxu0 %v6604
  %7717 = vmatpush1.bf16.msra.mxu0 %v6603
  %7718 = vmatprep.subr.bf16.mxu0 %v6600
  %7719 = vmatpush1.bf16.msra.mxu0 %v6599
  %7720 = vmatprep.subr.bf16.mxu0 %v6596
  %7721 = vmatpush1.bf16.msra.mxu0 %v6595
  %7722 = vmatprep.subr.bf16.mxu0 %v6592
  %7723 = vmatpush1.bf16.msra.mxu0 %v6591
  %7724 = vmatprep.subr.bf16.mxu0 %v6588
  %7725 = vmatpush1.bf16.msra.mxu0 %v6587
  %7726 = vmatprep.subr.bf16.mxu0 %v6584
  %7727 = vmatpush1.bf16.msra.mxu0 %v6583
  %7728 = vmatprep.subr.bf16.mxu0 %v6580
  %7729 = vmatpush1.bf16.msra.mxu0 %v6579
  %7730 = vmatprep.subr.bf16.mxu0 %v6576
  %7731 = vmatpush1.bf16.msra.mxu0 %v6575
  %7732 = vmatprep.subr.bf16.mxu0 %v6636
  %7733 = vmatpush2.bf16.msra.mxu0 %v6635
  %7734 = vmatprep.subr.bf16.mxu0 %v6632
  %7735 = vmatpush2.bf16.msra.mxu0 %v6631
  %7736 = vmatprep.subr.bf16.mxu0 %v6628
  %7737 = vmatpush2.bf16.msra.mxu0 %v6627
  %7738 = vmatprep.subr.bf16.mxu0 %v6624
  %7739 = vmatpush2.bf16.msra.mxu0 %v6623
  %7740 = vmatprep.subr.bf16.mxu0 %v6620
  %7741 = vmatpush2.bf16.msra.mxu0 %v6619
  %7742 = vmatprep.subr.bf16.mxu0 %v6616
  %7743 = vmatpush2.bf16.msra.mxu0 %v6615
  %7744 = vmatprep.subr.bf16.mxu0 %v6612
  %7745 = vmatpush2.bf16.msra.mxu0 %v6611
  %7746 = vmatprep.subr.bf16.mxu0 %v6608
  %7747 = vmatpush2.bf16.msra.mxu0 %v6607
  %7748 = vmatprep.mubr.bf16.mxu0 %v4340
  %7749 = vmatmul.mubr.bf16.gmra.mxu0 %v4339
  %v7750 = vpop.f32.mrf.mxu0
  %v7751 = vadd.f32 %v7638, %v7750
  %v7752 = vpop.f32.mrf.mxu0
  %v7753 = vadd.f32 %v7640, %v7752
  %v7754 = vpop.f32.mrf.mxu0
  %v7755 = vadd.f32 %v7642, %v7754
  %v7756 = vpop.f32.mrf.mxu0
  %v7757 = vadd.f32 %v7644, %v7756
  %7758 = vmatprep.mubr.bf16.mxu0 %v4354
  %7759 = vmatmul.mubr.bf16.gmra.mxu0 %v4353
  %v7760 = vpop.f32.mrf.mxu0
  %v7761 = vadd.f32 %v7648, %v7760
  %v7762 = vpop.f32.mrf.mxu0
  %v7763 = vadd.f32 %v7650, %v7762
  %v7764 = vpop.f32.mrf.mxu0
  %v7765 = vadd.f32 %v7652, %v7764
  %v7766 = vpop.f32.mrf.mxu0
  %v7767 = vadd.f32 %v7654, %v7766
  %7768 = vmatprep.mubr.bf16.mxu0 %v4368
  %7769 = vmatmul.mubr.bf16.gmra.mxu0 %v4367
  %v7770 = vpop.f32.mrf.mxu0
  %v7771 = vadd.f32 %v7658, %v7770
  %v7772 = vpop.f32.mrf.mxu0
  %v7773 = vadd.f32 %v7660, %v7772
  %v7774 = vpop.f32.mrf.mxu0
  %v7775 = vadd.f32 %v7662, %v7774
  %v7776 = vpop.f32.mrf.mxu0
  %v7777 = vadd.f32 %v7664, %v7776
  %7778 = vmatprep.mubr.bf16.mxu0 %v4382
  %7779 = vmatmul.mubr.bf16.gmra.mxu0 %v4381
  %v7780 = vpop.f32.mrf.mxu0
  %v7781 = vadd.f32 %v7668, %v7780
  %v7782 = vpop.f32.mrf.mxu0
  %v7783 = vadd.f32 %v7670, %v7782
  %v7784 = vpop.f32.mrf.mxu0
  %v7785 = vadd.f32 %v7672, %v7784
  %v7786 = vpop.f32.mrf.mxu0
  %v7787 = vadd.f32 %v7674, %v7786
  %7788 = vmatprep.mubr.bf16.mxu0 %v4396
  %7789 = vmatmul.mubr.bf16.gmra.mxu0 %v4395
  %v7790 = vpop.f32.mrf.mxu0
  %v7791 = vadd.f32 %v7678, %v7790
  %v7792 = vpop.f32.mrf.mxu0
  %v7793 = vadd.f32 %v7680, %v7792
  %v7794 = vpop.f32.mrf.mxu0
  %v7795 = vadd.f32 %v7682, %v7794
  %v7796 = vpop.f32.mrf.mxu0
  %v7797 = vadd.f32 %v7684, %v7796
  %7798 = vmatprep.mubr.bf16.mxu0 %v4410
  %7799 = vmatmul.mubr.bf16.gmra.mxu0 %v4409
  %v7800 = vpop.f32.mrf.mxu0
  %v7801 = vadd.f32 %v7688, %v7800
  %v7802 = vpop.f32.mrf.mxu0
  %v7803 = vadd.f32 %v7690, %v7802
  %v7804 = vpop.f32.mrf.mxu0
  %v7805 = vadd.f32 %v7692, %v7804
  %v7806 = vpop.f32.mrf.mxu0
  %v7807 = vadd.f32 %v7694, %v7806
  %7808 = vmatprep.mubr.bf16.mxu0 %v4424
  %7809 = vmatmul.mubr.bf16.gmra.mxu0 %v4423
  %v7810 = vpop.f32.mrf.mxu0
  %v7811 = vadd.f32 %v7698, %v7810
  %v7812 = vpop.f32.mrf.mxu0
  %v7813 = vadd.f32 %v7700, %v7812
  %v7814 = vpop.f32.mrf.mxu0
  %v7815 = vadd.f32 %v7702, %v7814
  %v7816 = vpop.f32.mrf.mxu0
  %v7817 = vadd.f32 %v7704, %v7816
  %7818 = vmatprep.mubr.bf16.mxu0 %v4438
  %7819 = vmatmul.mubr.bf16.gmra.mxu0 %v4437
  %v7820 = vpop.f32.mrf.mxu0
  %v7821 = vadd.f32 %v7708, %v7820
  %v7822 = vpop.f32.mrf.mxu0
  %v7823 = vadd.f32 %v7710, %v7822
  %v7824 = vpop.f32.mrf.mxu0
  %v7825 = vadd.f32 %v7712, %v7824
  %v7826 = vpop.f32.mrf.mxu0
  %v7827 = vadd.f32 %v7714, %v7826
  %7828 = vdwg.mxu0
  %7829 = vmatprep.subr.bf16.mxu0 %v6668
  %7830 = vmatpush1.bf16.msra.mxu0 %v6667
  %7831 = vmatprep.subr.bf16.mxu0 %v6664
  %7832 = vmatpush1.bf16.msra.mxu0 %v6663
  %7833 = vmatprep.subr.bf16.mxu0 %v6660
  %7834 = vmatpush1.bf16.msra.mxu0 %v6659
  %7835 = vmatprep.subr.bf16.mxu0 %v6656
  %7836 = vmatpush1.bf16.msra.mxu0 %v6655
  %7837 = vmatprep.subr.bf16.mxu0 %v6652
  %7838 = vmatpush1.bf16.msra.mxu0 %v6651
  %7839 = vmatprep.subr.bf16.mxu0 %v6648
  %7840 = vmatpush1.bf16.msra.mxu0 %v6647
  %7841 = vmatprep.subr.bf16.mxu0 %v6644
  %7842 = vmatpush1.bf16.msra.mxu0 %v6643
  %7843 = vmatprep.subr.bf16.mxu0 %v6640
  %7844 = vmatpush1.bf16.msra.mxu0 %v6639
  %7845 = vmatprep.subr.bf16.mxu0 %v6700
  %7846 = vmatpush2.bf16.msra.mxu0 %v6699
  %7847 = vmatprep.subr.bf16.mxu0 %v6696
  %7848 = vmatpush2.bf16.msra.mxu0 %v6695
  %7849 = vmatprep.subr.bf16.mxu0 %v6692
  %7850 = vmatpush2.bf16.msra.mxu0 %v6691
  %7851 = vmatprep.subr.bf16.mxu0 %v6688
  %7852 = vmatpush2.bf16.msra.mxu0 %v6687
  %7853 = vmatprep.subr.bf16.mxu0 %v6684
  %7854 = vmatpush2.bf16.msra.mxu0 %v6683
  %7855 = vmatprep.subr.bf16.mxu0 %v6680
  %7856 = vmatpush2.bf16.msra.mxu0 %v6679
  %7857 = vmatprep.subr.bf16.mxu0 %v6676
  %7858 = vmatpush2.bf16.msra.mxu0 %v6675
  %7859 = vmatprep.subr.bf16.mxu0 %v6672
  %7860 = vmatpush2.bf16.msra.mxu0 %v6671
  %7861 = vmatprep.mubr.bf16.mxu0 %v4342
  %7862 = vmatmul.mubr.bf16.gmra.mxu0 %v4341
  %v7863 = vpop.f32.mrf.mxu0
  %v7864 = vadd.f32 %v7751, %v7863
  %v7865 = vpop.f32.mrf.mxu0
  %v7866 = vadd.f32 %v7753, %v7865
  %v7867 = vpop.f32.mrf.mxu0
  %v7868 = vadd.f32 %v7755, %v7867
  %v7869 = vpop.f32.mrf.mxu0
  %v7870 = vadd.f32 %v7757, %v7869
  %7871 = vmatprep.mubr.bf16.mxu0 %v4356
  %7872 = vmatmul.mubr.bf16.gmra.mxu0 %v4355
  %v7873 = vpop.f32.mrf.mxu0
  %v7874 = vadd.f32 %v7761, %v7873
  %v7875 = vpop.f32.mrf.mxu0
  %v7876 = vadd.f32 %v7763, %v7875
  %v7877 = vpop.f32.mrf.mxu0
  %v7878 = vadd.f32 %v7765, %v7877
  %v7879 = vpop.f32.mrf.mxu0
  %v7880 = vadd.f32 %v7767, %v7879
  %7881 = vmatprep.mubr.bf16.mxu0 %v4370
  %7882 = vmatmul.mubr.bf16.gmra.mxu0 %v4369
  %v7883 = vpop.f32.mrf.mxu0
  %v7884 = vadd.f32 %v7771, %v7883
  %v7885 = vpop.f32.mrf.mxu0
  %v7886 = vadd.f32 %v7773, %v7885
  %v7887 = vpop.f32.mrf.mxu0
  %v7888 = vadd.f32 %v7775, %v7887
  %v7889 = vpop.f32.mrf.mxu0
  %v7890 = vadd.f32 %v7777, %v7889
  %7891 = vmatprep.mubr.bf16.mxu0 %v4384
  %7892 = vmatmul.mubr.bf16.gmra.mxu0 %v4383
  %v7893 = vpop.f32.mrf.mxu0
  %v7894 = vadd.f32 %v7781, %v7893
  %v7895 = vpop.f32.mrf.mxu0
  %v7896 = vadd.f32 %v7783, %v7895
  %v7897 = vpop.f32.mrf.mxu0
  %v7898 = vadd.f32 %v7785, %v7897
  %v7899 = vpop.f32.mrf.mxu0
  %v7900 = vadd.f32 %v7787, %v7899
  %7901 = vmatprep.mubr.bf16.mxu0 %v4398
  %7902 = vmatmul.mubr.bf16.gmra.mxu0 %v4397
  %v7903 = vpop.f32.mrf.mxu0
  %v7904 = vadd.f32 %v7791, %v7903
  %v7905 = vpop.f32.mrf.mxu0
  %v7906 = vadd.f32 %v7793, %v7905
  %v7907 = vpop.f32.mrf.mxu0
  %v7908 = vadd.f32 %v7795, %v7907
  %v7909 = vpop.f32.mrf.mxu0
  %v7910 = vadd.f32 %v7797, %v7909
  %7911 = vmatprep.mubr.bf16.mxu0 %v4412
  %7912 = vmatmul.mubr.bf16.gmra.mxu0 %v4411
  %v7913 = vpop.f32.mrf.mxu0
  %v7914 = vadd.f32 %v7801, %v7913
  %v7915 = vpop.f32.mrf.mxu0
  %v7916 = vadd.f32 %v7803, %v7915
  %v7917 = vpop.f32.mrf.mxu0
  %v7918 = vadd.f32 %v7805, %v7917
  %v7919 = vpop.f32.mrf.mxu0
  %v7920 = vadd.f32 %v7807, %v7919
  %7921 = vmatprep.mubr.bf16.mxu0 %v4426
  %7922 = vmatmul.mubr.bf16.gmra.mxu0 %v4425
  %v7923 = vpop.f32.mrf.mxu0
  %v7924 = vadd.f32 %v7811, %v7923
  %v7925 = vpop.f32.mrf.mxu0
  %v7926 = vadd.f32 %v7813, %v7925
  %v7927 = vpop.f32.mrf.mxu0
  %v7928 = vadd.f32 %v7815, %v7927
  %v7929 = vpop.f32.mrf.mxu0
  %v7930 = vadd.f32 %v7817, %v7929
  %7931 = vmatprep.mubr.bf16.mxu0 %v4440
  %7932 = vmatmul.mubr.bf16.gmra.mxu0 %v4439
  %v7933 = vpop.f32.mrf.mxu0
  %v7934 = vadd.f32 %v7821, %v7933
  %v7935 = vpop.f32.mrf.mxu0
  %v7936 = vadd.f32 %v7823, %v7935
  %v7937 = vpop.f32.mrf.mxu0
  %v7938 = vadd.f32 %v7825, %v7937
  %v7939 = vpop.f32.mrf.mxu0
  %v7940 = vadd.f32 %v7827, %v7939
  %7941 = vdwg.mxu0
  %7942 = vmatprep.subr.bf16.mxu0 %v6286
  %7943 = vmatpush1.bf16.msra.mxu0 %v6285
  %7944 = vmatprep.subr.bf16.mxu0 %v6282
  %7945 = vmatpush1.bf16.msra.mxu0 %v6281
  %7946 = vmatprep.subr.bf16.mxu0 %v6278
  %7947 = vmatpush1.bf16.msra.mxu0 %v6277
  %7948 = vmatprep.subr.bf16.mxu0 %v6274
  %7949 = vmatpush1.bf16.msra.mxu0 %v6273
  %7950 = vmatprep.subr.bf16.mxu0 %v6270
  %7951 = vmatpush1.bf16.msra.mxu0 %v6269
  %7952 = vmatprep.subr.bf16.mxu0 %v6266
  %7953 = vmatpush1.bf16.msra.mxu0 %v6265
  %7954 = vmatprep.subr.bf16.mxu0 %v6262
  %7955 = vmatpush1.bf16.msra.mxu0 %v6261
  %7956 = vmatprep.subr.bf16.mxu0 %v6258
  %7957 = vmatpush1.bf16.msra.mxu0 %v6257
  %7958 = vmatprep.subr.bf16.mxu0 %v6318
  %7959 = vmatpush2.bf16.msra.mxu0 %v6317
  %7960 = vmatprep.subr.bf16.mxu0 %v6314
  %7961 = vmatpush2.bf16.msra.mxu0 %v6313
  %7962 = vmatprep.subr.bf16.mxu0 %v6310
  %7963 = vmatpush2.bf16.msra.mxu0 %v6309
  %7964 = vmatprep.subr.bf16.mxu0 %v6306
  %7965 = vmatpush2.bf16.msra.mxu0 %v6305
  %7966 = vmatprep.subr.bf16.mxu0 %v6302
  %7967 = vmatpush2.bf16.msra.mxu0 %v6301
  %7968 = vmatprep.subr.bf16.mxu0 %v6298
  %7969 = vmatpush2.bf16.msra.mxu0 %v6297
  %7970 = vmatprep.subr.bf16.mxu0 %v6294
  %7971 = vmatpush2.bf16.msra.mxu0 %v6293
  %7972 = vmatprep.subr.bf16.mxu0 %v6290
  %7973 = vmatpush2.bf16.msra.mxu0 %v6289
  %7974 = vmatprep.mubr.bf16.mxu0 %v4330
  %7975 = vmatmul.mubr.bf16.gmra.mxu0 %v4329
  %v7976 = vpop.f32.mrf.mxu0
  %v7977 = vadd.f32 %v4902, %v7976
  %v7978 = vpop.f32.mrf.mxu0
  %v7979 = vadd.f32 %v4906, %v7978
  %v7980 = vpop.f32.mrf.mxu0
  %v7981 = vadd.f32 %v4902, %v7980
  %v7982 = vpop.f32.mrf.mxu0
  %v7983 = vadd.f32 %v4906, %v7982
  %7984 = vmatprep.mubr.bf16.mxu0 %v4344
  %7985 = vmatmul.mubr.bf16.gmra.mxu0 %v4343
  %v7986 = vpop.f32.mrf.mxu0
  %v7987 = vadd.f32 %v4902, %v7986
  %v7988 = vpop.f32.mrf.mxu0
  %v7989 = vadd.f32 %v4906, %v7988
  %v7990 = vpop.f32.mrf.mxu0
  %v7991 = vadd.f32 %v4902, %v7990
  %v7992 = vpop.f32.mrf.mxu0
  %v7993 = vadd.f32 %v4906, %v7992
  %7994 = vmatprep.mubr.bf16.mxu0 %v4358
  %7995 = vmatmul.mubr.bf16.gmra.mxu0 %v4357
  %v7996 = vpop.f32.mrf.mxu0
  %v7997 = vadd.f32 %v4902, %v7996
  %v7998 = vpop.f32.mrf.mxu0
  %v7999 = vadd.f32 %v4906, %v7998
  %v8000 = vpop.f32.mrf.mxu0
  %v8001 = vadd.f32 %v4902, %v8000
  %v8002 = vpop.f32.mrf.mxu0
  %v8003 = vadd.f32 %v4906, %v8002
  %8004 = vmatprep.mubr.bf16.mxu0 %v4372
  %8005 = vmatmul.mubr.bf16.gmra.mxu0 %v4371
  %v8006 = vpop.f32.mrf.mxu0
  %v8007 = vadd.f32 %v4902, %v8006
  %v8008 = vpop.f32.mrf.mxu0
  %v8009 = vadd.f32 %v4906, %v8008
  %v8010 = vpop.f32.mrf.mxu0
  %v8011 = vadd.f32 %v4902, %v8010
  %v8012 = vpop.f32.mrf.mxu0
  %v8013 = vadd.f32 %v4906, %v8012
  %8014 = vmatprep.mubr.bf16.mxu0 %v4386
  %8015 = vmatmul.mubr.bf16.gmra.mxu0 %v4385
  %v8016 = vpop.f32.mrf.mxu0
  %v8017 = vadd.f32 %v4902, %v8016
  %v8018 = vpop.f32.mrf.mxu0
  %v8019 = vadd.f32 %v4906, %v8018
  %v8020 = vpop.f32.mrf.mxu0
  %v8021 = vadd.f32 %v4902, %v8020
  %v8022 = vpop.f32.mrf.mxu0
  %v8023 = vadd.f32 %v4906, %v8022
  %8024 = vmatprep.mubr.bf16.mxu0 %v4400
  %8025 = vmatmul.mubr.bf16.gmra.mxu0 %v4399
  %v8026 = vpop.f32.mrf.mxu0
  %v8027 = vadd.f32 %v4902, %v8026
  %v8028 = vpop.f32.mrf.mxu0
  %v8029 = vadd.f32 %v4906, %v8028
  %v8030 = vpop.f32.mrf.mxu0
  %v8031 = vadd.f32 %v4902, %v8030
  %v8032 = vpop.f32.mrf.mxu0
  %v8033 = vadd.f32 %v4906, %v8032
  %8034 = vmatprep.mubr.bf16.mxu0 %v4414
  %8035 = vmatmul.mubr.bf16.gmra.mxu0 %v4413
  %v8036 = vpop.f32.mrf.mxu0
  %v8037 = vadd.f32 %v4902, %v8036
  %v8038 = vpop.f32.mrf.mxu0
  %v8039 = vadd.f32 %v4906, %v8038
  %v8040 = vpop.f32.mrf.mxu0
  %v8041 = vadd.f32 %v4902, %v8040
  %v8042 = vpop.f32.mrf.mxu0
  %v8043 = vadd.f32 %v4906, %v8042
  %8044 = vmatprep.mubr.bf16.mxu0 %v4428
  %8045 = vmatmul.mubr.bf16.gmra.mxu0 %v4427
  %v8046 = vpop.f32.mrf.mxu0
  %v8047 = vadd.f32 %v4902, %v8046
  %v8048 = vpop.f32.mrf.mxu0
  %v8049 = vadd.f32 %v4906, %v8048
  %v8050 = vpop.f32.mrf.mxu0
  %v8051 = vadd.f32 %v4902, %v8050
  %v8052 = vpop.f32.mrf.mxu0
  %v8053 = vadd.f32 %v4906, %v8052
  %8054 = vdwg.mxu0
  %8055 = vmatprep.subr.bf16.mxu0 %v6350
  %8056 = vmatpush1.bf16.msra.mxu0 %v6349
  %8057 = vmatprep.subr.bf16.mxu0 %v6346
  %8058 = vmatpush1.bf16.msra.mxu0 %v6345
  %8059 = vmatprep.subr.bf16.mxu0 %v6342
  %8060 = vmatpush1.bf16.msra.mxu0 %v6341
  %8061 = vmatprep.subr.bf16.mxu0 %v6338
  %8062 = vmatpush1.bf16.msra.mxu0 %v6337
  %8063 = vmatprep.subr.bf16.mxu0 %v6334
  %8064 = vmatpush1.bf16.msra.mxu0 %v6333
  %8065 = vmatprep.subr.bf16.mxu0 %v6330
  %8066 = vmatpush1.bf16.msra.mxu0 %v6329
  %8067 = vmatprep.subr.bf16.mxu0 %v6326
  %8068 = vmatpush1.bf16.msra.mxu0 %v6325
  %8069 = vmatprep.subr.bf16.mxu0 %v6322
  %8070 = vmatpush1.bf16.msra.mxu0 %v6321
  %8071 = vmatprep.subr.bf16.mxu0 %v6382
  %8072 = vmatpush2.bf16.msra.mxu0 %v6381
  %8073 = vmatprep.subr.bf16.mxu0 %v6378
  %8074 = vmatpush2.bf16.msra.mxu0 %v6377
  %8075 = vmatprep.subr.bf16.mxu0 %v6374
  %8076 = vmatpush2.bf16.msra.mxu0 %v6373
  %8077 = vmatprep.subr.bf16.mxu0 %v6370
  %8078 = vmatpush2.bf16.msra.mxu0 %v6369
  %8079 = vmatprep.subr.bf16.mxu0 %v6366
  %8080 = vmatpush2.bf16.msra.mxu0 %v6365
  %8081 = vmatprep.subr.bf16.mxu0 %v6362
  %8082 = vmatpush2.bf16.msra.mxu0 %v6361
  %8083 = vmatprep.subr.bf16.mxu0 %v6358
  %8084 = vmatpush2.bf16.msra.mxu0 %v6357
  %8085 = vmatprep.subr.bf16.mxu0 %v6354
  %8086 = vmatpush2.bf16.msra.mxu0 %v6353
  %8087 = vmatprep.mubr.bf16.mxu0 %v4332
  %8088 = vmatmul.mubr.bf16.gmra.mxu0 %v4331
  %v8089 = vpop.f32.mrf.mxu0
  %v8090 = vadd.f32 %v7977, %v8089
  %v8091 = vpop.f32.mrf.mxu0
  %v8092 = vadd.f32 %v7979, %v8091
  %v8093 = vpop.f32.mrf.mxu0
  %v8094 = vadd.f32 %v7981, %v8093
  %v8095 = vpop.f32.mrf.mxu0
  %v8096 = vadd.f32 %v7983, %v8095
  %8097 = vmatprep.mubr.bf16.mxu0 %v4346
  %8098 = vmatmul.mubr.bf16.gmra.mxu0 %v4345
  %v8099 = vpop.f32.mrf.mxu0
  %v8100 = vadd.f32 %v7987, %v8099
  %v8101 = vpop.f32.mrf.mxu0
  %v8102 = vadd.f32 %v7989, %v8101
  %v8103 = vpop.f32.mrf.mxu0
  %v8104 = vadd.f32 %v7991, %v8103
  %v8105 = vpop.f32.mrf.mxu0
  %v8106 = vadd.f32 %v7993, %v8105
  %8107 = vmatprep.mubr.bf16.mxu0 %v4360
  %8108 = vmatmul.mubr.bf16.gmra.mxu0 %v4359
  %v8109 = vpop.f32.mrf.mxu0
  %v8110 = vadd.f32 %v7997, %v8109
  %v8111 = vpop.f32.mrf.mxu0
  %v8112 = vadd.f32 %v7999, %v8111
  %v8113 = vpop.f32.mrf.mxu0
  %v8114 = vadd.f32 %v8001, %v8113
  %v8115 = vpop.f32.mrf.mxu0
  %v8116 = vadd.f32 %v8003, %v8115
  %8117 = vmatprep.mubr.bf16.mxu0 %v4374
  %8118 = vmatmul.mubr.bf16.gmra.mxu0 %v4373
  %v8119 = vpop.f32.mrf.mxu0
  %v8120 = vadd.f32 %v8007, %v8119
  %v8121 = vpop.f32.mrf.mxu0
  %v8122 = vadd.f32 %v8009, %v8121
  %v8123 = vpop.f32.mrf.mxu0
  %v8124 = vadd.f32 %v8011, %v8123
  %v8125 = vpop.f32.mrf.mxu0
  %v8126 = vadd.f32 %v8013, %v8125
  %8127 = vmatprep.mubr.bf16.mxu0 %v4388
  %8128 = vmatmul.mubr.bf16.gmra.mxu0 %v4387
  %v8129 = vpop.f32.mrf.mxu0
  %v8130 = vadd.f32 %v8017, %v8129
  %v8131 = vpop.f32.mrf.mxu0
  %v8132 = vadd.f32 %v8019, %v8131
  %v8133 = vpop.f32.mrf.mxu0
  %v8134 = vadd.f32 %v8021, %v8133
  %v8135 = vpop.f32.mrf.mxu0
  %v8136 = vadd.f32 %v8023, %v8135
  %8137 = vmatprep.mubr.bf16.mxu0 %v4402
  %8138 = vmatmul.mubr.bf16.gmra.mxu0 %v4401
  %v8139 = vpop.f32.mrf.mxu0
  %v8140 = vadd.f32 %v8027, %v8139
  %v8141 = vpop.f32.mrf.mxu0
  %v8142 = vadd.f32 %v8029, %v8141
  %v8143 = vpop.f32.mrf.mxu0
  %v8144 = vadd.f32 %v8031, %v8143
  %v8145 = vpop.f32.mrf.mxu0
  %v8146 = vadd.f32 %v8033, %v8145
  %8147 = vmatprep.mubr.bf16.mxu0 %v4416
  %8148 = vmatmul.mubr.bf16.gmra.mxu0 %v4415
  %v8149 = vpop.f32.mrf.mxu0
  %v8150 = vadd.f32 %v8037, %v8149
  %v8151 = vpop.f32.mrf.mxu0
  %v8152 = vadd.f32 %v8039, %v8151
  %v8153 = vpop.f32.mrf.mxu0
  %v8154 = vadd.f32 %v8041, %v8153
  %v8155 = vpop.f32.mrf.mxu0
  %v8156 = vadd.f32 %v8043, %v8155
  %8157 = vmatprep.mubr.bf16.mxu0 %v4430
  %8158 = vmatmul.mubr.bf16.gmra.mxu0 %v4429
  %v8159 = vpop.f32.mrf.mxu0
  %v8160 = vadd.f32 %v8047, %v8159
  %v8161 = vpop.f32.mrf.mxu0
  %v8162 = vadd.f32 %v8049, %v8161
  %v8163 = vpop.f32.mrf.mxu0
  %v8164 = vadd.f32 %v8051, %v8163
  %v8165 = vpop.f32.mrf.mxu0
  %v8166 = vadd.f32 %v8053, %v8165
  %8167 = vdwg.mxu0
  %8168 = vmatprep.subr.bf16.mxu0 %v6414
  %8169 = vmatpush1.bf16.msra.mxu0 %v6413
  %8170 = vmatprep.subr.bf16.mxu0 %v6410
  %8171 = vmatpush1.bf16.msra.mxu0 %v6409
  %8172 = vmatprep.subr.bf16.mxu0 %v6406
  %8173 = vmatpush1.bf16.msra.mxu0 %v6405
  %8174 = vmatprep.subr.bf16.mxu0 %v6402
  %8175 = vmatpush1.bf16.msra.mxu0 %v6401
  %8176 = vmatprep.subr.bf16.mxu0 %v6398
  %8177 = vmatpush1.bf16.msra.mxu0 %v6397
  %8178 = vmatprep.subr.bf16.mxu0 %v6394
  %8179 = vmatpush1.bf16.msra.mxu0 %v6393
  %8180 = vmatprep.subr.bf16.mxu0 %v6390
  %8181 = vmatpush1.bf16.msra.mxu0 %v6389
  %8182 = vmatprep.subr.bf16.mxu0 %v6386
  %8183 = vmatpush1.bf16.msra.mxu0 %v6385
  %8184 = vmatprep.subr.bf16.mxu0 %v6446
  %8185 = vmatpush2.bf16.msra.mxu0 %v6445
  %8186 = vmatprep.subr.bf16.mxu0 %v6442
  %8187 = vmatpush2.bf16.msra.mxu0 %v6441
  %8188 = vmatprep.subr.bf16.mxu0 %v6438
  %8189 = vmatpush2.bf16.msra.mxu0 %v6437
  %8190 = vmatprep.subr.bf16.mxu0 %v6434
  %8191 = vmatpush2.bf16.msra.mxu0 %v6433
  %8192 = vmatprep.subr.bf16.mxu0 %v6430
  %8193 = vmatpush2.bf16.msra.mxu0 %v6429
  %8194 = vmatprep.subr.bf16.mxu0 %v6426
  %8195 = vmatpush2.bf16.msra.mxu0 %v6425
  %8196 = vmatprep.subr.bf16.mxu0 %v6422
  %8197 = vmatpush2.bf16.msra.mxu0 %v6421
  %8198 = vmatprep.subr.bf16.mxu0 %v6418
  %8199 = vmatpush2.bf16.msra.mxu0 %v6417
  %8200 = vmatprep.mubr.bf16.mxu0 %v4334
  %8201 = vmatmul.mubr.bf16.gmra.mxu0 %v4333
  %v8202 = vpop.f32.mrf.mxu0
  %v8203 = vadd.f32 %v8090, %v8202
  %v8204 = vpop.f32.mrf.mxu0
  %v8205 = vadd.f32 %v8092, %v8204
  %v8206 = vpop.f32.mrf.mxu0
  %v8207 = vadd.f32 %v8094, %v8206
  %v8208 = vpop.f32.mrf.mxu0
  %v8209 = vadd.f32 %v8096, %v8208
  %8210 = vmatprep.mubr.bf16.mxu0 %v4348
  %8211 = vmatmul.mubr.bf16.gmra.mxu0 %v4347
  %v8212 = vpop.f32.mrf.mxu0
  %v8213 = vadd.f32 %v8100, %v8212
  %v8214 = vpop.f32.mrf.mxu0
  %v8215 = vadd.f32 %v8102, %v8214
  %v8216 = vpop.f32.mrf.mxu0
  %v8217 = vadd.f32 %v8104, %v8216
  %v8218 = vpop.f32.mrf.mxu0
  %v8219 = vadd.f32 %v8106, %v8218
  %8220 = vmatprep.mubr.bf16.mxu0 %v4362
  %8221 = vmatmul.mubr.bf16.gmra.mxu0 %v4361
  %v8222 = vpop.f32.mrf.mxu0
  %v8223 = vadd.f32 %v8110, %v8222
  %v8224 = vpop.f32.mrf.mxu0
  %v8225 = vadd.f32 %v8112, %v8224
  %v8226 = vpop.f32.mrf.mxu0
  %v8227 = vadd.f32 %v8114, %v8226
  %v8228 = vpop.f32.mrf.mxu0
  %v8229 = vadd.f32 %v8116, %v8228
  %8230 = vmatprep.mubr.bf16.mxu0 %v4376
  %8231 = vmatmul.mubr.bf16.gmra.mxu0 %v4375
  %v8232 = vpop.f32.mrf.mxu0
  %v8233 = vadd.f32 %v8120, %v8232
  %v8234 = vpop.f32.mrf.mxu0
  %v8235 = vadd.f32 %v8122, %v8234
  %v8236 = vpop.f32.mrf.mxu0
  %v8237 = vadd.f32 %v8124, %v8236
  %v8238 = vpop.f32.mrf.mxu0
  %v8239 = vadd.f32 %v8126, %v8238
  %8240 = vmatprep.mubr.bf16.mxu0 %v4390
  %8241 = vmatmul.mubr.bf16.gmra.mxu0 %v4389
  %v8242 = vpop.f32.mrf.mxu0
  %v8243 = vadd.f32 %v8130, %v8242
  %v8244 = vpop.f32.mrf.mxu0
  %v8245 = vadd.f32 %v8132, %v8244
  %v8246 = vpop.f32.mrf.mxu0
  %v8247 = vadd.f32 %v8134, %v8246
  %v8248 = vpop.f32.mrf.mxu0
  %v8249 = vadd.f32 %v8136, %v8248
  %8250 = vmatprep.mubr.bf16.mxu0 %v4404
  %8251 = vmatmul.mubr.bf16.gmra.mxu0 %v4403
  %v8252 = vpop.f32.mrf.mxu0
  %v8253 = vadd.f32 %v8140, %v8252
  %v8254 = vpop.f32.mrf.mxu0
  %v8255 = vadd.f32 %v8142, %v8254
  %v8256 = vpop.f32.mrf.mxu0
  %v8257 = vadd.f32 %v8144, %v8256
  %v8258 = vpop.f32.mrf.mxu0
  %v8259 = vadd.f32 %v8146, %v8258
  %8260 = vmatprep.mubr.bf16.mxu0 %v4418
  %8261 = vmatmul.mubr.bf16.gmra.mxu0 %v4417
  %v8262 = vpop.f32.mrf.mxu0
  %v8263 = vadd.f32 %v8150, %v8262
  %v8264 = vpop.f32.mrf.mxu0
  %v8265 = vadd.f32 %v8152, %v8264
  %v8266 = vpop.f32.mrf.mxu0
  %v8267 = vadd.f32 %v8154, %v8266
  %v8268 = vpop.f32.mrf.mxu0
  %v8269 = vadd.f32 %v8156, %v8268
  %8270 = vmatprep.mubr.bf16.mxu0 %v4432
  %8271 = vmatmul.mubr.bf16.gmra.mxu0 %v4431
  %v8272 = vpop.f32.mrf.mxu0
  %v8273 = vadd.f32 %v8160, %v8272
  %v8274 = vpop.f32.mrf.mxu0
  %v8275 = vadd.f32 %v8162, %v8274
  %v8276 = vpop.f32.mrf.mxu0
  %v8277 = vadd.f32 %v8164, %v8276
  %v8278 = vpop.f32.mrf.mxu0
  %v8279 = vadd.f32 %v8166, %v8278
  %8280 = vdwg.mxu0
  %8281 = vmatprep.subr.bf16.mxu0 %v6478
  %8282 = vmatpush1.bf16.msra.mxu0 %v6477
  %8283 = vmatprep.subr.bf16.mxu0 %v6474
  %8284 = vmatpush1.bf16.msra.mxu0 %v6473
  %8285 = vmatprep.subr.bf16.mxu0 %v6470
  %8286 = vmatpush1.bf16.msra.mxu0 %v6469
  %8287 = vmatprep.subr.bf16.mxu0 %v6466
  %8288 = vmatpush1.bf16.msra.mxu0 %v6465
  %8289 = vmatprep.subr.bf16.mxu0 %v6462
  %8290 = vmatpush1.bf16.msra.mxu0 %v6461
  %8291 = vmatprep.subr.bf16.mxu0 %v6458
  %8292 = vmatpush1.bf16.msra.mxu0 %v6457
  %8293 = vmatprep.subr.bf16.mxu0 %v6454
  %8294 = vmatpush1.bf16.msra.mxu0 %v6453
  %8295 = vmatprep.subr.bf16.mxu0 %v6450
  %8296 = vmatpush1.bf16.msra.mxu0 %v6449
  %8297 = vmatprep.subr.bf16.mxu0 %v6510
  %8298 = vmatpush2.bf16.msra.mxu0 %v6509
  %8299 = vmatprep.subr.bf16.mxu0 %v6506
  %8300 = vmatpush2.bf16.msra.mxu0 %v6505
  %8301 = vmatprep.subr.bf16.mxu0 %v6502
  %8302 = vmatpush2.bf16.msra.mxu0 %v6501
  %8303 = vmatprep.subr.bf16.mxu0 %v6498
  %8304 = vmatpush2.bf16.msra.mxu0 %v6497
  %8305 = vmatprep.subr.bf16.mxu0 %v6494
  %8306 = vmatpush2.bf16.msra.mxu0 %v6493
  %8307 = vmatprep.subr.bf16.mxu0 %v6490
  %8308 = vmatpush2.bf16.msra.mxu0 %v6489
  %8309 = vmatprep.subr.bf16.mxu0 %v6486
  %8310 = vmatpush2.bf16.msra.mxu0 %v6485
  %8311 = vmatprep.subr.bf16.mxu0 %v6482
  %8312 = vmatpush2.bf16.msra.mxu0 %v6481
  %8313 = vmatprep.mubr.bf16.mxu0 %v4336
  %8314 = vmatmul.mubr.bf16.gmra.mxu0 %v4335
  %v8315 = vpop.f32.mrf.mxu0
  %v8316 = vadd.f32 %v8203, %v8315
  %v8317 = vpop.f32.mrf.mxu0
  %v8318 = vadd.f32 %v8205, %v8317
  %v8319 = vpop.f32.mrf.mxu0
  %v8320 = vadd.f32 %v8207, %v8319
  %v8321 = vpop.f32.mrf.mxu0
  %v8322 = vadd.f32 %v8209, %v8321
  %8323 = vmatprep.mubr.bf16.mxu0 %v4350
  %8324 = vmatmul.mubr.bf16.gmra.mxu0 %v4349
  %v8325 = vpop.f32.mrf.mxu0
  %v8326 = vadd.f32 %v8213, %v8325
  %v8327 = vpop.f32.mrf.mxu0
  %v8328 = vadd.f32 %v8215, %v8327
  %v8329 = vpop.f32.mrf.mxu0
  %v8330 = vadd.f32 %v8217, %v8329
  %v8331 = vpop.f32.mrf.mxu0
  %v8332 = vadd.f32 %v8219, %v8331
  %8333 = vmatprep.mubr.bf16.mxu0 %v4364
  %8334 = vmatmul.mubr.bf16.gmra.mxu0 %v4363
  %v8335 = vpop.f32.mrf.mxu0
  %v8336 = vadd.f32 %v8223, %v8335
  %v8337 = vpop.f32.mrf.mxu0
  %v8338 = vadd.f32 %v8225, %v8337
  %v8339 = vpop.f32.mrf.mxu0
  %v8340 = vadd.f32 %v8227, %v8339
  %v8341 = vpop.f32.mrf.mxu0
  %v8342 = vadd.f32 %v8229, %v8341
  %8343 = vmatprep.mubr.bf16.mxu0 %v4378
  %8344 = vmatmul.mubr.bf16.gmra.mxu0 %v4377
  %v8345 = vpop.f32.mrf.mxu0
  %v8346 = vadd.f32 %v8233, %v8345
  %v8347 = vpop.f32.mrf.mxu0
  %v8348 = vadd.f32 %v8235, %v8347
  %v8349 = vpop.f32.mrf.mxu0
  %v8350 = vadd.f32 %v8237, %v8349
  %v8351 = vpop.f32.mrf.mxu0
  %v8352 = vadd.f32 %v8239, %v8351
  %8353 = vmatprep.mubr.bf16.mxu0 %v4392
  %8354 = vmatmul.mubr.bf16.gmra.mxu0 %v4391
  %v8355 = vpop.f32.mrf.mxu0
  %v8356 = vadd.f32 %v8243, %v8355
  %v8357 = vpop.f32.mrf.mxu0
  %v8358 = vadd.f32 %v8245, %v8357
  %v8359 = vpop.f32.mrf.mxu0
  %v8360 = vadd.f32 %v8247, %v8359
  %v8361 = vpop.f32.mrf.mxu0
  %v8362 = vadd.f32 %v8249, %v8361
  %8363 = vmatprep.mubr.bf16.mxu0 %v4406
  %8364 = vmatmul.mubr.bf16.gmra.mxu0 %v4405
  %v8365 = vpop.f32.mrf.mxu0
  %v8366 = vadd.f32 %v8253, %v8365
  %v8367 = vpop.f32.mrf.mxu0
  %v8368 = vadd.f32 %v8255, %v8367
  %v8369 = vpop.f32.mrf.mxu0
  %v8370 = vadd.f32 %v8257, %v8369
  %v8371 = vpop.f32.mrf.mxu0
  %v8372 = vadd.f32 %v8259, %v8371
  %8373 = vmatprep.mubr.bf16.mxu0 %v4420
  %8374 = vmatmul.mubr.bf16.gmra.mxu0 %v4419
  %v8375 = vpop.f32.mrf.mxu0
  %v8376 = vadd.f32 %v8263, %v8375
  %v8377 = vpop.f32.mrf.mxu0
  %v8378 = vadd.f32 %v8265, %v8377
  %v8379 = vpop.f32.mrf.mxu0
  %v8380 = vadd.f32 %v8267, %v8379
  %v8381 = vpop.f32.mrf.mxu0
  %v8382 = vadd.f32 %v8269, %v8381
  %8383 = vmatprep.mubr.bf16.mxu0 %v4434
  %8384 = vmatmul.mubr.bf16.gmra.mxu0 %v4433
  %v8385 = vpop.f32.mrf.mxu0
  %v8386 = vadd.f32 %v8273, %v8385
  %v8387 = vpop.f32.mrf.mxu0
  %v8388 = vadd.f32 %v8275, %v8387
  %v8389 = vpop.f32.mrf.mxu0
  %v8390 = vadd.f32 %v8277, %v8389
  %v8391 = vpop.f32.mrf.mxu0
  %v8392 = vadd.f32 %v8279, %v8391
  %8393 = vdwg.mxu0
  %8394 = vmatprep.subr.bf16.mxu0 %v6542
  %8395 = vmatpush1.bf16.msra.mxu0 %v6541
  %8396 = vmatprep.subr.bf16.mxu0 %v6538
  %8397 = vmatpush1.bf16.msra.mxu0 %v6537
  %8398 = vmatprep.subr.bf16.mxu0 %v6534
  %8399 = vmatpush1.bf16.msra.mxu0 %v6533
  %8400 = vmatprep.subr.bf16.mxu0 %v6530
  %8401 = vmatpush1.bf16.msra.mxu0 %v6529
  %8402 = vmatprep.subr.bf16.mxu0 %v6526
  %8403 = vmatpush1.bf16.msra.mxu0 %v6525
  %8404 = vmatprep.subr.bf16.mxu0 %v6522
  %8405 = vmatpush1.bf16.msra.mxu0 %v6521
  %8406 = vmatprep.subr.bf16.mxu0 %v6518
  %8407 = vmatpush1.bf16.msra.mxu0 %v6517
  %8408 = vmatprep.subr.bf16.mxu0 %v6514
  %8409 = vmatpush1.bf16.msra.mxu0 %v6513
  %8410 = vmatprep.subr.bf16.mxu0 %v6574
  %8411 = vmatpush2.bf16.msra.mxu0 %v6573
  %8412 = vmatprep.subr.bf16.mxu0 %v6570
  %8413 = vmatpush2.bf16.msra.mxu0 %v6569
  %8414 = vmatprep.subr.bf16.mxu0 %v6566
  %8415 = vmatpush2.bf16.msra.mxu0 %v6565
  %8416 = vmatprep.subr.bf16.mxu0 %v6562
  %8417 = vmatpush2.bf16.msra.mxu0 %v6561
  %8418 = vmatprep.subr.bf16.mxu0 %v6558
  %8419 = vmatpush2.bf16.msra.mxu0 %v6557
  %8420 = vmatprep.subr.bf16.mxu0 %v6554
  %8421 = vmatpush2.bf16.msra.mxu0 %v6553
  %8422 = vmatprep.subr.bf16.mxu0 %v6550
  %8423 = vmatpush2.bf16.msra.mxu0 %v6549
  %8424 = vmatprep.subr.bf16.mxu0 %v6546
  %8425 = vmatpush2.bf16.msra.mxu0 %v6545
  %8426 = vmatprep.mubr.bf16.mxu0 %v4338
  %8427 = vmatmul.mubr.bf16.gmra.mxu0 %v4337
  %v8428 = vpop.f32.mrf.mxu0
  %v8429 = vadd.f32 %v8316, %v8428
  %v8430 = vpop.f32.mrf.mxu0
  %v8431 = vadd.f32 %v8318, %v8430
  %v8432 = vpop.f32.mrf.mxu0
  %v8433 = vadd.f32 %v8320, %v8432
  %v8434 = vpop.f32.mrf.mxu0
  %v8435 = vadd.f32 %v8322, %v8434
  %8436 = vmatprep.mubr.bf16.mxu0 %v4352
  %8437 = vmatmul.mubr.bf16.gmra.mxu0 %v4351
  %v8438 = vpop.f32.mrf.mxu0
  %v8439 = vadd.f32 %v8326, %v8438
  %v8440 = vpop.f32.mrf.mxu0
  %v8441 = vadd.f32 %v8328, %v8440
  %v8442 = vpop.f32.mrf.mxu0
  %v8443 = vadd.f32 %v8330, %v8442
  %v8444 = vpop.f32.mrf.mxu0
  %v8445 = vadd.f32 %v8332, %v8444
  %8446 = vmatprep.mubr.bf16.mxu0 %v4366
  %8447 = vmatmul.mubr.bf16.gmra.mxu0 %v4365
  %v8448 = vpop.f32.mrf.mxu0
  %v8449 = vadd.f32 %v8336, %v8448
  %v8450 = vpop.f32.mrf.mxu0
  %v8451 = vadd.f32 %v8338, %v8450
  %v8452 = vpop.f32.mrf.mxu0
  %v8453 = vadd.f32 %v8340, %v8452
  %v8454 = vpop.f32.mrf.mxu0
  %v8455 = vadd.f32 %v8342, %v8454
  %8456 = vmatprep.mubr.bf16.mxu0 %v4380
  %8457 = vmatmul.mubr.bf16.gmra.mxu0 %v4379
  %v8458 = vpop.f32.mrf.mxu0
  %v8459 = vadd.f32 %v8346, %v8458
  %v8460 = vpop.f32.mrf.mxu0
  %v8461 = vadd.f32 %v8348, %v8460
  %v8462 = vpop.f32.mrf.mxu0
  %v8463 = vadd.f32 %v8350, %v8462
  %v8464 = vpop.f32.mrf.mxu0
  %v8465 = vadd.f32 %v8352, %v8464
  %8466 = vmatprep.mubr.bf16.mxu0 %v4394
  %8467 = vmatmul.mubr.bf16.gmra.mxu0 %v4393
  %v8468 = vpop.f32.mrf.mxu0
  %v8469 = vadd.f32 %v8356, %v8468
  %v8470 = vpop.f32.mrf.mxu0
  %v8471 = vadd.f32 %v8358, %v8470
  %v8472 = vpop.f32.mrf.mxu0
  %v8473 = vadd.f32 %v8360, %v8472
  %v8474 = vpop.f32.mrf.mxu0
  %v8475 = vadd.f32 %v8362, %v8474
  %8476 = vmatprep.mubr.bf16.mxu0 %v4408
  %8477 = vmatmul.mubr.bf16.gmra.mxu0 %v4407
  %v8478 = vpop.f32.mrf.mxu0
  %v8479 = vadd.f32 %v8366, %v8478
  %v8480 = vpop.f32.mrf.mxu0
  %v8481 = vadd.f32 %v8368, %v8480
  %v8482 = vpop.f32.mrf.mxu0
  %v8483 = vadd.f32 %v8370, %v8482
  %v8484 = vpop.f32.mrf.mxu0
  %v8485 = vadd.f32 %v8372, %v8484
  %8486 = vmatprep.mubr.bf16.mxu0 %v4422
  %8487 = vmatmul.mubr.bf16.gmra.mxu0 %v4421
  %v8488 = vpop.f32.mrf.mxu0
  %v8489 = vadd.f32 %v8376, %v8488
  %v8490 = vpop.f32.mrf.mxu0
  %v8491 = vadd.f32 %v8378, %v8490
  %v8492 = vpop.f32.mrf.mxu0
  %v8493 = vadd.f32 %v8380, %v8492
  %v8494 = vpop.f32.mrf.mxu0
  %v8495 = vadd.f32 %v8382, %v8494
  %8496 = vmatprep.mubr.bf16.mxu0 %v4436
  %8497 = vmatmul.mubr.bf16.gmra.mxu0 %v4435
  %v8498 = vpop.f32.mrf.mxu0
  %v8499 = vadd.f32 %v8386, %v8498
  %v8500 = vpop.f32.mrf.mxu0
  %v8501 = vadd.f32 %v8388, %v8500
  %v8502 = vpop.f32.mrf.mxu0
  %v8503 = vadd.f32 %v8390, %v8502
  %v8504 = vpop.f32.mrf.mxu0
  %v8505 = vadd.f32 %v8392, %v8504
  %8506 = vdwg.mxu0
  %8507 = vmatprep.subr.bf16.mxu0 %v6606
  %8508 = vmatpush1.bf16.msra.mxu0 %v6605
  %8509 = vmatprep.subr.bf16.mxu0 %v6602
  %8510 = vmatpush1.bf16.msra.mxu0 %v6601
  %8511 = vmatprep.subr.bf16.mxu0 %v6598
  %8512 = vmatpush1.bf16.msra.mxu0 %v6597
  %8513 = vmatprep.subr.bf16.mxu0 %v6594
  %8514 = vmatpush1.bf16.msra.mxu0 %v6593
  %8515 = vmatprep.subr.bf16.mxu0 %v6590
  %8516 = vmatpush1.bf16.msra.mxu0 %v6589
  %8517 = vmatprep.subr.bf16.mxu0 %v6586
  %8518 = vmatpush1.bf16.msra.mxu0 %v6585
  %8519 = vmatprep.subr.bf16.mxu0 %v6582
  %8520 = vmatpush1.bf16.msra.mxu0 %v6581
  %8521 = vmatprep.subr.bf16.mxu0 %v6578
  %8522 = vmatpush1.bf16.msra.mxu0 %v6577
  %8523 = vmatprep.subr.bf16.mxu0 %v6638
  %8524 = vmatpush2.bf16.msra.mxu0 %v6637
  %8525 = vmatprep.subr.bf16.mxu0 %v6634
  %8526 = vmatpush2.bf16.msra.mxu0 %v6633
  %8527 = vmatprep.subr.bf16.mxu0 %v6630
  %8528 = vmatpush2.bf16.msra.mxu0 %v6629
  %8529 = vmatprep.subr.bf16.mxu0 %v6626
  %8530 = vmatpush2.bf16.msra.mxu0 %v6625
  %8531 = vmatprep.subr.bf16.mxu0 %v6622
  %8532 = vmatpush2.bf16.msra.mxu0 %v6621
  %8533 = vmatprep.subr.bf16.mxu0 %v6618
  %8534 = vmatpush2.bf16.msra.mxu0 %v6617
  %8535 = vmatprep.subr.bf16.mxu0 %v6614
  %8536 = vmatpush2.bf16.msra.mxu0 %v6613
  %8537 = vmatprep.subr.bf16.mxu0 %v6610
  %8538 = vmatpush2.bf16.msra.mxu0 %v6609
  %8539 = vmatprep.mubr.bf16.mxu0 %v4340
  %8540 = vmatmul.mubr.bf16.gmra.mxu0 %v4339
  %v8541 = vpop.f32.mrf.mxu0
  %v8542 = vadd.f32 %v8429, %v8541
  %v8543 = vpop.f32.mrf.mxu0
  %v8544 = vadd.f32 %v8431, %v8543
  %v8545 = vpop.f32.mrf.mxu0
  %v8546 = vadd.f32 %v8433, %v8545
  %v8547 = vpop.f32.mrf.mxu0
  %v8548 = vadd.f32 %v8435, %v8547
  %8549 = vmatprep.mubr.bf16.mxu0 %v4354
  %8550 = vmatmul.mubr.bf16.gmra.mxu0 %v4353
  %v8551 = vpop.f32.mrf.mxu0
  %v8552 = vadd.f32 %v8439, %v8551
  %v8553 = vpop.f32.mrf.mxu0
  %v8554 = vadd.f32 %v8441, %v8553
  %v8555 = vpop.f32.mrf.mxu0
  %v8556 = vadd.f32 %v8443, %v8555
  %v8557 = vpop.f32.mrf.mxu0
  %v8558 = vadd.f32 %v8445, %v8557
  %8559 = vmatprep.mubr.bf16.mxu0 %v4368
  %8560 = vmatmul.mubr.bf16.gmra.mxu0 %v4367
  %v8561 = vpop.f32.mrf.mxu0
  %v8562 = vadd.f32 %v8449, %v8561
  %v8563 = vpop.f32.mrf.mxu0
  %v8564 = vadd.f32 %v8451, %v8563
  %v8565 = vpop.f32.mrf.mxu0
  %v8566 = vadd.f32 %v8453, %v8565
  %v8567 = vpop.f32.mrf.mxu0
  %v8568 = vadd.f32 %v8455, %v8567
  %8569 = vmatprep.mubr.bf16.mxu0 %v4382
  %8570 = vmatmul.mubr.bf16.gmra.mxu0 %v4381
  %v8571 = vpop.f32.mrf.mxu0
  %v8572 = vadd.f32 %v8459, %v8571
  %v8573 = vpop.f32.mrf.mxu0
  %v8574 = vadd.f32 %v8461, %v8573
  %v8575 = vpop.f32.mrf.mxu0
  %v8576 = vadd.f32 %v8463, %v8575
  %v8577 = vpop.f32.mrf.mxu0
  %v8578 = vadd.f32 %v8465, %v8577
  %8579 = vmatprep.mubr.bf16.mxu0 %v4396
  %8580 = vmatmul.mubr.bf16.gmra.mxu0 %v4395
  %v8581 = vpop.f32.mrf.mxu0
  %v8582 = vadd.f32 %v8469, %v8581
  %v8583 = vpop.f32.mrf.mxu0
  %v8584 = vadd.f32 %v8471, %v8583
  %v8585 = vpop.f32.mrf.mxu0
  %v8586 = vadd.f32 %v8473, %v8585
  %v8587 = vpop.f32.mrf.mxu0
  %v8588 = vadd.f32 %v8475, %v8587
  %8589 = vmatprep.mubr.bf16.mxu0 %v4410
  %8590 = vmatmul.mubr.bf16.gmra.mxu0 %v4409
  %v8591 = vpop.f32.mrf.mxu0
  %v8592 = vadd.f32 %v8479, %v8591
  %v8593 = vpop.f32.mrf.mxu0
  %v8594 = vadd.f32 %v8481, %v8593
  %v8595 = vpop.f32.mrf.mxu0
  %v8596 = vadd.f32 %v8483, %v8595
  %v8597 = vpop.f32.mrf.mxu0
  %v8598 = vadd.f32 %v8485, %v8597
  %8599 = vmatprep.mubr.bf16.mxu0 %v4424
  %8600 = vmatmul.mubr.bf16.gmra.mxu0 %v4423
  %v8601 = vpop.f32.mrf.mxu0
  %v8602 = vadd.f32 %v8489, %v8601
  %v8603 = vpop.f32.mrf.mxu0
  %v8604 = vadd.f32 %v8491, %v8603
  %v8605 = vpop.f32.mrf.mxu0
  %v8606 = vadd.f32 %v8493, %v8605
  %v8607 = vpop.f32.mrf.mxu0
  %v8608 = vadd.f32 %v8495, %v8607
  %8609 = vmatprep.mubr.bf16.mxu0 %v4438
  %8610 = vmatmul.mubr.bf16.gmra.mxu0 %v4437
  %v8611 = vpop.f32.mrf.mxu0
  %v8612 = vadd.f32 %v8499, %v8611
  %v8613 = vpop.f32.mrf.mxu0
  %v8614 = vadd.f32 %v8501, %v8613
  %v8615 = vpop.f32.mrf.mxu0
  %v8616 = vadd.f32 %v8503, %v8615
  %v8617 = vpop.f32.mrf.mxu0
  %v8618 = vadd.f32 %v8505, %v8617
  %8619 = vdwg.mxu0
  %8620 = vmatprep.subr.bf16.mxu0 %v6670
  %8621 = vmatpush1.bf16.msra.mxu0 %v6669
  %8622 = vmatprep.subr.bf16.mxu0 %v6666
  %8623 = vmatpush1.bf16.msra.mxu0 %v6665
  %8624 = vmatprep.subr.bf16.mxu0 %v6662
  %8625 = vmatpush1.bf16.msra.mxu0 %v6661
  %8626 = vmatprep.subr.bf16.mxu0 %v6658
  %8627 = vmatpush1.bf16.msra.mxu0 %v6657
  %8628 = vmatprep.subr.bf16.mxu0 %v6654
  %8629 = vmatpush1.bf16.msra.mxu0 %v6653
  %8630 = vmatprep.subr.bf16.mxu0 %v6650
  %8631 = vmatpush1.bf16.msra.mxu0 %v6649
  %8632 = vmatprep.subr.bf16.mxu0 %v6646
  %8633 = vmatpush1.bf16.msra.mxu0 %v6645
  %8634 = vmatprep.subr.bf16.mxu0 %v6642
  %8635 = vmatpush1.bf16.msra.mxu0 %v6641
  %8636 = vmatprep.subr.bf16.mxu0 %v6702
  %8637 = vmatpush2.bf16.msra.mxu0 %v6701
  %8638 = vmatprep.subr.bf16.mxu0 %v6698
  %8639 = vmatpush2.bf16.msra.mxu0 %v6697
  %8640 = vmatprep.subr.bf16.mxu0 %v6694
  %8641 = vmatpush2.bf16.msra.mxu0 %v6693
  %8642 = vmatprep.subr.bf16.mxu0 %v6690
  %8643 = vmatpush2.bf16.msra.mxu0 %v6689
  %8644 = vmatprep.subr.bf16.mxu0 %v6686
  %8645 = vmatpush2.bf16.msra.mxu0 %v6685
  %8646 = vmatprep.subr.bf16.mxu0 %v6682
  %8647 = vmatpush2.bf16.msra.mxu0 %v6681
  %8648 = vmatprep.subr.bf16.mxu0 %v6678
  %8649 = vmatpush2.bf16.msra.mxu0 %v6677
  %8650 = vmatprep.subr.bf16.mxu0 %v6674
  %8651 = vmatpush2.bf16.msra.mxu0 %v6673
  %8652 = vmatprep.mubr.bf16.mxu0 %v4342
  %8653 = vmatmul.mubr.bf16.gmra.mxu0 %v4341
  %v8654 = vpop.f32.mrf.mxu0
  %v8655 = vadd.f32 %v8542, %v8654
  %v8656 = vpop.f32.mrf.mxu0
  %v8657 = vadd.f32 %v8544, %v8656
  %v8658 = vpop.f32.mrf.mxu0
  %v8659 = vadd.f32 %v8546, %v8658
  %v8660 = vpop.f32.mrf.mxu0
  %v8661 = vadd.f32 %v8548, %v8660
  %8662 = vmatprep.mubr.bf16.mxu0 %v4356
  %8663 = vmatmul.mubr.bf16.gmra.mxu0 %v4355
  %v8664 = vpop.f32.mrf.mxu0
  %v8665 = vadd.f32 %v8552, %v8664
  %v8666 = vpop.f32.mrf.mxu0
  %v8667 = vadd.f32 %v8554, %v8666
  %v8668 = vpop.f32.mrf.mxu0
  %v8669 = vadd.f32 %v8556, %v8668
  %v8670 = vpop.f32.mrf.mxu0
  %v8671 = vadd.f32 %v8558, %v8670
  %8672 = vmatprep.mubr.bf16.mxu0 %v4370
  %8673 = vmatmul.mubr.bf16.gmra.mxu0 %v4369
  %v8674 = vpop.f32.mrf.mxu0
  %v8675 = vadd.f32 %v8562, %v8674
  %v8676 = vpop.f32.mrf.mxu0
  %v8677 = vadd.f32 %v8564, %v8676
  %v8678 = vpop.f32.mrf.mxu0
  %v8679 = vadd.f32 %v8566, %v8678
  %v8680 = vpop.f32.mrf.mxu0
  %v8681 = vadd.f32 %v8568, %v8680
  %8682 = vmatprep.mubr.bf16.mxu0 %v4384
  %8683 = vmatmul.mubr.bf16.gmra.mxu0 %v4383
  %v8684 = vpop.f32.mrf.mxu0
  %v8685 = vadd.f32 %v8572, %v8684
  %v8686 = vpop.f32.mrf.mxu0
  %v8687 = vadd.f32 %v8574, %v8686
  %v8688 = vpop.f32.mrf.mxu0
  %v8689 = vadd.f32 %v8576, %v8688
  %v8690 = vpop.f32.mrf.mxu0
  %v8691 = vadd.f32 %v8578, %v8690
  %8692 = vmatprep.mubr.bf16.mxu0 %v4398
  %8693 = vmatmul.mubr.bf16.gmra.mxu0 %v4397
  %v8694 = vpop.f32.mrf.mxu0
  %v8695 = vadd.f32 %v8582, %v8694
  %v8696 = vpop.f32.mrf.mxu0
  %v8697 = vadd.f32 %v8584, %v8696
  %v8698 = vpop.f32.mrf.mxu0
  %v8699 = vadd.f32 %v8586, %v8698
  %v8700 = vpop.f32.mrf.mxu0
  %v8701 = vadd.f32 %v8588, %v8700
  %8702 = vmatprep.mubr.bf16.mxu0 %v4412
  %8703 = vmatmul.mubr.bf16.gmra.mxu0 %v4411
  %v8704 = vpop.f32.mrf.mxu0
  %v8705 = vadd.f32 %v8592, %v8704
  %v8706 = vpop.f32.mrf.mxu0
  %v8707 = vadd.f32 %v8594, %v8706
  %v8708 = vpop.f32.mrf.mxu0
  %v8709 = vadd.f32 %v8596, %v8708
  %v8710 = vpop.f32.mrf.mxu0
  %v8711 = vadd.f32 %v8598, %v8710
  %8712 = vmatprep.mubr.bf16.mxu0 %v4426
  %8713 = vmatmul.mubr.bf16.gmra.mxu0 %v4425
  %v8714 = vpop.f32.mrf.mxu0
  %v8715 = vadd.f32 %v8602, %v8714
  %v8716 = vpop.f32.mrf.mxu0
  %v8717 = vadd.f32 %v8604, %v8716
  %v8718 = vpop.f32.mrf.mxu0
  %v8719 = vadd.f32 %v8606, %v8718
  %v8720 = vpop.f32.mrf.mxu0
  %v8721 = vadd.f32 %v8608, %v8720
  %8722 = vmatprep.mubr.bf16.mxu0 %v4440
  %8723 = vmatmul.mubr.bf16.gmra.mxu0 %v4439
  %v8724 = vpop.f32.mrf.mxu0
  %v8725 = vadd.f32 %v8612, %v8724
  %v8726 = vpop.f32.mrf.mxu0
  %v8727 = vadd.f32 %v8614, %v8726
  %v8728 = vpop.f32.mrf.mxu0
  %v8729 = vadd.f32 %v8616, %v8728
  %v8730 = vpop.f32.mrf.mxu0
  %v8731 = vadd.f32 %v8618, %v8730
  %8732 = vdwg.mxu0
  %8733 = vst [vmem:[%s6] sm:$0xff] %v7864
  %8734 = vst [vmem:[%s6 + $0x8] sm:$0xff] %v7866
  %8735 = vst [vmem:[%s6 + $0x10] sm:$0xff] %v8655
  %8736 = vst [vmem:[%s6 + $0x18] sm:$0xff] %v8657
  %8737 = vst [vmem:[%s6 + $0x20] sm:$0xff] %v7868
  %8738 = vst [vmem:[%s6 + $0x28] sm:$0xff] %v7870
  %8739 = vst [vmem:[%s6 + $0x30] sm:$0xff] %v8659
  %8740 = vst [vmem:[%s6 + $0x38] sm:$0xff] %v8661
  %8741 = vst [vmem:[%s6 + $0x40] sm:$0xff] %v7874
  %8742 = vst [vmem:[%s6 + $0x48] sm:$0xff] %v7876
  %8743 = vst [vmem:[%s6 + $0x50] sm:$0xff] %v8665
  %8744 = vst [vmem:[%s6 + $0x58] sm:$0xff] %v8667
  %8745 = vst [vmem:[%s6 + $0x60] sm:$0xff] %v7878
  %8746 = vst [vmem:[%s6 + $0x68] sm:$0xff] %v7880
  %8747 = vst [vmem:[%s6 + $0x70] sm:$0xff] %v8669
  %8748 = vst [vmem:[%s6 + $0x78] sm:$0xff] %v8671
  %8749 = vst [vmem:[%s6 + $0x80] sm:$0xff] %v7884
  %8750 = vst [vmem:[%s6 + $0x88] sm:$0xff] %v7886
  %8751 = vst [vmem:[%s6 + $0x90] sm:$0xff] %v8675
  %8752 = vst [vmem:[%s6 + $0x98] sm:$0xff] %v8677
  %8753 = vst [vmem:[%s6 + $0xa0] sm:$0xff] %v7888
  %8754 = vst [vmem:[%s6 + $0xa8] sm:$0xff] %v7890
  %8755 = vst [vmem:[%s6 + $0xb0] sm:$0xff] %v8679
  %8756 = vst [vmem:[%s6 + $0xb8] sm:$0xff] %v8681
  %8757 = vst [vmem:[%s6 + $0xc0] sm:$0xff] %v7894
  %8758 = vst [vmem:[%s6 + $0xc8] sm:$0xff] %v7896
  %8759 = vst [vmem:[%s6 + $0xd0] sm:$0xff] %v8685
  %8760 = vst [vmem:[%s6 + $0xd8] sm:$0xff] %v8687
  %8761 = vst [vmem:[%s6 + $0xe0] sm:$0xff] %v7898
  %8762 = vst [vmem:[%s6 + $0xe8] sm:$0xff] %v7900
  %8763 = vst [vmem:[%s6 + $0xf0] sm:$0xff] %v8689
  %8764 = vst [vmem:[%s6 + $0xf8] sm:$0xff] %v8691
  %8765 = vst [vmem:[%s6 + $0x100] sm:$0xff] %v7904
  %8766 = vst [vmem:[%s6 + $0x108] sm:$0xff] %v7906
  %8767 = vst [vmem:[%s6 + $0x110] sm:$0xff] %v8695
  %8768 = vst [vmem:[%s6 + $0x118] sm:$0xff] %v8697
  %8769 = vst [vmem:[%s6 + $0x120] sm:$0xff] %v7908
  %8770 = vst [vmem:[%s6 + $0x128] sm:$0xff] %v7910
  %8771 = vst [vmem:[%s6 + $0x130] sm:$0xff] %v8699
  %8772 = vst [vmem:[%s6 + $0x138] sm:$0xff] %v8701
  %8773 = vst [vmem:[%s6 + $0x140] sm:$0xff] %v7914
  %8774 = vst [vmem:[%s6 + $0x148] sm:$0xff] %v7916
  %8775 = vst [vmem:[%s6 + $0x150] sm:$0xff] %v8705
  %8776 = vst [vmem:[%s6 + $0x158] sm:$0xff] %v8707
  %8777 = vst [vmem:[%s6 + $0x160] sm:$0xff] %v7918
  %8778 = vst [vmem:[%s6 + $0x168] sm:$0xff] %v7920
  %8779 = vst [vmem:[%s6 + $0x170] sm:$0xff] %v8709
  %8780 = vst [vmem:[%s6 + $0x178] sm:$0xff] %v8711
  %8781 = vst [vmem:[%s6 + $0x180] sm:$0xff] %v7924
  %8782 = vst [vmem:[%s6 + $0x188] sm:$0xff] %v7926
  %8783 = vst [vmem:[%s6 + $0x190] sm:$0xff] %v8715
  %8784 = vst [vmem:[%s6 + $0x198] sm:$0xff] %v8717
  %8785 = vst [vmem:[%s6 + $0x1a0] sm:$0xff] %v7928
  %8786 = vst [vmem:[%s6 + $0x1a8] sm:$0xff] %v7930
  %8787 = vst [vmem:[%s6 + $0x1b0] sm:$0xff] %v8719
  %8788 = vst [vmem:[%s6 + $0x1b8] sm:$0xff] %v8721
  %8789 = vst [vmem:[%s6 + $0x1c0] sm:$0xff] %v7934
  %8790 = vst [vmem:[%s6 + $0x1c8] sm:$0xff] %v7936
  %8791 = vst [vmem:[%s6 + $0x1d0] sm:$0xff] %v8725
  %8792 = vst [vmem:[%s6 + $0x1d8] sm:$0xff] %v8727
  %8793 = vst [vmem:[%s6 + $0x1e0] sm:$0xff] %v7938
  %8794 = vst [vmem:[%s6 + $0x1e8] sm:$0xff] %v7940
  %8795 = vst [vmem:[%s6 + $0x1f0] sm:$0xff] %v8729
  %8796 = vst [vmem:[%s6 + $0x1f8] sm:$0xff] %v8731
  // Predicated region
  $region26: #{_lambda_.1} parent=0 // pred_check
    _
  $region27: #{_lambda_.1} parent=0 // pred_check_branch
    %8798 = sbr.rel (0) target = $region29
  $region28: #{_lambda_.1} parent=0 // pred_region
    _
  $region29: #{_lambda_.1} parent=0 // pred_fallthru
    _
  // Predicated region
  $region30: #{_lambda_.1} parent=0 // pred_check
    _
  $region31: #{_lambda_.1} parent=0 // pred_check_branch
    %8800 = sbr.rel (0) target = $region33
  $region32: #{_lambda_.1} parent=0 // pred_region
    _
  $region33: #{_lambda_.1} parent=0 // pred_fallthru
    _

</llo_original>
